<compile_context>
chip_gen: v6e
topology: v6e:2x2x1
jax: 0.10.0
libtpu: 0.0.40
codegen_flags: <defaults>
</compile_context>

<pallas_src>
import jax
import jax.numpy as jnp
from jax.experimental import pallas as pl
from jax.experimental.pallas import tpu as pltpu


def _mlp_kernel(x_ref, w0_ref, b_ref, *rest):
    """Transposed MLP: activations are (width, bm) with batch on the lane axis.

    rest = (hidden_w_refs..., w_out_ref, o_ref)
    """
    hidden_refs = rest[:-2]
    w_out_ref = rest[-2]
    o_ref = rest[-1]

    in_dim = x_ref.shape[0]
    out_dim = o_ref.shape[0]
    last = b_ref.shape[1] - 1            # bias column of the output layer

    x = x_ref[...]                        # (in_dim, bm) f32
    w0 = w0_ref[...]                      # (width, in_dim) f32

    # Layer 0 (K = input_dim, tiny): VPU broadcast multiply-adds instead of a
    # degenerate K=2 systolic pass.
    if in_dim <= 8:
        h = b_ref[:, 0:1] + w0[:, 0:1] * x[0:1, :]
        for i in range(1, in_dim):
            h = h + w0[:, i:i + 1] * x[i:i + 1, :]
    else:
        # TODO(synk): pad K to 128 for an aligned MXU pass if input_dim grows.
        h = jnp.dot(w0, x, preferred_element_type=jnp.float32) + b_ref[:, 0:1]
    h = jnp.maximum(h, 0.0)

    # Hidden layers: bf16 MXU operands, f32 accumulation; bias/ReLU stay f32.
    for j, w_ref in enumerate(hidden_refs):
        h = jnp.dot(w_ref[...], h.astype(w_ref.dtype),
                    preferred_element_type=jnp.float32) + b_ref[:, j + 1:j + 2]
        h = jnp.maximum(h, 0.0)

    # Output layer (small out_dim): f32 VPU multiply + sublane reduce.  No
    # lane padding, no mostly-zero MXU pass; the store is a lane-dense
    # (out_dim, bm) block.
    # TODO(synk): for out_dim >> 8, switch to an MXU pass on a pre-transposed w_out.
    w_out = w_out_ref[...]                # (width, out_dim) f32
    rows = []
    for c in range(out_dim):
        col = jnp.sum(h * w_out[:, c:c + 1], axis=0, keepdims=True)
        rows.append(col + b_ref[c:c + 1, last:last + 1])
    out = rows[0] if out_dim == 1 else jnp.concatenate(rows, axis=0)
    o_ref[...] = out.astype(o_ref.dtype)


def _num_tensorcores():
    """Grid steps worth running in parallel: 2 TensorCores/chip on v7x,
    1 addressable TensorCore per device otherwise (perf hint only)."""
    try:
        kind = (jax.devices()[0].device_kind or "").lower()
    except Exception:
        return 1
    return 2 if ("v7" in kind or "7x" in kind) else 1


def _pick_block_batch(B, n_cores, max_bm=2048):
    """One grid step per TensorCore unless the tile would exceed max_bm rows.
    bm is a multiple of 128 so the batch (lane) axis stays lane-dense."""
    target = min(max(pl.cdiv(B, max(n_cores, 1)), 1), max_bm)
    bm = 128 * pl.cdiv(target, 128)
    b_pad = bm * pl.cdiv(B, bm)
    return bm, b_pad


def basic_discriminator_forward(x, params, *, block_batch=None,
                                mxu_dtype=jnp.bfloat16):
    """x: (B, input_dim) float32. params: {'weights': [...], 'biases': [...]}.
    Returns a flat (B * output_dim,) array, matching output.view(-1)."""
    ws, bs = params["weights"], params["biases"]
    B, in_dim = x.shape
    width = ws[0].shape[1]
    out_dim = ws[-1].shape[1]
    n_layers = len(ws)
    assert n_layers >= 2
    assert width >= out_dim, "output bias is packed into a (width, n_layers) block"

    n_cores = _num_tensorcores()
    if block_batch is None:
        bm, b_pad = _pick_block_batch(B, n_cores)
    else:
        bm = 128 * pl.cdiv(int(block_batch), 128)
        b_pad = bm * pl.cdiv(B, bm)
    grid = b_pad // bm

    # Batch-on-lanes layout: x^T is (in_dim, B_pad); padded rows are zero and
    # their (discarded) outputs never leave the sliced result below.
    x_t = jnp.zeros((in_dim, b_pad), jnp.float32).at[:, :B].set(
        x.astype(jnp.float32).T)

    w0_t = ws[0].T.astype(jnp.float32)                    # (width, in_dim), VPU
    hidden_t = [w.T.astype(mxu_dtype) for w in ws[1:-1]]  # (width, width), MXU
    w_out = ws[-1].astype(jnp.float32)                    # (width, out_dim), VPU

    # All biases packed into one (width, n_layers) f32 block (single DMA).
    b_packed = jnp.zeros((width, n_layers), jnp.float32)
    for j in range(n_layers - 1):
        b_packed = b_packed.at[:, j].set(bs[j].astype(jnp.float32).reshape(-1))
    b_packed = b_packed.at[:out_dim, n_layers - 1].set(
        bs[-1].astype(jnp.float32).reshape(-1))

    full = lambda i: (0, 0)     # weights/biases: whole (resident) block
    tiled = lambda i: (0, i)    # batch-tiled arrays (batch is the lane axis)

    in_specs = ([pl.BlockSpec((in_dim, bm), tiled),
                 pl.BlockSpec((width, in_dim), full),
                 pl.BlockSpec((width, n_layers), full)]
                + [pl.BlockSpec((width, width), full) for _ in hidden_t]
                + [pl.BlockSpec((width, out_dim), full)])

    flops = 2 * b_pad * (in_dim * width
                         + (n_layers - 2) * width * width
                         + width * out_dim)
    bytes_accessed = (x_t.size * 4 + w0_t.size * 4 + b_packed.size * 4
                      + sum(w.size * w.dtype.itemsize for w in hidden_t)
                      + w_out.size * 4 + out_dim * b_pad * 4)

    compiler_kwargs = dict(dimension_semantics=("parallel",))
    if bm >= 1024:
        # Big tiles: (width, bm) f32 activations approach v5e's 16 MiB default
        # scoped-VMEM limit; 32 MiB is safe on v5e/v6e/v7x.
        compiler_kwargs["vmem_limit_bytes"] = 32 << 20

    out_t = pl.pallas_call(
        _mlp_kernel,
        out_shape=jax.ShapeDtypeStruct((out_dim, b_pad), jnp.float32),
        grid_spec=pltpu.PrefetchScalarGridSpec(
            num_scalar_prefetch=0,
            grid=(grid,),
            in_specs=in_specs,
            out_specs=pl.BlockSpec((out_dim, bm), tiled),
        ),
        compiler_params=pltpu.CompilerParams(**compiler_kwargs),
        cost_estimate=pl.CostEstimate(flops=flops, transcendentals=0,
                                      bytes_accessed=bytes_accessed),
    )(x_t, w0_t, b_packed, *hidden_t, w_out)

    # Matches nn.Module forward: output.view(-1) on the (B, out_dim) result.
    return out_t[:, :B].T.reshape(-1)


def init_params(key, input_dim=2, width=512, hidden_layers=2, output_dim=1):
    """Mimics PyTorch nn.Linear default init: U(-1/sqrt(fan_in), 1/sqrt(fan_in))."""
    dims = [input_dim] + [width] * (hidden_layers + 1) + [output_dim]
    keys = jax.random.split(key, len(dims) - 1)
    weights, biases = [], []
    for k, fan_in, fan_out in zip(keys, dims[:-1], dims[1:]):
        kw, kb = jax.random.split(k)
        bound = 1.0 / (fan_in ** 0.5)
        weights.append(jax.random.uniform(kw, (fan_in, fan_out), jnp.float32,
                                          -bound, bound))
        biases.append(jax.random.uniform(kb, (fan_out,), jnp.float32,
                                         -bound, bound))
    return {"weights": weights, "biases": biases}


def reference_forward(x, params, mxu_dtype=jnp.bfloat16):
    """Pure-JAX reference mirroring the kernel's dtype path:
    f32 first/last layers, bf16 MXU hidden layers with f32 accumulation."""
    ws, bs = params["weights"], params["biases"]
    hi = jax.lax.Precision.HIGHEST
    h = jnp.maximum(jnp.dot(x, ws[0], precision=hi) + bs[0][None, :], 0.0)
    for w, b in zip(ws[1:-1], bs[1:-1]):
        h = jnp.dot(h.astype(mxu_dtype), w.astype(mxu_dtype),
                    preferred_element_type=jnp.float32) + b[None, :]
        h = jnp.maximum(h, 0.0)
    out = jnp.dot(h, ws[-1], precision=hi) + bs[-1][None, :]
    return out.reshape(-1)


if __name__ == "__main__":
    # Module defaults: width=512, input_dim=2, hidden_layers=2, output_dim=1.
    key = jax.random.PRNGKey(0)
    k_x, k_p = jax.random.split(key)

    B, INPUT_DIM, WIDTH, HIDDEN, OUT_DIM = 512, 2, 512, 2, 1
    x = jax.random.normal(k_x, (B, INPUT_DIM), jnp.float32)
    params = init_params(k_p, input_dim=INPUT_DIM, width=WIDTH,
                         hidden_layers=HIDDEN, output_dim=OUT_DIM)

    # Default tiling -> grid=(1,) on v5e/v6e, grid=(2,) on v7x.
    out = basic_discriminator_forward(x, params)
    out = jax.block_until_ready(out)

    ref = reference_forward(x, params)
    assert out.shape == (B * OUT_DIM,), out.shape
    max_err = float(jnp.max(jnp.abs(out - ref)))
    assert jnp.allclose(out, ref, atol=2e-3, rtol=2e-3), max_err

    print("KERNEL_OK")
</pallas_src>

<mosaic_0001>
module attributes {stable_mosaic.version = 11 : i64} {
  func.func @_mlp_kernel(%arg0: i32, %arg1: memref<2x512xf32, #tpu.memory_space<vmem>>, %arg2: memref<512x2xf32, #tpu.memory_space<vmem>>, %arg3: memref<512x4xf32, #tpu.memory_space<vmem>>, %arg4: memref<512x512xbf16, #tpu.memory_space<vmem>>, %arg5: memref<512x512xbf16, #tpu.memory_space<vmem>>, %arg6: memref<512x1xf32, #tpu.memory_space<vmem>>, %arg7: memref<1x512xf32, #tpu.memory_space<vmem>>) attributes {dimension_semantics = [#tpu.dimension_semantics<parallel>], iteration_bounds = array<i64: 1>, scalar_prefetch = 0 : i64, scratch_operands = 0 : i64, tpu.core_type = #tpu.core_type<tc>, window_params = [{transform_indices = @transform_0, window_bounds = array<i64: 2, 512>}, {pipeline_mode = #tpu.pipeline_mode<synchronous>, transform_indices = @transform_1, window_bounds = array<i64: 512, 2>}, {pipeline_mode = #tpu.pipeline_mode<synchronous>, transform_indices = @transform_2, window_bounds = array<i64: 512, 4>}, {pipeline_mode = #tpu.pipeline_mode<synchronous>, transform_indices = @transform_3, window_bounds = array<i64: 512, 512>}, {pipeline_mode = #tpu.pipeline_mode<synchronous>, transform_indices = @transform_4, window_bounds = array<i64: 512, 512>}, {pipeline_mode = #tpu.pipeline_mode<synchronous>, transform_indices = @transform_5, window_bounds = array<i64: 512, 1>}, {transform_indices = @transform_6, window_bounds = array<i64: 1, 512>}]} {
    %c0 = arith.constant 0 : index
    %c0_0 = arith.constant 0 : index
    %0 = vector.load %arg1[%c0, %c0_0] : memref<2x512xf32, #tpu.memory_space<vmem>>, vector<2x512xf32>
    %c0_1 = arith.constant 0 : index
    %c0_2 = arith.constant 0 : index
    %1 = vector.load %arg2[%c0_1, %c0_2] : memref<512x2xf32, #tpu.memory_space<vmem>>, vector<512x2xf32>
    %c0_3 = arith.constant 0 : index
    %c0_4 = arith.constant 0 : index
    %2 = vector.load %arg3[%c0_3, %c0_4] : memref<512x4xf32, #tpu.memory_space<vmem>>, vector<512x1xf32>
    %3 = vector.extract_strided_slice %1 {offsets = [0, 0], sizes = [512, 1], strides = [1, 1]} : vector<512x2xf32> to vector<512x1xf32>
    %4 = vector.extract_strided_slice %0 {offsets = [0, 0], sizes = [1, 512], strides = [1, 1]} : vector<2x512xf32> to vector<1x512xf32>
    %5 = vector.broadcast %3 : vector<512x1xf32> to vector<512x512xf32>
    %6 = vector.broadcast %4 : vector<1x512xf32> to vector<512x512xf32>
    %7 = arith.mulf %5, %6 : vector<512x512xf32>
    %8 = vector.broadcast %2 : vector<512x1xf32> to vector<512x512xf32>
    %9 = arith.addf %8, %7 : vector<512x512xf32>
    %10 = vector.extract_strided_slice %1 {offsets = [0, 1], sizes = [512, 1], strides = [1, 1]} : vector<512x2xf32> to vector<512x1xf32>
    %11 = vector.extract_strided_slice %0 {offsets = [1, 0], sizes = [1, 512], strides = [1, 1]} : vector<2x512xf32> to vector<1x512xf32>
    %12 = vector.broadcast %10 : vector<512x1xf32> to vector<512x512xf32>
    %13 = vector.broadcast %11 : vector<1x512xf32> to vector<512x512xf32>
    %14 = arith.mulf %12, %13 : vector<512x512xf32>
    %15 = arith.addf %9, %14 : vector<512x512xf32>
    %cst = arith.constant 0.000000e+00 : f32
    %16 = vector.broadcast %cst : f32 to vector<512x512xf32>
    %17 = arith.maximumf %15, %16 : vector<512x512xf32>
    %c0_5 = arith.constant 0 : index
    %c0_6 = arith.constant 0 : index
    %18 = vector.load %arg4[%c0_5, %c0_6] : memref<512x512xbf16, #tpu.memory_space<vmem>>, vector<512x512xbf16>
    %19 = arith.truncf %17 : vector<512x512xf32> to vector<512x512xbf16>
    %cst_7 = arith.constant dense<0.000000e+00> : vector<512x512xf32>
    %20 = tpu.matmul %18, %19, %cst_7 {dimension_numbers = #tpu.dot_dimension_numbers<[1], [0], [0], [1], [0, 0, 1, 1], [], []>} : vector<512x512xbf16>, vector<512x512xbf16>, vector<512x512xf32> -> vector<512x512xf32>
    %c0_8 = arith.constant 0 : index
    %c1 = arith.constant 1 : index
    %21 = vector.load %arg3[%c0_8, %c1] : memref<512x4xf32, #tpu.memory_space<vmem>>, vector<512x1xf32>
    %22 = vector.broadcast %21 : vector<512x1xf32> to vector<512x512xf32>
    %23 = arith.addf %20, %22 : vector<512x512xf32>
    %cst_9 = arith.constant 0.000000e+00 : f32
    %24 = vector.broadcast %cst_9 : f32 to vector<512x512xf32>
    %25 = arith.maximumf %23, %24 : vector<512x512xf32>
    %c0_10 = arith.constant 0 : index
    %c0_11 = arith.constant 0 : index
    %26 = vector.load %arg5[%c0_10, %c0_11] : memref<512x512xbf16, #tpu.memory_space<vmem>>, vector<512x512xbf16>
    %27 = arith.truncf %25 : vector<512x512xf32> to vector<512x512xbf16>
    %cst_12 = arith.constant dense<0.000000e+00> : vector<512x512xf32>
    %28 = tpu.matmul %26, %27, %cst_12 {dimension_numbers = #tpu.dot_dimension_numbers<[1], [0], [0], [1], [0, 0, 1, 1], [], []>} : vector<512x512xbf16>, vector<512x512xbf16>, vector<512x512xf32> -> vector<512x512xf32>
    %c0_13 = arith.constant 0 : index
    %c2 = arith.constant 2 : index
    %29 = vector.load %arg3[%c0_13, %c2] : memref<512x4xf32, #tpu.memory_space<vmem>>, vector<512x1xf32>
    %30 = vector.broadcast %29 : vector<512x1xf32> to vector<512x512xf32>
    %31 = arith.addf %28, %30 : vector<512x512xf32>
    %cst_14 = arith.constant 0.000000e+00 : f32
    %32 = vector.broadcast %cst_14 : f32 to vector<512x512xf32>
    %33 = arith.maximumf %31, %32 : vector<512x512xf32>
    %c0_15 = arith.constant 0 : index
    %c0_16 = arith.constant 0 : index
    %34 = vector.load %arg6[%c0_15, %c0_16] : memref<512x1xf32, #tpu.memory_space<vmem>>, vector<512x1xf32>
    %35 = vector.broadcast %34 : vector<512x1xf32> to vector<512x512xf32>
    %36 = arith.mulf %33, %35 : vector<512x512xf32>
    %cst_17 = arith.constant dense<0.000000e+00> : vector<512xf32>
    %37 = vector.multi_reduction <add>, %36, %cst_17 [0] : vector<512x512xf32> to vector<512xf32>
    %38 = vector.shape_cast %37 : vector<512xf32> to vector<1x512xf32>
    %c0_18 = arith.constant 0 : index
    %c3 = arith.constant 3 : index
    %39 = vector.load %arg3[%c0_18, %c3] : memref<512x4xf32, #tpu.memory_space<vmem>>, vector<1x1xf32>
    %40 = vector.broadcast %39 : vector<1x1xf32> to vector<1x512xf32>
    %41 = arith.addf %38, %40 : vector<1x512xf32>
    %c0_19 = arith.constant 0 : index
    %c0_20 = arith.constant 0 : index
    %42 = vector.load %arg7[%c0_19, %c0_20] : memref<1x512xf32, #tpu.memory_space<vmem>>, vector<1x512xf32>
    tpu.vector_store %arg7[%c0_19, %c0_20], %41 {strides = array<i32>} : memref<1x512xf32, #tpu.memory_space<vmem>>, vector<1x512xf32>,
    return
  }
  func.func @transform_0(%arg0: i32) -> (i32, i32) {
    %c0_i32 = arith.constant 0 : i32
    %c0_i32_0 = arith.constant 0 : i32
    return %c0_i32, %arg0 : i32, i32
  }
  func.func @transform_1(%arg0: i32) -> (i32, i32) {
    %c0_i32 = arith.constant 0 : i32
    %c0_i32_0 = arith.constant 0 : i32
    %c0_i32_1 = arith.constant 0 : i32
    return %c0_i32, %c0_i32_0 : i32, i32
  }
  func.func @transform_2(%arg0: i32) -> (i32, i32) {
    %c0_i32 = arith.constant 0 : i32
    %c0_i32_0 = arith.constant 0 : i32
    %c0_i32_1 = arith.constant 0 : i32
    return %c0_i32, %c0_i32_0 : i32, i32
  }
  func.func @transform_3(%arg0: i32) -> (i32, i32) {
    %c0_i32 = arith.constant 0 : i32
    %c0_i32_0 = arith.constant 0 : i32
    %c0_i32_1 = arith.constant 0 : i32
    return %c0_i32, %c0_i32_0 : i32, i32
  }
  func.func @transform_4(%arg0: i32) -> (i32, i32) {
    %c0_i32 = arith.constant 0 : i32
    %c0_i32_0 = arith.constant 0 : i32
    %c0_i32_1 = arith.constant 0 : i32
    return %c0_i32, %c0_i32_0 : i32, i32
  }
  func.func @transform_5(%arg0: i32) -> (i32, i32) {
    %c0_i32 = arith.constant 0 : i32
    %c0_i32_0 = arith.constant 0 : i32
    %c0_i32_1 = arith.constant 0 : i32
    return %c0_i32, %c0_i32_0 : i32, i32
  }
  func.func @transform_6(%arg0: i32) -> (i32, i32) {
    %c0_i32 = arith.constant 0 : i32
    %c0_i32_0 = arith.constant 0 : i32
    return %c0_i32, %arg0 : i32, i32
  }
}

</mosaic_0001>

<llo_original>
// kernel: tpu_custom_call.1
$region0: #{tpu_custom_call.1}
  #allocation0 [shape = 'u32[]', space=smem, size = 0x4, offset = 0x4, fixed_abs, tag = 'smem constant byte address 0x4 - core index']
  #allocation1 [shape = 'u32[144,128]{1,0:T(1,128)}', space=vmem, size = 0x12000, scoped, tag = 'internal scratch']
  %s0 = inlined_call_operand.vmem [shape: f32[2,512], index: 0, kind: input, shape index: {}]
  %s1 = inlined_call_operand.vmem [shape: f32[512,2], index: 1, kind: input, shape index: {}]
  %s2 = inlined_call_operand.vmem [shape: f32[512,4], index: 2, kind: input, shape index: {}]
  %s3 = inlined_call_operand.vmem [shape: bf16[512,512], index: 3, kind: input, shape index: {}]
  %s4 = inlined_call_operand.hbm [shape: bf16[512,512], index: 4, kind: input, shape index: {}]
  %s5 = inlined_call_operand.vmem [shape: f32[512,1], index: 5, kind: input, shape index: {}]
  %s6 = inlined_call_operand.hbm [shape: f32[1,512], index: 6, kind: output, shape index: {}]
  %s7 = sld [smem:[#allocation0]]
  $region38: #{tpu_custom_call.1} parent=0
    _
  %s9 = ssub.s32 1, %s7
  %s10 = scalar_select 0, %s9, %s7
  $region1: #{tpu_custom_call.1} parent=0
    #allocation2 [shape = 'u8[524288]{0}', space=vmem, size = 0x80000, scoped, tag = 'input window, operand 4, single buffered']
    #allocation3 [shape = 's32[1]{0}', space=sflag, size = 0x4, scoped, tag = 'scoped memory for tpu_custom_call.1']
    #allocation4 [shape = 's32[1]{0}', space=sflag, size = 0x4, scoped, tag = 'scoped memory for tpu_custom_call.1']
    #allocation5 [shape = 'u8[2048]{0}', space=vmem, size = 0x800, scoped, tag = 'output window, operand 0, single buffered']
    %11 = vsyncpa [#allocation3], 0
    %12 = vsyncpa [#allocation4], 0
    // Predicated region
    $region2: #{tpu_custom_call.1} parent=1 // pred_check
      _
    $region3: #{tpu_custom_call.1} parent=1 // pred_check_branch
      %14 = sbr.rel (0) target = $region5
    $region4: #{tpu_custom_call.1} parent=1 // pred_region
      _
    $region5: #{tpu_custom_call.1} parent=1 // pred_fallthru
      _
    // Predicated region
    $region6: #{tpu_custom_call.1} parent=1 // pred_check
      _
    $region7: #{tpu_custom_call.1} parent=1 // pred_check_branch
      %16 = sbr.rel (0) target = $region9
    $region8: #{tpu_custom_call.1} parent=1 // pred_region
      _
    $region9: #{tpu_custom_call.1} parent=1 // pred_fallthru
      _
    // Predicated region
    $region10: #{tpu_custom_call.1} parent=1 // pred_check
      _
    $region11: #{tpu_custom_call.1} parent=1 // pred_check_branch
      %18 = sbr.rel (0) target = $region13
    $region12: #{tpu_custom_call.1} parent=1 // pred_region
      _
    $region13: #{tpu_custom_call.1} parent=1 // pred_fallthru
      _
    // Predicated region
    $region14: #{tpu_custom_call.1} parent=1 // pred_check
      _
    $region15: #{tpu_custom_call.1} parent=1 // pred_check_branch
      %20 = sbr.rel (0) target = $region17
    $region16: #{tpu_custom_call.1} parent=1 // pred_region
      _
    $region17: #{tpu_custom_call.1} parent=1 // pred_fallthru
      _
    // Predicated region
    $region18: #{tpu_custom_call.1} parent=1 // pred_check
      _
    $region19: #{tpu_custom_call.1} parent=1 // pred_check_branch
      %22 = sbr.rel (0) target = $region21
    $region20: #{tpu_custom_call.1} parent=1 // pred_region
      %s24 = ssub.s32 16384, 16384
      %25 = vsyncadd [#allocation3], %s24
      %s26 = sshll.u32 [#allocation2], 4
      %s27 = int_to_ptr.vmem [resolvable:$true] %s26
      %32 = dma.hbm_to_vmem [thread:$0]  %s4, 16384, %s27, [#allocation3], 256, 256, 16
    $region21: #{tpu_custom_call.1} parent=1 // pred_fallthru
      _
    // Predicated region
    $region22: #{tpu_custom_call.1} parent=1 // pred_check
      _
    $region23: #{tpu_custom_call.1} parent=1 // pred_check_branch
      %34 = sbr.rel (0) target = $region25
    $region24: #{tpu_custom_call.1} parent=1 // pred_region
      _
    $region25: #{tpu_custom_call.1} parent=1 // pred_fallthru
      _
    // Predicated region
    $region26: #{tpu_custom_call.1} parent=1 // pred_check
      _
    $region27: #{tpu_custom_call.1} parent=1 // pred_check_branch
      %36 = sbr.rel (0) target = $region29
    $region28: #{tpu_custom_call.1} parent=1 // pred_region
      %37 = dma.done [#allocation3], 16384
    $region29: #{tpu_custom_call.1} parent=1 // pred_fallthru
      _
    %v38 = vld [vmem:[%s0] sm:$0xff]
    %v39 = vld [vmem:[%s1] sm:$0xff]
    %v40 = vld [vmem:[%s1 + $0x8] sm:$0xff]
    %v41 = vld [vmem:[%s1 + $0x10] sm:$0xff]
    %v42 = vld [vmem:[%s1 + $0x18] sm:$0xff]
    %v43 = vld [vmem:[%s1 + $0x20] sm:$0xff]
    %v44 = vld [vmem:[%s1 + $0x28] sm:$0xff]
    %v45 = vld [vmem:[%s1 + $0x30] sm:$0xff]
    %v46 = vld [vmem:[%s1 + $0x38] sm:$0xff]
    %v47 = vld [vmem:[%s1 + $0x40] sm:$0xff]
    %v48 = vld [vmem:[%s1 + $0x48] sm:$0xff]
    %v49 = vld [vmem:[%s1 + $0x50] sm:$0xff]
    %v50 = vld [vmem:[%s1 + $0x58] sm:$0xff]
    %v51 = vld [vmem:[%s1 + $0x60] sm:$0xff]
    %v52 = vld [vmem:[%s1 + $0x68] sm:$0xff]
    %v53 = vld [vmem:[%s1 + $0x70] sm:$0xff]
    %v54 = vld [vmem:[%s1 + $0x78] sm:$0xff]
    %v55 = vld [vmem:[%s1 + $0x80] sm:$0xff]
    %v56 = vld [vmem:[%s1 + $0x88] sm:$0xff]
    %v57 = vld [vmem:[%s1 + $0x90] sm:$0xff]
    %v58 = vld [vmem:[%s1 + $0x98] sm:$0xff]
    %v59 = vld [vmem:[%s1 + $0xa0] sm:$0xff]
    %v60 = vld [vmem:[%s1 + $0xa8] sm:$0xff]
    %v61 = vld [vmem:[%s1 + $0xb0] sm:$0xff]
    %v62 = vld [vmem:[%s1 + $0xb8] sm:$0xff]
    %v63 = vld [vmem:[%s1 + $0xc0] sm:$0xff]
    %v64 = vld [vmem:[%s1 + $0xc8] sm:$0xff]
    %v65 = vld [vmem:[%s1 + $0xd0] sm:$0xff]
    %v66 = vld [vmem:[%s1 + $0xd8] sm:$0xff]
    %v67 = vld [vmem:[%s1 + $0xe0] sm:$0xff]
    %v68 = vld [vmem:[%s1 + $0xe8] sm:$0xff]
    %v69 = vld [vmem:[%s1 + $0xf0] sm:$0xff]
    %v70 = vld [vmem:[%s1 + $0xf8] sm:$0xff]
    %v71 = vld [vmem:[%s1 + $0x100] sm:$0xff]
    %v72 = vld [vmem:[%s1 + $0x108] sm:$0xff]
    %v73 = vld [vmem:[%s1 + $0x110] sm:$0xff]
    %v74 = vld [vmem:[%s1 + $0x118] sm:$0xff]
    %v75 = vld [vmem:[%s1 + $0x120] sm:$0xff]
    %v76 = vld [vmem:[%s1 + $0x128] sm:$0xff]
    %v77 = vld [vmem:[%s1 + $0x130] sm:$0xff]
    %v78 = vld [vmem:[%s1 + $0x138] sm:$0xff]
    %v79 = vld [vmem:[%s1 + $0x140] sm:$0xff]
    %v80 = vld [vmem:[%s1 + $0x148] sm:$0xff]
    %v81 = vld [vmem:[%s1 + $0x150] sm:$0xff]
    %v82 = vld [vmem:[%s1 + $0x158] sm:$0xff]
    %v83 = vld [vmem:[%s1 + $0x160] sm:$0xff]
    %v84 = vld [vmem:[%s1 + $0x168] sm:$0xff]
    %v85 = vld [vmem:[%s1 + $0x170] sm:$0xff]
    %v86 = vld [vmem:[%s1 + $0x178] sm:$0xff]
    %v87 = vld [vmem:[%s1 + $0x180] sm:$0xff]
    %v88 = vld [vmem:[%s1 + $0x188] sm:$0xff]
    %v89 = vld [vmem:[%s1 + $0x190] sm:$0xff]
    %v90 = vld [vmem:[%s1 + $0x198] sm:$0xff]
    %v91 = vld [vmem:[%s1 + $0x1a0] sm:$0xff]
    %v92 = vld [vmem:[%s1 + $0x1a8] sm:$0xff]
    %v93 = vld [vmem:[%s1 + $0x1b0] sm:$0xff]
    %v94 = vld [vmem:[%s1 + $0x1b8] sm:$0xff]
    %v95 = vld [vmem:[%s1 + $0x1c0] sm:$0xff]
    %v96 = vld [vmem:[%s1 + $0x1c8] sm:$0xff]
    %v97 = vld [vmem:[%s1 + $0x1d0] sm:$0xff]
    %v98 = vld [vmem:[%s1 + $0x1d8] sm:$0xff]
    %v99 = vld [vmem:[%s1 + $0x1e0] sm:$0xff]
    %v100 = vld [vmem:[%s1 + $0x1e8] sm:$0xff]
    %v101 = vld [vmem:[%s1 + $0x1f0] sm:$0xff]
    %v102 = vld [vmem:[%s1 + $0x1f8] sm:$0xff]
    %v103 = vld [vmem:[%s2] sm:$0xff]
    %v104 = vld [vmem:[%s2 + $0x8] sm:$0xff]
    %v105 = vld [vmem:[%s2 + $0x10] sm:$0xff]
    %v106 = vld [vmem:[%s2 + $0x18] sm:$0xff]
    %v107 = vld [vmem:[%s2 + $0x20] sm:$0xff]
    %v108 = vld [vmem:[%s2 + $0x28] sm:$0xff]
    %v109 = vld [vmem:[%s2 + $0x30] sm:$0xff]
    %v110 = vld [vmem:[%s2 + $0x38] sm:$0xff]
    %v111 = vld [vmem:[%s2 + $0x40] sm:$0xff]
    %v112 = vld [vmem:[%s2 + $0x48] sm:$0xff]
    %v113 = vld [vmem:[%s2 + $0x50] sm:$0xff]
    %v114 = vld [vmem:[%s2 + $0x58] sm:$0xff]
    %v115 = vld [vmem:[%s2 + $0x60] sm:$0xff]
    %v116 = vld [vmem:[%s2 + $0x68] sm:$0xff]
    %v117 = vld [vmem:[%s2 + $0x70] sm:$0xff]
    %v118 = vld [vmem:[%s2 + $0x78] sm:$0xff]
    %v119 = vld [vmem:[%s2 + $0x80] sm:$0xff]
    %v120 = vld [vmem:[%s2 + $0x88] sm:$0xff]
    %v121 = vld [vmem:[%s2 + $0x90] sm:$0xff]
    %v122 = vld [vmem:[%s2 + $0x98] sm:$0xff]
    %v123 = vld [vmem:[%s2 + $0xa0] sm:$0xff]
    %v124 = vld [vmem:[%s2 + $0xa8] sm:$0xff]
    %v125 = vld [vmem:[%s2 + $0xb0] sm:$0xff]
    %v126 = vld [vmem:[%s2 + $0xb8] sm:$0xff]
    %v127 = vld [vmem:[%s2 + $0xc0] sm:$0xff]
    %v128 = vld [vmem:[%s2 + $0xc8] sm:$0xff]
    %v129 = vld [vmem:[%s2 + $0xd0] sm:$0xff]
    %v130 = vld [vmem:[%s2 + $0xd8] sm:$0xff]
    %v131 = vld [vmem:[%s2 + $0xe0] sm:$0xff]
    %v132 = vld [vmem:[%s2 + $0xe8] sm:$0xff]
    %v133 = vld [vmem:[%s2 + $0xf0] sm:$0xff]
    %v134 = vld [vmem:[%s2 + $0xf8] sm:$0xff]
    %v135 = vld [vmem:[%s2 + $0x100] sm:$0xff]
    %v136 = vld [vmem:[%s2 + $0x108] sm:$0xff]
    %v137 = vld [vmem:[%s2 + $0x110] sm:$0xff]
    %v138 = vld [vmem:[%s2 + $0x118] sm:$0xff]
    %v139 = vld [vmem:[%s2 + $0x120] sm:$0xff]
    %v140 = vld [vmem:[%s2 + $0x128] sm:$0xff]
    %v141 = vld [vmem:[%s2 + $0x130] sm:$0xff]
    %v142 = vld [vmem:[%s2 + $0x138] sm:$0xff]
    %v143 = vld [vmem:[%s2 + $0x140] sm:$0xff]
    %v144 = vld [vmem:[%s2 + $0x148] sm:$0xff]
    %v145 = vld [vmem:[%s2 + $0x150] sm:$0xff]
    %v146 = vld [vmem:[%s2 + $0x158] sm:$0xff]
    %v147 = vld [vmem:[%s2 + $0x160] sm:$0xff]
    %v148 = vld [vmem:[%s2 + $0x168] sm:$0xff]
    %v149 = vld [vmem:[%s2 + $0x170] sm:$0xff]
    %v150 = vld [vmem:[%s2 + $0x178] sm:$0xff]
    %v151 = vld [vmem:[%s2 + $0x180] sm:$0xff]
    %v152 = vld [vmem:[%s2 + $0x188] sm:$0xff]
    %v153 = vld [vmem:[%s2 + $0x190] sm:$0xff]
    %v154 = vld [vmem:[%s2 + $0x198] sm:$0xff]
    %v155 = vld [vmem:[%s2 + $0x1a0] sm:$0xff]
    %v156 = vld [vmem:[%s2 + $0x1a8] sm:$0xff]
    %v157 = vld [vmem:[%s2 + $0x1b0] sm:$0xff]
    %v158 = vld [vmem:[%s2 + $0x1b8] sm:$0xff]
    %v159 = vld [vmem:[%s2 + $0x1c0] sm:$0xff]
    %v160 = vld [vmem:[%s2 + $0x1c8] sm:$0xff]
    %v161 = vld [vmem:[%s2 + $0x1d0] sm:$0xff]
    %v162 = vld [vmem:[%s2 + $0x1d8] sm:$0xff]
    %v163 = vld [vmem:[%s2 + $0x1e0] sm:$0xff]
    %v164 = vld [vmem:[%s2 + $0x1e8] sm:$0xff]
    %v165 = vld [vmem:[%s2 + $0x1f0] sm:$0xff]
    %v166 = vld [vmem:[%s2 + $0x1f8] sm:$0xff]
    %168 = vset.pattern.permute.xlu0 0
    %169 = vperm.xlu0 %168, %v39
    %v170 = vpop.permute.xlu0 %169
    %173 = vset.pattern.permute.xlu0 0
    %174 = vperm.xlu0 %173, %v40
    %v175 = vpop.permute.xlu0 %174
    %178 = vset.pattern.permute.xlu0 0
    %179 = vperm.xlu0 %178, %v41
    %v180 = vpop.permute.xlu0 %179
    %183 = vset.pattern.permute.xlu0 0
    %184 = vperm.xlu0 %183, %v42
    %v185 = vpop.permute.xlu0 %184
    %188 = vset.pattern.permute.xlu0 0
    %189 = vperm.xlu0 %188, %v43
    %v190 = vpop.permute.xlu0 %189
    %193 = vset.pattern.permute.xlu0 0
    %194 = vperm.xlu0 %193, %v44
    %v195 = vpop.permute.xlu0 %194
    %198 = vset.pattern.permute.xlu0 0
    %199 = vperm.xlu0 %198, %v45
    %v200 = vpop.permute.xlu0 %199
    %203 = vset.pattern.permute.xlu0 0
    %204 = vperm.xlu0 %203, %v46
    %v205 = vpop.permute.xlu0 %204
    %208 = vset.pattern.permute.xlu0 0
    %209 = vperm.xlu0 %208, %v47
    %v210 = vpop.permute.xlu0 %209
    %213 = vset.pattern.permute.xlu0 0
    %214 = vperm.xlu0 %213, %v48
    %v215 = vpop.permute.xlu0 %214
    %218 = vset.pattern.permute.xlu0 0
    %219 = vperm.xlu0 %218, %v49
    %v220 = vpop.permute.xlu0 %219
    %223 = vset.pattern.permute.xlu0 0
    %224 = vperm.xlu0 %223, %v50
    %v225 = vpop.permute.xlu0 %224
    %228 = vset.pattern.permute.xlu0 0
    %229 = vperm.xlu0 %228, %v51
    %v230 = vpop.permute.xlu0 %229
    %233 = vset.pattern.permute.xlu0 0
    %234 = vperm.xlu0 %233, %v52
    %v235 = vpop.permute.xlu0 %234
    %238 = vset.pattern.permute.xlu0 0
    %239 = vperm.xlu0 %238, %v53
    %v240 = vpop.permute.xlu0 %239
    %243 = vset.pattern.permute.xlu0 0
    %244 = vperm.xlu0 %243, %v54
    %v245 = vpop.permute.xlu0 %244
    %248 = vset.pattern.permute.xlu0 0
    %249 = vperm.xlu0 %248, %v55
    %v250 = vpop.permute.xlu0 %249
    %253 = vset.pattern.permute.xlu0 0
    %254 = vperm.xlu0 %253, %v56
    %v255 = vpop.permute.xlu0 %254
    %258 = vset.pattern.permute.xlu0 0
    %259 = vperm.xlu0 %258, %v57
    %v260 = vpop.permute.xlu0 %259
    %263 = vset.pattern.permute.xlu0 0
    %264 = vperm.xlu0 %263, %v58
    %v265 = vpop.permute.xlu0 %264
    %268 = vset.pattern.permute.xlu0 0
    %269 = vperm.xlu0 %268, %v59
    %v270 = vpop.permute.xlu0 %269
    %273 = vset.pattern.permute.xlu0 0
    %274 = vperm.xlu0 %273, %v60
    %v275 = vpop.permute.xlu0 %274
    %278 = vset.pattern.permute.xlu0 0
    %279 = vperm.xlu0 %278, %v61
    %v280 = vpop.permute.xlu0 %279
    %283 = vset.pattern.permute.xlu0 0
    %284 = vperm.xlu0 %283, %v62
    %v285 = vpop.permute.xlu0 %284
    %288 = vset.pattern.permute.xlu0 0
    %289 = vperm.xlu0 %288, %v63
    %v290 = vpop.permute.xlu0 %289
    %293 = vset.pattern.permute.xlu0 0
    %294 = vperm.xlu0 %293, %v64
    %v295 = vpop.permute.xlu0 %294
    %298 = vset.pattern.permute.xlu0 0
    %299 = vperm.xlu0 %298, %v65
    %v300 = vpop.permute.xlu0 %299
    %303 = vset.pattern.permute.xlu0 0
    %304 = vperm.xlu0 %303, %v66
    %v305 = vpop.permute.xlu0 %304
    %308 = vset.pattern.permute.xlu0 0
    %309 = vperm.xlu0 %308, %v67
    %v310 = vpop.permute.xlu0 %309
    %313 = vset.pattern.permute.xlu0 0
    %314 = vperm.xlu0 %313, %v68
    %v315 = vpop.permute.xlu0 %314
    %318 = vset.pattern.permute.xlu0 0
    %319 = vperm.xlu0 %318, %v69
    %v320 = vpop.permute.xlu0 %319
    %323 = vset.pattern.permute.xlu0 0
    %324 = vperm.xlu0 %323, %v70
    %v325 = vpop.permute.xlu0 %324
    %328 = vset.pattern.permute.xlu0 0
    %329 = vperm.xlu0 %328, %v71
    %v330 = vpop.permute.xlu0 %329
    %333 = vset.pattern.permute.xlu0 0
    %334 = vperm.xlu0 %333, %v72
    %v335 = vpop.permute.xlu0 %334
    %338 = vset.pattern.permute.xlu0 0
    %339 = vperm.xlu0 %338, %v73
    %v340 = vpop.permute.xlu0 %339
    %343 = vset.pattern.permute.xlu0 0
    %344 = vperm.xlu0 %343, %v74
    %v345 = vpop.permute.xlu0 %344
    %348 = vset.pattern.permute.xlu0 0
    %349 = vperm.xlu0 %348, %v75
    %v350 = vpop.permute.xlu0 %349
    %353 = vset.pattern.permute.xlu0 0
    %354 = vperm.xlu0 %353, %v76
    %v355 = vpop.permute.xlu0 %354
    %358 = vset.pattern.permute.xlu0 0
    %359 = vperm.xlu0 %358, %v77
    %v360 = vpop.permute.xlu0 %359
    %363 = vset.pattern.permute.xlu0 0
    %364 = vperm.xlu0 %363, %v78
    %v365 = vpop.permute.xlu0 %364
    %368 = vset.pattern.permute.xlu0 0
    %369 = vperm.xlu0 %368, %v79
    %v370 = vpop.permute.xlu0 %369
    %373 = vset.pattern.permute.xlu0 0
    %374 = vperm.xlu0 %373, %v80
    %v375 = vpop.permute.xlu0 %374
    %378 = vset.pattern.permute.xlu0 0
    %379 = vperm.xlu0 %378, %v81
    %v380 = vpop.permute.xlu0 %379
    %383 = vset.pattern.permute.xlu0 0
    %384 = vperm.xlu0 %383, %v82
    %v385 = vpop.permute.xlu0 %384
    %388 = vset.pattern.permute.xlu0 0
    %389 = vperm.xlu0 %388, %v83
    %v390 = vpop.permute.xlu0 %389
    %393 = vset.pattern.permute.xlu0 0
    %394 = vperm.xlu0 %393, %v84
    %v395 = vpop.permute.xlu0 %394
    %398 = vset.pattern.permute.xlu0 0
    %399 = vperm.xlu0 %398, %v85
    %v400 = vpop.permute.xlu0 %399
    %403 = vset.pattern.permute.xlu0 0
    %404 = vperm.xlu0 %403, %v86
    %v405 = vpop.permute.xlu0 %404
    %408 = vset.pattern.permute.xlu0 0
    %409 = vperm.xlu0 %408, %v87
    %v410 = vpop.permute.xlu0 %409
    %413 = vset.pattern.permute.xlu0 0
    %414 = vperm.xlu0 %413, %v88
    %v415 = vpop.permute.xlu0 %414
    %418 = vset.pattern.permute.xlu0 0
    %419 = vperm.xlu0 %418, %v89
    %v420 = vpop.permute.xlu0 %419
    %423 = vset.pattern.permute.xlu0 0
    %424 = vperm.xlu0 %423, %v90
    %v425 = vpop.permute.xlu0 %424
    %428 = vset.pattern.permute.xlu0 0
    %429 = vperm.xlu0 %428, %v91
    %v430 = vpop.permute.xlu0 %429
    %433 = vset.pattern.permute.xlu0 0
    %434 = vperm.xlu0 %433, %v92
    %v435 = vpop.permute.xlu0 %434
    %438 = vset.pattern.permute.xlu0 0
    %439 = vperm.xlu0 %438, %v93
    %v440 = vpop.permute.xlu0 %439
    %443 = vset.pattern.permute.xlu0 0
    %444 = vperm.xlu0 %443, %v94
    %v445 = vpop.permute.xlu0 %444
    %448 = vset.pattern.permute.xlu0 0
    %449 = vperm.xlu0 %448, %v95
    %v450 = vpop.permute.xlu0 %449
    %453 = vset.pattern.permute.xlu0 0
    %454 = vperm.xlu0 %453, %v96
    %v455 = vpop.permute.xlu0 %454
    %458 = vset.pattern.permute.xlu0 0
    %459 = vperm.xlu0 %458, %v97
    %v460 = vpop.permute.xlu0 %459
    %463 = vset.pattern.permute.xlu0 0
    %464 = vperm.xlu0 %463, %v98
    %v465 = vpop.permute.xlu0 %464
    %468 = vset.pattern.permute.xlu0 0
    %469 = vperm.xlu0 %468, %v99
    %v470 = vpop.permute.xlu0 %469
    %473 = vset.pattern.permute.xlu0 0
    %474 = vperm.xlu0 %473, %v100
    %v475 = vpop.permute.xlu0 %474
    %478 = vset.pattern.permute.xlu0 0
    %479 = vperm.xlu0 %478, %v101
    %v480 = vpop.permute.xlu0 %479
    %483 = vset.pattern.permute.xlu0 0
    %484 = vperm.xlu0 %483, %v102
    %v485 = vpop.permute.xlu0 %484
    %v488 = vlaneseq
    %v489 = vshrl.u32 %v488, 7
    %v490 = vsub.s32 0, %v489
    %v491 = vrot.slane %v38, %v490
    %v492 = vlaneseq
    %v493 = vshrl.u32 %v492, 7
    %v494 = vsub.s32 2, %v493
    %v495 = vrot.slane %v38, %v494
    %v496 = vlaneseq
    %v497 = vshrl.u32 %v496, 7
    %v498 = vsub.s32 4, %v497
    %v499 = vrot.slane %v38, %v498
    %v500 = vlaneseq
    %v501 = vshrl.u32 %v500, 7
    %v502 = vsub.s32 6, %v501
    %v503 = vrot.slane %v38, %v502
    %v508 = vlaneseq
    %v509 = vshrl.u32 %v508, 7
    %v510 = vsub.s32 0, %v509
    %v511 = vrot.slane %v491, %v510
    %v512 = vlaneseq
    %v513 = vshrl.u32 %v512, 7
    %v514 = vsub.s32 0, %v513
    %v515 = vrot.slane %v495, %v514
    %v516 = vlaneseq
    %v517 = vshrl.u32 %v516, 7
    %v518 = vsub.s32 0, %v517
    %v519 = vrot.slane %v499, %v518
    %v520 = vlaneseq
    %v521 = vshrl.u32 %v520, 7
    %v522 = vsub.s32 0, %v521
    %v523 = vrot.slane %v503, %v522
    %v524 = vmul.f32 %v170, %v511
    %v525 = vmul.f32 %v170, %v515
    %v526 = vmul.f32 %v170, %v519
    %v527 = vmul.f32 %v170, %v523
    %v528 = vmul.f32 %v175, %v511
    %v529 = vmul.f32 %v175, %v515
    %v530 = vmul.f32 %v175, %v519
    %v531 = vmul.f32 %v175, %v523
    %v532 = vmul.f32 %v180, %v511
    %v533 = vmul.f32 %v180, %v515
    %v534 = vmul.f32 %v180, %v519
    %v535 = vmul.f32 %v180, %v523
    %v536 = vmul.f32 %v185, %v511
    %v537 = vmul.f32 %v185, %v515
    %v538 = vmul.f32 %v185, %v519
    %v539 = vmul.f32 %v185, %v523
    %v540 = vmul.f32 %v190, %v511
    %v541 = vmul.f32 %v190, %v515
    %v542 = vmul.f32 %v190, %v519
    %v543 = vmul.f32 %v190, %v523
    %v544 = vmul.f32 %v195, %v511
    %v545 = vmul.f32 %v195, %v515
    %v546 = vmul.f32 %v195, %v519
    %v547 = vmul.f32 %v195, %v523
    %v548 = vmul.f32 %v200, %v511
    %v549 = vmul.f32 %v200, %v515
    %v550 = vmul.f32 %v200, %v519
    %v551 = vmul.f32 %v200, %v523
    %v552 = vmul.f32 %v205, %v511
    %v553 = vmul.f32 %v205, %v515
    %v554 = vmul.f32 %v205, %v519
    %v555 = vmul.f32 %v205, %v523
    %v556 = vmul.f32 %v210, %v511
    %v557 = vmul.f32 %v210, %v515
    %v558 = vmul.f32 %v210, %v519
    %v559 = vmul.f32 %v210, %v523
    %v560 = vmul.f32 %v215, %v511
    %v561 = vmul.f32 %v215, %v515
    %v562 = vmul.f32 %v215, %v519
    %v563 = vmul.f32 %v215, %v523
    %v564 = vmul.f32 %v220, %v511
    %v565 = vmul.f32 %v220, %v515
    %v566 = vmul.f32 %v220, %v519
    %v567 = vmul.f32 %v220, %v523
    %v568 = vmul.f32 %v225, %v511
    %v569 = vmul.f32 %v225, %v515
    %v570 = vmul.f32 %v225, %v519
    %v571 = vmul.f32 %v225, %v523
    %v572 = vmul.f32 %v230, %v511
    %v573 = vmul.f32 %v230, %v515
    %v574 = vmul.f32 %v230, %v519
    %v575 = vmul.f32 %v230, %v523
    %v576 = vmul.f32 %v235, %v511
    %v577 = vmul.f32 %v235, %v515
    %v578 = vmul.f32 %v235, %v519
    %v579 = vmul.f32 %v235, %v523
    %v580 = vmul.f32 %v240, %v511
    %v581 = vmul.f32 %v240, %v515
    %v582 = vmul.f32 %v240, %v519
    %v583 = vmul.f32 %v240, %v523
    %v584 = vmul.f32 %v245, %v511
    %v585 = vmul.f32 %v245, %v515
    %v586 = vmul.f32 %v245, %v519
    %v587 = vmul.f32 %v245, %v523
    %v588 = vmul.f32 %v250, %v511
    %v589 = vmul.f32 %v250, %v515
    %v590 = vmul.f32 %v250, %v519
    %v591 = vmul.f32 %v250, %v523
    %v592 = vmul.f32 %v255, %v511
    %v593 = vmul.f32 %v255, %v515
    %v594 = vmul.f32 %v255, %v519
    %v595 = vmul.f32 %v255, %v523
    %v596 = vmul.f32 %v260, %v511
    %v597 = vmul.f32 %v260, %v515
    %v598 = vmul.f32 %v260, %v519
    %v599 = vmul.f32 %v260, %v523
    %v600 = vmul.f32 %v265, %v511
    %v601 = vmul.f32 %v265, %v515
    %v602 = vmul.f32 %v265, %v519
    %v603 = vmul.f32 %v265, %v523
    %v604 = vmul.f32 %v270, %v511
    %v605 = vmul.f32 %v270, %v515
    %v606 = vmul.f32 %v270, %v519
    %v607 = vmul.f32 %v270, %v523
    %v608 = vmul.f32 %v275, %v511
    %v609 = vmul.f32 %v275, %v515
    %v610 = vmul.f32 %v275, %v519
    %v611 = vmul.f32 %v275, %v523
    %v612 = vmul.f32 %v280, %v511
    %v613 = vmul.f32 %v280, %v515
    %v614 = vmul.f32 %v280, %v519
    %v615 = vmul.f32 %v280, %v523
    %v616 = vmul.f32 %v285, %v511
    %v617 = vmul.f32 %v285, %v515
    %v618 = vmul.f32 %v285, %v519
    %v619 = vmul.f32 %v285, %v523
    %v620 = vmul.f32 %v290, %v511
    %v621 = vmul.f32 %v290, %v515
    %v622 = vmul.f32 %v290, %v519
    %v623 = vmul.f32 %v290, %v523
    %v624 = vmul.f32 %v295, %v511
    %v625 = vmul.f32 %v295, %v515
    %v626 = vmul.f32 %v295, %v519
    %v627 = vmul.f32 %v295, %v523
    %v628 = vmul.f32 %v300, %v511
    %v629 = vmul.f32 %v300, %v515
    %v630 = vmul.f32 %v300, %v519
    %v631 = vmul.f32 %v300, %v523
    %v632 = vmul.f32 %v305, %v511
    %v633 = vmul.f32 %v305, %v515
    %v634 = vmul.f32 %v305, %v519
    %v635 = vmul.f32 %v305, %v523
    %v636 = vmul.f32 %v310, %v511
    %v637 = vmul.f32 %v310, %v515
    %v638 = vmul.f32 %v310, %v519
    %v639 = vmul.f32 %v310, %v523
    %v640 = vmul.f32 %v315, %v511
    %v641 = vmul.f32 %v315, %v515
    %v642 = vmul.f32 %v315, %v519
    %v643 = vmul.f32 %v315, %v523
    %v644 = vmul.f32 %v320, %v511
    %v645 = vmul.f32 %v320, %v515
    %v646 = vmul.f32 %v320, %v519
    %v647 = vmul.f32 %v320, %v523
    %v648 = vmul.f32 %v325, %v511
    %v649 = vmul.f32 %v325, %v515
    %v650 = vmul.f32 %v325, %v519
    %v651 = vmul.f32 %v325, %v523
    %v652 = vmul.f32 %v330, %v511
    %v653 = vmul.f32 %v330, %v515
    %v654 = vmul.f32 %v330, %v519
    %v655 = vmul.f32 %v330, %v523
    %v656 = vmul.f32 %v335, %v511
    %v657 = vmul.f32 %v335, %v515
    %v658 = vmul.f32 %v335, %v519
    %v659 = vmul.f32 %v335, %v523
    %v660 = vmul.f32 %v340, %v511
    %v661 = vmul.f32 %v340, %v515
    %v662 = vmul.f32 %v340, %v519
    %v663 = vmul.f32 %v340, %v523
    %v664 = vmul.f32 %v345, %v511
    %v665 = vmul.f32 %v345, %v515
    %v666 = vmul.f32 %v345, %v519
    %v667 = vmul.f32 %v345, %v523
    %v668 = vmul.f32 %v350, %v511
    %v669 = vmul.f32 %v350, %v515
    %v670 = vmul.f32 %v350, %v519
    %v671 = vmul.f32 %v350, %v523
    %v672 = vmul.f32 %v355, %v511
    %v673 = vmul.f32 %v355, %v515
    %v674 = vmul.f32 %v355, %v519
    %v675 = vmul.f32 %v355, %v523
    %v676 = vmul.f32 %v360, %v511
    %v677 = vmul.f32 %v360, %v515
    %v678 = vmul.f32 %v360, %v519
    %v679 = vmul.f32 %v360, %v523
    %v680 = vmul.f32 %v365, %v511
    %v681 = vmul.f32 %v365, %v515
    %v682 = vmul.f32 %v365, %v519
    %v683 = vmul.f32 %v365, %v523
    %v684 = vmul.f32 %v370, %v511
    %v685 = vmul.f32 %v370, %v515
    %v686 = vmul.f32 %v370, %v519
    %v687 = vmul.f32 %v370, %v523
    %v688 = vmul.f32 %v375, %v511
    %v689 = vmul.f32 %v375, %v515
    %v690 = vmul.f32 %v375, %v519
    %v691 = vmul.f32 %v375, %v523
    %v692 = vmul.f32 %v380, %v511
    %v693 = vmul.f32 %v380, %v515
    %v694 = vmul.f32 %v380, %v519
    %v695 = vmul.f32 %v380, %v523
    %v696 = vmul.f32 %v385, %v511
    %v697 = vmul.f32 %v385, %v515
    %v698 = vmul.f32 %v385, %v519
    %v699 = vmul.f32 %v385, %v523
    %v700 = vmul.f32 %v390, %v511
    %v701 = vmul.f32 %v390, %v515
    %v702 = vmul.f32 %v390, %v519
    %v703 = vmul.f32 %v390, %v523
    %v704 = vmul.f32 %v395, %v511
    %v705 = vmul.f32 %v395, %v515
    %v706 = vmul.f32 %v395, %v519
    %v707 = vmul.f32 %v395, %v523
    %v708 = vmul.f32 %v400, %v511
    %v709 = vmul.f32 %v400, %v515
    %v710 = vmul.f32 %v400, %v519
    %v711 = vmul.f32 %v400, %v523
    %v712 = vmul.f32 %v405, %v511
    %v713 = vmul.f32 %v405, %v515
    %v714 = vmul.f32 %v405, %v519
    %v715 = vmul.f32 %v405, %v523
    %v716 = vmul.f32 %v410, %v511
    %v717 = vmul.f32 %v410, %v515
    %v718 = vmul.f32 %v410, %v519
    %v719 = vmul.f32 %v410, %v523
    %v720 = vmul.f32 %v415, %v511
    %v721 = vmul.f32 %v415, %v515
    %v722 = vmul.f32 %v415, %v519
    %v723 = vmul.f32 %v415, %v523
    %v724 = vmul.f32 %v420, %v511
    %v725 = vmul.f32 %v420, %v515
    %v726 = vmul.f32 %v420, %v519
    %v727 = vmul.f32 %v420, %v523
    %v728 = vmul.f32 %v425, %v511
    %v729 = vmul.f32 %v425, %v515
    %v730 = vmul.f32 %v425, %v519
    %v731 = vmul.f32 %v425, %v523
    %v732 = vmul.f32 %v430, %v511
    %v733 = vmul.f32 %v430, %v515
    %v734 = vmul.f32 %v430, %v519
    %v735 = vmul.f32 %v430, %v523
    %v736 = vmul.f32 %v435, %v511
    %v737 = vmul.f32 %v435, %v515
    %v738 = vmul.f32 %v435, %v519
    %v739 = vmul.f32 %v435, %v523
    %v740 = vmul.f32 %v440, %v511
    %v741 = vmul.f32 %v440, %v515
    %v742 = vmul.f32 %v440, %v519
    %v743 = vmul.f32 %v440, %v523
    %v744 = vmul.f32 %v445, %v511
    %v745 = vmul.f32 %v445, %v515
    %v746 = vmul.f32 %v445, %v519
    %v747 = vmul.f32 %v445, %v523
    %v748 = vmul.f32 %v450, %v511
    %v749 = vmul.f32 %v450, %v515
    %v750 = vmul.f32 %v450, %v519
    %v751 = vmul.f32 %v450, %v523
    %v752 = vmul.f32 %v455, %v511
    %v753 = vmul.f32 %v455, %v515
    %v754 = vmul.f32 %v455, %v519
    %v755 = vmul.f32 %v455, %v523
    %v756 = vmul.f32 %v460, %v511
    %v757 = vmul.f32 %v460, %v515
    %v758 = vmul.f32 %v460, %v519
    %v759 = vmul.f32 %v460, %v523
    %v760 = vmul.f32 %v465, %v511
    %v761 = vmul.f32 %v465, %v515
    %v762 = vmul.f32 %v465, %v519
    %v763 = vmul.f32 %v465, %v523
    %v764 = vmul.f32 %v470, %v511
    %v765 = vmul.f32 %v470, %v515
    %v766 = vmul.f32 %v470, %v519
    %v767 = vmul.f32 %v470, %v523
    %v768 = vmul.f32 %v475, %v511
    %v769 = vmul.f32 %v475, %v515
    %v770 = vmul.f32 %v475, %v519
    %v771 = vmul.f32 %v475, %v523
    %v772 = vmul.f32 %v480, %v511
    %v773 = vmul.f32 %v480, %v515
    %v774 = vmul.f32 %v480, %v519
    %v775 = vmul.f32 %v480, %v523
    %v776 = vmul.f32 %v485, %v511
    %v777 = vmul.f32 %v485, %v515
    %v778 = vmul.f32 %v485, %v519
    %v779 = vmul.f32 %v485, %v523
    %781 = vset.pattern.permute.xlu0 0
    %782 = vperm.xlu0 %781, %v103
    %v783 = vpop.permute.xlu0 %782
    %786 = vset.pattern.permute.xlu0 0
    %787 = vperm.xlu0 %786, %v104
    %v788 = vpop.permute.xlu0 %787
    %791 = vset.pattern.permute.xlu0 0
    %792 = vperm.xlu0 %791, %v105
    %v793 = vpop.permute.xlu0 %792
    %796 = vset.pattern.permute.xlu0 0
    %797 = vperm.xlu0 %796, %v106
    %v798 = vpop.permute.xlu0 %797
    %801 = vset.pattern.permute.xlu0 0
    %802 = vperm.xlu0 %801, %v107
    %v803 = vpop.permute.xlu0 %802
    %806 = vset.pattern.permute.xlu0 0
    %807 = vperm.xlu0 %806, %v108
    %v808 = vpop.permute.xlu0 %807
    %811 = vset.pattern.permute.xlu0 0
    %812 = vperm.xlu0 %811, %v109
    %v813 = vpop.permute.xlu0 %812
    %816 = vset.pattern.permute.xlu0 0
    %817 = vperm.xlu0 %816, %v110
    %v818 = vpop.permute.xlu0 %817
    %821 = vset.pattern.permute.xlu0 0
    %822 = vperm.xlu0 %821, %v111
    %v823 = vpop.permute.xlu0 %822
    %826 = vset.pattern.permute.xlu0 0
    %827 = vperm.xlu0 %826, %v112
    %v828 = vpop.permute.xlu0 %827
    %831 = vset.pattern.permute.xlu0 0
    %832 = vperm.xlu0 %831, %v113
    %v833 = vpop.permute.xlu0 %832
    %836 = vset.pattern.permute.xlu0 0
    %837 = vperm.xlu0 %836, %v114
    %v838 = vpop.permute.xlu0 %837
    %841 = vset.pattern.permute.xlu0 0
    %842 = vperm.xlu0 %841, %v115
    %v843 = vpop.permute.xlu0 %842
    %846 = vset.pattern.permute.xlu0 0
    %847 = vperm.xlu0 %846, %v116
    %v848 = vpop.permute.xlu0 %847
    %851 = vset.pattern.permute.xlu0 0
    %852 = vperm.xlu0 %851, %v117
    %v853 = vpop.permute.xlu0 %852
    %856 = vset.pattern.permute.xlu0 0
    %857 = vperm.xlu0 %856, %v118
    %v858 = vpop.permute.xlu0 %857
    %861 = vset.pattern.permute.xlu0 0
    %862 = vperm.xlu0 %861, %v119
    %v863 = vpop.permute.xlu0 %862
    %866 = vset.pattern.permute.xlu0 0
    %867 = vperm.xlu0 %866, %v120
    %v868 = vpop.permute.xlu0 %867
    %871 = vset.pattern.permute.xlu0 0
    %872 = vperm.xlu0 %871, %v121
    %v873 = vpop.permute.xlu0 %872
    %876 = vset.pattern.permute.xlu0 0
    %877 = vperm.xlu0 %876, %v122
    %v878 = vpop.permute.xlu0 %877
    %881 = vset.pattern.permute.xlu0 0
    %882 = vperm.xlu0 %881, %v123
    %v883 = vpop.permute.xlu0 %882
    %886 = vset.pattern.permute.xlu0 0
    %887 = vperm.xlu0 %886, %v124
    %v888 = vpop.permute.xlu0 %887
    %891 = vset.pattern.permute.xlu0 0
    %892 = vperm.xlu0 %891, %v125
    %v893 = vpop.permute.xlu0 %892
    %896 = vset.pattern.permute.xlu0 0
    %897 = vperm.xlu0 %896, %v126
    %v898 = vpop.permute.xlu0 %897
    %901 = vset.pattern.permute.xlu0 0
    %902 = vperm.xlu0 %901, %v127
    %v903 = vpop.permute.xlu0 %902
    %906 = vset.pattern.permute.xlu0 0
    %907 = vperm.xlu0 %906, %v128
    %v908 = vpop.permute.xlu0 %907
    %911 = vset.pattern.permute.xlu0 0
    %912 = vperm.xlu0 %911, %v129
    %v913 = vpop.permute.xlu0 %912
    %916 = vset.pattern.permute.xlu0 0
    %917 = vperm.xlu0 %916, %v130
    %v918 = vpop.permute.xlu0 %917
    %921 = vset.pattern.permute.xlu0 0
    %922 = vperm.xlu0 %921, %v131
    %v923 = vpop.permute.xlu0 %922
    %926 = vset.pattern.permute.xlu0 0
    %927 = vperm.xlu0 %926, %v132
    %v928 = vpop.permute.xlu0 %927
    %931 = vset.pattern.permute.xlu0 0
    %932 = vperm.xlu0 %931, %v133
    %v933 = vpop.permute.xlu0 %932
    %936 = vset.pattern.permute.xlu0 0
    %937 = vperm.xlu0 %936, %v134
    %v938 = vpop.permute.xlu0 %937
    %941 = vset.pattern.permute.xlu0 0
    %942 = vperm.xlu0 %941, %v135
    %v943 = vpop.permute.xlu0 %942
    %946 = vset.pattern.permute.xlu0 0
    %947 = vperm.xlu0 %946, %v136
    %v948 = vpop.permute.xlu0 %947
    %951 = vset.pattern.permute.xlu0 0
    %952 = vperm.xlu0 %951, %v137
    %v953 = vpop.permute.xlu0 %952
    %956 = vset.pattern.permute.xlu0 0
    %957 = vperm.xlu0 %956, %v138
    %v958 = vpop.permute.xlu0 %957
    %961 = vset.pattern.permute.xlu0 0
    %962 = vperm.xlu0 %961, %v139
    %v963 = vpop.permute.xlu0 %962
    %966 = vset.pattern.permute.xlu0 0
    %967 = vperm.xlu0 %966, %v140
    %v968 = vpop.permute.xlu0 %967
    %971 = vset.pattern.permute.xlu0 0
    %972 = vperm.xlu0 %971, %v141
    %v973 = vpop.permute.xlu0 %972
    %976 = vset.pattern.permute.xlu0 0
    %977 = vperm.xlu0 %976, %v142
    %v978 = vpop.permute.xlu0 %977
    %981 = vset.pattern.permute.xlu0 0
    %982 = vperm.xlu0 %981, %v143
    %v983 = vpop.permute.xlu0 %982
    %986 = vset.pattern.permute.xlu0 0
    %987 = vperm.xlu0 %986, %v144
    %v988 = vpop.permute.xlu0 %987
    %991 = vset.pattern.permute.xlu0 0
    %992 = vperm.xlu0 %991, %v145
    %v993 = vpop.permute.xlu0 %992
    %996 = vset.pattern.permute.xlu0 0
    %997 = vperm.xlu0 %996, %v146
    %v998 = vpop.permute.xlu0 %997
    %1001 = vset.pattern.permute.xlu0 0
    %1002 = vperm.xlu0 %1001, %v147
    %v1003 = vpop.permute.xlu0 %1002
    %1006 = vset.pattern.permute.xlu0 0
    %1007 = vperm.xlu0 %1006, %v148
    %v1008 = vpop.permute.xlu0 %1007
    %1011 = vset.pattern.permute.xlu0 0
    %1012 = vperm.xlu0 %1011, %v149
    %v1013 = vpop.permute.xlu0 %1012
    %1016 = vset.pattern.permute.xlu0 0
    %1017 = vperm.xlu0 %1016, %v150
    %v1018 = vpop.permute.xlu0 %1017
    %1021 = vset.pattern.permute.xlu0 0
    %1022 = vperm.xlu0 %1021, %v151
    %v1023 = vpop.permute.xlu0 %1022
    %1026 = vset.pattern.permute.xlu0 0
    %1027 = vperm.xlu0 %1026, %v152
    %v1028 = vpop.permute.xlu0 %1027
    %1031 = vset.pattern.permute.xlu0 0
    %1032 = vperm.xlu0 %1031, %v153
    %v1033 = vpop.permute.xlu0 %1032
    %1036 = vset.pattern.permute.xlu0 0
    %1037 = vperm.xlu0 %1036, %v154
    %v1038 = vpop.permute.xlu0 %1037
    %1041 = vset.pattern.permute.xlu0 0
    %1042 = vperm.xlu0 %1041, %v155
    %v1043 = vpop.permute.xlu0 %1042
    %1046 = vset.pattern.permute.xlu0 0
    %1047 = vperm.xlu0 %1046, %v156
    %v1048 = vpop.permute.xlu0 %1047
    %1051 = vset.pattern.permute.xlu0 0
    %1052 = vperm.xlu0 %1051, %v157
    %v1053 = vpop.permute.xlu0 %1052
    %1056 = vset.pattern.permute.xlu0 0
    %1057 = vperm.xlu0 %1056, %v158
    %v1058 = vpop.permute.xlu0 %1057
    %1061 = vset.pattern.permute.xlu0 0
    %1062 = vperm.xlu0 %1061, %v159
    %v1063 = vpop.permute.xlu0 %1062
    %1066 = vset.pattern.permute.xlu0 0
    %1067 = vperm.xlu0 %1066, %v160
    %v1068 = vpop.permute.xlu0 %1067
    %1071 = vset.pattern.permute.xlu0 0
    %1072 = vperm.xlu0 %1071, %v161
    %v1073 = vpop.permute.xlu0 %1072
    %1076 = vset.pattern.permute.xlu0 0
    %1077 = vperm.xlu0 %1076, %v162
    %v1078 = vpop.permute.xlu0 %1077
    %1081 = vset.pattern.permute.xlu0 0
    %1082 = vperm.xlu0 %1081, %v163
    %v1083 = vpop.permute.xlu0 %1082
    %1086 = vset.pattern.permute.xlu0 0
    %1087 = vperm.xlu0 %1086, %v164
    %v1088 = vpop.permute.xlu0 %1087
    %1091 = vset.pattern.permute.xlu0 0
    %1092 = vperm.xlu0 %1091, %v165
    %v1093 = vpop.permute.xlu0 %1092
    %1096 = vset.pattern.permute.xlu0 0
    %1097 = vperm.xlu0 %1096, %v166
    %v1098 = vpop.permute.xlu0 %1097
    %v1100 = vadd.f32 %v783, %v524
    %v1101 = vadd.f32 %v783, %v525
    %v1102 = vadd.f32 %v783, %v526
    %v1103 = vadd.f32 %v783, %v527
    %v1104 = vadd.f32 %v788, %v528
    %v1105 = vadd.f32 %v788, %v529
    %v1106 = vadd.f32 %v788, %v530
    %v1107 = vadd.f32 %v788, %v531
    %v1108 = vadd.f32 %v793, %v532
    %v1109 = vadd.f32 %v793, %v533
    %v1110 = vadd.f32 %v793, %v534
    %v1111 = vadd.f32 %v793, %v535
    %v1112 = vadd.f32 %v798, %v536
    %v1113 = vadd.f32 %v798, %v537
    %v1114 = vadd.f32 %v798, %v538
    %v1115 = vadd.f32 %v798, %v539
    %v1116 = vadd.f32 %v803, %v540
    %v1117 = vadd.f32 %v803, %v541
    %v1118 = vadd.f32 %v803, %v542
    %v1119 = vadd.f32 %v803, %v543
    %v1120 = vadd.f32 %v808, %v544
    %v1121 = vadd.f32 %v808, %v545
    %v1122 = vadd.f32 %v808, %v546
    %v1123 = vadd.f32 %v808, %v547
    %v1124 = vadd.f32 %v813, %v548
    %v1125 = vadd.f32 %v813, %v549
    %v1126 = vadd.f32 %v813, %v550
    %v1127 = vadd.f32 %v813, %v551
    %v1128 = vadd.f32 %v818, %v552
    %v1129 = vadd.f32 %v818, %v553
    %v1130 = vadd.f32 %v818, %v554
    %v1131 = vadd.f32 %v818, %v555
    %v1132 = vadd.f32 %v823, %v556
    %v1133 = vadd.f32 %v823, %v557
    %v1134 = vadd.f32 %v823, %v558
    %v1135 = vadd.f32 %v823, %v559
    %v1136 = vadd.f32 %v828, %v560
    %v1137 = vadd.f32 %v828, %v561
    %v1138 = vadd.f32 %v828, %v562
    %v1139 = vadd.f32 %v828, %v563
    %v1140 = vadd.f32 %v833, %v564
    %v1141 = vadd.f32 %v833, %v565
    %v1142 = vadd.f32 %v833, %v566
    %v1143 = vadd.f32 %v833, %v567
    %v1144 = vadd.f32 %v838, %v568
    %v1145 = vadd.f32 %v838, %v569
    %v1146 = vadd.f32 %v838, %v570
    %v1147 = vadd.f32 %v838, %v571
    %v1148 = vadd.f32 %v843, %v572
    %v1149 = vadd.f32 %v843, %v573
    %v1150 = vadd.f32 %v843, %v574
    %v1151 = vadd.f32 %v843, %v575
    %v1152 = vadd.f32 %v848, %v576
    %v1153 = vadd.f32 %v848, %v577
    %v1154 = vadd.f32 %v848, %v578
    %v1155 = vadd.f32 %v848, %v579
    %v1156 = vadd.f32 %v853, %v580
    %v1157 = vadd.f32 %v853, %v581
    %v1158 = vadd.f32 %v853, %v582
    %v1159 = vadd.f32 %v853, %v583
    %v1160 = vadd.f32 %v858, %v584
    %v1161 = vadd.f32 %v858, %v585
    %v1162 = vadd.f32 %v858, %v586
    %v1163 = vadd.f32 %v858, %v587
    %v1164 = vadd.f32 %v863, %v588
    %v1165 = vadd.f32 %v863, %v589
    %v1166 = vadd.f32 %v863, %v590
    %v1167 = vadd.f32 %v863, %v591
    %v1168 = vadd.f32 %v868, %v592
    %v1169 = vadd.f32 %v868, %v593
    %v1170 = vadd.f32 %v868, %v594
    %v1171 = vadd.f32 %v868, %v595
    %v1172 = vadd.f32 %v873, %v596
    %v1173 = vadd.f32 %v873, %v597
    %v1174 = vadd.f32 %v873, %v598
    %v1175 = vadd.f32 %v873, %v599
    %v1176 = vadd.f32 %v878, %v600
    %v1177 = vadd.f32 %v878, %v601
    %v1178 = vadd.f32 %v878, %v602
    %v1179 = vadd.f32 %v878, %v603
    %v1180 = vadd.f32 %v883, %v604
    %v1181 = vadd.f32 %v883, %v605
    %v1182 = vadd.f32 %v883, %v606
    %v1183 = vadd.f32 %v883, %v607
    %v1184 = vadd.f32 %v888, %v608
    %v1185 = vadd.f32 %v888, %v609
    %v1186 = vadd.f32 %v888, %v610
    %v1187 = vadd.f32 %v888, %v611
    %v1188 = vadd.f32 %v893, %v612
    %v1189 = vadd.f32 %v893, %v613
    %v1190 = vadd.f32 %v893, %v614
    %v1191 = vadd.f32 %v893, %v615
    %v1192 = vadd.f32 %v898, %v616
    %v1193 = vadd.f32 %v898, %v617
    %v1194 = vadd.f32 %v898, %v618
    %v1195 = vadd.f32 %v898, %v619
    %v1196 = vadd.f32 %v903, %v620
    %v1197 = vadd.f32 %v903, %v621
    %v1198 = vadd.f32 %v903, %v622
    %v1199 = vadd.f32 %v903, %v623
    %v1200 = vadd.f32 %v908, %v624
    %v1201 = vadd.f32 %v908, %v625
    %v1202 = vadd.f32 %v908, %v626
    %v1203 = vadd.f32 %v908, %v627
    %v1204 = vadd.f32 %v913, %v628
    %v1205 = vadd.f32 %v913, %v629
    %v1206 = vadd.f32 %v913, %v630
    %v1207 = vadd.f32 %v913, %v631
    %v1208 = vadd.f32 %v918, %v632
    %v1209 = vadd.f32 %v918, %v633
    %v1210 = vadd.f32 %v918, %v634
    %v1211 = vadd.f32 %v918, %v635
    %v1212 = vadd.f32 %v923, %v636
    %v1213 = vadd.f32 %v923, %v637
    %v1214 = vadd.f32 %v923, %v638
    %v1215 = vadd.f32 %v923, %v639
    %v1216 = vadd.f32 %v928, %v640
    %v1217 = vadd.f32 %v928, %v641
    %v1218 = vadd.f32 %v928, %v642
    %v1219 = vadd.f32 %v928, %v643
    %v1220 = vadd.f32 %v933, %v644
    %v1221 = vadd.f32 %v933, %v645
    %v1222 = vadd.f32 %v933, %v646
    %v1223 = vadd.f32 %v933, %v647
    %v1224 = vadd.f32 %v938, %v648
    %v1225 = vadd.f32 %v938, %v649
    %v1226 = vadd.f32 %v938, %v650
    %v1227 = vadd.f32 %v938, %v651
    %v1228 = vadd.f32 %v943, %v652
    %v1229 = vadd.f32 %v943, %v653
    %v1230 = vadd.f32 %v943, %v654
    %v1231 = vadd.f32 %v943, %v655
    %v1232 = vadd.f32 %v948, %v656
    %v1233 = vadd.f32 %v948, %v657
    %v1234 = vadd.f32 %v948, %v658
    %v1235 = vadd.f32 %v948, %v659
    %v1236 = vadd.f32 %v953, %v660
    %v1237 = vadd.f32 %v953, %v661
    %v1238 = vadd.f32 %v953, %v662
    %v1239 = vadd.f32 %v953, %v663
    %v1240 = vadd.f32 %v958, %v664
    %v1241 = vadd.f32 %v958, %v665
    %v1242 = vadd.f32 %v958, %v666
    %v1243 = vadd.f32 %v958, %v667
    %v1244 = vadd.f32 %v963, %v668
    %v1245 = vadd.f32 %v963, %v669
    %v1246 = vadd.f32 %v963, %v670
    %v1247 = vadd.f32 %v963, %v671
    %v1248 = vadd.f32 %v968, %v672
    %v1249 = vadd.f32 %v968, %v673
    %v1250 = vadd.f32 %v968, %v674
    %v1251 = vadd.f32 %v968, %v675
    %v1252 = vadd.f32 %v973, %v676
    %v1253 = vadd.f32 %v973, %v677
    %v1254 = vadd.f32 %v973, %v678
    %v1255 = vadd.f32 %v973, %v679
    %v1256 = vadd.f32 %v978, %v680
    %v1257 = vadd.f32 %v978, %v681
    %v1258 = vadd.f32 %v978, %v682
    %v1259 = vadd.f32 %v978, %v683
    %v1260 = vadd.f32 %v983, %v684
    %v1261 = vadd.f32 %v983, %v685
    %v1262 = vadd.f32 %v983, %v686
    %v1263 = vadd.f32 %v983, %v687
    %v1264 = vadd.f32 %v988, %v688
    %v1265 = vadd.f32 %v988, %v689
    %v1266 = vadd.f32 %v988, %v690
    %v1267 = vadd.f32 %v988, %v691
    %v1268 = vadd.f32 %v993, %v692
    %v1269 = vadd.f32 %v993, %v693
    %v1270 = vadd.f32 %v993, %v694
    %v1271 = vadd.f32 %v993, %v695
    %v1272 = vadd.f32 %v998, %v696
    %v1273 = vadd.f32 %v998, %v697
    %v1274 = vadd.f32 %v998, %v698
    %v1275 = vadd.f32 %v998, %v699
    %v1276 = vadd.f32 %v1003, %v700
    %v1277 = vadd.f32 %v1003, %v701
    %v1278 = vadd.f32 %v1003, %v702
    %v1279 = vadd.f32 %v1003, %v703
    %v1280 = vadd.f32 %v1008, %v704
    %v1281 = vadd.f32 %v1008, %v705
    %v1282 = vadd.f32 %v1008, %v706
    %v1283 = vadd.f32 %v1008, %v707
    %v1284 = vadd.f32 %v1013, %v708
    %v1285 = vadd.f32 %v1013, %v709
    %v1286 = vadd.f32 %v1013, %v710
    %v1287 = vadd.f32 %v1013, %v711
    %v1288 = vadd.f32 %v1018, %v712
    %v1289 = vadd.f32 %v1018, %v713
    %v1290 = vadd.f32 %v1018, %v714
    %v1291 = vadd.f32 %v1018, %v715
    %v1292 = vadd.f32 %v1023, %v716
    %v1293 = vadd.f32 %v1023, %v717
    %v1294 = vadd.f32 %v1023, %v718
    %v1295 = vadd.f32 %v1023, %v719
    %v1296 = vadd.f32 %v1028, %v720
    %v1297 = vadd.f32 %v1028, %v721
    %v1298 = vadd.f32 %v1028, %v722
    %v1299 = vadd.f32 %v1028, %v723
    %v1300 = vadd.f32 %v1033, %v724
    %v1301 = vadd.f32 %v1033, %v725
    %v1302 = vadd.f32 %v1033, %v726
    %v1303 = vadd.f32 %v1033, %v727
    %v1304 = vadd.f32 %v1038, %v728
    %v1305 = vadd.f32 %v1038, %v729
    %v1306 = vadd.f32 %v1038, %v730
    %v1307 = vadd.f32 %v1038, %v731
    %v1308 = vadd.f32 %v1043, %v732
    %v1309 = vadd.f32 %v1043, %v733
    %v1310 = vadd.f32 %v1043, %v734
    %v1311 = vadd.f32 %v1043, %v735
    %v1312 = vadd.f32 %v1048, %v736
    %v1313 = vadd.f32 %v1048, %v737
    %v1314 = vadd.f32 %v1048, %v738
    %v1315 = vadd.f32 %v1048, %v739
    %v1316 = vadd.f32 %v1053, %v740
    %v1317 = vadd.f32 %v1053, %v741
    %v1318 = vadd.f32 %v1053, %v742
    %v1319 = vadd.f32 %v1053, %v743
    %v1320 = vadd.f32 %v1058, %v744
    %v1321 = vadd.f32 %v1058, %v745
    %v1322 = vadd.f32 %v1058, %v746
    %v1323 = vadd.f32 %v1058, %v747
    %v1324 = vadd.f32 %v1063, %v748
    %v1325 = vadd.f32 %v1063, %v749
    %v1326 = vadd.f32 %v1063, %v750
    %v1327 = vadd.f32 %v1063, %v751
    %v1328 = vadd.f32 %v1068, %v752
    %v1329 = vadd.f32 %v1068, %v753
    %v1330 = vadd.f32 %v1068, %v754
    %v1331 = vadd.f32 %v1068, %v755
    %v1332 = vadd.f32 %v1073, %v756
    %v1333 = vadd.f32 %v1073, %v757
    %v1334 = vadd.f32 %v1073, %v758
    %v1335 = vadd.f32 %v1073, %v759
    %v1336 = vadd.f32 %v1078, %v760
    %v1337 = vadd.f32 %v1078, %v761
    %v1338 = vadd.f32 %v1078, %v762
    %v1339 = vadd.f32 %v1078, %v763
    %v1340 = vadd.f32 %v1083, %v764
    %v1341 = vadd.f32 %v1083, %v765
    %v1342 = vadd.f32 %v1083, %v766
    %v1343 = vadd.f32 %v1083, %v767
    %v1344 = vadd.f32 %v1088, %v768
    %v1345 = vadd.f32 %v1088, %v769
    %v1346 = vadd.f32 %v1088, %v770
    %v1347 = vadd.f32 %v1088, %v771
    %v1348 = vadd.f32 %v1093, %v772
    %v1349 = vadd.f32 %v1093, %v773
    %v1350 = vadd.f32 %v1093, %v774
    %v1351 = vadd.f32 %v1093, %v775
    %v1352 = vadd.f32 %v1098, %v776
    %v1353 = vadd.f32 %v1098, %v777
    %v1354 = vadd.f32 %v1098, %v778
    %v1355 = vadd.f32 %v1098, %v779
    %1356 = vset.pattern.permute.xlu0 1
    %1357 = vperm.xlu0 %1356, %v39
    %v1358 = vpop.permute.xlu0 %1357
    %1360 = vset.pattern.permute.xlu0 1
    %1361 = vperm.xlu0 %1360, %v40
    %v1362 = vpop.permute.xlu0 %1361
    %1364 = vset.pattern.permute.xlu0 1
    %1365 = vperm.xlu0 %1364, %v41
    %v1366 = vpop.permute.xlu0 %1365
    %1368 = vset.pattern.permute.xlu0 1
    %1369 = vperm.xlu0 %1368, %v42
    %v1370 = vpop.permute.xlu0 %1369
    %1372 = vset.pattern.permute.xlu0 1
    %1373 = vperm.xlu0 %1372, %v43
    %v1374 = vpop.permute.xlu0 %1373
    %1376 = vset.pattern.permute.xlu0 1
    %1377 = vperm.xlu0 %1376, %v44
    %v1378 = vpop.permute.xlu0 %1377
    %1380 = vset.pattern.permute.xlu0 1
    %1381 = vperm.xlu0 %1380, %v45
    %v1382 = vpop.permute.xlu0 %1381
    %1384 = vset.pattern.permute.xlu0 1
    %1385 = vperm.xlu0 %1384, %v46
    %v1386 = vpop.permute.xlu0 %1385
    %1388 = vset.pattern.permute.xlu0 1
    %1389 = vperm.xlu0 %1388, %v47
    %v1390 = vpop.permute.xlu0 %1389
    %1392 = vset.pattern.permute.xlu0 1
    %1393 = vperm.xlu0 %1392, %v48
    %v1394 = vpop.permute.xlu0 %1393
    %1396 = vset.pattern.permute.xlu0 1
    %1397 = vperm.xlu0 %1396, %v49
    %v1398 = vpop.permute.xlu0 %1397
    %1400 = vset.pattern.permute.xlu0 1
    %1401 = vperm.xlu0 %1400, %v50
    %v1402 = vpop.permute.xlu0 %1401
    %1404 = vset.pattern.permute.xlu0 1
    %1405 = vperm.xlu0 %1404, %v51
    %v1406 = vpop.permute.xlu0 %1405
    %1408 = vset.pattern.permute.xlu0 1
    %1409 = vperm.xlu0 %1408, %v52
    %v1410 = vpop.permute.xlu0 %1409
    %1412 = vset.pattern.permute.xlu0 1
    %1413 = vperm.xlu0 %1412, %v53
    %v1414 = vpop.permute.xlu0 %1413
    %1416 = vset.pattern.permute.xlu0 1
    %1417 = vperm.xlu0 %1416, %v54
    %v1418 = vpop.permute.xlu0 %1417
    %1420 = vset.pattern.permute.xlu0 1
    %1421 = vperm.xlu0 %1420, %v55
    %v1422 = vpop.permute.xlu0 %1421
    %1424 = vset.pattern.permute.xlu0 1
    %1425 = vperm.xlu0 %1424, %v56
    %v1426 = vpop.permute.xlu0 %1425
    %1428 = vset.pattern.permute.xlu0 1
    %1429 = vperm.xlu0 %1428, %v57
    %v1430 = vpop.permute.xlu0 %1429
    %1432 = vset.pattern.permute.xlu0 1
    %1433 = vperm.xlu0 %1432, %v58
    %v1434 = vpop.permute.xlu0 %1433
    %1436 = vset.pattern.permute.xlu0 1
    %1437 = vperm.xlu0 %1436, %v59
    %v1438 = vpop.permute.xlu0 %1437
    %1440 = vset.pattern.permute.xlu0 1
    %1441 = vperm.xlu0 %1440, %v60
    %v1442 = vpop.permute.xlu0 %1441
    %1444 = vset.pattern.permute.xlu0 1
    %1445 = vperm.xlu0 %1444, %v61
    %v1446 = vpop.permute.xlu0 %1445
    %1448 = vset.pattern.permute.xlu0 1
    %1449 = vperm.xlu0 %1448, %v62
    %v1450 = vpop.permute.xlu0 %1449
    %1452 = vset.pattern.permute.xlu0 1
    %1453 = vperm.xlu0 %1452, %v63
    %v1454 = vpop.permute.xlu0 %1453
    %1456 = vset.pattern.permute.xlu0 1
    %1457 = vperm.xlu0 %1456, %v64
    %v1458 = vpop.permute.xlu0 %1457
    %1460 = vset.pattern.permute.xlu0 1
    %1461 = vperm.xlu0 %1460, %v65
    %v1462 = vpop.permute.xlu0 %1461
    %1464 = vset.pattern.permute.xlu0 1
    %1465 = vperm.xlu0 %1464, %v66
    %v1466 = vpop.permute.xlu0 %1465
    %1468 = vset.pattern.permute.xlu0 1
    %1469 = vperm.xlu0 %1468, %v67
    %v1470 = vpop.permute.xlu0 %1469
    %1472 = vset.pattern.permute.xlu0 1
    %1473 = vperm.xlu0 %1472, %v68
    %v1474 = vpop.permute.xlu0 %1473
    %1476 = vset.pattern.permute.xlu0 1
    %1477 = vperm.xlu0 %1476, %v69
    %v1478 = vpop.permute.xlu0 %1477
    %1480 = vset.pattern.permute.xlu0 1
    %1481 = vperm.xlu0 %1480, %v70
    %v1482 = vpop.permute.xlu0 %1481
    %1484 = vset.pattern.permute.xlu0 1
    %1485 = vperm.xlu0 %1484, %v71
    %v1486 = vpop.permute.xlu0 %1485
    %1488 = vset.pattern.permute.xlu0 1
    %1489 = vperm.xlu0 %1488, %v72
    %v1490 = vpop.permute.xlu0 %1489
    %1492 = vset.pattern.permute.xlu0 1
    %1493 = vperm.xlu0 %1492, %v73
    %v1494 = vpop.permute.xlu0 %1493
    %1496 = vset.pattern.permute.xlu0 1
    %1497 = vperm.xlu0 %1496, %v74
    %v1498 = vpop.permute.xlu0 %1497
    %1500 = vset.pattern.permute.xlu0 1
    %1501 = vperm.xlu0 %1500, %v75
    %v1502 = vpop.permute.xlu0 %1501
    %1504 = vset.pattern.permute.xlu0 1
    %1505 = vperm.xlu0 %1504, %v76
    %v1506 = vpop.permute.xlu0 %1505
    %1508 = vset.pattern.permute.xlu0 1
    %1509 = vperm.xlu0 %1508, %v77
    %v1510 = vpop.permute.xlu0 %1509
    %1512 = vset.pattern.permute.xlu0 1
    %1513 = vperm.xlu0 %1512, %v78
    %v1514 = vpop.permute.xlu0 %1513
    %1516 = vset.pattern.permute.xlu0 1
    %1517 = vperm.xlu0 %1516, %v79
    %v1518 = vpop.permute.xlu0 %1517
    %1520 = vset.pattern.permute.xlu0 1
    %1521 = vperm.xlu0 %1520, %v80
    %v1522 = vpop.permute.xlu0 %1521
    %1524 = vset.pattern.permute.xlu0 1
    %1525 = vperm.xlu0 %1524, %v81
    %v1526 = vpop.permute.xlu0 %1525
    %1528 = vset.pattern.permute.xlu0 1
    %1529 = vperm.xlu0 %1528, %v82
    %v1530 = vpop.permute.xlu0 %1529
    %1532 = vset.pattern.permute.xlu0 1
    %1533 = vperm.xlu0 %1532, %v83
    %v1534 = vpop.permute.xlu0 %1533
    %1536 = vset.pattern.permute.xlu0 1
    %1537 = vperm.xlu0 %1536, %v84
    %v1538 = vpop.permute.xlu0 %1537
    %1540 = vset.pattern.permute.xlu0 1
    %1541 = vperm.xlu0 %1540, %v85
    %v1542 = vpop.permute.xlu0 %1541
    %1544 = vset.pattern.permute.xlu0 1
    %1545 = vperm.xlu0 %1544, %v86
    %v1546 = vpop.permute.xlu0 %1545
    %1548 = vset.pattern.permute.xlu0 1
    %1549 = vperm.xlu0 %1548, %v87
    %v1550 = vpop.permute.xlu0 %1549
    %1552 = vset.pattern.permute.xlu0 1
    %1553 = vperm.xlu0 %1552, %v88
    %v1554 = vpop.permute.xlu0 %1553
    %1556 = vset.pattern.permute.xlu0 1
    %1557 = vperm.xlu0 %1556, %v89
    %v1558 = vpop.permute.xlu0 %1557
    %1560 = vset.pattern.permute.xlu0 1
    %1561 = vperm.xlu0 %1560, %v90
    %v1562 = vpop.permute.xlu0 %1561
    %1564 = vset.pattern.permute.xlu0 1
    %1565 = vperm.xlu0 %1564, %v91
    %v1566 = vpop.permute.xlu0 %1565
    %1568 = vset.pattern.permute.xlu0 1
    %1569 = vperm.xlu0 %1568, %v92
    %v1570 = vpop.permute.xlu0 %1569
    %1572 = vset.pattern.permute.xlu0 1
    %1573 = vperm.xlu0 %1572, %v93
    %v1574 = vpop.permute.xlu0 %1573
    %1576 = vset.pattern.permute.xlu0 1
    %1577 = vperm.xlu0 %1576, %v94
    %v1578 = vpop.permute.xlu0 %1577
    %1580 = vset.pattern.permute.xlu0 1
    %1581 = vperm.xlu0 %1580, %v95
    %v1582 = vpop.permute.xlu0 %1581
    %1584 = vset.pattern.permute.xlu0 1
    %1585 = vperm.xlu0 %1584, %v96
    %v1586 = vpop.permute.xlu0 %1585
    %1588 = vset.pattern.permute.xlu0 1
    %1589 = vperm.xlu0 %1588, %v97
    %v1590 = vpop.permute.xlu0 %1589
    %1592 = vset.pattern.permute.xlu0 1
    %1593 = vperm.xlu0 %1592, %v98
    %v1594 = vpop.permute.xlu0 %1593
    %1596 = vset.pattern.permute.xlu0 1
    %1597 = vperm.xlu0 %1596, %v99
    %v1598 = vpop.permute.xlu0 %1597
    %1600 = vset.pattern.permute.xlu0 1
    %1601 = vperm.xlu0 %1600, %v100
    %v1602 = vpop.permute.xlu0 %1601
    %1604 = vset.pattern.permute.xlu0 1
    %1605 = vperm.xlu0 %1604, %v101
    %v1606 = vpop.permute.xlu0 %1605
    %1608 = vset.pattern.permute.xlu0 1
    %1609 = vperm.xlu0 %1608, %v102
    %v1610 = vpop.permute.xlu0 %1609
    %v1612 = vlaneseq
    %v1613 = vshrl.u32 %v1612, 7
    %v1614 = vsub.s32 1, %v1613
    %v1615 = vrot.slane %v38, %v1614
    %v1616 = vlaneseq
    %v1617 = vshrl.u32 %v1616, 7
    %v1618 = vsub.s32 3, %v1617
    %v1619 = vrot.slane %v38, %v1618
    %v1620 = vlaneseq
    %v1621 = vshrl.u32 %v1620, 7
    %v1622 = vsub.s32 5, %v1621
    %v1623 = vrot.slane %v38, %v1622
    %v1624 = vlaneseq
    %v1625 = vshrl.u32 %v1624, 7
    %v1626 = vsub.s32 7, %v1625
    %v1627 = vrot.slane %v38, %v1626
    %v1632 = vlaneseq
    %v1633 = vshrl.u32 %v1632, 7
    %v1634 = vsub.s32 1, %v1633
    %v1635 = vrot.slane %v1615, %v1634
    %v1636 = vlaneseq
    %v1637 = vshrl.u32 %v1636, 7
    %v1638 = vsub.s32 1, %v1637
    %v1639 = vrot.slane %v1619, %v1638
    %v1640 = vlaneseq
    %v1641 = vshrl.u32 %v1640, 7
    %v1642 = vsub.s32 1, %v1641
    %v1643 = vrot.slane %v1623, %v1642
    %v1644 = vlaneseq
    %v1645 = vshrl.u32 %v1644, 7
    %v1646 = vsub.s32 1, %v1645
    %v1647 = vrot.slane %v1627, %v1646
    %v1648 = vmul.f32 %v1358, %v1635
    %v1649 = vmul.f32 %v1358, %v1639
    %v1650 = vmul.f32 %v1358, %v1643
    %v1651 = vmul.f32 %v1358, %v1647
    %v1652 = vmul.f32 %v1362, %v1635
    %v1653 = vmul.f32 %v1362, %v1639
    %v1654 = vmul.f32 %v1362, %v1643
    %v1655 = vmul.f32 %v1362, %v1647
    %v1656 = vmul.f32 %v1366, %v1635
    %v1657 = vmul.f32 %v1366, %v1639
    %v1658 = vmul.f32 %v1366, %v1643
    %v1659 = vmul.f32 %v1366, %v1647
    %v1660 = vmul.f32 %v1370, %v1635
    %v1661 = vmul.f32 %v1370, %v1639
    %v1662 = vmul.f32 %v1370, %v1643
    %v1663 = vmul.f32 %v1370, %v1647
    %v1664 = vmul.f32 %v1374, %v1635
    %v1665 = vmul.f32 %v1374, %v1639
    %v1666 = vmul.f32 %v1374, %v1643
    %v1667 = vmul.f32 %v1374, %v1647
    %v1668 = vmul.f32 %v1378, %v1635
    %v1669 = vmul.f32 %v1378, %v1639
    %v1670 = vmul.f32 %v1378, %v1643
    %v1671 = vmul.f32 %v1378, %v1647
    %v1672 = vmul.f32 %v1382, %v1635
    %v1673 = vmul.f32 %v1382, %v1639
    %v1674 = vmul.f32 %v1382, %v1643
    %v1675 = vmul.f32 %v1382, %v1647
    %v1676 = vmul.f32 %v1386, %v1635
    %v1677 = vmul.f32 %v1386, %v1639
    %v1678 = vmul.f32 %v1386, %v1643
    %v1679 = vmul.f32 %v1386, %v1647
    %v1680 = vmul.f32 %v1390, %v1635
    %v1681 = vmul.f32 %v1390, %v1639
    %v1682 = vmul.f32 %v1390, %v1643
    %v1683 = vmul.f32 %v1390, %v1647
    %v1684 = vmul.f32 %v1394, %v1635
    %v1685 = vmul.f32 %v1394, %v1639
    %v1686 = vmul.f32 %v1394, %v1643
    %v1687 = vmul.f32 %v1394, %v1647
    %v1688 = vmul.f32 %v1398, %v1635
    %v1689 = vmul.f32 %v1398, %v1639
    %v1690 = vmul.f32 %v1398, %v1643
    %v1691 = vmul.f32 %v1398, %v1647
    %v1692 = vmul.f32 %v1402, %v1635
    %v1693 = vmul.f32 %v1402, %v1639
    %v1694 = vmul.f32 %v1402, %v1643
    %v1695 = vmul.f32 %v1402, %v1647
    %v1696 = vmul.f32 %v1406, %v1635
    %v1697 = vmul.f32 %v1406, %v1639
    %v1698 = vmul.f32 %v1406, %v1643
    %v1699 = vmul.f32 %v1406, %v1647
    %v1700 = vmul.f32 %v1410, %v1635
    %v1701 = vmul.f32 %v1410, %v1639
    %v1702 = vmul.f32 %v1410, %v1643
    %v1703 = vmul.f32 %v1410, %v1647
    %v1704 = vmul.f32 %v1414, %v1635
    %v1705 = vmul.f32 %v1414, %v1639
    %v1706 = vmul.f32 %v1414, %v1643
    %v1707 = vmul.f32 %v1414, %v1647
    %v1708 = vmul.f32 %v1418, %v1635
    %v1709 = vmul.f32 %v1418, %v1639
    %v1710 = vmul.f32 %v1418, %v1643
    %v1711 = vmul.f32 %v1418, %v1647
    %v1712 = vmul.f32 %v1422, %v1635
    %v1713 = vmul.f32 %v1422, %v1639
    %v1714 = vmul.f32 %v1422, %v1643
    %v1715 = vmul.f32 %v1422, %v1647
    %v1716 = vmul.f32 %v1426, %v1635
    %v1717 = vmul.f32 %v1426, %v1639
    %v1718 = vmul.f32 %v1426, %v1643
    %v1719 = vmul.f32 %v1426, %v1647
    %v1720 = vmul.f32 %v1430, %v1635
    %v1721 = vmul.f32 %v1430, %v1639
    %v1722 = vmul.f32 %v1430, %v1643
    %v1723 = vmul.f32 %v1430, %v1647
    %v1724 = vmul.f32 %v1434, %v1635
    %v1725 = vmul.f32 %v1434, %v1639
    %v1726 = vmul.f32 %v1434, %v1643
    %v1727 = vmul.f32 %v1434, %v1647
    %v1728 = vmul.f32 %v1438, %v1635
    %v1729 = vmul.f32 %v1438, %v1639
    %v1730 = vmul.f32 %v1438, %v1643
    %v1731 = vmul.f32 %v1438, %v1647
    %v1732 = vmul.f32 %v1442, %v1635
    %v1733 = vmul.f32 %v1442, %v1639
    %v1734 = vmul.f32 %v1442, %v1643
    %v1735 = vmul.f32 %v1442, %v1647
    %v1736 = vmul.f32 %v1446, %v1635
    %v1737 = vmul.f32 %v1446, %v1639
    %v1738 = vmul.f32 %v1446, %v1643
    %v1739 = vmul.f32 %v1446, %v1647
    %v1740 = vmul.f32 %v1450, %v1635
    %v1741 = vmul.f32 %v1450, %v1639
    %v1742 = vmul.f32 %v1450, %v1643
    %v1743 = vmul.f32 %v1450, %v1647
    %v1744 = vmul.f32 %v1454, %v1635
    %v1745 = vmul.f32 %v1454, %v1639
    %v1746 = vmul.f32 %v1454, %v1643
    %v1747 = vmul.f32 %v1454, %v1647
    %v1748 = vmul.f32 %v1458, %v1635
    %v1749 = vmul.f32 %v1458, %v1639
    %v1750 = vmul.f32 %v1458, %v1643
    %v1751 = vmul.f32 %v1458, %v1647
    %v1752 = vmul.f32 %v1462, %v1635
    %v1753 = vmul.f32 %v1462, %v1639
    %v1754 = vmul.f32 %v1462, %v1643
    %v1755 = vmul.f32 %v1462, %v1647
    %v1756 = vmul.f32 %v1466, %v1635
    %v1757 = vmul.f32 %v1466, %v1639
    %v1758 = vmul.f32 %v1466, %v1643
    %v1759 = vmul.f32 %v1466, %v1647
    %v1760 = vmul.f32 %v1470, %v1635
    %v1761 = vmul.f32 %v1470, %v1639
    %v1762 = vmul.f32 %v1470, %v1643
    %v1763 = vmul.f32 %v1470, %v1647
    %v1764 = vmul.f32 %v1474, %v1635
    %v1765 = vmul.f32 %v1474, %v1639
    %v1766 = vmul.f32 %v1474, %v1643
    %v1767 = vmul.f32 %v1474, %v1647
    %v1768 = vmul.f32 %v1478, %v1635
    %v1769 = vmul.f32 %v1478, %v1639
    %v1770 = vmul.f32 %v1478, %v1643
    %v1771 = vmul.f32 %v1478, %v1647
    %v1772 = vmul.f32 %v1482, %v1635
    %v1773 = vmul.f32 %v1482, %v1639
    %v1774 = vmul.f32 %v1482, %v1643
    %v1775 = vmul.f32 %v1482, %v1647
    %v1776 = vmul.f32 %v1486, %v1635
    %v1777 = vmul.f32 %v1486, %v1639
    %v1778 = vmul.f32 %v1486, %v1643
    %v1779 = vmul.f32 %v1486, %v1647
    %v1780 = vmul.f32 %v1490, %v1635
    %v1781 = vmul.f32 %v1490, %v1639
    %v1782 = vmul.f32 %v1490, %v1643
    %v1783 = vmul.f32 %v1490, %v1647
    %v1784 = vmul.f32 %v1494, %v1635
    %v1785 = vmul.f32 %v1494, %v1639
    %v1786 = vmul.f32 %v1494, %v1643
    %v1787 = vmul.f32 %v1494, %v1647
    %v1788 = vmul.f32 %v1498, %v1635
    %v1789 = vmul.f32 %v1498, %v1639
    %v1790 = vmul.f32 %v1498, %v1643
    %v1791 = vmul.f32 %v1498, %v1647
    %v1792 = vmul.f32 %v1502, %v1635
    %v1793 = vmul.f32 %v1502, %v1639
    %v1794 = vmul.f32 %v1502, %v1643
    %v1795 = vmul.f32 %v1502, %v1647
    %v1796 = vmul.f32 %v1506, %v1635
    %v1797 = vmul.f32 %v1506, %v1639
    %v1798 = vmul.f32 %v1506, %v1643
    %v1799 = vmul.f32 %v1506, %v1647
    %v1800 = vmul.f32 %v1510, %v1635
    %v1801 = vmul.f32 %v1510, %v1639
    %v1802 = vmul.f32 %v1510, %v1643
    %v1803 = vmul.f32 %v1510, %v1647
    %v1804 = vmul.f32 %v1514, %v1635
    %v1805 = vmul.f32 %v1514, %v1639
    %v1806 = vmul.f32 %v1514, %v1643
    %v1807 = vmul.f32 %v1514, %v1647
    %v1808 = vmul.f32 %v1518, %v1635
    %v1809 = vmul.f32 %v1518, %v1639
    %v1810 = vmul.f32 %v1518, %v1643
    %v1811 = vmul.f32 %v1518, %v1647
    %v1812 = vmul.f32 %v1522, %v1635
    %v1813 = vmul.f32 %v1522, %v1639
    %v1814 = vmul.f32 %v1522, %v1643
    %v1815 = vmul.f32 %v1522, %v1647
    %v1816 = vmul.f32 %v1526, %v1635
    %v1817 = vmul.f32 %v1526, %v1639
    %v1818 = vmul.f32 %v1526, %v1643
    %v1819 = vmul.f32 %v1526, %v1647
    %v1820 = vmul.f32 %v1530, %v1635
    %v1821 = vmul.f32 %v1530, %v1639
    %v1822 = vmul.f32 %v1530, %v1643
    %v1823 = vmul.f32 %v1530, %v1647
    %v1824 = vmul.f32 %v1534, %v1635
    %v1825 = vmul.f32 %v1534, %v1639
    %v1826 = vmul.f32 %v1534, %v1643
    %v1827 = vmul.f32 %v1534, %v1647
    %v1828 = vmul.f32 %v1538, %v1635
    %v1829 = vmul.f32 %v1538, %v1639
    %v1830 = vmul.f32 %v1538, %v1643
    %v1831 = vmul.f32 %v1538, %v1647
    %v1832 = vmul.f32 %v1542, %v1635
    %v1833 = vmul.f32 %v1542, %v1639
    %v1834 = vmul.f32 %v1542, %v1643
    %v1835 = vmul.f32 %v1542, %v1647
    %v1836 = vmul.f32 %v1546, %v1635
    %v1837 = vmul.f32 %v1546, %v1639
    %v1838 = vmul.f32 %v1546, %v1643
    %v1839 = vmul.f32 %v1546, %v1647
    %v1840 = vmul.f32 %v1550, %v1635
    %v1841 = vmul.f32 %v1550, %v1639
    %v1842 = vmul.f32 %v1550, %v1643
    %v1843 = vmul.f32 %v1550, %v1647
    %v1844 = vmul.f32 %v1554, %v1635
    %v1845 = vmul.f32 %v1554, %v1639
    %v1846 = vmul.f32 %v1554, %v1643
    %v1847 = vmul.f32 %v1554, %v1647
    %v1848 = vmul.f32 %v1558, %v1635
    %v1849 = vmul.f32 %v1558, %v1639
    %v1850 = vmul.f32 %v1558, %v1643
    %v1851 = vmul.f32 %v1558, %v1647
    %v1852 = vmul.f32 %v1562, %v1635
    %v1853 = vmul.f32 %v1562, %v1639
    %v1854 = vmul.f32 %v1562, %v1643
    %v1855 = vmul.f32 %v1562, %v1647
    %v1856 = vmul.f32 %v1566, %v1635
    %v1857 = vmul.f32 %v1566, %v1639
    %v1858 = vmul.f32 %v1566, %v1643
    %v1859 = vmul.f32 %v1566, %v1647
    %v1860 = vmul.f32 %v1570, %v1635
    %v1861 = vmul.f32 %v1570, %v1639
    %v1862 = vmul.f32 %v1570, %v1643
    %v1863 = vmul.f32 %v1570, %v1647
    %v1864 = vmul.f32 %v1574, %v1635
    %v1865 = vmul.f32 %v1574, %v1639
    %v1866 = vmul.f32 %v1574, %v1643
    %v1867 = vmul.f32 %v1574, %v1647
    %v1868 = vmul.f32 %v1578, %v1635
    %v1869 = vmul.f32 %v1578, %v1639
    %v1870 = vmul.f32 %v1578, %v1643
    %v1871 = vmul.f32 %v1578, %v1647
    %v1872 = vmul.f32 %v1582, %v1635
    %v1873 = vmul.f32 %v1582, %v1639
    %v1874 = vmul.f32 %v1582, %v1643
    %v1875 = vmul.f32 %v1582, %v1647
    %v1876 = vmul.f32 %v1586, %v1635
    %v1877 = vmul.f32 %v1586, %v1639
    %v1878 = vmul.f32 %v1586, %v1643
    %v1879 = vmul.f32 %v1586, %v1647
    %v1880 = vmul.f32 %v1590, %v1635
    %v1881 = vmul.f32 %v1590, %v1639
    %v1882 = vmul.f32 %v1590, %v1643
    %v1883 = vmul.f32 %v1590, %v1647
    %v1884 = vmul.f32 %v1594, %v1635
    %v1885 = vmul.f32 %v1594, %v1639
    %v1886 = vmul.f32 %v1594, %v1643
    %v1887 = vmul.f32 %v1594, %v1647
    %v1888 = vmul.f32 %v1598, %v1635
    %v1889 = vmul.f32 %v1598, %v1639
    %v1890 = vmul.f32 %v1598, %v1643
    %v1891 = vmul.f32 %v1598, %v1647
    %v1892 = vmul.f32 %v1602, %v1635
    %v1893 = vmul.f32 %v1602, %v1639
    %v1894 = vmul.f32 %v1602, %v1643
    %v1895 = vmul.f32 %v1602, %v1647
    %v1896 = vmul.f32 %v1606, %v1635
    %v1897 = vmul.f32 %v1606, %v1639
    %v1898 = vmul.f32 %v1606, %v1643
    %v1899 = vmul.f32 %v1606, %v1647
    %v1900 = vmul.f32 %v1610, %v1635
    %v1901 = vmul.f32 %v1610, %v1639
    %v1902 = vmul.f32 %v1610, %v1643
    %v1903 = vmul.f32 %v1610, %v1647
    %v1904 = vadd.f32 %v1100, %v1648
    %v1905 = vadd.f32 %v1101, %v1649
    %v1906 = vadd.f32 %v1102, %v1650
    %v1907 = vadd.f32 %v1103, %v1651
    %v1908 = vadd.f32 %v1104, %v1652
    %v1909 = vadd.f32 %v1105, %v1653
    %v1910 = vadd.f32 %v1106, %v1654
    %v1911 = vadd.f32 %v1107, %v1655
    %v1912 = vadd.f32 %v1108, %v1656
    %v1913 = vadd.f32 %v1109, %v1657
    %v1914 = vadd.f32 %v1110, %v1658
    %v1915 = vadd.f32 %v1111, %v1659
    %v1916 = vadd.f32 %v1112, %v1660
    %v1917 = vadd.f32 %v1113, %v1661
    %v1918 = vadd.f32 %v1114, %v1662
    %v1919 = vadd.f32 %v1115, %v1663
    %v1920 = vadd.f32 %v1116, %v1664
    %v1921 = vadd.f32 %v1117, %v1665
    %v1922 = vadd.f32 %v1118, %v1666
    %v1923 = vadd.f32 %v1119, %v1667
    %v1924 = vadd.f32 %v1120, %v1668
    %v1925 = vadd.f32 %v1121, %v1669
    %v1926 = vadd.f32 %v1122, %v1670
    %v1927 = vadd.f32 %v1123, %v1671
    %v1928 = vadd.f32 %v1124, %v1672
    %v1929 = vadd.f32 %v1125, %v1673
    %v1930 = vadd.f32 %v1126, %v1674
    %v1931 = vadd.f32 %v1127, %v1675
    %v1932 = vadd.f32 %v1128, %v1676
    %v1933 = vadd.f32 %v1129, %v1677
    %v1934 = vadd.f32 %v1130, %v1678
    %v1935 = vadd.f32 %v1131, %v1679
    %v1936 = vadd.f32 %v1132, %v1680
    %v1937 = vadd.f32 %v1133, %v1681
    %v1938 = vadd.f32 %v1134, %v1682
    %v1939 = vadd.f32 %v1135, %v1683
    %v1940 = vadd.f32 %v1136, %v1684
    %v1941 = vadd.f32 %v1137, %v1685
    %v1942 = vadd.f32 %v1138, %v1686
    %v1943 = vadd.f32 %v1139, %v1687
    %v1944 = vadd.f32 %v1140, %v1688
    %v1945 = vadd.f32 %v1141, %v1689
    %v1946 = vadd.f32 %v1142, %v1690
    %v1947 = vadd.f32 %v1143, %v1691
    %v1948 = vadd.f32 %v1144, %v1692
    %v1949 = vadd.f32 %v1145, %v1693
    %v1950 = vadd.f32 %v1146, %v1694
    %v1951 = vadd.f32 %v1147, %v1695
    %v1952 = vadd.f32 %v1148, %v1696
    %v1953 = vadd.f32 %v1149, %v1697
    %v1954 = vadd.f32 %v1150, %v1698
    %v1955 = vadd.f32 %v1151, %v1699
    %v1956 = vadd.f32 %v1152, %v1700
    %v1957 = vadd.f32 %v1153, %v1701
    %v1958 = vadd.f32 %v1154, %v1702
    %v1959 = vadd.f32 %v1155, %v1703
    %v1960 = vadd.f32 %v1156, %v1704
    %v1961 = vadd.f32 %v1157, %v1705
    %v1962 = vadd.f32 %v1158, %v1706
    %v1963 = vadd.f32 %v1159, %v1707
    %v1964 = vadd.f32 %v1160, %v1708
    %v1965 = vadd.f32 %v1161, %v1709
    %v1966 = vadd.f32 %v1162, %v1710
    %v1967 = vadd.f32 %v1163, %v1711
    %v1968 = vadd.f32 %v1164, %v1712
    %v1969 = vadd.f32 %v1165, %v1713
    %v1970 = vadd.f32 %v1166, %v1714
    %v1971 = vadd.f32 %v1167, %v1715
    %v1972 = vadd.f32 %v1168, %v1716
    %v1973 = vadd.f32 %v1169, %v1717
    %v1974 = vadd.f32 %v1170, %v1718
    %v1975 = vadd.f32 %v1171, %v1719
    %v1976 = vadd.f32 %v1172, %v1720
    %v1977 = vadd.f32 %v1173, %v1721
    %v1978 = vadd.f32 %v1174, %v1722
    %v1979 = vadd.f32 %v1175, %v1723
    %v1980 = vadd.f32 %v1176, %v1724
    %v1981 = vadd.f32 %v1177, %v1725
    %v1982 = vadd.f32 %v1178, %v1726
    %v1983 = vadd.f32 %v1179, %v1727
    %v1984 = vadd.f32 %v1180, %v1728
    %v1985 = vadd.f32 %v1181, %v1729
    %v1986 = vadd.f32 %v1182, %v1730
    %v1987 = vadd.f32 %v1183, %v1731
    %v1988 = vadd.f32 %v1184, %v1732
    %v1989 = vadd.f32 %v1185, %v1733
    %v1990 = vadd.f32 %v1186, %v1734
    %v1991 = vadd.f32 %v1187, %v1735
    %v1992 = vadd.f32 %v1188, %v1736
    %v1993 = vadd.f32 %v1189, %v1737
    %v1994 = vadd.f32 %v1190, %v1738
    %v1995 = vadd.f32 %v1191, %v1739
    %v1996 = vadd.f32 %v1192, %v1740
    %v1997 = vadd.f32 %v1193, %v1741
    %v1998 = vadd.f32 %v1194, %v1742
    %v1999 = vadd.f32 %v1195, %v1743
    %v2000 = vadd.f32 %v1196, %v1744
    %v2001 = vadd.f32 %v1197, %v1745
    %v2002 = vadd.f32 %v1198, %v1746
    %v2003 = vadd.f32 %v1199, %v1747
    %v2004 = vadd.f32 %v1200, %v1748
    %v2005 = vadd.f32 %v1201, %v1749
    %v2006 = vadd.f32 %v1202, %v1750
    %v2007 = vadd.f32 %v1203, %v1751
    %v2008 = vadd.f32 %v1204, %v1752
    %v2009 = vadd.f32 %v1205, %v1753
    %v2010 = vadd.f32 %v1206, %v1754
    %v2011 = vadd.f32 %v1207, %v1755
    %v2012 = vadd.f32 %v1208, %v1756
    %v2013 = vadd.f32 %v1209, %v1757
    %v2014 = vadd.f32 %v1210, %v1758
    %v2015 = vadd.f32 %v1211, %v1759
    %v2016 = vadd.f32 %v1212, %v1760
    %v2017 = vadd.f32 %v1213, %v1761
    %v2018 = vadd.f32 %v1214, %v1762
    %v2019 = vadd.f32 %v1215, %v1763
    %v2020 = vadd.f32 %v1216, %v1764
    %v2021 = vadd.f32 %v1217, %v1765
    %v2022 = vadd.f32 %v1218, %v1766
    %v2023 = vadd.f32 %v1219, %v1767
    %v2024 = vadd.f32 %v1220, %v1768
    %v2025 = vadd.f32 %v1221, %v1769
    %v2026 = vadd.f32 %v1222, %v1770
    %v2027 = vadd.f32 %v1223, %v1771
    %v2028 = vadd.f32 %v1224, %v1772
    %v2029 = vadd.f32 %v1225, %v1773
    %v2030 = vadd.f32 %v1226, %v1774
    %v2031 = vadd.f32 %v1227, %v1775
    %v2032 = vadd.f32 %v1228, %v1776
    %v2033 = vadd.f32 %v1229, %v1777
    %v2034 = vadd.f32 %v1230, %v1778
    %v2035 = vadd.f32 %v1231, %v1779
    %v2036 = vadd.f32 %v1232, %v1780
    %v2037 = vadd.f32 %v1233, %v1781
    %v2038 = vadd.f32 %v1234, %v1782
    %v2039 = vadd.f32 %v1235, %v1783
    %v2040 = vadd.f32 %v1236, %v1784
    %v2041 = vadd.f32 %v1237, %v1785
    %v2042 = vadd.f32 %v1238, %v1786
    %v2043 = vadd.f32 %v1239, %v1787
    %v2044 = vadd.f32 %v1240, %v1788
    %v2045 = vadd.f32 %v1241, %v1789
    %v2046 = vadd.f32 %v1242, %v1790
    %v2047 = vadd.f32 %v1243, %v1791
    %v2048 = vadd.f32 %v1244, %v1792
    %v2049 = vadd.f32 %v1245, %v1793
    %v2050 = vadd.f32 %v1246, %v1794
    %v2051 = vadd.f32 %v1247, %v1795
    %v2052 = vadd.f32 %v1248, %v1796
    %v2053 = vadd.f32 %v1249, %v1797
    %v2054 = vadd.f32 %v1250, %v1798
    %v2055 = vadd.f32 %v1251, %v1799
    %v2056 = vadd.f32 %v1252, %v1800
    %v2057 = vadd.f32 %v1253, %v1801
    %v2058 = vadd.f32 %v1254, %v1802
    %v2059 = vadd.f32 %v1255, %v1803
    %v2060 = vadd.f32 %v1256, %v1804
    %v2061 = vadd.f32 %v1257, %v1805
    %v2062 = vadd.f32 %v1258, %v1806
    %v2063 = vadd.f32 %v1259, %v1807
    %v2064 = vadd.f32 %v1260, %v1808
    %v2065 = vadd.f32 %v1261, %v1809
    %v2066 = vadd.f32 %v1262, %v1810
    %v2067 = vadd.f32 %v1263, %v1811
    %v2068 = vadd.f32 %v1264, %v1812
    %v2069 = vadd.f32 %v1265, %v1813
    %v2070 = vadd.f32 %v1266, %v1814
    %v2071 = vadd.f32 %v1267, %v1815
    %v2072 = vadd.f32 %v1268, %v1816
    %v2073 = vadd.f32 %v1269, %v1817
    %v2074 = vadd.f32 %v1270, %v1818
    %v2075 = vadd.f32 %v1271, %v1819
    %v2076 = vadd.f32 %v1272, %v1820
    %v2077 = vadd.f32 %v1273, %v1821
    %v2078 = vadd.f32 %v1274, %v1822
    %v2079 = vadd.f32 %v1275, %v1823
    %v2080 = vadd.f32 %v1276, %v1824
    %v2081 = vadd.f32 %v1277, %v1825
    %v2082 = vadd.f32 %v1278, %v1826
    %v2083 = vadd.f32 %v1279, %v1827
    %v2084 = vadd.f32 %v1280, %v1828
    %v2085 = vadd.f32 %v1281, %v1829
    %v2086 = vadd.f32 %v1282, %v1830
    %v2087 = vadd.f32 %v1283, %v1831
    %v2088 = vadd.f32 %v1284, %v1832
    %v2089 = vadd.f32 %v1285, %v1833
    %v2090 = vadd.f32 %v1286, %v1834
    %v2091 = vadd.f32 %v1287, %v1835
    %v2092 = vadd.f32 %v1288, %v1836
    %v2093 = vadd.f32 %v1289, %v1837
    %v2094 = vadd.f32 %v1290, %v1838
    %v2095 = vadd.f32 %v1291, %v1839
    %v2096 = vadd.f32 %v1292, %v1840
    %v2097 = vadd.f32 %v1293, %v1841
    %v2098 = vadd.f32 %v1294, %v1842
    %v2099 = vadd.f32 %v1295, %v1843
    %v2100 = vadd.f32 %v1296, %v1844
    %v2101 = vadd.f32 %v1297, %v1845
    %v2102 = vadd.f32 %v1298, %v1846
    %v2103 = vadd.f32 %v1299, %v1847
    %v2104 = vadd.f32 %v1300, %v1848
    %v2105 = vadd.f32 %v1301, %v1849
    %v2106 = vadd.f32 %v1302, %v1850
    %v2107 = vadd.f32 %v1303, %v1851
    %v2108 = vadd.f32 %v1304, %v1852
    %v2109 = vadd.f32 %v1305, %v1853
    %v2110 = vadd.f32 %v1306, %v1854
    %v2111 = vadd.f32 %v1307, %v1855
    %v2112 = vadd.f32 %v1308, %v1856
    %v2113 = vadd.f32 %v1309, %v1857
    %v2114 = vadd.f32 %v1310, %v1858
    %v2115 = vadd.f32 %v1311, %v1859
    %v2116 = vadd.f32 %v1312, %v1860
    %v2117 = vadd.f32 %v1313, %v1861
    %v2118 = vadd.f32 %v1314, %v1862
    %v2119 = vadd.f32 %v1315, %v1863
    %v2120 = vadd.f32 %v1316, %v1864
    %v2121 = vadd.f32 %v1317, %v1865
    %v2122 = vadd.f32 %v1318, %v1866
    %v2123 = vadd.f32 %v1319, %v1867
    %v2124 = vadd.f32 %v1320, %v1868
    %v2125 = vadd.f32 %v1321, %v1869
    %v2126 = vadd.f32 %v1322, %v1870
    %v2127 = vadd.f32 %v1323, %v1871
    %v2128 = vadd.f32 %v1324, %v1872
    %v2129 = vadd.f32 %v1325, %v1873
    %v2130 = vadd.f32 %v1326, %v1874
    %v2131 = vadd.f32 %v1327, %v1875
    %v2132 = vadd.f32 %v1328, %v1876
    %v2133 = vadd.f32 %v1329, %v1877
    %v2134 = vadd.f32 %v1330, %v1878
    %v2135 = vadd.f32 %v1331, %v1879
    %v2136 = vadd.f32 %v1332, %v1880
    %v2137 = vadd.f32 %v1333, %v1881
    %v2138 = vadd.f32 %v1334, %v1882
    %v2139 = vadd.f32 %v1335, %v1883
    %v2140 = vadd.f32 %v1336, %v1884
    %v2141 = vadd.f32 %v1337, %v1885
    %v2142 = vadd.f32 %v1338, %v1886
    %v2143 = vadd.f32 %v1339, %v1887
    %v2144 = vadd.f32 %v1340, %v1888
    %v2145 = vadd.f32 %v1341, %v1889
    %v2146 = vadd.f32 %v1342, %v1890
    %v2147 = vadd.f32 %v1343, %v1891
    %v2148 = vadd.f32 %v1344, %v1892
    %v2149 = vadd.f32 %v1345, %v1893
    %v2150 = vadd.f32 %v1346, %v1894
    %v2151 = vadd.f32 %v1347, %v1895
    %v2152 = vadd.f32 %v1348, %v1896
    %v2153 = vadd.f32 %v1349, %v1897
    %v2154 = vadd.f32 %v1350, %v1898
    %v2155 = vadd.f32 %v1351, %v1899
    %v2156 = vadd.f32 %v1352, %v1900
    %v2157 = vadd.f32 %v1353, %v1901
    %v2158 = vadd.f32 %v1354, %v1902
    %v2159 = vadd.f32 %v1355, %v1903
    %v2160 = vmax.f32 %v1904, 0.0
    %v2161 = vmax.f32 %v1905, 0.0
    %v2162 = vmax.f32 %v1906, 0.0
    %v2163 = vmax.f32 %v1907, 0.0
    %v2164 = vmax.f32 %v1908, 0.0
    %v2165 = vmax.f32 %v1909, 0.0
    %v2166 = vmax.f32 %v1910, 0.0
    %v2167 = vmax.f32 %v1911, 0.0
    %v2168 = vmax.f32 %v1912, 0.0
    %v2169 = vmax.f32 %v1913, 0.0
    %v2170 = vmax.f32 %v1914, 0.0
    %v2171 = vmax.f32 %v1915, 0.0
    %v2172 = vmax.f32 %v1916, 0.0
    %v2173 = vmax.f32 %v1917, 0.0
    %v2174 = vmax.f32 %v1918, 0.0
    %v2175 = vmax.f32 %v1919, 0.0
    %v2176 = vmax.f32 %v1920, 0.0
    %v2177 = vmax.f32 %v1921, 0.0
    %v2178 = vmax.f32 %v1922, 0.0
    %v2179 = vmax.f32 %v1923, 0.0
    %v2180 = vmax.f32 %v1924, 0.0
    %v2181 = vmax.f32 %v1925, 0.0
    %v2182 = vmax.f32 %v1926, 0.0
    %v2183 = vmax.f32 %v1927, 0.0
    %v2184 = vmax.f32 %v1928, 0.0
    %v2185 = vmax.f32 %v1929, 0.0
    %v2186 = vmax.f32 %v1930, 0.0
    %v2187 = vmax.f32 %v1931, 0.0
    %v2188 = vmax.f32 %v1932, 0.0
    %v2189 = vmax.f32 %v1933, 0.0
    %v2190 = vmax.f32 %v1934, 0.0
    %v2191 = vmax.f32 %v1935, 0.0
    %v2192 = vmax.f32 %v1936, 0.0
    %v2193 = vmax.f32 %v1937, 0.0
    %v2194 = vmax.f32 %v1938, 0.0
    %v2195 = vmax.f32 %v1939, 0.0
    %v2196 = vmax.f32 %v1940, 0.0
    %v2197 = vmax.f32 %v1941, 0.0
    %v2198 = vmax.f32 %v1942, 0.0
    %v2199 = vmax.f32 %v1943, 0.0
    %v2200 = vmax.f32 %v1944, 0.0
    %v2201 = vmax.f32 %v1945, 0.0
    %v2202 = vmax.f32 %v1946, 0.0
    %v2203 = vmax.f32 %v1947, 0.0
    %v2204 = vmax.f32 %v1948, 0.0
    %v2205 = vmax.f32 %v1949, 0.0
    %v2206 = vmax.f32 %v1950, 0.0
    %v2207 = vmax.f32 %v1951, 0.0
    %v2208 = vmax.f32 %v1952, 0.0
    %v2209 = vmax.f32 %v1953, 0.0
    %v2210 = vmax.f32 %v1954, 0.0
    %v2211 = vmax.f32 %v1955, 0.0
    %v2212 = vmax.f32 %v1956, 0.0
    %v2213 = vmax.f32 %v1957, 0.0
    %v2214 = vmax.f32 %v1958, 0.0
    %v2215 = vmax.f32 %v1959, 0.0
    %v2216 = vmax.f32 %v1960, 0.0
    %v2217 = vmax.f32 %v1961, 0.0
    %v2218 = vmax.f32 %v1962, 0.0
    %v2219 = vmax.f32 %v1963, 0.0
    %v2220 = vmax.f32 %v1964, 0.0
    %v2221 = vmax.f32 %v1965, 0.0
    %v2222 = vmax.f32 %v1966, 0.0
    %v2223 = vmax.f32 %v1967, 0.0
    %v2224 = vmax.f32 %v1968, 0.0
    %v2225 = vmax.f32 %v1969, 0.0
    %v2226 = vmax.f32 %v1970, 0.0
    %v2227 = vmax.f32 %v1971, 0.0
    %v2228 = vmax.f32 %v1972, 0.0
    %v2229 = vmax.f32 %v1973, 0.0
    %v2230 = vmax.f32 %v1974, 0.0
    %v2231 = vmax.f32 %v1975, 0.0
    %v2232 = vmax.f32 %v1976, 0.0
    %v2233 = vmax.f32 %v1977, 0.0
    %v2234 = vmax.f32 %v1978, 0.0
    %v2235 = vmax.f32 %v1979, 0.0
    %v2236 = vmax.f32 %v1980, 0.0
    %v2237 = vmax.f32 %v1981, 0.0
    %v2238 = vmax.f32 %v1982, 0.0
    %v2239 = vmax.f32 %v1983, 0.0
    %v2240 = vmax.f32 %v1984, 0.0
    %v2241 = vmax.f32 %v1985, 0.0
    %v2242 = vmax.f32 %v1986, 0.0
    %v2243 = vmax.f32 %v1987, 0.0
    %v2244 = vmax.f32 %v1988, 0.0
    %v2245 = vmax.f32 %v1989, 0.0
    %v2246 = vmax.f32 %v1990, 0.0
    %v2247 = vmax.f32 %v1991, 0.0
    %v2248 = vmax.f32 %v1992, 0.0
    %v2249 = vmax.f32 %v1993, 0.0
    %v2250 = vmax.f32 %v1994, 0.0
    %v2251 = vmax.f32 %v1995, 0.0
    %v2252 = vmax.f32 %v1996, 0.0
    %v2253 = vmax.f32 %v1997, 0.0
    %v2254 = vmax.f32 %v1998, 0.0
    %v2255 = vmax.f32 %v1999, 0.0
    %v2256 = vmax.f32 %v2000, 0.0
    %v2257 = vmax.f32 %v2001, 0.0
    %v2258 = vmax.f32 %v2002, 0.0
    %v2259 = vmax.f32 %v2003, 0.0
    %v2260 = vmax.f32 %v2004, 0.0
    %v2261 = vmax.f32 %v2005, 0.0
    %v2262 = vmax.f32 %v2006, 0.0
    %v2263 = vmax.f32 %v2007, 0.0
    %v2264 = vmax.f32 %v2008, 0.0
    %v2265 = vmax.f32 %v2009, 0.0
    %v2266 = vmax.f32 %v2010, 0.0
    %v2267 = vmax.f32 %v2011, 0.0
    %v2268 = vmax.f32 %v2012, 0.0
    %v2269 = vmax.f32 %v2013, 0.0
    %v2270 = vmax.f32 %v2014, 0.0
    %v2271 = vmax.f32 %v2015, 0.0
    %v2272 = vmax.f32 %v2016, 0.0
    %v2273 = vmax.f32 %v2017, 0.0
    %v2274 = vmax.f32 %v2018, 0.0
    %v2275 = vmax.f32 %v2019, 0.0
    %v2276 = vmax.f32 %v2020, 0.0
    %v2277 = vmax.f32 %v2021, 0.0
    %v2278 = vmax.f32 %v2022, 0.0
    %v2279 = vmax.f32 %v2023, 0.0
    %v2280 = vmax.f32 %v2024, 0.0
    %v2281 = vmax.f32 %v2025, 0.0
    %v2282 = vmax.f32 %v2026, 0.0
    %v2283 = vmax.f32 %v2027, 0.0
    %v2284 = vmax.f32 %v2028, 0.0
    %v2285 = vmax.f32 %v2029, 0.0
    %v2286 = vmax.f32 %v2030, 0.0
    %v2287 = vmax.f32 %v2031, 0.0
    %v2288 = vmax.f32 %v2032, 0.0
    %v2289 = vmax.f32 %v2033, 0.0
    %v2290 = vmax.f32 %v2034, 0.0
    %v2291 = vmax.f32 %v2035, 0.0
    %v2292 = vmax.f32 %v2036, 0.0
    %v2293 = vmax.f32 %v2037, 0.0
    %v2294 = vmax.f32 %v2038, 0.0
    %v2295 = vmax.f32 %v2039, 0.0
    %v2296 = vmax.f32 %v2040, 0.0
    %v2297 = vmax.f32 %v2041, 0.0
    %v2298 = vmax.f32 %v2042, 0.0
    %v2299 = vmax.f32 %v2043, 0.0
    %v2300 = vmax.f32 %v2044, 0.0
    %v2301 = vmax.f32 %v2045, 0.0
    %v2302 = vmax.f32 %v2046, 0.0
    %v2303 = vmax.f32 %v2047, 0.0
    %v2304 = vmax.f32 %v2048, 0.0
    %v2305 = vmax.f32 %v2049, 0.0
    %v2306 = vmax.f32 %v2050, 0.0
    %v2307 = vmax.f32 %v2051, 0.0
    %v2308 = vmax.f32 %v2052, 0.0
    %v2309 = vmax.f32 %v2053, 0.0
    %v2310 = vmax.f32 %v2054, 0.0
    %v2311 = vmax.f32 %v2055, 0.0
    %v2312 = vmax.f32 %v2056, 0.0
    %v2313 = vmax.f32 %v2057, 0.0
    %v2314 = vmax.f32 %v2058, 0.0
    %v2315 = vmax.f32 %v2059, 0.0
    %v2316 = vmax.f32 %v2060, 0.0
    %v2317 = vmax.f32 %v2061, 0.0
    %v2318 = vmax.f32 %v2062, 0.0
    %v2319 = vmax.f32 %v2063, 0.0
    %v2320 = vmax.f32 %v2064, 0.0
    %v2321 = vmax.f32 %v2065, 0.0
    %v2322 = vmax.f32 %v2066, 0.0
    %v2323 = vmax.f32 %v2067, 0.0
    %v2324 = vmax.f32 %v2068, 0.0
    %v2325 = vmax.f32 %v2069, 0.0
    %v2326 = vmax.f32 %v2070, 0.0
    %v2327 = vmax.f32 %v2071, 0.0
    %v2328 = vmax.f32 %v2072, 0.0
    %v2329 = vmax.f32 %v2073, 0.0
    %v2330 = vmax.f32 %v2074, 0.0
    %v2331 = vmax.f32 %v2075, 0.0
    %v2332 = vmax.f32 %v2076, 0.0
    %v2333 = vmax.f32 %v2077, 0.0
    %v2334 = vmax.f32 %v2078, 0.0
    %v2335 = vmax.f32 %v2079, 0.0
    %v2336 = vmax.f32 %v2080, 0.0
    %v2337 = vmax.f32 %v2081, 0.0
    %v2338 = vmax.f32 %v2082, 0.0
    %v2339 = vmax.f32 %v2083, 0.0
    %v2340 = vmax.f32 %v2084, 0.0
    %v2341 = vmax.f32 %v2085, 0.0
    %v2342 = vmax.f32 %v2086, 0.0
    %v2343 = vmax.f32 %v2087, 0.0
    %v2344 = vmax.f32 %v2088, 0.0
    %v2345 = vmax.f32 %v2089, 0.0
    %v2346 = vmax.f32 %v2090, 0.0
    %v2347 = vmax.f32 %v2091, 0.0
    %v2348 = vmax.f32 %v2092, 0.0
    %v2349 = vmax.f32 %v2093, 0.0
    %v2350 = vmax.f32 %v2094, 0.0
    %v2351 = vmax.f32 %v2095, 0.0
    %v2352 = vmax.f32 %v2096, 0.0
    %v2353 = vmax.f32 %v2097, 0.0
    %v2354 = vmax.f32 %v2098, 0.0
    %v2355 = vmax.f32 %v2099, 0.0
    %v2356 = vmax.f32 %v2100, 0.0
    %v2357 = vmax.f32 %v2101, 0.0
    %v2358 = vmax.f32 %v2102, 0.0
    %v2359 = vmax.f32 %v2103, 0.0
    %v2360 = vmax.f32 %v2104, 0.0
    %v2361 = vmax.f32 %v2105, 0.0
    %v2362 = vmax.f32 %v2106, 0.0
    %v2363 = vmax.f32 %v2107, 0.0
    %v2364 = vmax.f32 %v2108, 0.0
    %v2365 = vmax.f32 %v2109, 0.0
    %v2366 = vmax.f32 %v2110, 0.0
    %v2367 = vmax.f32 %v2111, 0.0
    %v2368 = vmax.f32 %v2112, 0.0
    %v2369 = vmax.f32 %v2113, 0.0
    %v2370 = vmax.f32 %v2114, 0.0
    %v2371 = vmax.f32 %v2115, 0.0
    %v2372 = vmax.f32 %v2116, 0.0
    %v2373 = vmax.f32 %v2117, 0.0
    %v2374 = vmax.f32 %v2118, 0.0
    %v2375 = vmax.f32 %v2119, 0.0
    %v2376 = vmax.f32 %v2120, 0.0
    %v2377 = vmax.f32 %v2121, 0.0
    %v2378 = vmax.f32 %v2122, 0.0
    %v2379 = vmax.f32 %v2123, 0.0
    %v2380 = vmax.f32 %v2124, 0.0
    %v2381 = vmax.f32 %v2125, 0.0
    %v2382 = vmax.f32 %v2126, 0.0
    %v2383 = vmax.f32 %v2127, 0.0
    %v2384 = vmax.f32 %v2128, 0.0
    %v2385 = vmax.f32 %v2129, 0.0
    %v2386 = vmax.f32 %v2130, 0.0
    %v2387 = vmax.f32 %v2131, 0.0
    %v2388 = vmax.f32 %v2132, 0.0
    %v2389 = vmax.f32 %v2133, 0.0
    %v2390 = vmax.f32 %v2134, 0.0
    %v2391 = vmax.f32 %v2135, 0.0
    %v2392 = vmax.f32 %v2136, 0.0
    %v2393 = vmax.f32 %v2137, 0.0
    %v2394 = vmax.f32 %v2138, 0.0
    %v2395 = vmax.f32 %v2139, 0.0
    %v2396 = vmax.f32 %v2140, 0.0
    %v2397 = vmax.f32 %v2141, 0.0
    %v2398 = vmax.f32 %v2142, 0.0
    %v2399 = vmax.f32 %v2143, 0.0
    %v2400 = vmax.f32 %v2144, 0.0
    %v2401 = vmax.f32 %v2145, 0.0
    %v2402 = vmax.f32 %v2146, 0.0
    %v2403 = vmax.f32 %v2147, 0.0
    %v2404 = vmax.f32 %v2148, 0.0
    %v2405 = vmax.f32 %v2149, 0.0
    %v2406 = vmax.f32 %v2150, 0.0
    %v2407 = vmax.f32 %v2151, 0.0
    %v2408 = vmax.f32 %v2152, 0.0
    %v2409 = vmax.f32 %v2153, 0.0
    %v2410 = vmax.f32 %v2154, 0.0
    %v2411 = vmax.f32 %v2155, 0.0
    %v2412 = vmax.f32 %v2156, 0.0
    %v2413 = vmax.f32 %v2157, 0.0
    %v2414 = vmax.f32 %v2158, 0.0
    %v2415 = vmax.f32 %v2159, 0.0
    %v2416 = vld [vmem:[%s3] sm:$0xff]
    %v2417 = vld [vmem:[%s3 + $0x8] sm:$0xff]
    %v2418 = vld [vmem:[%s3 + $0x10] sm:$0xff]
    %v2419 = vld [vmem:[%s3 + $0x18] sm:$0xff]
    %v2420 = vld [vmem:[%s3 + $0x20] sm:$0xff]
    %v2421 = vld [vmem:[%s3 + $0x28] sm:$0xff]
    %v2422 = vld [vmem:[%s3 + $0x30] sm:$0xff]
    %v2423 = vld [vmem:[%s3 + $0x38] sm:$0xff]
    %v2424 = vld [vmem:[%s3 + $0x40] sm:$0xff]
    %v2425 = vld [vmem:[%s3 + $0x48] sm:$0xff]
    %v2426 = vld [vmem:[%s3 + $0x50] sm:$0xff]
    %v2427 = vld [vmem:[%s3 + $0x58] sm:$0xff]
    %v2428 = vld [vmem:[%s3 + $0x60] sm:$0xff]
    %v2429 = vld [vmem:[%s3 + $0x68] sm:$0xff]
    %v2430 = vld [vmem:[%s3 + $0x70] sm:$0xff]
    %v2431 = vld [vmem:[%s3 + $0x78] sm:$0xff]
    %v2432 = vld [vmem:[%s3 + $0x80] sm:$0xff]
    %v2433 = vld [vmem:[%s3 + $0x88] sm:$0xff]
    %v2434 = vld [vmem:[%s3 + $0x90] sm:$0xff]
    %v2435 = vld [vmem:[%s3 + $0x98] sm:$0xff]
    %v2436 = vld [vmem:[%s3 + $0xa0] sm:$0xff]
    %v2437 = vld [vmem:[%s3 + $0xa8] sm:$0xff]
    %v2438 = vld [vmem:[%s3 + $0xb0] sm:$0xff]
    %v2439 = vld [vmem:[%s3 + $0xb8] sm:$0xff]
    %v2440 = vld [vmem:[%s3 + $0xc0] sm:$0xff]
    %v2441 = vld [vmem:[%s3 + $0xc8] sm:$0xff]
    %v2442 = vld [vmem:[%s3 + $0xd0] sm:$0xff]
    %v2443 = vld [vmem:[%s3 + $0xd8] sm:$0xff]
    %v2444 = vld [vmem:[%s3 + $0xe0] sm:$0xff]
    %v2445 = vld [vmem:[%s3 + $0xe8] sm:$0xff]
    %v2446 = vld [vmem:[%s3 + $0xf0] sm:$0xff]
    %v2447 = vld [vmem:[%s3 + $0xf8] sm:$0xff]
    %v2448 = vld [vmem:[%s3 + $0x100] sm:$0xff]
    %v2449 = vld [vmem:[%s3 + $0x108] sm:$0xff]
    %v2450 = vld [vmem:[%s3 + $0x110] sm:$0xff]
    %v2451 = vld [vmem:[%s3 + $0x118] sm:$0xff]
    %v2452 = vld [vmem:[%s3 + $0x120] sm:$0xff]
    %v2453 = vld [vmem:[%s3 + $0x128] sm:$0xff]
    %v2454 = vld [vmem:[%s3 + $0x130] sm:$0xff]
    %v2455 = vld [vmem:[%s3 + $0x138] sm:$0xff]
    %v2456 = vld [vmem:[%s3 + $0x140] sm:$0xff]
    %v2457 = vld [vmem:[%s3 + $0x148] sm:$0xff]
    %v2458 = vld [vmem:[%s3 + $0x150] sm:$0xff]
    %v2459 = vld [vmem:[%s3 + $0x158] sm:$0xff]
    %v2460 = vld [vmem:[%s3 + $0x160] sm:$0xff]
    %v2461 = vld [vmem:[%s3 + $0x168] sm:$0xff]
    %v2462 = vld [vmem:[%s3 + $0x170] sm:$0xff]
    %v2463 = vld [vmem:[%s3 + $0x178] sm:$0xff]
    %v2464 = vld [vmem:[%s3 + $0x180] sm:$0xff]
    %v2465 = vld [vmem:[%s3 + $0x188] sm:$0xff]
    %v2466 = vld [vmem:[%s3 + $0x190] sm:$0xff]
    %v2467 = vld [vmem:[%s3 + $0x198] sm:$0xff]
    %v2468 = vld [vmem:[%s3 + $0x1a0] sm:$0xff]
    %v2469 = vld [vmem:[%s3 + $0x1a8] sm:$0xff]
    %v2470 = vld [vmem:[%s3 + $0x1b0] sm:$0xff]
    %v2471 = vld [vmem:[%s3 + $0x1b8] sm:$0xff]
    %v2472 = vld [vmem:[%s3 + $0x1c0] sm:$0xff]
    %v2473 = vld [vmem:[%s3 + $0x1c8] sm:$0xff]
    %v2474 = vld [vmem:[%s3 + $0x1d0] sm:$0xff]
    %v2475 = vld [vmem:[%s3 + $0x1d8] sm:$0xff]
    %v2476 = vld [vmem:[%s3 + $0x1e0] sm:$0xff]
    %v2477 = vld [vmem:[%s3 + $0x1e8] sm:$0xff]
    %v2478 = vld [vmem:[%s3 + $0x1f0] sm:$0xff]
    %v2479 = vld [vmem:[%s3 + $0x1f8] sm:$0xff]
    %v2480 = vld [vmem:[%s3 + $0x200] sm:$0xff]
    %v2481 = vld [vmem:[%s3 + $0x208] sm:$0xff]
    %v2482 = vld [vmem:[%s3 + $0x210] sm:$0xff]
    %v2483 = vld [vmem:[%s3 + $0x218] sm:$0xff]
    %v2484 = vld [vmem:[%s3 + $0x220] sm:$0xff]
    %v2485 = vld [vmem:[%s3 + $0x228] sm:$0xff]
    %v2486 = vld [vmem:[%s3 + $0x230] sm:$0xff]
    %v2487 = vld [vmem:[%s3 + $0x238] sm:$0xff]
    %v2488 = vld [vmem:[%s3 + $0x240] sm:$0xff]
    %v2489 = vld [vmem:[%s3 + $0x248] sm:$0xff]
    %v2490 = vld [vmem:[%s3 + $0x250] sm:$0xff]
    %v2491 = vld [vmem:[%s3 + $0x258] sm:$0xff]
    %v2492 = vld [vmem:[%s3 + $0x260] sm:$0xff]
    %v2493 = vld [vmem:[%s3 + $0x268] sm:$0xff]
    %v2494 = vld [vmem:[%s3 + $0x270] sm:$0xff]
    %v2495 = vld [vmem:[%s3 + $0x278] sm:$0xff]
    %v2496 = vld [vmem:[%s3 + $0x280] sm:$0xff]
    %v2497 = vld [vmem:[%s3 + $0x288] sm:$0xff]
    %v2498 = vld [vmem:[%s3 + $0x290] sm:$0xff]
    %v2499 = vld [vmem:[%s3 + $0x298] sm:$0xff]
    %v2500 = vld [vmem:[%s3 + $0x2a0] sm:$0xff]
    %v2501 = vld [vmem:[%s3 + $0x2a8] sm:$0xff]
    %v2502 = vld [vmem:[%s3 + $0x2b0] sm:$0xff]
    %v2503 = vld [vmem:[%s3 + $0x2b8] sm:$0xff]
    %v2504 = vld [vmem:[%s3 + $0x2c0] sm:$0xff]
    %v2505 = vld [vmem:[%s3 + $0x2c8] sm:$0xff]
    %v2506 = vld [vmem:[%s3 + $0x2d0] sm:$0xff]
    %v2507 = vld [vmem:[%s3 + $0x2d8] sm:$0xff]
    %v2508 = vld [vmem:[%s3 + $0x2e0] sm:$0xff]
    %v2509 = vld [vmem:[%s3 + $0x2e8] sm:$0xff]
    %v2510 = vld [vmem:[%s3 + $0x2f0] sm:$0xff]
    %v2511 = vld [vmem:[%s3 + $0x2f8] sm:$0xff]
    %v2512 = vld [vmem:[%s3 + $0x300] sm:$0xff]
    %v2513 = vld [vmem:[%s3 + $0x308] sm:$0xff]
    %v2514 = vld [vmem:[%s3 + $0x310] sm:$0xff]
    %v2515 = vld [vmem:[%s3 + $0x318] sm:$0xff]
    %v2516 = vld [vmem:[%s3 + $0x320] sm:$0xff]
    %v2517 = vld [vmem:[%s3 + $0x328] sm:$0xff]
    %v2518 = vld [vmem:[%s3 + $0x330] sm:$0xff]
    %v2519 = vld [vmem:[%s3 + $0x338] sm:$0xff]
    %v2520 = vld [vmem:[%s3 + $0x340] sm:$0xff]
    %v2521 = vld [vmem:[%s3 + $0x348] sm:$0xff]
    %v2522 = vld [vmem:[%s3 + $0x350] sm:$0xff]
    %v2523 = vld [vmem:[%s3 + $0x358] sm:$0xff]
    %v2524 = vld [vmem:[%s3 + $0x360] sm:$0xff]
    %v2525 = vld [vmem:[%s3 + $0x368] sm:$0xff]
    %v2526 = vld [vmem:[%s3 + $0x370] sm:$0xff]
    %v2527 = vld [vmem:[%s3 + $0x378] sm:$0xff]
    %v2528 = vld [vmem:[%s3 + $0x380] sm:$0xff]
    %v2529 = vld [vmem:[%s3 + $0x388] sm:$0xff]
    %v2530 = vld [vmem:[%s3 + $0x390] sm:$0xff]
    %v2531 = vld [vmem:[%s3 + $0x398] sm:$0xff]
    %v2532 = vld [vmem:[%s3 + $0x3a0] sm:$0xff]
    %v2533 = vld [vmem:[%s3 + $0x3a8] sm:$0xff]
    %v2534 = vld [vmem:[%s3 + $0x3b0] sm:$0xff]
    %v2535 = vld [vmem:[%s3 + $0x3b8] sm:$0xff]
    %v2536 = vld [vmem:[%s3 + $0x3c0] sm:$0xff]
    %v2537 = vld [vmem:[%s3 + $0x3c8] sm:$0xff]
    %v2538 = vld [vmem:[%s3 + $0x3d0] sm:$0xff]
    %v2539 = vld [vmem:[%s3 + $0x3d8] sm:$0xff]
    %v2540 = vld [vmem:[%s3 + $0x3e0] sm:$0xff]
    %v2541 = vld [vmem:[%s3 + $0x3e8] sm:$0xff]
    %v2542 = vld [vmem:[%s3 + $0x3f0] sm:$0xff]
    %v2543 = vld [vmem:[%s3 + $0x3f8] sm:$0xff]
    %v2544 = vpack.c.bf16 %v2164, %v2160
    %v2545 = vpack.c.bf16 %v2165, %v2161
    %v2546 = vpack.c.bf16 %v2166, %v2162
    %v2547 = vpack.c.bf16 %v2167, %v2163
    %v2548 = vpack.c.bf16 %v2172, %v2168
    %v2549 = vpack.c.bf16 %v2173, %v2169
    %v2550 = vpack.c.bf16 %v2174, %v2170
    %v2551 = vpack.c.bf16 %v2175, %v2171
    %v2552 = vpack.c.bf16 %v2180, %v2176
    %v2553 = vpack.c.bf16 %v2181, %v2177
    %v2554 = vpack.c.bf16 %v2182, %v2178
    %v2555 = vpack.c.bf16 %v2183, %v2179
    %v2556 = vpack.c.bf16 %v2188, %v2184
    %v2557 = vpack.c.bf16 %v2189, %v2185
    %v2558 = vpack.c.bf16 %v2190, %v2186
    %v2559 = vpack.c.bf16 %v2191, %v2187
    %v2560 = vpack.c.bf16 %v2196, %v2192
    %v2561 = vpack.c.bf16 %v2197, %v2193
    %v2562 = vpack.c.bf16 %v2198, %v2194
    %v2563 = vpack.c.bf16 %v2199, %v2195
    %v2564 = vpack.c.bf16 %v2204, %v2200
    %v2565 = vpack.c.bf16 %v2205, %v2201
    %v2566 = vpack.c.bf16 %v2206, %v2202
    %v2567 = vpack.c.bf16 %v2207, %v2203
    %v2568 = vpack.c.bf16 %v2212, %v2208
    %v2569 = vpack.c.bf16 %v2213, %v2209
    %v2570 = vpack.c.bf16 %v2214, %v2210
    %v2571 = vpack.c.bf16 %v2215, %v2211
    %v2572 = vpack.c.bf16 %v2220, %v2216
    %v2573 = vpack.c.bf16 %v2221, %v2217
    %v2574 = vpack.c.bf16 %v2222, %v2218
    %v2575 = vpack.c.bf16 %v2223, %v2219
    %v2576 = vpack.c.bf16 %v2228, %v2224
    %v2577 = vpack.c.bf16 %v2229, %v2225
    %v2578 = vpack.c.bf16 %v2230, %v2226
    %v2579 = vpack.c.bf16 %v2231, %v2227
    %v2580 = vpack.c.bf16 %v2236, %v2232
    %v2581 = vpack.c.bf16 %v2237, %v2233
    %v2582 = vpack.c.bf16 %v2238, %v2234
    %v2583 = vpack.c.bf16 %v2239, %v2235
    %v2584 = vpack.c.bf16 %v2244, %v2240
    %v2585 = vpack.c.bf16 %v2245, %v2241
    %v2586 = vpack.c.bf16 %v2246, %v2242
    %v2587 = vpack.c.bf16 %v2247, %v2243
    %v2588 = vpack.c.bf16 %v2252, %v2248
    %v2589 = vpack.c.bf16 %v2253, %v2249
    %v2590 = vpack.c.bf16 %v2254, %v2250
    %v2591 = vpack.c.bf16 %v2255, %v2251
    %v2592 = vpack.c.bf16 %v2260, %v2256
    %v2593 = vpack.c.bf16 %v2261, %v2257
    %v2594 = vpack.c.bf16 %v2262, %v2258
    %v2595 = vpack.c.bf16 %v2263, %v2259
    %v2596 = vpack.c.bf16 %v2268, %v2264
    %v2597 = vpack.c.bf16 %v2269, %v2265
    %v2598 = vpack.c.bf16 %v2270, %v2266
    %v2599 = vpack.c.bf16 %v2271, %v2267
    %v2600 = vpack.c.bf16 %v2276, %v2272
    %v2601 = vpack.c.bf16 %v2277, %v2273
    %v2602 = vpack.c.bf16 %v2278, %v2274
    %v2603 = vpack.c.bf16 %v2279, %v2275
    %v2604 = vpack.c.bf16 %v2284, %v2280
    %v2605 = vpack.c.bf16 %v2285, %v2281
    %v2606 = vpack.c.bf16 %v2286, %v2282
    %v2607 = vpack.c.bf16 %v2287, %v2283
    %v2608 = vpack.c.bf16 %v2292, %v2288
    %v2609 = vpack.c.bf16 %v2293, %v2289
    %v2610 = vpack.c.bf16 %v2294, %v2290
    %v2611 = vpack.c.bf16 %v2295, %v2291
    %v2612 = vpack.c.bf16 %v2300, %v2296
    %v2613 = vpack.c.bf16 %v2301, %v2297
    %v2614 = vpack.c.bf16 %v2302, %v2298
    %v2615 = vpack.c.bf16 %v2303, %v2299
    %v2616 = vpack.c.bf16 %v2308, %v2304
    %v2617 = vpack.c.bf16 %v2309, %v2305
    %v2618 = vpack.c.bf16 %v2310, %v2306
    %v2619 = vpack.c.bf16 %v2311, %v2307
    %v2620 = vpack.c.bf16 %v2316, %v2312
    %v2621 = vpack.c.bf16 %v2317, %v2313
    %v2622 = vpack.c.bf16 %v2318, %v2314
    %v2623 = vpack.c.bf16 %v2319, %v2315
    %v2624 = vpack.c.bf16 %v2324, %v2320
    %v2625 = vpack.c.bf16 %v2325, %v2321
    %v2626 = vpack.c.bf16 %v2326, %v2322
    %v2627 = vpack.c.bf16 %v2327, %v2323
    %v2628 = vpack.c.bf16 %v2332, %v2328
    %v2629 = vpack.c.bf16 %v2333, %v2329
    %v2630 = vpack.c.bf16 %v2334, %v2330
    %v2631 = vpack.c.bf16 %v2335, %v2331
    %v2632 = vpack.c.bf16 %v2340, %v2336
    %v2633 = vpack.c.bf16 %v2341, %v2337
    %v2634 = vpack.c.bf16 %v2342, %v2338
    %v2635 = vpack.c.bf16 %v2343, %v2339
    %v2636 = vpack.c.bf16 %v2348, %v2344
    %v2637 = vpack.c.bf16 %v2349, %v2345
    %v2638 = vpack.c.bf16 %v2350, %v2346
    %v2639 = vpack.c.bf16 %v2351, %v2347
    %v2640 = vpack.c.bf16 %v2356, %v2352
    %v2641 = vpack.c.bf16 %v2357, %v2353
    %v2642 = vpack.c.bf16 %v2358, %v2354
    %v2643 = vpack.c.bf16 %v2359, %v2355
    %v2644 = vpack.c.bf16 %v2364, %v2360
    %v2645 = vpack.c.bf16 %v2365, %v2361
    %v2646 = vpack.c.bf16 %v2366, %v2362
    %v2647 = vpack.c.bf16 %v2367, %v2363
    %v2648 = vpack.c.bf16 %v2372, %v2368
    %v2649 = vpack.c.bf16 %v2373, %v2369
    %v2650 = vpack.c.bf16 %v2374, %v2370
    %v2651 = vpack.c.bf16 %v2375, %v2371
    %v2652 = vpack.c.bf16 %v2380, %v2376
    %v2653 = vpack.c.bf16 %v2381, %v2377
    %v2654 = vpack.c.bf16 %v2382, %v2378
    %v2655 = vpack.c.bf16 %v2383, %v2379
    %v2656 = vpack.c.bf16 %v2388, %v2384
    %v2657 = vpack.c.bf16 %v2389, %v2385
    %v2658 = vpack.c.bf16 %v2390, %v2386
    %v2659 = vpack.c.bf16 %v2391, %v2387
    %v2660 = vpack.c.bf16 %v2396, %v2392
    %v2661 = vpack.c.bf16 %v2397, %v2393
    %v2662 = vpack.c.bf16 %v2398, %v2394
    %v2663 = vpack.c.bf16 %v2399, %v2395
    %v2664 = vpack.c.bf16 %v2404, %v2400
    %v2665 = vpack.c.bf16 %v2405, %v2401
    %v2666 = vpack.c.bf16 %v2406, %v2402
    %v2667 = vpack.c.bf16 %v2407, %v2403
    %v2668 = vpack.c.bf16 %v2412, %v2408
    %v2669 = vpack.c.bf16 %v2413, %v2409
    %v2670 = vpack.c.bf16 %v2414, %v2410
    %v2671 = vpack.c.bf16 %v2415, %v2411
    %2672 = vset.pattern.permute.xlu0 1
    %2673 = vperm.xlu0 %2672, %v103
    %v2674 = vpop.permute.xlu0 %2673
    %2676 = vset.pattern.permute.xlu0 1
    %2677 = vperm.xlu0 %2676, %v104
    %v2678 = vpop.permute.xlu0 %2677
    %2680 = vset.pattern.permute.xlu0 1
    %2681 = vperm.xlu0 %2680, %v105
    %v2682 = vpop.permute.xlu0 %2681
    %2684 = vset.pattern.permute.xlu0 1
    %2685 = vperm.xlu0 %2684, %v106
    %v2686 = vpop.permute.xlu0 %2685
    %2688 = vset.pattern.permute.xlu0 1
    %2689 = vperm.xlu0 %2688, %v107
    %v2690 = vpop.permute.xlu0 %2689
    %2692 = vset.pattern.permute.xlu0 1
    %2693 = vperm.xlu0 %2692, %v108
    %v2694 = vpop.permute.xlu0 %2693
    %2696 = vset.pattern.permute.xlu0 1
    %2697 = vperm.xlu0 %2696, %v109
    %v2698 = vpop.permute.xlu0 %2697
    %2700 = vset.pattern.permute.xlu0 1
    %2701 = vperm.xlu0 %2700, %v110
    %v2702 = vpop.permute.xlu0 %2701
    %2704 = vset.pattern.permute.xlu0 1
    %2705 = vperm.xlu0 %2704, %v111
    %v2706 = vpop.permute.xlu0 %2705
    %2708 = vset.pattern.permute.xlu0 1
    %2709 = vperm.xlu0 %2708, %v112
    %v2710 = vpop.permute.xlu0 %2709
    %2712 = vset.pattern.permute.xlu0 1
    %2713 = vperm.xlu0 %2712, %v113
    %v2714 = vpop.permute.xlu0 %2713
    %2716 = vset.pattern.permute.xlu0 1
    %2717 = vperm.xlu0 %2716, %v114
    %v2718 = vpop.permute.xlu0 %2717
    %2720 = vset.pattern.permute.xlu0 1
    %2721 = vperm.xlu0 %2720, %v115
    %v2722 = vpop.permute.xlu0 %2721
    %2724 = vset.pattern.permute.xlu0 1
    %2725 = vperm.xlu0 %2724, %v116
    %v2726 = vpop.permute.xlu0 %2725
    %2728 = vset.pattern.permute.xlu0 1
    %2729 = vperm.xlu0 %2728, %v117
    %v2730 = vpop.permute.xlu0 %2729
    %2732 = vset.pattern.permute.xlu0 1
    %2733 = vperm.xlu0 %2732, %v118
    %v2734 = vpop.permute.xlu0 %2733
    %2736 = vset.pattern.permute.xlu0 1
    %2737 = vperm.xlu0 %2736, %v119
    %v2738 = vpop.permute.xlu0 %2737
    %2740 = vset.pattern.permute.xlu0 1
    %2741 = vperm.xlu0 %2740, %v120
    %v2742 = vpop.permute.xlu0 %2741
    %2744 = vset.pattern.permute.xlu0 1
    %2745 = vperm.xlu0 %2744, %v121
    %v2746 = vpop.permute.xlu0 %2745
    %2748 = vset.pattern.permute.xlu0 1
    %2749 = vperm.xlu0 %2748, %v122
    %v2750 = vpop.permute.xlu0 %2749
    %2752 = vset.pattern.permute.xlu0 1
    %2753 = vperm.xlu0 %2752, %v123
    %v2754 = vpop.permute.xlu0 %2753
    %2756 = vset.pattern.permute.xlu0 1
    %2757 = vperm.xlu0 %2756, %v124
    %v2758 = vpop.permute.xlu0 %2757
    %2760 = vset.pattern.permute.xlu0 1
    %2761 = vperm.xlu0 %2760, %v125
    %v2762 = vpop.permute.xlu0 %2761
    %2764 = vset.pattern.permute.xlu0 1
    %2765 = vperm.xlu0 %2764, %v126
    %v2766 = vpop.permute.xlu0 %2765
    %2768 = vset.pattern.permute.xlu0 1
    %2769 = vperm.xlu0 %2768, %v127
    %v2770 = vpop.permute.xlu0 %2769
    %2772 = vset.pattern.permute.xlu0 1
    %2773 = vperm.xlu0 %2772, %v128
    %v2774 = vpop.permute.xlu0 %2773
    %2776 = vset.pattern.permute.xlu0 1
    %2777 = vperm.xlu0 %2776, %v129
    %v2778 = vpop.permute.xlu0 %2777
    %2780 = vset.pattern.permute.xlu0 1
    %2781 = vperm.xlu0 %2780, %v130
    %v2782 = vpop.permute.xlu0 %2781
    %2784 = vset.pattern.permute.xlu0 1
    %2785 = vperm.xlu0 %2784, %v131
    %v2786 = vpop.permute.xlu0 %2785
    %2788 = vset.pattern.permute.xlu0 1
    %2789 = vperm.xlu0 %2788, %v132
    %v2790 = vpop.permute.xlu0 %2789
    %2792 = vset.pattern.permute.xlu0 1
    %2793 = vperm.xlu0 %2792, %v133
    %v2794 = vpop.permute.xlu0 %2793
    %2796 = vset.pattern.permute.xlu0 1
    %2797 = vperm.xlu0 %2796, %v134
    %v2798 = vpop.permute.xlu0 %2797
    %2800 = vset.pattern.permute.xlu0 1
    %2801 = vperm.xlu0 %2800, %v135
    %v2802 = vpop.permute.xlu0 %2801
    %2804 = vset.pattern.permute.xlu0 1
    %2805 = vperm.xlu0 %2804, %v136
    %v2806 = vpop.permute.xlu0 %2805
    %2808 = vset.pattern.permute.xlu0 1
    %2809 = vperm.xlu0 %2808, %v137
    %v2810 = vpop.permute.xlu0 %2809
    %2812 = vset.pattern.permute.xlu0 1
    %2813 = vperm.xlu0 %2812, %v138
    %v2814 = vpop.permute.xlu0 %2813
    %2816 = vset.pattern.permute.xlu0 1
    %2817 = vperm.xlu0 %2816, %v139
    %v2818 = vpop.permute.xlu0 %2817
    %2820 = vset.pattern.permute.xlu0 1
    %2821 = vperm.xlu0 %2820, %v140
    %v2822 = vpop.permute.xlu0 %2821
    %2824 = vset.pattern.permute.xlu0 1
    %2825 = vperm.xlu0 %2824, %v141
    %v2826 = vpop.permute.xlu0 %2825
    %2828 = vset.pattern.permute.xlu0 1
    %2829 = vperm.xlu0 %2828, %v142
    %v2830 = vpop.permute.xlu0 %2829
    %2832 = vset.pattern.permute.xlu0 1
    %2833 = vperm.xlu0 %2832, %v143
    %v2834 = vpop.permute.xlu0 %2833
    %2836 = vset.pattern.permute.xlu0 1
    %2837 = vperm.xlu0 %2836, %v144
    %v2838 = vpop.permute.xlu0 %2837
    %2840 = vset.pattern.permute.xlu0 1
    %2841 = vperm.xlu0 %2840, %v145
    %v2842 = vpop.permute.xlu0 %2841
    %2844 = vset.pattern.permute.xlu0 1
    %2845 = vperm.xlu0 %2844, %v146
    %v2846 = vpop.permute.xlu0 %2845
    %2848 = vset.pattern.permute.xlu0 1
    %2849 = vperm.xlu0 %2848, %v147
    %v2850 = vpop.permute.xlu0 %2849
    %2852 = vset.pattern.permute.xlu0 1
    %2853 = vperm.xlu0 %2852, %v148
    %v2854 = vpop.permute.xlu0 %2853
    %2856 = vset.pattern.permute.xlu0 1
    %2857 = vperm.xlu0 %2856, %v149
    %v2858 = vpop.permute.xlu0 %2857
    %2860 = vset.pattern.permute.xlu0 1
    %2861 = vperm.xlu0 %2860, %v150
    %v2862 = vpop.permute.xlu0 %2861
    %2864 = vset.pattern.permute.xlu0 1
    %2865 = vperm.xlu0 %2864, %v151
    %v2866 = vpop.permute.xlu0 %2865
    %2868 = vset.pattern.permute.xlu0 1
    %2869 = vperm.xlu0 %2868, %v152
    %v2870 = vpop.permute.xlu0 %2869
    %2872 = vset.pattern.permute.xlu0 1
    %2873 = vperm.xlu0 %2872, %v153
    %v2874 = vpop.permute.xlu0 %2873
    %2876 = vset.pattern.permute.xlu0 1
    %2877 = vperm.xlu0 %2876, %v154
    %v2878 = vpop.permute.xlu0 %2877
    %2880 = vset.pattern.permute.xlu0 1
    %2881 = vperm.xlu0 %2880, %v155
    %v2882 = vpop.permute.xlu0 %2881
    %2884 = vset.pattern.permute.xlu0 1
    %2885 = vperm.xlu0 %2884, %v156
    %v2886 = vpop.permute.xlu0 %2885
    %2888 = vset.pattern.permute.xlu0 1
    %2889 = vperm.xlu0 %2888, %v157
    %v2890 = vpop.permute.xlu0 %2889
    %2892 = vset.pattern.permute.xlu0 1
    %2893 = vperm.xlu0 %2892, %v158
    %v2894 = vpop.permute.xlu0 %2893
    %2896 = vset.pattern.permute.xlu0 1
    %2897 = vperm.xlu0 %2896, %v159
    %v2898 = vpop.permute.xlu0 %2897
    %2900 = vset.pattern.permute.xlu0 1
    %2901 = vperm.xlu0 %2900, %v160
    %v2902 = vpop.permute.xlu0 %2901
    %2904 = vset.pattern.permute.xlu0 1
    %2905 = vperm.xlu0 %2904, %v161
    %v2906 = vpop.permute.xlu0 %2905
    %2908 = vset.pattern.permute.xlu0 1
    %2909 = vperm.xlu0 %2908, %v162
    %v2910 = vpop.permute.xlu0 %2909
    %2912 = vset.pattern.permute.xlu0 1
    %2913 = vperm.xlu0 %2912, %v163
    %v2914 = vpop.permute.xlu0 %2913
    %2916 = vset.pattern.permute.xlu0 1
    %2917 = vperm.xlu0 %2916, %v164
    %v2918 = vpop.permute.xlu0 %2917
    %2920 = vset.pattern.permute.xlu0 1
    %2921 = vperm.xlu0 %2920, %v165
    %v2922 = vpop.permute.xlu0 %2921
    %2924 = vset.pattern.permute.xlu0 1
    %2925 = vperm.xlu0 %2924, %v166
    %v2926 = vpop.permute.xlu0 %2925
    %v3056 = vunpack.c.l.b16 %v2416
    %v3057 = vunpack.c.h.b16 %v2416
    %v3058 = vunpack.c.l.b16 %v2417
    %v3059 = vunpack.c.h.b16 %v2417
    %v3060 = vunpack.c.l.b16 %v2418
    %v3061 = vunpack.c.h.b16 %v2418
    %v3062 = vunpack.c.l.b16 %v2419
    %v3063 = vunpack.c.h.b16 %v2419
    %v3064 = vunpack.c.l.b16 %v2420
    %v3065 = vunpack.c.h.b16 %v2420
    %v3066 = vunpack.c.l.b16 %v2421
    %v3067 = vunpack.c.h.b16 %v2421
    %v3068 = vunpack.c.l.b16 %v2422
    %v3069 = vunpack.c.h.b16 %v2422
    %v3070 = vunpack.c.l.b16 %v2423
    %v3071 = vunpack.c.h.b16 %v2423
    %v3072 = vunpack.c.l.b16 %v2424
    %v3073 = vunpack.c.h.b16 %v2424
    %v3074 = vunpack.c.l.b16 %v2425
    %v3075 = vunpack.c.h.b16 %v2425
    %v3076 = vunpack.c.l.b16 %v2426
    %v3077 = vunpack.c.h.b16 %v2426
    %v3078 = vunpack.c.l.b16 %v2427
    %v3079 = vunpack.c.h.b16 %v2427
    %v3080 = vunpack.c.l.b16 %v2428
    %v3081 = vunpack.c.h.b16 %v2428
    %v3082 = vunpack.c.l.b16 %v2429
    %v3083 = vunpack.c.h.b16 %v2429
    %v3084 = vunpack.c.l.b16 %v2430
    %v3085 = vunpack.c.h.b16 %v2430
    %v3086 = vunpack.c.l.b16 %v2431
    %v3087 = vunpack.c.h.b16 %v2431
    %v3088 = vunpack.c.l.b16 %v2432
    %v3089 = vunpack.c.h.b16 %v2432
    %v3090 = vunpack.c.l.b16 %v2433
    %v3091 = vunpack.c.h.b16 %v2433
    %v3092 = vunpack.c.l.b16 %v2434
    %v3093 = vunpack.c.h.b16 %v2434
    %v3094 = vunpack.c.l.b16 %v2435
    %v3095 = vunpack.c.h.b16 %v2435
    %v3096 = vunpack.c.l.b16 %v2436
    %v3097 = vunpack.c.h.b16 %v2436
    %v3098 = vunpack.c.l.b16 %v2437
    %v3099 = vunpack.c.h.b16 %v2437
    %v3100 = vunpack.c.l.b16 %v2438
    %v3101 = vunpack.c.h.b16 %v2438
    %v3102 = vunpack.c.l.b16 %v2439
    %v3103 = vunpack.c.h.b16 %v2439
    %v3104 = vunpack.c.l.b16 %v2440
    %v3105 = vunpack.c.h.b16 %v2440
    %v3106 = vunpack.c.l.b16 %v2441
    %v3107 = vunpack.c.h.b16 %v2441
    %v3108 = vunpack.c.l.b16 %v2442
    %v3109 = vunpack.c.h.b16 %v2442
    %v3110 = vunpack.c.l.b16 %v2443
    %v3111 = vunpack.c.h.b16 %v2443
    %v3112 = vunpack.c.l.b16 %v2444
    %v3113 = vunpack.c.h.b16 %v2444
    %v3114 = vunpack.c.l.b16 %v2445
    %v3115 = vunpack.c.h.b16 %v2445
    %v3116 = vunpack.c.l.b16 %v2446
    %v3117 = vunpack.c.h.b16 %v2446
    %v3118 = vunpack.c.l.b16 %v2447
    %v3119 = vunpack.c.h.b16 %v2447
    %v3120 = vunpack.c.l.b16 %v2448
    %v3121 = vunpack.c.h.b16 %v2448
    %v3122 = vunpack.c.l.b16 %v2449
    %v3123 = vunpack.c.h.b16 %v2449
    %v3124 = vunpack.c.l.b16 %v2450
    %v3125 = vunpack.c.h.b16 %v2450
    %v3126 = vunpack.c.l.b16 %v2451
    %v3127 = vunpack.c.h.b16 %v2451
    %v3128 = vunpack.c.l.b16 %v2452
    %v3129 = vunpack.c.h.b16 %v2452
    %v3130 = vunpack.c.l.b16 %v2453
    %v3131 = vunpack.c.h.b16 %v2453
    %v3132 = vunpack.c.l.b16 %v2454
    %v3133 = vunpack.c.h.b16 %v2454
    %v3134 = vunpack.c.l.b16 %v2455
    %v3135 = vunpack.c.h.b16 %v2455
    %v3136 = vunpack.c.l.b16 %v2456
    %v3137 = vunpack.c.h.b16 %v2456
    %v3138 = vunpack.c.l.b16 %v2457
    %v3139 = vunpack.c.h.b16 %v2457
    %v3140 = vunpack.c.l.b16 %v2458
    %v3141 = vunpack.c.h.b16 %v2458
    %v3142 = vunpack.c.l.b16 %v2459
    %v3143 = vunpack.c.h.b16 %v2459
    %v3144 = vunpack.c.l.b16 %v2460
    %v3145 = vunpack.c.h.b16 %v2460
    %v3146 = vunpack.c.l.b16 %v2461
    %v3147 = vunpack.c.h.b16 %v2461
    %v3148 = vunpack.c.l.b16 %v2462
    %v3149 = vunpack.c.h.b16 %v2462
    %v3150 = vunpack.c.l.b16 %v2463
    %v3151 = vunpack.c.h.b16 %v2463
    %v3152 = vunpack.c.l.b16 %v2464
    %v3153 = vunpack.c.h.b16 %v2464
    %v3154 = vunpack.c.l.b16 %v2465
    %v3155 = vunpack.c.h.b16 %v2465
    %v3156 = vunpack.c.l.b16 %v2466
    %v3157 = vunpack.c.h.b16 %v2466
    %v3158 = vunpack.c.l.b16 %v2467
    %v3159 = vunpack.c.h.b16 %v2467
    %v3160 = vunpack.c.l.b16 %v2468
    %v3161 = vunpack.c.h.b16 %v2468
    %v3162 = vunpack.c.l.b16 %v2469
    %v3163 = vunpack.c.h.b16 %v2469
    %v3164 = vunpack.c.l.b16 %v2470
    %v3165 = vunpack.c.h.b16 %v2470
    %v3166 = vunpack.c.l.b16 %v2471
    %v3167 = vunpack.c.h.b16 %v2471
    %v3168 = vunpack.c.l.b16 %v2472
    %v3169 = vunpack.c.h.b16 %v2472
    %v3170 = vunpack.c.l.b16 %v2473
    %v3171 = vunpack.c.h.b16 %v2473
    %v3172 = vunpack.c.l.b16 %v2474
    %v3173 = vunpack.c.h.b16 %v2474
    %v3174 = vunpack.c.l.b16 %v2475
    %v3175 = vunpack.c.h.b16 %v2475
    %v3176 = vunpack.c.l.b16 %v2476
    %v3177 = vunpack.c.h.b16 %v2476
    %v3178 = vunpack.c.l.b16 %v2477
    %v3179 = vunpack.c.h.b16 %v2477
    %v3180 = vunpack.c.l.b16 %v2478
    %v3181 = vunpack.c.h.b16 %v2478
    %v3182 = vunpack.c.l.b16 %v2479
    %v3183 = vunpack.c.h.b16 %v2479
    %v3184 = vunpack.c.l.b16 %v2480
    %v3185 = vunpack.c.h.b16 %v2480
    %v3186 = vunpack.c.l.b16 %v2481
    %v3187 = vunpack.c.h.b16 %v2481
    %v3188 = vunpack.c.l.b16 %v2482
    %v3189 = vunpack.c.h.b16 %v2482
    %v3190 = vunpack.c.l.b16 %v2483
    %v3191 = vunpack.c.h.b16 %v2483
    %v3192 = vunpack.c.l.b16 %v2484
    %v3193 = vunpack.c.h.b16 %v2484
    %v3194 = vunpack.c.l.b16 %v2485
    %v3195 = vunpack.c.h.b16 %v2485
    %v3196 = vunpack.c.l.b16 %v2486
    %v3197 = vunpack.c.h.b16 %v2486
    %v3198 = vunpack.c.l.b16 %v2487
    %v3199 = vunpack.c.h.b16 %v2487
    %v3200 = vunpack.c.l.b16 %v2488
    %v3201 = vunpack.c.h.b16 %v2488
    %v3202 = vunpack.c.l.b16 %v2489
    %v3203 = vunpack.c.h.b16 %v2489
    %v3204 = vunpack.c.l.b16 %v2490
    %v3205 = vunpack.c.h.b16 %v2490
    %v3206 = vunpack.c.l.b16 %v2491
    %v3207 = vunpack.c.h.b16 %v2491
    %v3208 = vunpack.c.l.b16 %v2492
    %v3209 = vunpack.c.h.b16 %v2492
    %v3210 = vunpack.c.l.b16 %v2493
    %v3211 = vunpack.c.h.b16 %v2493
    %v3212 = vunpack.c.l.b16 %v2494
    %v3213 = vunpack.c.h.b16 %v2494
    %v3214 = vunpack.c.l.b16 %v2495
    %v3215 = vunpack.c.h.b16 %v2495
    %v3216 = vunpack.c.l.b16 %v2496
    %v3217 = vunpack.c.h.b16 %v2496
    %v3218 = vunpack.c.l.b16 %v2497
    %v3219 = vunpack.c.h.b16 %v2497
    %v3220 = vunpack.c.l.b16 %v2498
    %v3221 = vunpack.c.h.b16 %v2498
    %v3222 = vunpack.c.l.b16 %v2499
    %v3223 = vunpack.c.h.b16 %v2499
    %v3224 = vunpack.c.l.b16 %v2500
    %v3225 = vunpack.c.h.b16 %v2500
    %v3226 = vunpack.c.l.b16 %v2501
    %v3227 = vunpack.c.h.b16 %v2501
    %v3228 = vunpack.c.l.b16 %v2502
    %v3229 = vunpack.c.h.b16 %v2502
    %v3230 = vunpack.c.l.b16 %v2503
    %v3231 = vunpack.c.h.b16 %v2503
    %v3232 = vunpack.c.l.b16 %v2504
    %v3233 = vunpack.c.h.b16 %v2504
    %v3234 = vunpack.c.l.b16 %v2505
    %v3235 = vunpack.c.h.b16 %v2505
    %v3236 = vunpack.c.l.b16 %v2506
    %v3237 = vunpack.c.h.b16 %v2506
    %v3238 = vunpack.c.l.b16 %v2507
    %v3239 = vunpack.c.h.b16 %v2507
    %v3240 = vunpack.c.l.b16 %v2508
    %v3241 = vunpack.c.h.b16 %v2508
    %v3242 = vunpack.c.l.b16 %v2509
    %v3243 = vunpack.c.h.b16 %v2509
    %v3244 = vunpack.c.l.b16 %v2510
    %v3245 = vunpack.c.h.b16 %v2510
    %v3246 = vunpack.c.l.b16 %v2511
    %v3247 = vunpack.c.h.b16 %v2511
    %v3248 = vunpack.c.l.b16 %v2512
    %v3249 = vunpack.c.h.b16 %v2512
    %v3250 = vunpack.c.l.b16 %v2513
    %v3251 = vunpack.c.h.b16 %v2513
    %v3252 = vunpack.c.l.b16 %v2514
    %v3253 = vunpack.c.h.b16 %v2514
    %v3254 = vunpack.c.l.b16 %v2515
    %v3255 = vunpack.c.h.b16 %v2515
    %v3256 = vunpack.c.l.b16 %v2516
    %v3257 = vunpack.c.h.b16 %v2516
    %v3258 = vunpack.c.l.b16 %v2517
    %v3259 = vunpack.c.h.b16 %v2517
    %v3260 = vunpack.c.l.b16 %v2518
    %v3261 = vunpack.c.h.b16 %v2518
    %v3262 = vunpack.c.l.b16 %v2519
    %v3263 = vunpack.c.h.b16 %v2519
    %v3264 = vunpack.c.l.b16 %v2520
    %v3265 = vunpack.c.h.b16 %v2520
    %v3266 = vunpack.c.l.b16 %v2521
    %v3267 = vunpack.c.h.b16 %v2521
    %v3268 = vunpack.c.l.b16 %v2522
    %v3269 = vunpack.c.h.b16 %v2522
    %v3270 = vunpack.c.l.b16 %v2523
    %v3271 = vunpack.c.h.b16 %v2523
    %v3272 = vunpack.c.l.b16 %v2524
    %v3273 = vunpack.c.h.b16 %v2524
    %v3274 = vunpack.c.l.b16 %v2525
    %v3275 = vunpack.c.h.b16 %v2525
    %v3276 = vunpack.c.l.b16 %v2526
    %v3277 = vunpack.c.h.b16 %v2526
    %v3278 = vunpack.c.l.b16 %v2527
    %v3279 = vunpack.c.h.b16 %v2527
    %v3280 = vunpack.c.l.b16 %v2528
    %v3281 = vunpack.c.h.b16 %v2528
    %v3282 = vunpack.c.l.b16 %v2529
    %v3283 = vunpack.c.h.b16 %v2529
    %v3284 = vunpack.c.l.b16 %v2530
    %v3285 = vunpack.c.h.b16 %v2530
    %v3286 = vunpack.c.l.b16 %v2531
    %v3287 = vunpack.c.h.b16 %v2531
    %v3288 = vunpack.c.l.b16 %v2532
    %v3289 = vunpack.c.h.b16 %v2532
    %v3290 = vunpack.c.l.b16 %v2533
    %v3291 = vunpack.c.h.b16 %v2533
    %v3292 = vunpack.c.l.b16 %v2534
    %v3293 = vunpack.c.h.b16 %v2534
    %v3294 = vunpack.c.l.b16 %v2535
    %v3295 = vunpack.c.h.b16 %v2535
    %v3296 = vunpack.c.l.b16 %v2536
    %v3297 = vunpack.c.h.b16 %v2536
    %v3298 = vunpack.c.l.b16 %v2537
    %v3299 = vunpack.c.h.b16 %v2537
    %v3300 = vunpack.c.l.b16 %v2538
    %v3301 = vunpack.c.h.b16 %v2538
    %v3302 = vunpack.c.l.b16 %v2539
    %v3303 = vunpack.c.h.b16 %v2539
    %v3304 = vunpack.c.l.b16 %v2540
    %v3305 = vunpack.c.h.b16 %v2540
    %v3306 = vunpack.c.l.b16 %v2541
    %v3307 = vunpack.c.h.b16 %v2541
    %v3308 = vunpack.c.l.b16 %v2542
    %v3309 = vunpack.c.h.b16 %v2542
    %v3310 = vunpack.c.l.b16 %v2543
    %v3311 = vunpack.c.h.b16 %v2543
    %v3312 = vpack.c.b16 %v3060, %v3056
    %v3313 = vpack.c.b16 %v3061, %v3057
    %v3314 = vpack.c.b16 %v3062, %v3058
    %v3315 = vpack.c.b16 %v3063, %v3059
    %v3316 = vpack.c.b16 %v3068, %v3064
    %v3317 = vpack.c.b16 %v3069, %v3065
    %v3318 = vpack.c.b16 %v3070, %v3066
    %v3319 = vpack.c.b16 %v3071, %v3067
    %v3320 = vpack.c.b16 %v3076, %v3072
    %v3321 = vpack.c.b16 %v3077, %v3073
    %v3322 = vpack.c.b16 %v3078, %v3074
    %v3323 = vpack.c.b16 %v3079, %v3075
    %v3324 = vpack.c.b16 %v3084, %v3080
    %v3325 = vpack.c.b16 %v3085, %v3081
    %v3326 = vpack.c.b16 %v3086, %v3082
    %v3327 = vpack.c.b16 %v3087, %v3083
    %v3328 = vpack.c.b16 %v3092, %v3088
    %v3329 = vpack.c.b16 %v3093, %v3089
    %v3330 = vpack.c.b16 %v3094, %v3090
    %v3331 = vpack.c.b16 %v3095, %v3091
    %v3332 = vpack.c.b16 %v3100, %v3096
    %v3333 = vpack.c.b16 %v3101, %v3097
    %v3334 = vpack.c.b16 %v3102, %v3098
    %v3335 = vpack.c.b16 %v3103, %v3099
    %v3336 = vpack.c.b16 %v3108, %v3104
    %v3337 = vpack.c.b16 %v3109, %v3105
    %v3338 = vpack.c.b16 %v3110, %v3106
    %v3339 = vpack.c.b16 %v3111, %v3107
    %v3340 = vpack.c.b16 %v3116, %v3112
    %v3341 = vpack.c.b16 %v3117, %v3113
    %v3342 = vpack.c.b16 %v3118, %v3114
    %v3343 = vpack.c.b16 %v3119, %v3115
    %v3344 = vpack.c.b16 %v3124, %v3120
    %v3345 = vpack.c.b16 %v3125, %v3121
    %v3346 = vpack.c.b16 %v3126, %v3122
    %v3347 = vpack.c.b16 %v3127, %v3123
    %v3348 = vpack.c.b16 %v3132, %v3128
    %v3349 = vpack.c.b16 %v3133, %v3129
    %v3350 = vpack.c.b16 %v3134, %v3130
    %v3351 = vpack.c.b16 %v3135, %v3131
    %v3352 = vpack.c.b16 %v3140, %v3136
    %v3353 = vpack.c.b16 %v3141, %v3137
    %v3354 = vpack.c.b16 %v3142, %v3138
    %v3355 = vpack.c.b16 %v3143, %v3139
    %v3356 = vpack.c.b16 %v3148, %v3144
    %v3357 = vpack.c.b16 %v3149, %v3145
    %v3358 = vpack.c.b16 %v3150, %v3146
    %v3359 = vpack.c.b16 %v3151, %v3147
    %v3360 = vpack.c.b16 %v3156, %v3152
    %v3361 = vpack.c.b16 %v3157, %v3153
    %v3362 = vpack.c.b16 %v3158, %v3154
    %v3363 = vpack.c.b16 %v3159, %v3155
    %v3364 = vpack.c.b16 %v3164, %v3160
    %v3365 = vpack.c.b16 %v3165, %v3161
    %v3366 = vpack.c.b16 %v3166, %v3162
    %v3367 = vpack.c.b16 %v3167, %v3163
    %v3368 = vpack.c.b16 %v3172, %v3168
    %v3369 = vpack.c.b16 %v3173, %v3169
    %v3370 = vpack.c.b16 %v3174, %v3170
    %v3371 = vpack.c.b16 %v3175, %v3171
    %v3372 = vpack.c.b16 %v3180, %v3176
    %v3373 = vpack.c.b16 %v3181, %v3177
    %v3374 = vpack.c.b16 %v3182, %v3178
    %v3375 = vpack.c.b16 %v3183, %v3179
    %v3376 = vpack.c.b16 %v3188, %v3184
    %v3377 = vpack.c.b16 %v3189, %v3185
    %v3378 = vpack.c.b16 %v3190, %v3186
    %v3379 = vpack.c.b16 %v3191, %v3187
    %v3380 = vpack.c.b16 %v3196, %v3192
    %v3381 = vpack.c.b16 %v3197, %v3193
    %v3382 = vpack.c.b16 %v3198, %v3194
    %v3383 = vpack.c.b16 %v3199, %v3195
    %v3384 = vpack.c.b16 %v3204, %v3200
    %v3385 = vpack.c.b16 %v3205, %v3201
    %v3386 = vpack.c.b16 %v3206, %v3202
    %v3387 = vpack.c.b16 %v3207, %v3203
    %v3388 = vpack.c.b16 %v3212, %v3208
    %v3389 = vpack.c.b16 %v3213, %v3209
    %v3390 = vpack.c.b16 %v3214, %v3210
    %v3391 = vpack.c.b16 %v3215, %v3211
    %v3392 = vpack.c.b16 %v3220, %v3216
    %v3393 = vpack.c.b16 %v3221, %v3217
    %v3394 = vpack.c.b16 %v3222, %v3218
    %v3395 = vpack.c.b16 %v3223, %v3219
    %v3396 = vpack.c.b16 %v3228, %v3224
    %v3397 = vpack.c.b16 %v3229, %v3225
    %v3398 = vpack.c.b16 %v3230, %v3226
    %v3399 = vpack.c.b16 %v3231, %v3227
    %v3400 = vpack.c.b16 %v3236, %v3232
    %v3401 = vpack.c.b16 %v3237, %v3233
    %v3402 = vpack.c.b16 %v3238, %v3234
    %v3403 = vpack.c.b16 %v3239, %v3235
    %v3404 = vpack.c.b16 %v3244, %v3240
    %v3405 = vpack.c.b16 %v3245, %v3241
    %v3406 = vpack.c.b16 %v3246, %v3242
    %v3407 = vpack.c.b16 %v3247, %v3243
    %v3408 = vpack.c.b16 %v3252, %v3248
    %v3409 = vpack.c.b16 %v3253, %v3249
    %v3410 = vpack.c.b16 %v3254, %v3250
    %v3411 = vpack.c.b16 %v3255, %v3251
    %v3412 = vpack.c.b16 %v3260, %v3256
    %v3413 = vpack.c.b16 %v3261, %v3257
    %v3414 = vpack.c.b16 %v3262, %v3258
    %v3415 = vpack.c.b16 %v3263, %v3259
    %v3416 = vpack.c.b16 %v3268, %v3264
    %v3417 = vpack.c.b16 %v3269, %v3265
    %v3418 = vpack.c.b16 %v3270, %v3266
    %v3419 = vpack.c.b16 %v3271, %v3267
    %v3420 = vpack.c.b16 %v3276, %v3272
    %v3421 = vpack.c.b16 %v3277, %v3273
    %v3422 = vpack.c.b16 %v3278, %v3274
    %v3423 = vpack.c.b16 %v3279, %v3275
    %v3424 = vpack.c.b16 %v3284, %v3280
    %v3425 = vpack.c.b16 %v3285, %v3281
    %v3426 = vpack.c.b16 %v3286, %v3282
    %v3427 = vpack.c.b16 %v3287, %v3283
    %v3428 = vpack.c.b16 %v3292, %v3288
    %v3429 = vpack.c.b16 %v3293, %v3289
    %v3430 = vpack.c.b16 %v3294, %v3290
    %v3431 = vpack.c.b16 %v3295, %v3291
    %v3432 = vpack.c.b16 %v3300, %v3296
    %v3433 = vpack.c.b16 %v3301, %v3297
    %v3434 = vpack.c.b16 %v3302, %v3298
    %v3435 = vpack.c.b16 %v3303, %v3299
    %v3436 = vpack.c.b16 %v3308, %v3304
    %v3437 = vpack.c.b16 %v3309, %v3305
    %v3438 = vpack.c.b16 %v3310, %v3306
    %v3439 = vpack.c.b16 %v3311, %v3307
    %3568 = vmatprep.subr.bf16.mxu0 %v2573
    %3569 = vmatpush1.bf16.msra.mxu0 %v2572
    %3570 = vmatprep.subr.bf16.mxu0 %v2569
    %3571 = vmatpush1.bf16.msra.mxu0 %v2568
    %3572 = vmatprep.subr.bf16.mxu0 %v2565
    %3573 = vmatpush1.bf16.msra.mxu0 %v2564
    %3574 = vmatprep.subr.bf16.mxu0 %v2561
    %3575 = vmatpush1.bf16.msra.mxu0 %v2560
    %3576 = vmatprep.subr.bf16.mxu0 %v2557
    %3577 = vmatpush1.bf16.msra.mxu0 %v2556
    %3578 = vmatprep.subr.bf16.mxu0 %v2553
    %3579 = vmatpush1.bf16.msra.mxu0 %v2552
    %3580 = vmatprep.subr.bf16.mxu0 %v2549
    %3581 = vmatpush1.bf16.msra.mxu0 %v2548
    %3582 = vmatprep.subr.bf16.mxu0 %v2545
    %3583 = vmatpush1.bf16.msra.mxu0 %v2544
    %3584 = vmatprep.subr.bf16.mxu0 %v2605
    %3585 = vmatpush2.bf16.msra.mxu0 %v2604
    %3586 = vmatprep.subr.bf16.mxu0 %v2601
    %3587 = vmatpush2.bf16.msra.mxu0 %v2600
    %3588 = vmatprep.subr.bf16.mxu0 %v2597
    %3589 = vmatpush2.bf16.msra.mxu0 %v2596
    %3590 = vmatprep.subr.bf16.mxu0 %v2593
    %3591 = vmatpush2.bf16.msra.mxu0 %v2592
    %3592 = vmatprep.subr.bf16.mxu0 %v2589
    %3593 = vmatpush2.bf16.msra.mxu0 %v2588
    %3594 = vmatprep.subr.bf16.mxu0 %v2585
    %3595 = vmatpush2.bf16.msra.mxu0 %v2584
    %3596 = vmatprep.subr.bf16.mxu0 %v2581
    %3597 = vmatpush2.bf16.msra.mxu0 %v2580
    %3598 = vmatprep.subr.bf16.mxu0 %v2577
    %3599 = vmatpush2.bf16.msra.mxu0 %v2576
    %3600 = vmatprep.mubr.bf16.mxu0 %v3313
    %3601 = vmatmul.mubr.bf16.gmra.mxu0 %v3312
    %v3602 = vpop.f32.mrf.mxu0
    %v3603 = vadd.f32 %v2674, %v3602
    %v3604 = vpop.f32.mrf.mxu0
    %v3605 = vadd.f32 %v2674, %v3604
    %v3606 = vpop.f32.mrf.mxu0
    %v3607 = vadd.f32 %v2678, %v3606
    %v3608 = vpop.f32.mrf.mxu0
    %v3609 = vadd.f32 %v2678, %v3608
    %3610 = vmatprep.mubr.bf16.mxu0 %v3317
    %3611 = vmatmul.mubr.bf16.gmra.mxu0 %v3316
    %v3612 = vpop.f32.mrf.mxu0
    %v3613 = vadd.f32 %v2682, %v3612
    %v3614 = vpop.f32.mrf.mxu0
    %v3615 = vadd.f32 %v2682, %v3614
    %v3616 = vpop.f32.mrf.mxu0
    %v3617 = vadd.f32 %v2686, %v3616
    %v3618 = vpop.f32.mrf.mxu0
    %v3619 = vadd.f32 %v2686, %v3618
    %3620 = vmatprep.mubr.bf16.mxu0 %v3321
    %3621 = vmatmul.mubr.bf16.gmra.mxu0 %v3320
    %v3622 = vpop.f32.mrf.mxu0
    %v3623 = vadd.f32 %v2690, %v3622
    %v3624 = vpop.f32.mrf.mxu0
    %v3625 = vadd.f32 %v2690, %v3624
    %v3626 = vpop.f32.mrf.mxu0
    %v3627 = vadd.f32 %v2694, %v3626
    %v3628 = vpop.f32.mrf.mxu0
    %v3629 = vadd.f32 %v2694, %v3628
    %3630 = vmatprep.mubr.bf16.mxu0 %v3325
    %3631 = vmatmul.mubr.bf16.gmra.mxu0 %v3324
    %v3632 = vpop.f32.mrf.mxu0
    %v3633 = vadd.f32 %v2698, %v3632
    %v3634 = vpop.f32.mrf.mxu0
    %v3635 = vadd.f32 %v2698, %v3634
    %v3636 = vpop.f32.mrf.mxu0
    %v3637 = vadd.f32 %v2702, %v3636
    %v3638 = vpop.f32.mrf.mxu0
    %v3639 = vadd.f32 %v2702, %v3638
    %3640 = vmatprep.mubr.bf16.mxu0 %v3329
    %3641 = vmatmul.mubr.bf16.gmra.mxu0 %v3328
    %v3642 = vpop.f32.mrf.mxu0
    %v3643 = vadd.f32 %v2706, %v3642
    %v3644 = vpop.f32.mrf.mxu0
    %v3645 = vadd.f32 %v2706, %v3644
    %v3646 = vpop.f32.mrf.mxu0
    %v3647 = vadd.f32 %v2710, %v3646
    %v3648 = vpop.f32.mrf.mxu0
    %v3649 = vadd.f32 %v2710, %v3648
    %3650 = vmatprep.mubr.bf16.mxu0 %v3333
    %3651 = vmatmul.mubr.bf16.gmra.mxu0 %v3332
    %v3652 = vpop.f32.mrf.mxu0
    %v3653 = vadd.f32 %v2714, %v3652
    %v3654 = vpop.f32.mrf.mxu0
    %v3655 = vadd.f32 %v2714, %v3654
    %v3656 = vpop.f32.mrf.mxu0
    %v3657 = vadd.f32 %v2718, %v3656
    %v3658 = vpop.f32.mrf.mxu0
    %v3659 = vadd.f32 %v2718, %v3658
    %3660 = vmatprep.mubr.bf16.mxu0 %v3337
    %3661 = vmatmul.mubr.bf16.gmra.mxu0 %v3336
    %v3662 = vpop.f32.mrf.mxu0
    %v3663 = vadd.f32 %v2722, %v3662
    %v3664 = vpop.f32.mrf.mxu0
    %v3665 = vadd.f32 %v2722, %v3664
    %v3666 = vpop.f32.mrf.mxu0
    %v3667 = vadd.f32 %v2726, %v3666
    %v3668 = vpop.f32.mrf.mxu0
    %v3669 = vadd.f32 %v2726, %v3668
    %3670 = vmatprep.mubr.bf16.mxu0 %v3341
    %3671 = vmatmul.mubr.bf16.gmra.mxu0 %v3340
    %v3672 = vpop.f32.mrf.mxu0
    %v3673 = vadd.f32 %v2730, %v3672
    %v3674 = vpop.f32.mrf.mxu0
    %v3675 = vadd.f32 %v2730, %v3674
    %v3676 = vpop.f32.mrf.mxu0
    %v3677 = vadd.f32 %v2734, %v3676
    %v3678 = vpop.f32.mrf.mxu0
    %v3679 = vadd.f32 %v2734, %v3678
    %3680 = vmatprep.mubr.bf16.mxu0 %v3345
    %3681 = vmatmul.mubr.bf16.gmra.mxu0 %v3344
    %v3682 = vpop.f32.mrf.mxu0
    %v3683 = vadd.f32 %v2738, %v3682
    %v3684 = vpop.f32.mrf.mxu0
    %v3685 = vadd.f32 %v2738, %v3684
    %v3686 = vpop.f32.mrf.mxu0
    %v3687 = vadd.f32 %v2742, %v3686
    %v3688 = vpop.f32.mrf.mxu0
    %v3689 = vadd.f32 %v2742, %v3688
    %3690 = vmatprep.mubr.bf16.mxu0 %v3349
    %3691 = vmatmul.mubr.bf16.gmra.mxu0 %v3348
    %v3692 = vpop.f32.mrf.mxu0
    %v3693 = vadd.f32 %v2746, %v3692
    %v3694 = vpop.f32.mrf.mxu0
    %v3695 = vadd.f32 %v2746, %v3694
    %v3696 = vpop.f32.mrf.mxu0
    %v3697 = vadd.f32 %v2750, %v3696
    %v3698 = vpop.f32.mrf.mxu0
    %v3699 = vadd.f32 %v2750, %v3698
    %3700 = vmatprep.mubr.bf16.mxu0 %v3353
    %3701 = vmatmul.mubr.bf16.gmra.mxu0 %v3352
    %v3702 = vpop.f32.mrf.mxu0
    %v3703 = vadd.f32 %v2754, %v3702
    %v3704 = vpop.f32.mrf.mxu0
    %v3705 = vadd.f32 %v2754, %v3704
    %v3706 = vpop.f32.mrf.mxu0
    %v3707 = vadd.f32 %v2758, %v3706
    %v3708 = vpop.f32.mrf.mxu0
    %v3709 = vadd.f32 %v2758, %v3708
    %3710 = vmatprep.mubr.bf16.mxu0 %v3357
    %3711 = vmatmul.mubr.bf16.gmra.mxu0 %v3356
    %v3712 = vpop.f32.mrf.mxu0
    %v3713 = vadd.f32 %v2762, %v3712
    %v3714 = vpop.f32.mrf.mxu0
    %v3715 = vadd.f32 %v2762, %v3714
    %v3716 = vpop.f32.mrf.mxu0
    %v3717 = vadd.f32 %v2766, %v3716
    %v3718 = vpop.f32.mrf.mxu0
    %v3719 = vadd.f32 %v2766, %v3718
    %3720 = vmatprep.mubr.bf16.mxu0 %v3361
    %3721 = vmatmul.mubr.bf16.gmra.mxu0 %v3360
    %v3722 = vpop.f32.mrf.mxu0
    %v3723 = vadd.f32 %v2770, %v3722
    %v3724 = vpop.f32.mrf.mxu0
    %v3725 = vadd.f32 %v2770, %v3724
    %v3726 = vpop.f32.mrf.mxu0
    %v3727 = vadd.f32 %v2774, %v3726
    %v3728 = vpop.f32.mrf.mxu0
    %v3729 = vadd.f32 %v2774, %v3728
    %3730 = vmatprep.mubr.bf16.mxu0 %v3365
    %3731 = vmatmul.mubr.bf16.gmra.mxu0 %v3364
    %v3732 = vpop.f32.mrf.mxu0
    %v3733 = vadd.f32 %v2778, %v3732
    %v3734 = vpop.f32.mrf.mxu0
    %v3735 = vadd.f32 %v2778, %v3734
    %v3736 = vpop.f32.mrf.mxu0
    %v3737 = vadd.f32 %v2782, %v3736
    %v3738 = vpop.f32.mrf.mxu0
    %v3739 = vadd.f32 %v2782, %v3738
    %3740 = vmatprep.mubr.bf16.mxu0 %v3369
    %3741 = vmatmul.mubr.bf16.gmra.mxu0 %v3368
    %v3742 = vpop.f32.mrf.mxu0
    %v3743 = vadd.f32 %v2786, %v3742
    %v3744 = vpop.f32.mrf.mxu0
    %v3745 = vadd.f32 %v2786, %v3744
    %v3746 = vpop.f32.mrf.mxu0
    %v3747 = vadd.f32 %v2790, %v3746
    %v3748 = vpop.f32.mrf.mxu0
    %v3749 = vadd.f32 %v2790, %v3748
    %3750 = vmatprep.mubr.bf16.mxu0 %v3373
    %3751 = vmatmul.mubr.bf16.gmra.mxu0 %v3372
    %v3752 = vpop.f32.mrf.mxu0
    %v3753 = vadd.f32 %v2794, %v3752
    %v3754 = vpop.f32.mrf.mxu0
    %v3755 = vadd.f32 %v2794, %v3754
    %v3756 = vpop.f32.mrf.mxu0
    %v3757 = vadd.f32 %v2798, %v3756
    %v3758 = vpop.f32.mrf.mxu0
    %v3759 = vadd.f32 %v2798, %v3758
    %3760 = vmatprep.mubr.bf16.mxu0 %v3377
    %3761 = vmatmul.mubr.bf16.gmra.mxu0 %v3376
    %v3762 = vpop.f32.mrf.mxu0
    %v3763 = vadd.f32 %v2802, %v3762
    %v3764 = vpop.f32.mrf.mxu0
    %v3765 = vadd.f32 %v2802, %v3764
    %v3766 = vpop.f32.mrf.mxu0
    %v3767 = vadd.f32 %v2806, %v3766
    %v3768 = vpop.f32.mrf.mxu0
    %v3769 = vadd.f32 %v2806, %v3768
    %3770 = vmatprep.mubr.bf16.mxu0 %v3381
    %3771 = vmatmul.mubr.bf16.gmra.mxu0 %v3380
    %v3772 = vpop.f32.mrf.mxu0
    %v3773 = vadd.f32 %v2810, %v3772
    %v3774 = vpop.f32.mrf.mxu0
    %v3775 = vadd.f32 %v2810, %v3774
    %v3776 = vpop.f32.mrf.mxu0
    %v3777 = vadd.f32 %v2814, %v3776
    %v3778 = vpop.f32.mrf.mxu0
    %v3779 = vadd.f32 %v2814, %v3778
    %3780 = vmatprep.mubr.bf16.mxu0 %v3385
    %3781 = vmatmul.mubr.bf16.gmra.mxu0 %v3384
    %v3782 = vpop.f32.mrf.mxu0
    %v3783 = vadd.f32 %v2818, %v3782
    %v3784 = vpop.f32.mrf.mxu0
    %v3785 = vadd.f32 %v2818, %v3784
    %v3786 = vpop.f32.mrf.mxu0
    %v3787 = vadd.f32 %v2822, %v3786
    %v3788 = vpop.f32.mrf.mxu0
    %v3789 = vadd.f32 %v2822, %v3788
    %3790 = vmatprep.mubr.bf16.mxu0 %v3389
    %3791 = vmatmul.mubr.bf16.gmra.mxu0 %v3388
    %v3792 = vpop.f32.mrf.mxu0
    %v3793 = vadd.f32 %v2826, %v3792
    %v3794 = vpop.f32.mrf.mxu0
    %v3795 = vadd.f32 %v2826, %v3794
    %v3796 = vpop.f32.mrf.mxu0
    %v3797 = vadd.f32 %v2830, %v3796
    %v3798 = vpop.f32.mrf.mxu0
    %v3799 = vadd.f32 %v2830, %v3798
    %3800 = vmatprep.mubr.bf16.mxu0 %v3393
    %3801 = vmatmul.mubr.bf16.gmra.mxu0 %v3392
    %v3802 = vpop.f32.mrf.mxu0
    %v3803 = vadd.f32 %v2834, %v3802
    %v3804 = vpop.f32.mrf.mxu0
    %v3805 = vadd.f32 %v2834, %v3804
    %v3806 = vpop.f32.mrf.mxu0
    %v3807 = vadd.f32 %v2838, %v3806
    %v3808 = vpop.f32.mrf.mxu0
    %v3809 = vadd.f32 %v2838, %v3808
    %3810 = vmatprep.mubr.bf16.mxu0 %v3397
    %3811 = vmatmul.mubr.bf16.gmra.mxu0 %v3396
    %v3812 = vpop.f32.mrf.mxu0
    %v3813 = vadd.f32 %v2842, %v3812
    %v3814 = vpop.f32.mrf.mxu0
    %v3815 = vadd.f32 %v2842, %v3814
    %v3816 = vpop.f32.mrf.mxu0
    %v3817 = vadd.f32 %v2846, %v3816
    %v3818 = vpop.f32.mrf.mxu0
    %v3819 = vadd.f32 %v2846, %v3818
    %3820 = vmatprep.mubr.bf16.mxu0 %v3401
    %3821 = vmatmul.mubr.bf16.gmra.mxu0 %v3400
    %v3822 = vpop.f32.mrf.mxu0
    %v3823 = vadd.f32 %v2850, %v3822
    %v3824 = vpop.f32.mrf.mxu0
    %v3825 = vadd.f32 %v2850, %v3824
    %v3826 = vpop.f32.mrf.mxu0
    %v3827 = vadd.f32 %v2854, %v3826
    %v3828 = vpop.f32.mrf.mxu0
    %v3829 = vadd.f32 %v2854, %v3828
    %3830 = vmatprep.mubr.bf16.mxu0 %v3405
    %3831 = vmatmul.mubr.bf16.gmra.mxu0 %v3404
    %v3832 = vpop.f32.mrf.mxu0
    %v3833 = vadd.f32 %v2858, %v3832
    %v3834 = vpop.f32.mrf.mxu0
    %v3835 = vadd.f32 %v2858, %v3834
    %v3836 = vpop.f32.mrf.mxu0
    %v3837 = vadd.f32 %v2862, %v3836
    %v3838 = vpop.f32.mrf.mxu0
    %v3839 = vadd.f32 %v2862, %v3838
    %3840 = vmatprep.mubr.bf16.mxu0 %v3409
    %3841 = vmatmul.mubr.bf16.gmra.mxu0 %v3408
    %v3842 = vpop.f32.mrf.mxu0
    %v3843 = vadd.f32 %v2866, %v3842
    %v3844 = vpop.f32.mrf.mxu0
    %v3845 = vadd.f32 %v2866, %v3844
    %v3846 = vpop.f32.mrf.mxu0
    %v3847 = vadd.f32 %v2870, %v3846
    %v3848 = vpop.f32.mrf.mxu0
    %v3849 = vadd.f32 %v2870, %v3848
    %3850 = vmatprep.mubr.bf16.mxu0 %v3413
    %3851 = vmatmul.mubr.bf16.gmra.mxu0 %v3412
    %v3852 = vpop.f32.mrf.mxu0
    %v3853 = vadd.f32 %v2874, %v3852
    %v3854 = vpop.f32.mrf.mxu0
    %v3855 = vadd.f32 %v2874, %v3854
    %v3856 = vpop.f32.mrf.mxu0
    %v3857 = vadd.f32 %v2878, %v3856
    %v3858 = vpop.f32.mrf.mxu0
    %v3859 = vadd.f32 %v2878, %v3858
    %3860 = vmatprep.mubr.bf16.mxu0 %v3417
    %3861 = vmatmul.mubr.bf16.gmra.mxu0 %v3416
    %v3862 = vpop.f32.mrf.mxu0
    %v3863 = vadd.f32 %v2882, %v3862
    %v3864 = vpop.f32.mrf.mxu0
    %v3865 = vadd.f32 %v2882, %v3864
    %v3866 = vpop.f32.mrf.mxu0
    %v3867 = vadd.f32 %v2886, %v3866
    %v3868 = vpop.f32.mrf.mxu0
    %v3869 = vadd.f32 %v2886, %v3868
    %3870 = vmatprep.mubr.bf16.mxu0 %v3421
    %3871 = vmatmul.mubr.bf16.gmra.mxu0 %v3420
    %v3872 = vpop.f32.mrf.mxu0
    %v3873 = vadd.f32 %v2890, %v3872
    %v3874 = vpop.f32.mrf.mxu0
    %v3875 = vadd.f32 %v2890, %v3874
    %v3876 = vpop.f32.mrf.mxu0
    %v3877 = vadd.f32 %v2894, %v3876
    %v3878 = vpop.f32.mrf.mxu0
    %v3879 = vadd.f32 %v2894, %v3878
    %3880 = vmatprep.mubr.bf16.mxu0 %v3425
    %3881 = vmatmul.mubr.bf16.gmra.mxu0 %v3424
    %v3882 = vpop.f32.mrf.mxu0
    %v3883 = vadd.f32 %v2898, %v3882
    %v3884 = vpop.f32.mrf.mxu0
    %v3885 = vadd.f32 %v2898, %v3884
    %v3886 = vpop.f32.mrf.mxu0
    %v3887 = vadd.f32 %v2902, %v3886
    %v3888 = vpop.f32.mrf.mxu0
    %v3889 = vadd.f32 %v2902, %v3888
    %3890 = vmatprep.mubr.bf16.mxu0 %v3429
    %3891 = vmatmul.mubr.bf16.gmra.mxu0 %v3428
    %v3892 = vpop.f32.mrf.mxu0
    %v3893 = vadd.f32 %v2906, %v3892
    %v3894 = vpop.f32.mrf.mxu0
    %v3895 = vadd.f32 %v2906, %v3894
    %v3896 = vpop.f32.mrf.mxu0
    %v3897 = vadd.f32 %v2910, %v3896
    %v3898 = vpop.f32.mrf.mxu0
    %v3899 = vadd.f32 %v2910, %v3898
    %3900 = vmatprep.mubr.bf16.mxu0 %v3433
    %3901 = vmatmul.mubr.bf16.gmra.mxu0 %v3432
    %v3902 = vpop.f32.mrf.mxu0
    %v3903 = vadd.f32 %v2914, %v3902
    %v3904 = vpop.f32.mrf.mxu0
    %v3905 = vadd.f32 %v2914, %v3904
    %v3906 = vpop.f32.mrf.mxu0
    %v3907 = vadd.f32 %v2918, %v3906
    %v3908 = vpop.f32.mrf.mxu0
    %v3909 = vadd.f32 %v2918, %v3908
    %3910 = vmatprep.mubr.bf16.mxu0 %v3437
    %3911 = vmatmul.mubr.bf16.gmra.mxu0 %v3436
    %v3912 = vpop.f32.mrf.mxu0
    %v3913 = vadd.f32 %v2922, %v3912
    %v3914 = vpop.f32.mrf.mxu0
    %v3915 = vadd.f32 %v2922, %v3914
    %v3916 = vpop.f32.mrf.mxu0
    %v3917 = vadd.f32 %v2926, %v3916
    %v3918 = vpop.f32.mrf.mxu0
    %v3919 = vadd.f32 %v2926, %v3918
    %3920 = vdwg.mxu0
    %3921 = vmatprep.subr.bf16.mxu0 %v2637
    %3922 = vmatpush1.bf16.msra.mxu0 %v2636
    %3923 = vmatprep.subr.bf16.mxu0 %v2633
    %3924 = vmatpush1.bf16.msra.mxu0 %v2632
    %3925 = vmatprep.subr.bf16.mxu0 %v2629
    %3926 = vmatpush1.bf16.msra.mxu0 %v2628
    %3927 = vmatprep.subr.bf16.mxu0 %v2625
    %3928 = vmatpush1.bf16.msra.mxu0 %v2624
    %3929 = vmatprep.subr.bf16.mxu0 %v2621
    %3930 = vmatpush1.bf16.msra.mxu0 %v2620
    %3931 = vmatprep.subr.bf16.mxu0 %v2617
    %3932 = vmatpush1.bf16.msra.mxu0 %v2616
    %3933 = vmatprep.subr.bf16.mxu0 %v2613
    %3934 = vmatpush1.bf16.msra.mxu0 %v2612
    %3935 = vmatprep.subr.bf16.mxu0 %v2609
    %3936 = vmatpush1.bf16.msra.mxu0 %v2608
    %3937 = vmatprep.subr.bf16.mxu0 %v2669
    %3938 = vmatpush2.bf16.msra.mxu0 %v2668
    %3939 = vmatprep.subr.bf16.mxu0 %v2665
    %3940 = vmatpush2.bf16.msra.mxu0 %v2664
    %3941 = vmatprep.subr.bf16.mxu0 %v2661
    %3942 = vmatpush2.bf16.msra.mxu0 %v2660
    %3943 = vmatprep.subr.bf16.mxu0 %v2657
    %3944 = vmatpush2.bf16.msra.mxu0 %v2656
    %3945 = vmatprep.subr.bf16.mxu0 %v2653
    %3946 = vmatpush2.bf16.msra.mxu0 %v2652
    %3947 = vmatprep.subr.bf16.mxu0 %v2649
    %3948 = vmatpush2.bf16.msra.mxu0 %v2648
    %3949 = vmatprep.subr.bf16.mxu0 %v2645
    %3950 = vmatpush2.bf16.msra.mxu0 %v2644
    %3951 = vmatprep.subr.bf16.mxu0 %v2641
    %3952 = vmatpush2.bf16.msra.mxu0 %v2640
    %3953 = vmatprep.mubr.bf16.mxu0 %v3315
    %3954 = vmatmul.mubr.bf16.gmra.mxu0 %v3314
    %v3955 = vpop.f32.mrf.mxu0
    %v3956 = vadd.f32 %v3603, %v3955
    %v3957 = vpop.f32.mrf.mxu0
    %v3958 = vadd.f32 %v3605, %v3957
    %v3959 = vpop.f32.mrf.mxu0
    %v3960 = vadd.f32 %v3607, %v3959
    %v3961 = vpop.f32.mrf.mxu0
    %v3962 = vadd.f32 %v3609, %v3961
    %3963 = vmatprep.mubr.bf16.mxu0 %v3319
    %3964 = vmatmul.mubr.bf16.gmra.mxu0 %v3318
    %v3965 = vpop.f32.mrf.mxu0
    %v3966 = vadd.f32 %v3613, %v3965
    %v3967 = vpop.f32.mrf.mxu0
    %v3968 = vadd.f32 %v3615, %v3967
    %v3969 = vpop.f32.mrf.mxu0
    %v3970 = vadd.f32 %v3617, %v3969
    %v3971 = vpop.f32.mrf.mxu0
    %v3972 = vadd.f32 %v3619, %v3971
    %3973 = vmatprep.mubr.bf16.mxu0 %v3323
    %3974 = vmatmul.mubr.bf16.gmra.mxu0 %v3322
    %v3975 = vpop.f32.mrf.mxu0
    %v3976 = vadd.f32 %v3623, %v3975
    %v3977 = vpop.f32.mrf.mxu0
    %v3978 = vadd.f32 %v3625, %v3977
    %v3979 = vpop.f32.mrf.mxu0
    %v3980 = vadd.f32 %v3627, %v3979
    %v3981 = vpop.f32.mrf.mxu0
    %v3982 = vadd.f32 %v3629, %v3981
    %3983 = vmatprep.mubr.bf16.mxu0 %v3327
    %3984 = vmatmul.mubr.bf16.gmra.mxu0 %v3326
    %v3985 = vpop.f32.mrf.mxu0
    %v3986 = vadd.f32 %v3633, %v3985
    %v3987 = vpop.f32.mrf.mxu0
    %v3988 = vadd.f32 %v3635, %v3987
    %v3989 = vpop.f32.mrf.mxu0
    %v3990 = vadd.f32 %v3637, %v3989
    %v3991 = vpop.f32.mrf.mxu0
    %v3992 = vadd.f32 %v3639, %v3991
    %3993 = vmatprep.mubr.bf16.mxu0 %v3331
    %3994 = vmatmul.mubr.bf16.gmra.mxu0 %v3330
    %v3995 = vpop.f32.mrf.mxu0
    %v3996 = vadd.f32 %v3643, %v3995
    %v3997 = vpop.f32.mrf.mxu0
    %v3998 = vadd.f32 %v3645, %v3997
    %v3999 = vpop.f32.mrf.mxu0
    %v4000 = vadd.f32 %v3647, %v3999
    %v4001 = vpop.f32.mrf.mxu0
    %v4002 = vadd.f32 %v3649, %v4001
    %4003 = vmatprep.mubr.bf16.mxu0 %v3335
    %4004 = vmatmul.mubr.bf16.gmra.mxu0 %v3334
    %v4005 = vpop.f32.mrf.mxu0
    %v4006 = vadd.f32 %v3653, %v4005
    %v4007 = vpop.f32.mrf.mxu0
    %v4008 = vadd.f32 %v3655, %v4007
    %v4009 = vpop.f32.mrf.mxu0
    %v4010 = vadd.f32 %v3657, %v4009
    %v4011 = vpop.f32.mrf.mxu0
    %v4012 = vadd.f32 %v3659, %v4011
    %4013 = vmatprep.mubr.bf16.mxu0 %v3339
    %4014 = vmatmul.mubr.bf16.gmra.mxu0 %v3338
    %v4015 = vpop.f32.mrf.mxu0
    %v4016 = vadd.f32 %v3663, %v4015
    %v4017 = vpop.f32.mrf.mxu0
    %v4018 = vadd.f32 %v3665, %v4017
    %v4019 = vpop.f32.mrf.mxu0
    %v4020 = vadd.f32 %v3667, %v4019
    %v4021 = vpop.f32.mrf.mxu0
    %v4022 = vadd.f32 %v3669, %v4021
    %4023 = vmatprep.mubr.bf16.mxu0 %v3343
    %4024 = vmatmul.mubr.bf16.gmra.mxu0 %v3342
    %v4025 = vpop.f32.mrf.mxu0
    %v4026 = vadd.f32 %v3673, %v4025
    %v4027 = vpop.f32.mrf.mxu0
    %v4028 = vadd.f32 %v3675, %v4027
    %v4029 = vpop.f32.mrf.mxu0
    %v4030 = vadd.f32 %v3677, %v4029
    %v4031 = vpop.f32.mrf.mxu0
    %v4032 = vadd.f32 %v3679, %v4031
    %4033 = vmatprep.mubr.bf16.mxu0 %v3347
    %4034 = vmatmul.mubr.bf16.gmra.mxu0 %v3346
    %v4035 = vpop.f32.mrf.mxu0
    %v4036 = vadd.f32 %v3683, %v4035
    %v4037 = vpop.f32.mrf.mxu0
    %v4038 = vadd.f32 %v3685, %v4037
    %v4039 = vpop.f32.mrf.mxu0
    %v4040 = vadd.f32 %v3687, %v4039
    %v4041 = vpop.f32.mrf.mxu0
    %v4042 = vadd.f32 %v3689, %v4041
    %4043 = vmatprep.mubr.bf16.mxu0 %v3351
    %4044 = vmatmul.mubr.bf16.gmra.mxu0 %v3350
    %v4045 = vpop.f32.mrf.mxu0
    %v4046 = vadd.f32 %v3693, %v4045
    %v4047 = vpop.f32.mrf.mxu0
    %v4048 = vadd.f32 %v3695, %v4047
    %v4049 = vpop.f32.mrf.mxu0
    %v4050 = vadd.f32 %v3697, %v4049
    %v4051 = vpop.f32.mrf.mxu0
    %v4052 = vadd.f32 %v3699, %v4051
    %4053 = vmatprep.mubr.bf16.mxu0 %v3355
    %4054 = vmatmul.mubr.bf16.gmra.mxu0 %v3354
    %v4055 = vpop.f32.mrf.mxu0
    %v4056 = vadd.f32 %v3703, %v4055
    %v4057 = vpop.f32.mrf.mxu0
    %v4058 = vadd.f32 %v3705, %v4057
    %v4059 = vpop.f32.mrf.mxu0
    %v4060 = vadd.f32 %v3707, %v4059
    %v4061 = vpop.f32.mrf.mxu0
    %v4062 = vadd.f32 %v3709, %v4061
    %4063 = vmatprep.mubr.bf16.mxu0 %v3359
    %4064 = vmatmul.mubr.bf16.gmra.mxu0 %v3358
    %v4065 = vpop.f32.mrf.mxu0
    %v4066 = vadd.f32 %v3713, %v4065
    %v4067 = vpop.f32.mrf.mxu0
    %v4068 = vadd.f32 %v3715, %v4067
    %v4069 = vpop.f32.mrf.mxu0
    %v4070 = vadd.f32 %v3717, %v4069
    %v4071 = vpop.f32.mrf.mxu0
    %v4072 = vadd.f32 %v3719, %v4071
    %4073 = vmatprep.mubr.bf16.mxu0 %v3363
    %4074 = vmatmul.mubr.bf16.gmra.mxu0 %v3362
    %v4075 = vpop.f32.mrf.mxu0
    %v4076 = vadd.f32 %v3723, %v4075
    %v4077 = vpop.f32.mrf.mxu0
    %v4078 = vadd.f32 %v3725, %v4077
    %v4079 = vpop.f32.mrf.mxu0
    %v4080 = vadd.f32 %v3727, %v4079
    %v4081 = vpop.f32.mrf.mxu0
    %v4082 = vadd.f32 %v3729, %v4081
    %4083 = vmatprep.mubr.bf16.mxu0 %v3367
    %4084 = vmatmul.mubr.bf16.gmra.mxu0 %v3366
    %v4085 = vpop.f32.mrf.mxu0
    %v4086 = vadd.f32 %v3733, %v4085
    %v4087 = vpop.f32.mrf.mxu0
    %v4088 = vadd.f32 %v3735, %v4087
    %v4089 = vpop.f32.mrf.mxu0
    %v4090 = vadd.f32 %v3737, %v4089
    %v4091 = vpop.f32.mrf.mxu0
    %v4092 = vadd.f32 %v3739, %v4091
    %4093 = vmatprep.mubr.bf16.mxu0 %v3371
    %4094 = vmatmul.mubr.bf16.gmra.mxu0 %v3370
    %v4095 = vpop.f32.mrf.mxu0
    %v4096 = vadd.f32 %v3743, %v4095
    %v4097 = vpop.f32.mrf.mxu0
    %v4098 = vadd.f32 %v3745, %v4097
    %v4099 = vpop.f32.mrf.mxu0
    %v4100 = vadd.f32 %v3747, %v4099
    %v4101 = vpop.f32.mrf.mxu0
    %v4102 = vadd.f32 %v3749, %v4101
    %4103 = vmatprep.mubr.bf16.mxu0 %v3375
    %4104 = vmatmul.mubr.bf16.gmra.mxu0 %v3374
    %v4105 = vpop.f32.mrf.mxu0
    %v4106 = vadd.f32 %v3753, %v4105
    %v4107 = vpop.f32.mrf.mxu0
    %v4108 = vadd.f32 %v3755, %v4107
    %v4109 = vpop.f32.mrf.mxu0
    %v4110 = vadd.f32 %v3757, %v4109
    %v4111 = vpop.f32.mrf.mxu0
    %v4112 = vadd.f32 %v3759, %v4111
    %4113 = vmatprep.mubr.bf16.mxu0 %v3379
    %4114 = vmatmul.mubr.bf16.gmra.mxu0 %v3378
    %v4115 = vpop.f32.mrf.mxu0
    %v4116 = vadd.f32 %v3763, %v4115
    %v4117 = vpop.f32.mrf.mxu0
    %v4118 = vadd.f32 %v3765, %v4117
    %v4119 = vpop.f32.mrf.mxu0
    %v4120 = vadd.f32 %v3767, %v4119
    %v4121 = vpop.f32.mrf.mxu0
    %v4122 = vadd.f32 %v3769, %v4121
    %4123 = vmatprep.mubr.bf16.mxu0 %v3383
    %4124 = vmatmul.mubr.bf16.gmra.mxu0 %v3382
    %v4125 = vpop.f32.mrf.mxu0
    %v4126 = vadd.f32 %v3773, %v4125
    %v4127 = vpop.f32.mrf.mxu0
    %v4128 = vadd.f32 %v3775, %v4127
    %v4129 = vpop.f32.mrf.mxu0
    %v4130 = vadd.f32 %v3777, %v4129
    %v4131 = vpop.f32.mrf.mxu0
    %v4132 = vadd.f32 %v3779, %v4131
    %4133 = vmatprep.mubr.bf16.mxu0 %v3387
    %4134 = vmatmul.mubr.bf16.gmra.mxu0 %v3386
    %v4135 = vpop.f32.mrf.mxu0
    %v4136 = vadd.f32 %v3783, %v4135
    %v4137 = vpop.f32.mrf.mxu0
    %v4138 = vadd.f32 %v3785, %v4137
    %v4139 = vpop.f32.mrf.mxu0
    %v4140 = vadd.f32 %v3787, %v4139
    %v4141 = vpop.f32.mrf.mxu0
    %v4142 = vadd.f32 %v3789, %v4141
    %4143 = vmatprep.mubr.bf16.mxu0 %v3391
    %4144 = vmatmul.mubr.bf16.gmra.mxu0 %v3390
    %v4145 = vpop.f32.mrf.mxu0
    %v4146 = vadd.f32 %v3793, %v4145
    %v4147 = vpop.f32.mrf.mxu0
    %v4148 = vadd.f32 %v3795, %v4147
    %v4149 = vpop.f32.mrf.mxu0
    %v4150 = vadd.f32 %v3797, %v4149
    %v4151 = vpop.f32.mrf.mxu0
    %v4152 = vadd.f32 %v3799, %v4151
    %4153 = vmatprep.mubr.bf16.mxu0 %v3395
    %4154 = vmatmul.mubr.bf16.gmra.mxu0 %v3394
    %v4155 = vpop.f32.mrf.mxu0
    %v4156 = vadd.f32 %v3803, %v4155
    %v4157 = vpop.f32.mrf.mxu0
    %v4158 = vadd.f32 %v3805, %v4157
    %v4159 = vpop.f32.mrf.mxu0
    %v4160 = vadd.f32 %v3807, %v4159
    %v4161 = vpop.f32.mrf.mxu0
    %v4162 = vadd.f32 %v3809, %v4161
    %4163 = vmatprep.mubr.bf16.mxu0 %v3399
    %4164 = vmatmul.mubr.bf16.gmra.mxu0 %v3398
    %v4165 = vpop.f32.mrf.mxu0
    %v4166 = vadd.f32 %v3813, %v4165
    %v4167 = vpop.f32.mrf.mxu0
    %v4168 = vadd.f32 %v3815, %v4167
    %v4169 = vpop.f32.mrf.mxu0
    %v4170 = vadd.f32 %v3817, %v4169
    %v4171 = vpop.f32.mrf.mxu0
    %v4172 = vadd.f32 %v3819, %v4171
    %4173 = vmatprep.mubr.bf16.mxu0 %v3403
    %4174 = vmatmul.mubr.bf16.gmra.mxu0 %v3402
    %v4175 = vpop.f32.mrf.mxu0
    %v4176 = vadd.f32 %v3823, %v4175
    %v4177 = vpop.f32.mrf.mxu0
    %v4178 = vadd.f32 %v3825, %v4177
    %v4179 = vpop.f32.mrf.mxu0
    %v4180 = vadd.f32 %v3827, %v4179
    %v4181 = vpop.f32.mrf.mxu0
    %v4182 = vadd.f32 %v3829, %v4181
    %4183 = vmatprep.mubr.bf16.mxu0 %v3407
    %4184 = vmatmul.mubr.bf16.gmra.mxu0 %v3406
    %v4185 = vpop.f32.mrf.mxu0
    %v4186 = vadd.f32 %v3833, %v4185
    %v4187 = vpop.f32.mrf.mxu0
    %v4188 = vadd.f32 %v3835, %v4187
    %v4189 = vpop.f32.mrf.mxu0
    %v4190 = vadd.f32 %v3837, %v4189
    %v4191 = vpop.f32.mrf.mxu0
    %v4192 = vadd.f32 %v3839, %v4191
    %4193 = vmatprep.mubr.bf16.mxu0 %v3411
    %4194 = vmatmul.mubr.bf16.gmra.mxu0 %v3410
    %v4195 = vpop.f32.mrf.mxu0
    %v4196 = vadd.f32 %v3843, %v4195
    %v4197 = vpop.f32.mrf.mxu0
    %v4198 = vadd.f32 %v3845, %v4197
    %v4199 = vpop.f32.mrf.mxu0
    %v4200 = vadd.f32 %v3847, %v4199
    %v4201 = vpop.f32.mrf.mxu0
    %v4202 = vadd.f32 %v3849, %v4201
    %4203 = vmatprep.mubr.bf16.mxu0 %v3415
    %4204 = vmatmul.mubr.bf16.gmra.mxu0 %v3414
    %v4205 = vpop.f32.mrf.mxu0
    %v4206 = vadd.f32 %v3853, %v4205
    %v4207 = vpop.f32.mrf.mxu0
    %v4208 = vadd.f32 %v3855, %v4207
    %v4209 = vpop.f32.mrf.mxu0
    %v4210 = vadd.f32 %v3857, %v4209
    %v4211 = vpop.f32.mrf.mxu0
    %v4212 = vadd.f32 %v3859, %v4211
    %4213 = vmatprep.mubr.bf16.mxu0 %v3419
    %4214 = vmatmul.mubr.bf16.gmra.mxu0 %v3418
    %v4215 = vpop.f32.mrf.mxu0
    %v4216 = vadd.f32 %v3863, %v4215
    %v4217 = vpop.f32.mrf.mxu0
    %v4218 = vadd.f32 %v3865, %v4217
    %v4219 = vpop.f32.mrf.mxu0
    %v4220 = vadd.f32 %v3867, %v4219
    %v4221 = vpop.f32.mrf.mxu0
    %v4222 = vadd.f32 %v3869, %v4221
    %4223 = vmatprep.mubr.bf16.mxu0 %v3423
    %4224 = vmatmul.mubr.bf16.gmra.mxu0 %v3422
    %v4225 = vpop.f32.mrf.mxu0
    %v4226 = vadd.f32 %v3873, %v4225
    %v4227 = vpop.f32.mrf.mxu0
    %v4228 = vadd.f32 %v3875, %v4227
    %v4229 = vpop.f32.mrf.mxu0
    %v4230 = vadd.f32 %v3877, %v4229
    %v4231 = vpop.f32.mrf.mxu0
    %v4232 = vadd.f32 %v3879, %v4231
    %4233 = vmatprep.mubr.bf16.mxu0 %v3427
    %4234 = vmatmul.mubr.bf16.gmra.mxu0 %v3426
    %v4235 = vpop.f32.mrf.mxu0
    %v4236 = vadd.f32 %v3883, %v4235
    %v4237 = vpop.f32.mrf.mxu0
    %v4238 = vadd.f32 %v3885, %v4237
    %v4239 = vpop.f32.mrf.mxu0
    %v4240 = vadd.f32 %v3887, %v4239
    %v4241 = vpop.f32.mrf.mxu0
    %v4242 = vadd.f32 %v3889, %v4241
    %4243 = vmatprep.mubr.bf16.mxu0 %v3431
    %4244 = vmatmul.mubr.bf16.gmra.mxu0 %v3430
    %v4245 = vpop.f32.mrf.mxu0
    %v4246 = vadd.f32 %v3893, %v4245
    %v4247 = vpop.f32.mrf.mxu0
    %v4248 = vadd.f32 %v3895, %v4247
    %v4249 = vpop.f32.mrf.mxu0
    %v4250 = vadd.f32 %v3897, %v4249
    %v4251 = vpop.f32.mrf.mxu0
    %v4252 = vadd.f32 %v3899, %v4251
    %4253 = vmatprep.mubr.bf16.mxu0 %v3435
    %4254 = vmatmul.mubr.bf16.gmra.mxu0 %v3434
    %v4255 = vpop.f32.mrf.mxu0
    %v4256 = vadd.f32 %v3903, %v4255
    %v4257 = vpop.f32.mrf.mxu0
    %v4258 = vadd.f32 %v3905, %v4257
    %v4259 = vpop.f32.mrf.mxu0
    %v4260 = vadd.f32 %v3907, %v4259
    %v4261 = vpop.f32.mrf.mxu0
    %v4262 = vadd.f32 %v3909, %v4261
    %4263 = vmatprep.mubr.bf16.mxu0 %v3439
    %4264 = vmatmul.mubr.bf16.gmra.mxu0 %v3438
    %v4265 = vpop.f32.mrf.mxu0
    %v4266 = vadd.f32 %v3913, %v4265
    %v4267 = vpop.f32.mrf.mxu0
    %v4268 = vadd.f32 %v3915, %v4267
    %v4269 = vpop.f32.mrf.mxu0
    %v4270 = vadd.f32 %v3917, %v4269
    %v4271 = vpop.f32.mrf.mxu0
    %v4272 = vadd.f32 %v3919, %v4271
    %4273 = vdwg.mxu0
    %4274 = vmatprep.subr.bf16.mxu0 %v2575
    %4275 = vmatpush1.bf16.msra.mxu0 %v2574
    %4276 = vmatprep.subr.bf16.mxu0 %v2571
    %4277 = vmatpush1.bf16.msra.mxu0 %v2570
    %4278 = vmatprep.subr.bf16.mxu0 %v2567
    %4279 = vmatpush1.bf16.msra.mxu0 %v2566
    %4280 = vmatprep.subr.bf16.mxu0 %v2563
    %4281 = vmatpush1.bf16.msra.mxu0 %v2562
    %4282 = vmatprep.subr.bf16.mxu0 %v2559
    %4283 = vmatpush1.bf16.msra.mxu0 %v2558
    %4284 = vmatprep.subr.bf16.mxu0 %v2555
    %4285 = vmatpush1.bf16.msra.mxu0 %v2554
    %4286 = vmatprep.subr.bf16.mxu0 %v2551
    %4287 = vmatpush1.bf16.msra.mxu0 %v2550
    %4288 = vmatprep.subr.bf16.mxu0 %v2547
    %4289 = vmatpush1.bf16.msra.mxu0 %v2546
    %4290 = vmatprep.subr.bf16.mxu0 %v2607
    %4291 = vmatpush2.bf16.msra.mxu0 %v2606
    %4292 = vmatprep.subr.bf16.mxu0 %v2603
    %4293 = vmatpush2.bf16.msra.mxu0 %v2602
    %4294 = vmatprep.subr.bf16.mxu0 %v2599
    %4295 = vmatpush2.bf16.msra.mxu0 %v2598
    %4296 = vmatprep.subr.bf16.mxu0 %v2595
    %4297 = vmatpush2.bf16.msra.mxu0 %v2594
    %4298 = vmatprep.subr.bf16.mxu0 %v2591
    %4299 = vmatpush2.bf16.msra.mxu0 %v2590
    %4300 = vmatprep.subr.bf16.mxu0 %v2587
    %4301 = vmatpush2.bf16.msra.mxu0 %v2586
    %4302 = vmatprep.subr.bf16.mxu0 %v2583
    %4303 = vmatpush2.bf16.msra.mxu0 %v2582
    %4304 = vmatprep.subr.bf16.mxu0 %v2579
    %4305 = vmatpush2.bf16.msra.mxu0 %v2578
    %4306 = vmatprep.mubr.bf16.mxu0 %v3313
    %4307 = vmatmul.mubr.bf16.gmra.mxu0 %v3312
    %v4308 = vpop.f32.mrf.mxu0
    %v4309 = vadd.f32 %v2674, %v4308
    %v4310 = vpop.f32.mrf.mxu0
    %v4311 = vadd.f32 %v2674, %v4310
    %v4312 = vpop.f32.mrf.mxu0
    %v4313 = vadd.f32 %v2678, %v4312
    %v4314 = vpop.f32.mrf.mxu0
    %v4315 = vadd.f32 %v2678, %v4314
    %4316 = vmatprep.mubr.bf16.mxu0 %v3317
    %4317 = vmatmul.mubr.bf16.gmra.mxu0 %v3316
    %v4318 = vpop.f32.mrf.mxu0
    %v4319 = vadd.f32 %v2682, %v4318
    %v4320 = vpop.f32.mrf.mxu0
    %v4321 = vadd.f32 %v2682, %v4320
    %v4322 = vpop.f32.mrf.mxu0
    %v4323 = vadd.f32 %v2686, %v4322
    %v4324 = vpop.f32.mrf.mxu0
    %v4325 = vadd.f32 %v2686, %v4324
    %4326 = vmatprep.mubr.bf16.mxu0 %v3321
    %4327 = vmatmul.mubr.bf16.gmra.mxu0 %v3320
    %v4328 = vpop.f32.mrf.mxu0
    %v4329 = vadd.f32 %v2690, %v4328
    %v4330 = vpop.f32.mrf.mxu0
    %v4331 = vadd.f32 %v2690, %v4330
    %v4332 = vpop.f32.mrf.mxu0
    %v4333 = vadd.f32 %v2694, %v4332
    %v4334 = vpop.f32.mrf.mxu0
    %v4335 = vadd.f32 %v2694, %v4334
    %4336 = vmatprep.mubr.bf16.mxu0 %v3325
    %4337 = vmatmul.mubr.bf16.gmra.mxu0 %v3324
    %v4338 = vpop.f32.mrf.mxu0
    %v4339 = vadd.f32 %v2698, %v4338
    %v4340 = vpop.f32.mrf.mxu0
    %v4341 = vadd.f32 %v2698, %v4340
    %v4342 = vpop.f32.mrf.mxu0
    %v4343 = vadd.f32 %v2702, %v4342
    %v4344 = vpop.f32.mrf.mxu0
    %v4345 = vadd.f32 %v2702, %v4344
    %4346 = vmatprep.mubr.bf16.mxu0 %v3329
    %4347 = vmatmul.mubr.bf16.gmra.mxu0 %v3328
    %v4348 = vpop.f32.mrf.mxu0
    %v4349 = vadd.f32 %v2706, %v4348
    %v4350 = vpop.f32.mrf.mxu0
    %v4351 = vadd.f32 %v2706, %v4350
    %v4352 = vpop.f32.mrf.mxu0
    %v4353 = vadd.f32 %v2710, %v4352
    %v4354 = vpop.f32.mrf.mxu0
    %v4355 = vadd.f32 %v2710, %v4354
    %4356 = vmatprep.mubr.bf16.mxu0 %v3333
    %4357 = vmatmul.mubr.bf16.gmra.mxu0 %v3332
    %v4358 = vpop.f32.mrf.mxu0
    %v4359 = vadd.f32 %v2714, %v4358
    %v4360 = vpop.f32.mrf.mxu0
    %v4361 = vadd.f32 %v2714, %v4360
    %v4362 = vpop.f32.mrf.mxu0
    %v4363 = vadd.f32 %v2718, %v4362
    %v4364 = vpop.f32.mrf.mxu0
    %v4365 = vadd.f32 %v2718, %v4364
    %4366 = vmatprep.mubr.bf16.mxu0 %v3337
    %4367 = vmatmul.mubr.bf16.gmra.mxu0 %v3336
    %v4368 = vpop.f32.mrf.mxu0
    %v4369 = vadd.f32 %v2722, %v4368
    %v4370 = vpop.f32.mrf.mxu0
    %v4371 = vadd.f32 %v2722, %v4370
    %v4372 = vpop.f32.mrf.mxu0
    %v4373 = vadd.f32 %v2726, %v4372
    %v4374 = vpop.f32.mrf.mxu0
    %v4375 = vadd.f32 %v2726, %v4374
    %4376 = vmatprep.mubr.bf16.mxu0 %v3341
    %4377 = vmatmul.mubr.bf16.gmra.mxu0 %v3340
    %v4378 = vpop.f32.mrf.mxu0
    %v4379 = vadd.f32 %v2730, %v4378
    %v4380 = vpop.f32.mrf.mxu0
    %v4381 = vadd.f32 %v2730, %v4380
    %v4382 = vpop.f32.mrf.mxu0
    %v4383 = vadd.f32 %v2734, %v4382
    %v4384 = vpop.f32.mrf.mxu0
    %v4385 = vadd.f32 %v2734, %v4384
    %4386 = vmatprep.mubr.bf16.mxu0 %v3345
    %4387 = vmatmul.mubr.bf16.gmra.mxu0 %v3344
    %v4388 = vpop.f32.mrf.mxu0
    %v4389 = vadd.f32 %v2738, %v4388
    %v4390 = vpop.f32.mrf.mxu0
    %v4391 = vadd.f32 %v2738, %v4390
    %v4392 = vpop.f32.mrf.mxu0
    %v4393 = vadd.f32 %v2742, %v4392
    %v4394 = vpop.f32.mrf.mxu0
    %v4395 = vadd.f32 %v2742, %v4394
    %4396 = vmatprep.mubr.bf16.mxu0 %v3349
    %4397 = vmatmul.mubr.bf16.gmra.mxu0 %v3348
    %v4398 = vpop.f32.mrf.mxu0
    %v4399 = vadd.f32 %v2746, %v4398
    %v4400 = vpop.f32.mrf.mxu0
    %v4401 = vadd.f32 %v2746, %v4400
    %v4402 = vpop.f32.mrf.mxu0
    %v4403 = vadd.f32 %v2750, %v4402
    %v4404 = vpop.f32.mrf.mxu0
    %v4405 = vadd.f32 %v2750, %v4404
    %4406 = vmatprep.mubr.bf16.mxu0 %v3353
    %4407 = vmatmul.mubr.bf16.gmra.mxu0 %v3352
    %v4408 = vpop.f32.mrf.mxu0
    %v4409 = vadd.f32 %v2754, %v4408
    %v4410 = vpop.f32.mrf.mxu0
    %v4411 = vadd.f32 %v2754, %v4410
    %v4412 = vpop.f32.mrf.mxu0
    %v4413 = vadd.f32 %v2758, %v4412
    %v4414 = vpop.f32.mrf.mxu0
    %v4415 = vadd.f32 %v2758, %v4414
    %4416 = vmatprep.mubr.bf16.mxu0 %v3357
    %4417 = vmatmul.mubr.bf16.gmra.mxu0 %v3356
    %v4418 = vpop.f32.mrf.mxu0
    %v4419 = vadd.f32 %v2762, %v4418
    %v4420 = vpop.f32.mrf.mxu0
    %v4421 = vadd.f32 %v2762, %v4420
    %v4422 = vpop.f32.mrf.mxu0
    %v4423 = vadd.f32 %v2766, %v4422
    %v4424 = vpop.f32.mrf.mxu0
    %v4425 = vadd.f32 %v2766, %v4424
    %4426 = vmatprep.mubr.bf16.mxu0 %v3361
    %4427 = vmatmul.mubr.bf16.gmra.mxu0 %v3360
    %v4428 = vpop.f32.mrf.mxu0
    %v4429 = vadd.f32 %v2770, %v4428
    %v4430 = vpop.f32.mrf.mxu0
    %v4431 = vadd.f32 %v2770, %v4430
    %v4432 = vpop.f32.mrf.mxu0
    %v4433 = vadd.f32 %v2774, %v4432
    %v4434 = vpop.f32.mrf.mxu0
    %v4435 = vadd.f32 %v2774, %v4434
    %4436 = vmatprep.mubr.bf16.mxu0 %v3365
    %4437 = vmatmul.mubr.bf16.gmra.mxu0 %v3364
    %v4438 = vpop.f32.mrf.mxu0
    %v4439 = vadd.f32 %v2778, %v4438
    %v4440 = vpop.f32.mrf.mxu0
    %v4441 = vadd.f32 %v2778, %v4440
    %v4442 = vpop.f32.mrf.mxu0
    %v4443 = vadd.f32 %v2782, %v4442
    %v4444 = vpop.f32.mrf.mxu0
    %v4445 = vadd.f32 %v2782, %v4444
    %4446 = vmatprep.mubr.bf16.mxu0 %v3369
    %4447 = vmatmul.mubr.bf16.gmra.mxu0 %v3368
    %v4448 = vpop.f32.mrf.mxu0
    %v4449 = vadd.f32 %v2786, %v4448
    %v4450 = vpop.f32.mrf.mxu0
    %v4451 = vadd.f32 %v2786, %v4450
    %v4452 = vpop.f32.mrf.mxu0
    %v4453 = vadd.f32 %v2790, %v4452
    %v4454 = vpop.f32.mrf.mxu0
    %v4455 = vadd.f32 %v2790, %v4454
    %4456 = vmatprep.mubr.bf16.mxu0 %v3373
    %4457 = vmatmul.mubr.bf16.gmra.mxu0 %v3372
    %v4458 = vpop.f32.mrf.mxu0
    %v4459 = vadd.f32 %v2794, %v4458
    %v4460 = vpop.f32.mrf.mxu0
    %v4461 = vadd.f32 %v2794, %v4460
    %v4462 = vpop.f32.mrf.mxu0
    %v4463 = vadd.f32 %v2798, %v4462
    %v4464 = vpop.f32.mrf.mxu0
    %v4465 = vadd.f32 %v2798, %v4464
    %4466 = vmatprep.mubr.bf16.mxu0 %v3377
    %4467 = vmatmul.mubr.bf16.gmra.mxu0 %v3376
    %v4468 = vpop.f32.mrf.mxu0
    %v4469 = vadd.f32 %v2802, %v4468
    %v4470 = vpop.f32.mrf.mxu0
    %v4471 = vadd.f32 %v2802, %v4470
    %v4472 = vpop.f32.mrf.mxu0
    %v4473 = vadd.f32 %v2806, %v4472
    %v4474 = vpop.f32.mrf.mxu0
    %v4475 = vadd.f32 %v2806, %v4474
    %4476 = vmatprep.mubr.bf16.mxu0 %v3381
    %4477 = vmatmul.mubr.bf16.gmra.mxu0 %v3380
    %v4478 = vpop.f32.mrf.mxu0
    %v4479 = vadd.f32 %v2810, %v4478
    %v4480 = vpop.f32.mrf.mxu0
    %v4481 = vadd.f32 %v2810, %v4480
    %v4482 = vpop.f32.mrf.mxu0
    %v4483 = vadd.f32 %v2814, %v4482
    %v4484 = vpop.f32.mrf.mxu0
    %v4485 = vadd.f32 %v2814, %v4484
    %4486 = vmatprep.mubr.bf16.mxu0 %v3385
    %4487 = vmatmul.mubr.bf16.gmra.mxu0 %v3384
    %v4488 = vpop.f32.mrf.mxu0
    %v4489 = vadd.f32 %v2818, %v4488
    %v4490 = vpop.f32.mrf.mxu0
    %v4491 = vadd.f32 %v2818, %v4490
    %v4492 = vpop.f32.mrf.mxu0
    %v4493 = vadd.f32 %v2822, %v4492
    %v4494 = vpop.f32.mrf.mxu0
    %v4495 = vadd.f32 %v2822, %v4494
    %4496 = vmatprep.mubr.bf16.mxu0 %v3389
    %4497 = vmatmul.mubr.bf16.gmra.mxu0 %v3388
    %v4498 = vpop.f32.mrf.mxu0
    %v4499 = vadd.f32 %v2826, %v4498
    %v4500 = vpop.f32.mrf.mxu0
    %v4501 = vadd.f32 %v2826, %v4500
    %v4502 = vpop.f32.mrf.mxu0
    %v4503 = vadd.f32 %v2830, %v4502
    %v4504 = vpop.f32.mrf.mxu0
    %v4505 = vadd.f32 %v2830, %v4504
    %4506 = vmatprep.mubr.bf16.mxu0 %v3393
    %4507 = vmatmul.mubr.bf16.gmra.mxu0 %v3392
    %v4508 = vpop.f32.mrf.mxu0
    %v4509 = vadd.f32 %v2834, %v4508
    %v4510 = vpop.f32.mrf.mxu0
    %v4511 = vadd.f32 %v2834, %v4510
    %v4512 = vpop.f32.mrf.mxu0
    %v4513 = vadd.f32 %v2838, %v4512
    %v4514 = vpop.f32.mrf.mxu0
    %v4515 = vadd.f32 %v2838, %v4514
    %4516 = vmatprep.mubr.bf16.mxu0 %v3397
    %4517 = vmatmul.mubr.bf16.gmra.mxu0 %v3396
    %v4518 = vpop.f32.mrf.mxu0
    %v4519 = vadd.f32 %v2842, %v4518
    %v4520 = vpop.f32.mrf.mxu0
    %v4521 = vadd.f32 %v2842, %v4520
    %v4522 = vpop.f32.mrf.mxu0
    %v4523 = vadd.f32 %v2846, %v4522
    %v4524 = vpop.f32.mrf.mxu0
    %v4525 = vadd.f32 %v2846, %v4524
    %4526 = vmatprep.mubr.bf16.mxu0 %v3401
    %4527 = vmatmul.mubr.bf16.gmra.mxu0 %v3400
    %v4528 = vpop.f32.mrf.mxu0
    %v4529 = vadd.f32 %v2850, %v4528
    %v4530 = vpop.f32.mrf.mxu0
    %v4531 = vadd.f32 %v2850, %v4530
    %v4532 = vpop.f32.mrf.mxu0
    %v4533 = vadd.f32 %v2854, %v4532
    %v4534 = vpop.f32.mrf.mxu0
    %v4535 = vadd.f32 %v2854, %v4534
    %4536 = vmatprep.mubr.bf16.mxu0 %v3405
    %4537 = vmatmul.mubr.bf16.gmra.mxu0 %v3404
    %v4538 = vpop.f32.mrf.mxu0
    %v4539 = vadd.f32 %v2858, %v4538
    %v4540 = vpop.f32.mrf.mxu0
    %v4541 = vadd.f32 %v2858, %v4540
    %v4542 = vpop.f32.mrf.mxu0
    %v4543 = vadd.f32 %v2862, %v4542
    %v4544 = vpop.f32.mrf.mxu0
    %v4545 = vadd.f32 %v2862, %v4544
    %4546 = vmatprep.mubr.bf16.mxu0 %v3409
    %4547 = vmatmul.mubr.bf16.gmra.mxu0 %v3408
    %v4548 = vpop.f32.mrf.mxu0
    %v4549 = vadd.f32 %v2866, %v4548
    %v4550 = vpop.f32.mrf.mxu0
    %v4551 = vadd.f32 %v2866, %v4550
    %v4552 = vpop.f32.mrf.mxu0
    %v4553 = vadd.f32 %v2870, %v4552
    %v4554 = vpop.f32.mrf.mxu0
    %v4555 = vadd.f32 %v2870, %v4554
    %4556 = vmatprep.mubr.bf16.mxu0 %v3413
    %4557 = vmatmul.mubr.bf16.gmra.mxu0 %v3412
    %v4558 = vpop.f32.mrf.mxu0
    %v4559 = vadd.f32 %v2874, %v4558
    %v4560 = vpop.f32.mrf.mxu0
    %v4561 = vadd.f32 %v2874, %v4560
    %v4562 = vpop.f32.mrf.mxu0
    %v4563 = vadd.f32 %v2878, %v4562
    %v4564 = vpop.f32.mrf.mxu0
    %v4565 = vadd.f32 %v2878, %v4564
    %4566 = vmatprep.mubr.bf16.mxu0 %v3417
    %4567 = vmatmul.mubr.bf16.gmra.mxu0 %v3416
    %v4568 = vpop.f32.mrf.mxu0
    %v4569 = vadd.f32 %v2882, %v4568
    %v4570 = vpop.f32.mrf.mxu0
    %v4571 = vadd.f32 %v2882, %v4570
    %v4572 = vpop.f32.mrf.mxu0
    %v4573 = vadd.f32 %v2886, %v4572
    %v4574 = vpop.f32.mrf.mxu0
    %v4575 = vadd.f32 %v2886, %v4574
    %4576 = vmatprep.mubr.bf16.mxu0 %v3421
    %4577 = vmatmul.mubr.bf16.gmra.mxu0 %v3420
    %v4578 = vpop.f32.mrf.mxu0
    %v4579 = vadd.f32 %v2890, %v4578
    %v4580 = vpop.f32.mrf.mxu0
    %v4581 = vadd.f32 %v2890, %v4580
    %v4582 = vpop.f32.mrf.mxu0
    %v4583 = vadd.f32 %v2894, %v4582
    %v4584 = vpop.f32.mrf.mxu0
    %v4585 = vadd.f32 %v2894, %v4584
    %4586 = vmatprep.mubr.bf16.mxu0 %v3425
    %4587 = vmatmul.mubr.bf16.gmra.mxu0 %v3424
    %v4588 = vpop.f32.mrf.mxu0
    %v4589 = vadd.f32 %v2898, %v4588
    %v4590 = vpop.f32.mrf.mxu0
    %v4591 = vadd.f32 %v2898, %v4590
    %v4592 = vpop.f32.mrf.mxu0
    %v4593 = vadd.f32 %v2902, %v4592
    %v4594 = vpop.f32.mrf.mxu0
    %v4595 = vadd.f32 %v2902, %v4594
    %4596 = vmatprep.mubr.bf16.mxu0 %v3429
    %4597 = vmatmul.mubr.bf16.gmra.mxu0 %v3428
    %v4598 = vpop.f32.mrf.mxu0
    %v4599 = vadd.f32 %v2906, %v4598
    %v4600 = vpop.f32.mrf.mxu0
    %v4601 = vadd.f32 %v2906, %v4600
    %v4602 = vpop.f32.mrf.mxu0
    %v4603 = vadd.f32 %v2910, %v4602
    %v4604 = vpop.f32.mrf.mxu0
    %v4605 = vadd.f32 %v2910, %v4604
    %4606 = vmatprep.mubr.bf16.mxu0 %v3433
    %4607 = vmatmul.mubr.bf16.gmra.mxu0 %v3432
    %v4608 = vpop.f32.mrf.mxu0
    %v4609 = vadd.f32 %v2914, %v4608
    %v4610 = vpop.f32.mrf.mxu0
    %v4611 = vadd.f32 %v2914, %v4610
    %v4612 = vpop.f32.mrf.mxu0
    %v4613 = vadd.f32 %v2918, %v4612
    %v4614 = vpop.f32.mrf.mxu0
    %v4615 = vadd.f32 %v2918, %v4614
    %4616 = vmatprep.mubr.bf16.mxu0 %v3437
    %4617 = vmatmul.mubr.bf16.gmra.mxu0 %v3436
    %v4618 = vpop.f32.mrf.mxu0
    %v4619 = vadd.f32 %v2922, %v4618
    %v4620 = vpop.f32.mrf.mxu0
    %v4621 = vadd.f32 %v2922, %v4620
    %v4622 = vpop.f32.mrf.mxu0
    %v4623 = vadd.f32 %v2926, %v4622
    %v4624 = vpop.f32.mrf.mxu0
    %v4625 = vadd.f32 %v2926, %v4624
    %4626 = vdwg.mxu0
    %4627 = vmatprep.subr.bf16.mxu0 %v2639
    %4628 = vmatpush1.bf16.msra.mxu0 %v2638
    %4629 = vmatprep.subr.bf16.mxu0 %v2635
    %4630 = vmatpush1.bf16.msra.mxu0 %v2634
    %4631 = vmatprep.subr.bf16.mxu0 %v2631
    %4632 = vmatpush1.bf16.msra.mxu0 %v2630
    %4633 = vmatprep.subr.bf16.mxu0 %v2627
    %4634 = vmatpush1.bf16.msra.mxu0 %v2626
    %4635 = vmatprep.subr.bf16.mxu0 %v2623
    %4636 = vmatpush1.bf16.msra.mxu0 %v2622
    %4637 = vmatprep.subr.bf16.mxu0 %v2619
    %4638 = vmatpush1.bf16.msra.mxu0 %v2618
    %4639 = vmatprep.subr.bf16.mxu0 %v2615
    %4640 = vmatpush1.bf16.msra.mxu0 %v2614
    %4641 = vmatprep.subr.bf16.mxu0 %v2611
    %4642 = vmatpush1.bf16.msra.mxu0 %v2610
    %4643 = vmatprep.subr.bf16.mxu0 %v2671
    %4644 = vmatpush2.bf16.msra.mxu0 %v2670
    %4645 = vmatprep.subr.bf16.mxu0 %v2667
    %4646 = vmatpush2.bf16.msra.mxu0 %v2666
    %4647 = vmatprep.subr.bf16.mxu0 %v2663
    %4648 = vmatpush2.bf16.msra.mxu0 %v2662
    %4649 = vmatprep.subr.bf16.mxu0 %v2659
    %4650 = vmatpush2.bf16.msra.mxu0 %v2658
    %4651 = vmatprep.subr.bf16.mxu0 %v2655
    %4652 = vmatpush2.bf16.msra.mxu0 %v2654
    %4653 = vmatprep.subr.bf16.mxu0 %v2651
    %4654 = vmatpush2.bf16.msra.mxu0 %v2650
    %4655 = vmatprep.subr.bf16.mxu0 %v2647
    %4656 = vmatpush2.bf16.msra.mxu0 %v2646
    %4657 = vmatprep.subr.bf16.mxu0 %v2643
    %4658 = vmatpush2.bf16.msra.mxu0 %v2642
    %4659 = vmatprep.mubr.bf16.mxu0 %v3315
    %4660 = vmatmul.mubr.bf16.gmra.mxu0 %v3314
    %v4661 = vpop.f32.mrf.mxu0
    %v4662 = vadd.f32 %v4309, %v4661
    %v4663 = vpop.f32.mrf.mxu0
    %v4664 = vadd.f32 %v4311, %v4663
    %v4665 = vpop.f32.mrf.mxu0
    %v4666 = vadd.f32 %v4313, %v4665
    %v4667 = vpop.f32.mrf.mxu0
    %v4668 = vadd.f32 %v4315, %v4667
    %4669 = vmatprep.mubr.bf16.mxu0 %v3319
    %4670 = vmatmul.mubr.bf16.gmra.mxu0 %v3318
    %v4671 = vpop.f32.mrf.mxu0
    %v4672 = vadd.f32 %v4319, %v4671
    %v4673 = vpop.f32.mrf.mxu0
    %v4674 = vadd.f32 %v4321, %v4673
    %v4675 = vpop.f32.mrf.mxu0
    %v4676 = vadd.f32 %v4323, %v4675
    %v4677 = vpop.f32.mrf.mxu0
    %v4678 = vadd.f32 %v4325, %v4677
    %4679 = vmatprep.mubr.bf16.mxu0 %v3323
    %4680 = vmatmul.mubr.bf16.gmra.mxu0 %v3322
    %v4681 = vpop.f32.mrf.mxu0
    %v4682 = vadd.f32 %v4329, %v4681
    %v4683 = vpop.f32.mrf.mxu0
    %v4684 = vadd.f32 %v4331, %v4683
    %v4685 = vpop.f32.mrf.mxu0
    %v4686 = vadd.f32 %v4333, %v4685
    %v4687 = vpop.f32.mrf.mxu0
    %v4688 = vadd.f32 %v4335, %v4687
    %4689 = vmatprep.mubr.bf16.mxu0 %v3327
    %4690 = vmatmul.mubr.bf16.gmra.mxu0 %v3326
    %v4691 = vpop.f32.mrf.mxu0
    %v4692 = vadd.f32 %v4339, %v4691
    %v4693 = vpop.f32.mrf.mxu0
    %v4694 = vadd.f32 %v4341, %v4693
    %v4695 = vpop.f32.mrf.mxu0
    %v4696 = vadd.f32 %v4343, %v4695
    %v4697 = vpop.f32.mrf.mxu0
    %v4698 = vadd.f32 %v4345, %v4697
    %4699 = vmatprep.mubr.bf16.mxu0 %v3331
    %4700 = vmatmul.mubr.bf16.gmra.mxu0 %v3330
    %v4701 = vpop.f32.mrf.mxu0
    %v4702 = vadd.f32 %v4349, %v4701
    %v4703 = vpop.f32.mrf.mxu0
    %v4704 = vadd.f32 %v4351, %v4703
    %v4705 = vpop.f32.mrf.mxu0
    %v4706 = vadd.f32 %v4353, %v4705
    %v4707 = vpop.f32.mrf.mxu0
    %v4708 = vadd.f32 %v4355, %v4707
    %4709 = vmatprep.mubr.bf16.mxu0 %v3335
    %4710 = vmatmul.mubr.bf16.gmra.mxu0 %v3334
    %v4711 = vpop.f32.mrf.mxu0
    %v4712 = vadd.f32 %v4359, %v4711
    %v4713 = vpop.f32.mrf.mxu0
    %v4714 = vadd.f32 %v4361, %v4713
    %v4715 = vpop.f32.mrf.mxu0
    %v4716 = vadd.f32 %v4363, %v4715
    %v4717 = vpop.f32.mrf.mxu0
    %v4718 = vadd.f32 %v4365, %v4717
    %4719 = vmatprep.mubr.bf16.mxu0 %v3339
    %4720 = vmatmul.mubr.bf16.gmra.mxu0 %v3338
    %v4721 = vpop.f32.mrf.mxu0
    %v4722 = vadd.f32 %v4369, %v4721
    %v4723 = vpop.f32.mrf.mxu0
    %v4724 = vadd.f32 %v4371, %v4723
    %v4725 = vpop.f32.mrf.mxu0
    %v4726 = vadd.f32 %v4373, %v4725
    %v4727 = vpop.f32.mrf.mxu0
    %v4728 = vadd.f32 %v4375, %v4727
    %4729 = vmatprep.mubr.bf16.mxu0 %v3343
    %4730 = vmatmul.mubr.bf16.gmra.mxu0 %v3342
    %v4731 = vpop.f32.mrf.mxu0
    %v4732 = vadd.f32 %v4379, %v4731
    %v4733 = vpop.f32.mrf.mxu0
    %v4734 = vadd.f32 %v4381, %v4733
    %v4735 = vpop.f32.mrf.mxu0
    %v4736 = vadd.f32 %v4383, %v4735
    %v4737 = vpop.f32.mrf.mxu0
    %v4738 = vadd.f32 %v4385, %v4737
    %4739 = vmatprep.mubr.bf16.mxu0 %v3347
    %4740 = vmatmul.mubr.bf16.gmra.mxu0 %v3346
    %v4741 = vpop.f32.mrf.mxu0
    %v4742 = vadd.f32 %v4389, %v4741
    %v4743 = vpop.f32.mrf.mxu0
    %v4744 = vadd.f32 %v4391, %v4743
    %v4745 = vpop.f32.mrf.mxu0
    %v4746 = vadd.f32 %v4393, %v4745
    %v4747 = vpop.f32.mrf.mxu0
    %v4748 = vadd.f32 %v4395, %v4747
    %4749 = vmatprep.mubr.bf16.mxu0 %v3351
    %4750 = vmatmul.mubr.bf16.gmra.mxu0 %v3350
    %v4751 = vpop.f32.mrf.mxu0
    %v4752 = vadd.f32 %v4399, %v4751
    %v4753 = vpop.f32.mrf.mxu0
    %v4754 = vadd.f32 %v4401, %v4753
    %v4755 = vpop.f32.mrf.mxu0
    %v4756 = vadd.f32 %v4403, %v4755
    %v4757 = vpop.f32.mrf.mxu0
    %v4758 = vadd.f32 %v4405, %v4757
    %4759 = vmatprep.mubr.bf16.mxu0 %v3355
    %4760 = vmatmul.mubr.bf16.gmra.mxu0 %v3354
    %v4761 = vpop.f32.mrf.mxu0
    %v4762 = vadd.f32 %v4409, %v4761
    %v4763 = vpop.f32.mrf.mxu0
    %v4764 = vadd.f32 %v4411, %v4763
    %v4765 = vpop.f32.mrf.mxu0
    %v4766 = vadd.f32 %v4413, %v4765
    %v4767 = vpop.f32.mrf.mxu0
    %v4768 = vadd.f32 %v4415, %v4767
    %4769 = vmatprep.mubr.bf16.mxu0 %v3359
    %4770 = vmatmul.mubr.bf16.gmra.mxu0 %v3358
    %v4771 = vpop.f32.mrf.mxu0
    %v4772 = vadd.f32 %v4419, %v4771
    %v4773 = vpop.f32.mrf.mxu0
    %v4774 = vadd.f32 %v4421, %v4773
    %v4775 = vpop.f32.mrf.mxu0
    %v4776 = vadd.f32 %v4423, %v4775
    %v4777 = vpop.f32.mrf.mxu0
    %v4778 = vadd.f32 %v4425, %v4777
    %4779 = vmatprep.mubr.bf16.mxu0 %v3363
    %4780 = vmatmul.mubr.bf16.gmra.mxu0 %v3362
    %v4781 = vpop.f32.mrf.mxu0
    %v4782 = vadd.f32 %v4429, %v4781
    %v4783 = vpop.f32.mrf.mxu0
    %v4784 = vadd.f32 %v4431, %v4783
    %v4785 = vpop.f32.mrf.mxu0
    %v4786 = vadd.f32 %v4433, %v4785
    %v4787 = vpop.f32.mrf.mxu0
    %v4788 = vadd.f32 %v4435, %v4787
    %4789 = vmatprep.mubr.bf16.mxu0 %v3367
    %4790 = vmatmul.mubr.bf16.gmra.mxu0 %v3366
    %v4791 = vpop.f32.mrf.mxu0
    %v4792 = vadd.f32 %v4439, %v4791
    %v4793 = vpop.f32.mrf.mxu0
    %v4794 = vadd.f32 %v4441, %v4793
    %v4795 = vpop.f32.mrf.mxu0
    %v4796 = vadd.f32 %v4443, %v4795
    %v4797 = vpop.f32.mrf.mxu0
    %v4798 = vadd.f32 %v4445, %v4797
    %4799 = vmatprep.mubr.bf16.mxu0 %v3371
    %4800 = vmatmul.mubr.bf16.gmra.mxu0 %v3370
    %v4801 = vpop.f32.mrf.mxu0
    %v4802 = vadd.f32 %v4449, %v4801
    %v4803 = vpop.f32.mrf.mxu0
    %v4804 = vadd.f32 %v4451, %v4803
    %v4805 = vpop.f32.mrf.mxu0
    %v4806 = vadd.f32 %v4453, %v4805
    %v4807 = vpop.f32.mrf.mxu0
    %v4808 = vadd.f32 %v4455, %v4807
    %4809 = vmatprep.mubr.bf16.mxu0 %v3375
    %4810 = vmatmul.mubr.bf16.gmra.mxu0 %v3374
    %v4811 = vpop.f32.mrf.mxu0
    %v4812 = vadd.f32 %v4459, %v4811
    %v4813 = vpop.f32.mrf.mxu0
    %v4814 = vadd.f32 %v4461, %v4813
    %v4815 = vpop.f32.mrf.mxu0
    %v4816 = vadd.f32 %v4463, %v4815
    %v4817 = vpop.f32.mrf.mxu0
    %v4818 = vadd.f32 %v4465, %v4817
    %4819 = vmatprep.mubr.bf16.mxu0 %v3379
    %4820 = vmatmul.mubr.bf16.gmra.mxu0 %v3378
    %v4821 = vpop.f32.mrf.mxu0
    %v4822 = vadd.f32 %v4469, %v4821
    %v4823 = vpop.f32.mrf.mxu0
    %v4824 = vadd.f32 %v4471, %v4823
    %v4825 = vpop.f32.mrf.mxu0
    %v4826 = vadd.f32 %v4473, %v4825
    %v4827 = vpop.f32.mrf.mxu0
    %v4828 = vadd.f32 %v4475, %v4827
    %4829 = vmatprep.mubr.bf16.mxu0 %v3383
    %4830 = vmatmul.mubr.bf16.gmra.mxu0 %v3382
    %v4831 = vpop.f32.mrf.mxu0
    %v4832 = vadd.f32 %v4479, %v4831
    %v4833 = vpop.f32.mrf.mxu0
    %v4834 = vadd.f32 %v4481, %v4833
    %v4835 = vpop.f32.mrf.mxu0
    %v4836 = vadd.f32 %v4483, %v4835
    %v4837 = vpop.f32.mrf.mxu0
    %v4838 = vadd.f32 %v4485, %v4837
    %4839 = vmatprep.mubr.bf16.mxu0 %v3387
    %4840 = vmatmul.mubr.bf16.gmra.mxu0 %v3386
    %v4841 = vpop.f32.mrf.mxu0
    %v4842 = vadd.f32 %v4489, %v4841
    %v4843 = vpop.f32.mrf.mxu0
    %v4844 = vadd.f32 %v4491, %v4843
    %v4845 = vpop.f32.mrf.mxu0
    %v4846 = vadd.f32 %v4493, %v4845
    %v4847 = vpop.f32.mrf.mxu0
    %v4848 = vadd.f32 %v4495, %v4847
    %4849 = vmatprep.mubr.bf16.mxu0 %v3391
    %4850 = vmatmul.mubr.bf16.gmra.mxu0 %v3390
    %v4851 = vpop.f32.mrf.mxu0
    %v4852 = vadd.f32 %v4499, %v4851
    %v4853 = vpop.f32.mrf.mxu0
    %v4854 = vadd.f32 %v4501, %v4853
    %v4855 = vpop.f32.mrf.mxu0
    %v4856 = vadd.f32 %v4503, %v4855
    %v4857 = vpop.f32.mrf.mxu0
    %v4858 = vadd.f32 %v4505, %v4857
    %4859 = vmatprep.mubr.bf16.mxu0 %v3395
    %4860 = vmatmul.mubr.bf16.gmra.mxu0 %v3394
    %v4861 = vpop.f32.mrf.mxu0
    %v4862 = vadd.f32 %v4509, %v4861
    %v4863 = vpop.f32.mrf.mxu0
    %v4864 = vadd.f32 %v4511, %v4863
    %v4865 = vpop.f32.mrf.mxu0
    %v4866 = vadd.f32 %v4513, %v4865
    %v4867 = vpop.f32.mrf.mxu0
    %v4868 = vadd.f32 %v4515, %v4867
    %4869 = vmatprep.mubr.bf16.mxu0 %v3399
    %4870 = vmatmul.mubr.bf16.gmra.mxu0 %v3398
    %v4871 = vpop.f32.mrf.mxu0
    %v4872 = vadd.f32 %v4519, %v4871
    %v4873 = vpop.f32.mrf.mxu0
    %v4874 = vadd.f32 %v4521, %v4873
    %v4875 = vpop.f32.mrf.mxu0
    %v4876 = vadd.f32 %v4523, %v4875
    %v4877 = vpop.f32.mrf.mxu0
    %v4878 = vadd.f32 %v4525, %v4877
    %4879 = vmatprep.mubr.bf16.mxu0 %v3403
    %4880 = vmatmul.mubr.bf16.gmra.mxu0 %v3402
    %v4881 = vpop.f32.mrf.mxu0
    %v4882 = vadd.f32 %v4529, %v4881
    %v4883 = vpop.f32.mrf.mxu0
    %v4884 = vadd.f32 %v4531, %v4883
    %v4885 = vpop.f32.mrf.mxu0
    %v4886 = vadd.f32 %v4533, %v4885
    %v4887 = vpop.f32.mrf.mxu0
    %v4888 = vadd.f32 %v4535, %v4887
    %4889 = vmatprep.mubr.bf16.mxu0 %v3407
    %4890 = vmatmul.mubr.bf16.gmra.mxu0 %v3406
    %v4891 = vpop.f32.mrf.mxu0
    %v4892 = vadd.f32 %v4539, %v4891
    %v4893 = vpop.f32.mrf.mxu0
    %v4894 = vadd.f32 %v4541, %v4893
    %v4895 = vpop.f32.mrf.mxu0
    %v4896 = vadd.f32 %v4543, %v4895
    %v4897 = vpop.f32.mrf.mxu0
    %v4898 = vadd.f32 %v4545, %v4897
    %4899 = vmatprep.mubr.bf16.mxu0 %v3411
    %4900 = vmatmul.mubr.bf16.gmra.mxu0 %v3410
    %v4901 = vpop.f32.mrf.mxu0
    %v4902 = vadd.f32 %v4549, %v4901
    %v4903 = vpop.f32.mrf.mxu0
    %v4904 = vadd.f32 %v4551, %v4903
    %v4905 = vpop.f32.mrf.mxu0
    %v4906 = vadd.f32 %v4553, %v4905
    %v4907 = vpop.f32.mrf.mxu0
    %v4908 = vadd.f32 %v4555, %v4907
    %4909 = vmatprep.mubr.bf16.mxu0 %v3415
    %4910 = vmatmul.mubr.bf16.gmra.mxu0 %v3414
    %v4911 = vpop.f32.mrf.mxu0
    %v4912 = vadd.f32 %v4559, %v4911
    %v4913 = vpop.f32.mrf.mxu0
    %v4914 = vadd.f32 %v4561, %v4913
    %v4915 = vpop.f32.mrf.mxu0
    %v4916 = vadd.f32 %v4563, %v4915
    %v4917 = vpop.f32.mrf.mxu0
    %v4918 = vadd.f32 %v4565, %v4917
    %4919 = vmatprep.mubr.bf16.mxu0 %v3419
    %4920 = vmatmul.mubr.bf16.gmra.mxu0 %v3418
    %v4921 = vpop.f32.mrf.mxu0
    %v4922 = vadd.f32 %v4569, %v4921
    %v4923 = vpop.f32.mrf.mxu0
    %v4924 = vadd.f32 %v4571, %v4923
    %v4925 = vpop.f32.mrf.mxu0
    %v4926 = vadd.f32 %v4573, %v4925
    %v4927 = vpop.f32.mrf.mxu0
    %v4928 = vadd.f32 %v4575, %v4927
    %4929 = vmatprep.mubr.bf16.mxu0 %v3423
    %4930 = vmatmul.mubr.bf16.gmra.mxu0 %v3422
    %v4931 = vpop.f32.mrf.mxu0
    %v4932 = vadd.f32 %v4579, %v4931
    %v4933 = vpop.f32.mrf.mxu0
    %v4934 = vadd.f32 %v4581, %v4933
    %v4935 = vpop.f32.mrf.mxu0
    %v4936 = vadd.f32 %v4583, %v4935
    %v4937 = vpop.f32.mrf.mxu0
    %v4938 = vadd.f32 %v4585, %v4937
    %4939 = vmatprep.mubr.bf16.mxu0 %v3427
    %4940 = vmatmul.mubr.bf16.gmra.mxu0 %v3426
    %v4941 = vpop.f32.mrf.mxu0
    %v4942 = vadd.f32 %v4589, %v4941
    %v4943 = vpop.f32.mrf.mxu0
    %v4944 = vadd.f32 %v4591, %v4943
    %v4945 = vpop.f32.mrf.mxu0
    %v4946 = vadd.f32 %v4593, %v4945
    %v4947 = vpop.f32.mrf.mxu0
    %v4948 = vadd.f32 %v4595, %v4947
    %4949 = vmatprep.mubr.bf16.mxu0 %v3431
    %4950 = vmatmul.mubr.bf16.gmra.mxu0 %v3430
    %v4951 = vpop.f32.mrf.mxu0
    %v4952 = vadd.f32 %v4599, %v4951
    %v4953 = vpop.f32.mrf.mxu0
    %v4954 = vadd.f32 %v4601, %v4953
    %v4955 = vpop.f32.mrf.mxu0
    %v4956 = vadd.f32 %v4603, %v4955
    %v4957 = vpop.f32.mrf.mxu0
    %v4958 = vadd.f32 %v4605, %v4957
    %4959 = vmatprep.mubr.bf16.mxu0 %v3435
    %4960 = vmatmul.mubr.bf16.gmra.mxu0 %v3434
    %v4961 = vpop.f32.mrf.mxu0
    %v4962 = vadd.f32 %v4609, %v4961
    %v4963 = vpop.f32.mrf.mxu0
    %v4964 = vadd.f32 %v4611, %v4963
    %v4965 = vpop.f32.mrf.mxu0
    %v4966 = vadd.f32 %v4613, %v4965
    %v4967 = vpop.f32.mrf.mxu0
    %v4968 = vadd.f32 %v4615, %v4967
    %4969 = vmatprep.mubr.bf16.mxu0 %v3439
    %4970 = vmatmul.mubr.bf16.gmra.mxu0 %v3438
    %v4971 = vpop.f32.mrf.mxu0
    %v4972 = vadd.f32 %v4619, %v4971
    %v4973 = vpop.f32.mrf.mxu0
    %v4974 = vadd.f32 %v4621, %v4973
    %v4975 = vpop.f32.mrf.mxu0
    %v4976 = vadd.f32 %v4623, %v4975
    %v4977 = vpop.f32.mrf.mxu0
    %v4978 = vadd.f32 %v4625, %v4977
    %4979 = vdwg.mxu0
    %v4980 = vmax.f32 %v3956, 0.0
    %v4981 = vmax.f32 %v3958, 0.0
    %v4982 = vmax.f32 %v4662, 0.0
    %v4983 = vmax.f32 %v4664, 0.0
    %v4984 = vmax.f32 %v3960, 0.0
    %v4985 = vmax.f32 %v3962, 0.0
    %v4986 = vmax.f32 %v4666, 0.0
    %v4987 = vmax.f32 %v4668, 0.0
    %v4988 = vmax.f32 %v3966, 0.0
    %v4989 = vmax.f32 %v3968, 0.0
    %v4990 = vmax.f32 %v4672, 0.0
    %v4991 = vmax.f32 %v4674, 0.0
    %v4992 = vmax.f32 %v3970, 0.0
    %v4993 = vmax.f32 %v3972, 0.0
    %v4994 = vmax.f32 %v4676, 0.0
    %v4995 = vmax.f32 %v4678, 0.0
    %v4996 = vmax.f32 %v3976, 0.0
    %v4997 = vmax.f32 %v3978, 0.0
    %v4998 = vmax.f32 %v4682, 0.0
    %v4999 = vmax.f32 %v4684, 0.0
    %v5000 = vmax.f32 %v3980, 0.0
    %v5001 = vmax.f32 %v3982, 0.0
    %v5002 = vmax.f32 %v4686, 0.0
    %v5003 = vmax.f32 %v4688, 0.0
    %v5004 = vmax.f32 %v3986, 0.0
    %v5005 = vmax.f32 %v3988, 0.0
    %v5006 = vmax.f32 %v4692, 0.0
    %v5007 = vmax.f32 %v4694, 0.0
    %v5008 = vmax.f32 %v3990, 0.0
    %v5009 = vmax.f32 %v3992, 0.0
    %v5010 = vmax.f32 %v4696, 0.0
    %v5011 = vmax.f32 %v4698, 0.0
    %v5012 = vmax.f32 %v3996, 0.0
    %v5013 = vmax.f32 %v3998, 0.0
    %v5014 = vmax.f32 %v4702, 0.0
    %v5015 = vmax.f32 %v4704, 0.0
    %v5016 = vmax.f32 %v4000, 0.0
    %v5017 = vmax.f32 %v4002, 0.0
    %v5018 = vmax.f32 %v4706, 0.0
    %v5019 = vmax.f32 %v4708, 0.0
    %v5020 = vmax.f32 %v4006, 0.0
    %v5021 = vmax.f32 %v4008, 0.0
    %v5022 = vmax.f32 %v4712, 0.0
    %v5023 = vmax.f32 %v4714, 0.0
    %v5024 = vmax.f32 %v4010, 0.0
    %v5025 = vmax.f32 %v4012, 0.0
    %v5026 = vmax.f32 %v4716, 0.0
    %v5027 = vmax.f32 %v4718, 0.0
    %v5028 = vmax.f32 %v4016, 0.0
    %v5029 = vmax.f32 %v4018, 0.0
    %v5030 = vmax.f32 %v4722, 0.0
    %v5031 = vmax.f32 %v4724, 0.0
    %v5032 = vmax.f32 %v4020, 0.0
    %v5033 = vmax.f32 %v4022, 0.0
    %v5034 = vmax.f32 %v4726, 0.0
    %v5035 = vmax.f32 %v4728, 0.0
    %v5036 = vmax.f32 %v4026, 0.0
    %v5037 = vmax.f32 %v4028, 0.0
    %v5038 = vmax.f32 %v4732, 0.0
    %v5039 = vmax.f32 %v4734, 0.0
    %v5040 = vmax.f32 %v4030, 0.0
    %v5041 = vmax.f32 %v4032, 0.0
    %v5042 = vmax.f32 %v4736, 0.0
    %v5043 = vmax.f32 %v4738, 0.0
    %v5044 = vmax.f32 %v4036, 0.0
    %v5045 = vmax.f32 %v4038, 0.0
    %v5046 = vmax.f32 %v4742, 0.0
    %v5047 = vmax.f32 %v4744, 0.0
    %v5048 = vmax.f32 %v4040, 0.0
    %v5049 = vmax.f32 %v4042, 0.0
    %v5050 = vmax.f32 %v4746, 0.0
    %v5051 = vmax.f32 %v4748, 0.0
    %v5052 = vmax.f32 %v4046, 0.0
    %v5053 = vmax.f32 %v4048, 0.0
    %v5054 = vmax.f32 %v4752, 0.0
    %v5055 = vmax.f32 %v4754, 0.0
    %v5056 = vmax.f32 %v4050, 0.0
    %v5057 = vmax.f32 %v4052, 0.0
    %v5058 = vmax.f32 %v4756, 0.0
    %v5059 = vmax.f32 %v4758, 0.0
    %v5060 = vmax.f32 %v4056, 0.0
    %v5061 = vmax.f32 %v4058, 0.0
    %v5062 = vmax.f32 %v4762, 0.0
    %v5063 = vmax.f32 %v4764, 0.0
    %v5064 = vmax.f32 %v4060, 0.0
    %v5065 = vmax.f32 %v4062, 0.0
    %v5066 = vmax.f32 %v4766, 0.0
    %v5067 = vmax.f32 %v4768, 0.0
    %v5068 = vmax.f32 %v4066, 0.0
    %v5069 = vmax.f32 %v4068, 0.0
    %v5070 = vmax.f32 %v4772, 0.0
    %v5071 = vmax.f32 %v4774, 0.0
    %v5072 = vmax.f32 %v4070, 0.0
    %v5073 = vmax.f32 %v4072, 0.0
    %v5074 = vmax.f32 %v4776, 0.0
    %v5075 = vmax.f32 %v4778, 0.0
    %v5076 = vmax.f32 %v4076, 0.0
    %v5077 = vmax.f32 %v4078, 0.0
    %v5078 = vmax.f32 %v4782, 0.0
    %v5079 = vmax.f32 %v4784, 0.0
    %v5080 = vmax.f32 %v4080, 0.0
    %v5081 = vmax.f32 %v4082, 0.0
    %v5082 = vmax.f32 %v4786, 0.0
    %v5083 = vmax.f32 %v4788, 0.0
    %v5084 = vmax.f32 %v4086, 0.0
    %v5085 = vmax.f32 %v4088, 0.0
    %v5086 = vmax.f32 %v4792, 0.0
    %v5087 = vmax.f32 %v4794, 0.0
    %v5088 = vmax.f32 %v4090, 0.0
    %v5089 = vmax.f32 %v4092, 0.0
    %v5090 = vmax.f32 %v4796, 0.0
    %v5091 = vmax.f32 %v4798, 0.0
    %v5092 = vmax.f32 %v4096, 0.0
    %v5093 = vmax.f32 %v4098, 0.0
    %v5094 = vmax.f32 %v4802, 0.0
    %v5095 = vmax.f32 %v4804, 0.0
    %v5096 = vmax.f32 %v4100, 0.0
    %v5097 = vmax.f32 %v4102, 0.0
    %v5098 = vmax.f32 %v4806, 0.0
    %v5099 = vmax.f32 %v4808, 0.0
    %v5100 = vmax.f32 %v4106, 0.0
    %v5101 = vmax.f32 %v4108, 0.0
    %v5102 = vmax.f32 %v4812, 0.0
    %v5103 = vmax.f32 %v4814, 0.0
    %v5104 = vmax.f32 %v4110, 0.0
    %v5105 = vmax.f32 %v4112, 0.0
    %v5106 = vmax.f32 %v4816, 0.0
    %v5107 = vmax.f32 %v4818, 0.0
    %v5108 = vmax.f32 %v4116, 0.0
    %v5109 = vmax.f32 %v4118, 0.0
    %v5110 = vmax.f32 %v4822, 0.0
    %v5111 = vmax.f32 %v4824, 0.0
    %v5112 = vmax.f32 %v4120, 0.0
    %v5113 = vmax.f32 %v4122, 0.0
    %v5114 = vmax.f32 %v4826, 0.0
    %v5115 = vmax.f32 %v4828, 0.0
    %v5116 = vmax.f32 %v4126, 0.0
    %v5117 = vmax.f32 %v4128, 0.0
    %v5118 = vmax.f32 %v4832, 0.0
    %v5119 = vmax.f32 %v4834, 0.0
    %v5120 = vmax.f32 %v4130, 0.0
    %v5121 = vmax.f32 %v4132, 0.0
    %v5122 = vmax.f32 %v4836, 0.0
    %v5123 = vmax.f32 %v4838, 0.0
    %v5124 = vmax.f32 %v4136, 0.0
    %v5125 = vmax.f32 %v4138, 0.0
    %v5126 = vmax.f32 %v4842, 0.0
    %v5127 = vmax.f32 %v4844, 0.0
    %v5128 = vmax.f32 %v4140, 0.0
    %v5129 = vmax.f32 %v4142, 0.0
    %v5130 = vmax.f32 %v4846, 0.0
    %v5131 = vmax.f32 %v4848, 0.0
    %v5132 = vmax.f32 %v4146, 0.0
    %v5133 = vmax.f32 %v4148, 0.0
    %v5134 = vmax.f32 %v4852, 0.0
    %v5135 = vmax.f32 %v4854, 0.0
    %v5136 = vmax.f32 %v4150, 0.0
    %v5137 = vmax.f32 %v4152, 0.0
    %v5138 = vmax.f32 %v4856, 0.0
    %v5139 = vmax.f32 %v4858, 0.0
    %v5140 = vmax.f32 %v4156, 0.0
    %v5141 = vmax.f32 %v4158, 0.0
    %v5142 = vmax.f32 %v4862, 0.0
    %v5143 = vmax.f32 %v4864, 0.0
    %v5144 = vmax.f32 %v4160, 0.0
    %v5145 = vmax.f32 %v4162, 0.0
    %v5146 = vmax.f32 %v4866, 0.0
    %v5147 = vmax.f32 %v4868, 0.0
    %v5148 = vmax.f32 %v4166, 0.0
    %v5149 = vmax.f32 %v4168, 0.0
    %v5150 = vmax.f32 %v4872, 0.0
    %v5151 = vmax.f32 %v4874, 0.0
    %v5152 = vmax.f32 %v4170, 0.0
    %v5153 = vmax.f32 %v4172, 0.0
    %v5154 = vmax.f32 %v4876, 0.0
    %v5155 = vmax.f32 %v4878, 0.0
    %v5156 = vmax.f32 %v4176, 0.0
    %v5157 = vmax.f32 %v4178, 0.0
    %v5158 = vmax.f32 %v4882, 0.0
    %v5159 = vmax.f32 %v4884, 0.0
    %v5160 = vmax.f32 %v4180, 0.0
    %v5161 = vmax.f32 %v4182, 0.0
    %v5162 = vmax.f32 %v4886, 0.0
    %v5163 = vmax.f32 %v4888, 0.0
    %v5164 = vmax.f32 %v4186, 0.0
    %v5165 = vmax.f32 %v4188, 0.0
    %v5166 = vmax.f32 %v4892, 0.0
    %v5167 = vmax.f32 %v4894, 0.0
    %v5168 = vmax.f32 %v4190, 0.0
    %v5169 = vmax.f32 %v4192, 0.0
    %v5170 = vmax.f32 %v4896, 0.0
    %v5171 = vmax.f32 %v4898, 0.0
    %v5172 = vmax.f32 %v4196, 0.0
    %v5173 = vmax.f32 %v4198, 0.0
    %v5174 = vmax.f32 %v4902, 0.0
    %v5175 = vmax.f32 %v4904, 0.0
    %v5176 = vmax.f32 %v4200, 0.0
    %v5177 = vmax.f32 %v4202, 0.0
    %v5178 = vmax.f32 %v4906, 0.0
    %v5179 = vmax.f32 %v4908, 0.0
    %v5180 = vmax.f32 %v4206, 0.0
    %v5181 = vmax.f32 %v4208, 0.0
    %v5182 = vmax.f32 %v4912, 0.0
    %v5183 = vmax.f32 %v4914, 0.0
    %v5184 = vmax.f32 %v4210, 0.0
    %v5185 = vmax.f32 %v4212, 0.0
    %v5186 = vmax.f32 %v4916, 0.0
    %v5187 = vmax.f32 %v4918, 0.0
    %v5188 = vmax.f32 %v4216, 0.0
    %v5189 = vmax.f32 %v4218, 0.0
    %v5190 = vmax.f32 %v4922, 0.0
    %v5191 = vmax.f32 %v4924, 0.0
    %v5192 = vmax.f32 %v4220, 0.0
    %v5193 = vmax.f32 %v4222, 0.0
    %v5194 = vmax.f32 %v4926, 0.0
    %v5195 = vmax.f32 %v4928, 0.0
    %v5196 = vmax.f32 %v4226, 0.0
    %v5197 = vmax.f32 %v4228, 0.0
    %v5198 = vmax.f32 %v4932, 0.0
    %v5199 = vmax.f32 %v4934, 0.0
    %v5200 = vmax.f32 %v4230, 0.0
    %v5201 = vmax.f32 %v4232, 0.0
    %v5202 = vmax.f32 %v4936, 0.0
    %v5203 = vmax.f32 %v4938, 0.0
    %v5204 = vmax.f32 %v4236, 0.0
    %v5205 = vmax.f32 %v4238, 0.0
    %v5206 = vmax.f32 %v4942, 0.0
    %v5207 = vmax.f32 %v4944, 0.0
    %v5208 = vmax.f32 %v4240, 0.0
    %v5209 = vmax.f32 %v4242, 0.0
    %v5210 = vmax.f32 %v4946, 0.0
    %v5211 = vmax.f32 %v4948, 0.0
    %v5212 = vmax.f32 %v4246, 0.0
    %v5213 = vmax.f32 %v4248, 0.0
    %v5214 = vmax.f32 %v4952, 0.0
    %v5215 = vmax.f32 %v4954, 0.0
    %v5216 = vmax.f32 %v4250, 0.0
    %v5217 = vmax.f32 %v4252, 0.0
    %v5218 = vmax.f32 %v4956, 0.0
    %v5219 = vmax.f32 %v4958, 0.0
    %v5220 = vmax.f32 %v4256, 0.0
    %v5221 = vmax.f32 %v4258, 0.0
    %v5222 = vmax.f32 %v4962, 0.0
    %v5223 = vmax.f32 %v4964, 0.0
    %v5224 = vmax.f32 %v4260, 0.0
    %v5225 = vmax.f32 %v4262, 0.0
    %v5226 = vmax.f32 %v4966, 0.0
    %v5227 = vmax.f32 %v4968, 0.0
    %v5228 = vmax.f32 %v4266, 0.0
    %v5229 = vmax.f32 %v4268, 0.0
    %v5230 = vmax.f32 %v4972, 0.0
    %v5231 = vmax.f32 %v4974, 0.0
    %v5232 = vmax.f32 %v4270, 0.0
    %v5233 = vmax.f32 %v4272, 0.0
    %v5234 = vmax.f32 %v4976, 0.0
    %v5235 = vmax.f32 %v4978, 0.0
    %v5236 = vld [vmem:[#allocation2] sm:$0xff]
    %v5237 = vld [vmem:[#allocation2 + $0x8] sm:$0xff]
    %v5238 = vld [vmem:[#allocation2 + $0x10] sm:$0xff]
    %v5239 = vld [vmem:[#allocation2 + $0x18] sm:$0xff]
    %v5240 = vld [vmem:[#allocation2 + $0x20] sm:$0xff]
    %v5241 = vld [vmem:[#allocation2 + $0x28] sm:$0xff]
    %v5242 = vld [vmem:[#allocation2 + $0x30] sm:$0xff]
    %v5243 = vld [vmem:[#allocation2 + $0x38] sm:$0xff]
    %v5244 = vld [vmem:[#allocation2 + $0x40] sm:$0xff]
    %v5245 = vld [vmem:[#allocation2 + $0x48] sm:$0xff]
    %v5246 = vld [vmem:[#allocation2 + $0x50] sm:$0xff]
    %v5247 = vld [vmem:[#allocation2 + $0x58] sm:$0xff]
    %v5248 = vld [vmem:[#allocation2 + $0x60] sm:$0xff]
    %v5249 = vld [vmem:[#allocation2 + $0x68] sm:$0xff]
    %v5250 = vld [vmem:[#allocation2 + $0x70] sm:$0xff]
    %v5251 = vld [vmem:[#allocation2 + $0x78] sm:$0xff]
    %v5252 = vld [vmem:[#allocation2 + $0x80] sm:$0xff]
    %v5253 = vld [vmem:[#allocation2 + $0x88] sm:$0xff]
    %v5254 = vld [vmem:[#allocation2 + $0x90] sm:$0xff]
    %v5255 = vld [vmem:[#allocation2 + $0x98] sm:$0xff]
    %v5256 = vld [vmem:[#allocation2 + $0xa0] sm:$0xff]
    %v5257 = vld [vmem:[#allocation2 + $0xa8] sm:$0xff]
    %v5258 = vld [vmem:[#allocation2 + $0xb0] sm:$0xff]
    %v5259 = vld [vmem:[#allocation2 + $0xb8] sm:$0xff]
    %v5260 = vld [vmem:[#allocation2 + $0xc0] sm:$0xff]
    %v5261 = vld [vmem:[#allocation2 + $0xc8] sm:$0xff]
    %v5262 = vld [vmem:[#allocation2 + $0xd0] sm:$0xff]
    %v5263 = vld [vmem:[#allocation2 + $0xd8] sm:$0xff]
    %v5264 = vld [vmem:[#allocation2 + $0xe0] sm:$0xff]
    %v5265 = vld [vmem:[#allocation2 + $0xe8] sm:$0xff]
    %v5266 = vld [vmem:[#allocation2 + $0xf0] sm:$0xff]
    %v5267 = vld [vmem:[#allocation2 + $0xf8] sm:$0xff]
    %v5268 = vld [vmem:[#allocation2 + $0x100] sm:$0xff]
    %v5269 = vld [vmem:[#allocation2 + $0x108] sm:$0xff]
    %v5270 = vld [vmem:[#allocation2 + $0x110] sm:$0xff]
    %v5271 = vld [vmem:[#allocation2 + $0x118] sm:$0xff]
    %v5272 = vld [vmem:[#allocation2 + $0x120] sm:$0xff]
    %v5273 = vld [vmem:[#allocation2 + $0x128] sm:$0xff]
    %v5274 = vld [vmem:[#allocation2 + $0x130] sm:$0xff]
    %v5275 = vld [vmem:[#allocation2 + $0x138] sm:$0xff]
    %v5276 = vld [vmem:[#allocation2 + $0x140] sm:$0xff]
    %v5277 = vld [vmem:[#allocation2 + $0x148] sm:$0xff]
    %v5278 = vld [vmem:[#allocation2 + $0x150] sm:$0xff]
    %v5279 = vld [vmem:[#allocation2 + $0x158] sm:$0xff]
    %v5280 = vld [vmem:[#allocation2 + $0x160] sm:$0xff]
    %v5281 = vld [vmem:[#allocation2 + $0x168] sm:$0xff]
    %v5282 = vld [vmem:[#allocation2 + $0x170] sm:$0xff]
    %v5283 = vld [vmem:[#allocation2 + $0x178] sm:$0xff]
    %v5284 = vld [vmem:[#allocation2 + $0x180] sm:$0xff]
    %v5285 = vld [vmem:[#allocation2 + $0x188] sm:$0xff]
    %v5286 = vld [vmem:[#allocation2 + $0x190] sm:$0xff]
    %v5287 = vld [vmem:[#allocation2 + $0x198] sm:$0xff]
    %v5288 = vld [vmem:[#allocation2 + $0x1a0] sm:$0xff]
    %v5289 = vld [vmem:[#allocation2 + $0x1a8] sm:$0xff]
    %v5290 = vld [vmem:[#allocation2 + $0x1b0] sm:$0xff]
    %v5291 = vld [vmem:[#allocation2 + $0x1b8] sm:$0xff]
    %v5292 = vld [vmem:[#allocation2 + $0x1c0] sm:$0xff]
    %v5293 = vld [vmem:[#allocation2 + $0x1c8] sm:$0xff]
    %v5294 = vld [vmem:[#allocation2 + $0x1d0] sm:$0xff]
    %v5295 = vld [vmem:[#allocation2 + $0x1d8] sm:$0xff]
    %v5296 = vld [vmem:[#allocation2 + $0x1e0] sm:$0xff]
    %v5297 = vld [vmem:[#allocation2 + $0x1e8] sm:$0xff]
    %v5298 = vld [vmem:[#allocation2 + $0x1f0] sm:$0xff]
    %v5299 = vld [vmem:[#allocation2 + $0x1f8] sm:$0xff]
    %v5300 = vld [vmem:[#allocation2 + $0x200] sm:$0xff]
    %v5301 = vld [vmem:[#allocation2 + $0x208] sm:$0xff]
    %v5302 = vld [vmem:[#allocation2 + $0x210] sm:$0xff]
    %v5303 = vld [vmem:[#allocation2 + $0x218] sm:$0xff]
    %v5304 = vld [vmem:[#allocation2 + $0x220] sm:$0xff]
    %v5305 = vld [vmem:[#allocation2 + $0x228] sm:$0xff]
    %v5306 = vld [vmem:[#allocation2 + $0x230] sm:$0xff]
    %v5307 = vld [vmem:[#allocation2 + $0x238] sm:$0xff]
    %v5308 = vld [vmem:[#allocation2 + $0x240] sm:$0xff]
    %v5309 = vld [vmem:[#allocation2 + $0x248] sm:$0xff]
    %v5310 = vld [vmem:[#allocation2 + $0x250] sm:$0xff]
    %v5311 = vld [vmem:[#allocation2 + $0x258] sm:$0xff]
    %v5312 = vld [vmem:[#allocation2 + $0x260] sm:$0xff]
    %v5313 = vld [vmem:[#allocation2 + $0x268] sm:$0xff]
    %v5314 = vld [vmem:[#allocation2 + $0x270] sm:$0xff]
    %v5315 = vld [vmem:[#allocation2 + $0x278] sm:$0xff]
    %v5316 = vld [vmem:[#allocation2 + $0x280] sm:$0xff]
    %v5317 = vld [vmem:[#allocation2 + $0x288] sm:$0xff]
    %v5318 = vld [vmem:[#allocation2 + $0x290] sm:$0xff]
    %v5319 = vld [vmem:[#allocation2 + $0x298] sm:$0xff]
    %v5320 = vld [vmem:[#allocation2 + $0x2a0] sm:$0xff]
    %v5321 = vld [vmem:[#allocation2 + $0x2a8] sm:$0xff]
    %v5322 = vld [vmem:[#allocation2 + $0x2b0] sm:$0xff]
    %v5323 = vld [vmem:[#allocation2 + $0x2b8] sm:$0xff]
    %v5324 = vld [vmem:[#allocation2 + $0x2c0] sm:$0xff]
    %v5325 = vld [vmem:[#allocation2 + $0x2c8] sm:$0xff]
    %v5326 = vld [vmem:[#allocation2 + $0x2d0] sm:$0xff]
    %v5327 = vld [vmem:[#allocation2 + $0x2d8] sm:$0xff]
    %v5328 = vld [vmem:[#allocation2 + $0x2e0] sm:$0xff]
    %v5329 = vld [vmem:[#allocation2 + $0x2e8] sm:$0xff]
    %v5330 = vld [vmem:[#allocation2 + $0x2f0] sm:$0xff]
    %v5331 = vld [vmem:[#allocation2 + $0x2f8] sm:$0xff]
    %v5332 = vld [vmem:[#allocation2 + $0x300] sm:$0xff]
    %v5333 = vld [vmem:[#allocation2 + $0x308] sm:$0xff]
    %v5334 = vld [vmem:[#allocation2 + $0x310] sm:$0xff]
    %v5335 = vld [vmem:[#allocation2 + $0x318] sm:$0xff]
    %v5336 = vld [vmem:[#allocation2 + $0x320] sm:$0xff]
    %v5337 = vld [vmem:[#allocation2 + $0x328] sm:$0xff]
    %v5338 = vld [vmem:[#allocation2 + $0x330] sm:$0xff]
    %v5339 = vld [vmem:[#allocation2 + $0x338] sm:$0xff]
    %v5340 = vld [vmem:[#allocation2 + $0x340] sm:$0xff]
    %v5341 = vld [vmem:[#allocation2 + $0x348] sm:$0xff]
    %v5342 = vld [vmem:[#allocation2 + $0x350] sm:$0xff]
    %v5343 = vld [vmem:[#allocation2 + $0x358] sm:$0xff]
    %v5344 = vld [vmem:[#allocation2 + $0x360] sm:$0xff]
    %v5345 = vld [vmem:[#allocation2 + $0x368] sm:$0xff]
    %v5346 = vld [vmem:[#allocation2 + $0x370] sm:$0xff]
    %v5347 = vld [vmem:[#allocation2 + $0x378] sm:$0xff]
    %v5348 = vld [vmem:[#allocation2 + $0x380] sm:$0xff]
    %v5349 = vld [vmem:[#allocation2 + $0x388] sm:$0xff]
    %v5350 = vld [vmem:[#allocation2 + $0x390] sm:$0xff]
    %v5351 = vld [vmem:[#allocation2 + $0x398] sm:$0xff]
    %v5352 = vld [vmem:[#allocation2 + $0x3a0] sm:$0xff]
    %v5353 = vld [vmem:[#allocation2 + $0x3a8] sm:$0xff]
    %v5354 = vld [vmem:[#allocation2 + $0x3b0] sm:$0xff]
    %v5355 = vld [vmem:[#allocation2 + $0x3b8] sm:$0xff]
    %v5356 = vld [vmem:[#allocation2 + $0x3c0] sm:$0xff]
    %v5357 = vld [vmem:[#allocation2 + $0x3c8] sm:$0xff]
    %v5358 = vld [vmem:[#allocation2 + $0x3d0] sm:$0xff]
    %v5359 = vld [vmem:[#allocation2 + $0x3d8] sm:$0xff]
    %v5360 = vld [vmem:[#allocation2 + $0x3e0] sm:$0xff]
    %v5361 = vld [vmem:[#allocation2 + $0x3e8] sm:$0xff]
    %v5362 = vld [vmem:[#allocation2 + $0x3f0] sm:$0xff]
    %v5363 = vld [vmem:[#allocation2 + $0x3f8] sm:$0xff]
    %v5364 = vpack.c.bf16 %v4984, %v4980
    %v5365 = vpack.c.bf16 %v4985, %v4981
    %v5366 = vpack.c.bf16 %v4986, %v4982
    %v5367 = vpack.c.bf16 %v4987, %v4983
    %v5368 = vpack.c.bf16 %v4992, %v4988
    %v5369 = vpack.c.bf16 %v4993, %v4989
    %v5370 = vpack.c.bf16 %v4994, %v4990
    %v5371 = vpack.c.bf16 %v4995, %v4991
    %v5372 = vpack.c.bf16 %v5000, %v4996
    %v5373 = vpack.c.bf16 %v5001, %v4997
    %v5374 = vpack.c.bf16 %v5002, %v4998
    %v5375 = vpack.c.bf16 %v5003, %v4999
    %v5376 = vpack.c.bf16 %v5008, %v5004
    %v5377 = vpack.c.bf16 %v5009, %v5005
    %v5378 = vpack.c.bf16 %v5010, %v5006
    %v5379 = vpack.c.bf16 %v5011, %v5007
    %v5380 = vpack.c.bf16 %v5016, %v5012
    %v5381 = vpack.c.bf16 %v5017, %v5013
    %v5382 = vpack.c.bf16 %v5018, %v5014
    %v5383 = vpack.c.bf16 %v5019, %v5015
    %v5384 = vpack.c.bf16 %v5024, %v5020
    %v5385 = vpack.c.bf16 %v5025, %v5021
    %v5386 = vpack.c.bf16 %v5026, %v5022
    %v5387 = vpack.c.bf16 %v5027, %v5023
    %v5388 = vpack.c.bf16 %v5032, %v5028
    %v5389 = vpack.c.bf16 %v5033, %v5029
    %v5390 = vpack.c.bf16 %v5034, %v5030
    %v5391 = vpack.c.bf16 %v5035, %v5031
    %v5392 = vpack.c.bf16 %v5040, %v5036
    %v5393 = vpack.c.bf16 %v5041, %v5037
    %v5394 = vpack.c.bf16 %v5042, %v5038
    %v5395 = vpack.c.bf16 %v5043, %v5039
    %v5396 = vpack.c.bf16 %v5048, %v5044
    %v5397 = vpack.c.bf16 %v5049, %v5045
    %v5398 = vpack.c.bf16 %v5050, %v5046
    %v5399 = vpack.c.bf16 %v5051, %v5047
    %v5400 = vpack.c.bf16 %v5056, %v5052
    %v5401 = vpack.c.bf16 %v5057, %v5053
    %v5402 = vpack.c.bf16 %v5058, %v5054
    %v5403 = vpack.c.bf16 %v5059, %v5055
    %v5404 = vpack.c.bf16 %v5064, %v5060
    %v5405 = vpack.c.bf16 %v5065, %v5061
    %v5406 = vpack.c.bf16 %v5066, %v5062
    %v5407 = vpack.c.bf16 %v5067, %v5063
    %v5408 = vpack.c.bf16 %v5072, %v5068
    %v5409 = vpack.c.bf16 %v5073, %v5069
    %v5410 = vpack.c.bf16 %v5074, %v5070
    %v5411 = vpack.c.bf16 %v5075, %v5071
    %v5412 = vpack.c.bf16 %v5080, %v5076
    %v5413 = vpack.c.bf16 %v5081, %v5077
    %v5414 = vpack.c.bf16 %v5082, %v5078
    %v5415 = vpack.c.bf16 %v5083, %v5079
    %v5416 = vpack.c.bf16 %v5088, %v5084
    %v5417 = vpack.c.bf16 %v5089, %v5085
    %v5418 = vpack.c.bf16 %v5090, %v5086
    %v5419 = vpack.c.bf16 %v5091, %v5087
    %v5420 = vpack.c.bf16 %v5096, %v5092
    %v5421 = vpack.c.bf16 %v5097, %v5093
    %v5422 = vpack.c.bf16 %v5098, %v5094
    %v5423 = vpack.c.bf16 %v5099, %v5095
    %v5424 = vpack.c.bf16 %v5104, %v5100
    %v5425 = vpack.c.bf16 %v5105, %v5101
    %v5426 = vpack.c.bf16 %v5106, %v5102
    %v5427 = vpack.c.bf16 %v5107, %v5103
    %v5428 = vpack.c.bf16 %v5112, %v5108
    %v5429 = vpack.c.bf16 %v5113, %v5109
    %v5430 = vpack.c.bf16 %v5114, %v5110
    %v5431 = vpack.c.bf16 %v5115, %v5111
    %v5432 = vpack.c.bf16 %v5120, %v5116
    %v5433 = vpack.c.bf16 %v5121, %v5117
    %v5434 = vpack.c.bf16 %v5122, %v5118
    %v5435 = vpack.c.bf16 %v5123, %v5119
    %v5436 = vpack.c.bf16 %v5128, %v5124
    %v5437 = vpack.c.bf16 %v5129, %v5125
    %v5438 = vpack.c.bf16 %v5130, %v5126
    %v5439 = vpack.c.bf16 %v5131, %v5127
    %v5440 = vpack.c.bf16 %v5136, %v5132
    %v5441 = vpack.c.bf16 %v5137, %v5133
    %v5442 = vpack.c.bf16 %v5138, %v5134
    %v5443 = vpack.c.bf16 %v5139, %v5135
    %v5444 = vpack.c.bf16 %v5144, %v5140
    %v5445 = vpack.c.bf16 %v5145, %v5141
    %v5446 = vpack.c.bf16 %v5146, %v5142
    %v5447 = vpack.c.bf16 %v5147, %v5143
    %v5448 = vpack.c.bf16 %v5152, %v5148
    %v5449 = vpack.c.bf16 %v5153, %v5149
    %v5450 = vpack.c.bf16 %v5154, %v5150
    %v5451 = vpack.c.bf16 %v5155, %v5151
    %v5452 = vpack.c.bf16 %v5160, %v5156
    %v5453 = vpack.c.bf16 %v5161, %v5157
    %v5454 = vpack.c.bf16 %v5162, %v5158
    %v5455 = vpack.c.bf16 %v5163, %v5159
    %v5456 = vpack.c.bf16 %v5168, %v5164
    %v5457 = vpack.c.bf16 %v5169, %v5165
    %v5458 = vpack.c.bf16 %v5170, %v5166
    %v5459 = vpack.c.bf16 %v5171, %v5167
    %v5460 = vpack.c.bf16 %v5176, %v5172
    %v5461 = vpack.c.bf16 %v5177, %v5173
    %v5462 = vpack.c.bf16 %v5178, %v5174
    %v5463 = vpack.c.bf16 %v5179, %v5175
    %v5464 = vpack.c.bf16 %v5184, %v5180
    %v5465 = vpack.c.bf16 %v5185, %v5181
    %v5466 = vpack.c.bf16 %v5186, %v5182
    %v5467 = vpack.c.bf16 %v5187, %v5183
    %v5468 = vpack.c.bf16 %v5192, %v5188
    %v5469 = vpack.c.bf16 %v5193, %v5189
    %v5470 = vpack.c.bf16 %v5194, %v5190
    %v5471 = vpack.c.bf16 %v5195, %v5191
    %v5472 = vpack.c.bf16 %v5200, %v5196
    %v5473 = vpack.c.bf16 %v5201, %v5197
    %v5474 = vpack.c.bf16 %v5202, %v5198
    %v5475 = vpack.c.bf16 %v5203, %v5199
    %v5476 = vpack.c.bf16 %v5208, %v5204
    %v5477 = vpack.c.bf16 %v5209, %v5205
    %v5478 = vpack.c.bf16 %v5210, %v5206
    %v5479 = vpack.c.bf16 %v5211, %v5207
    %v5480 = vpack.c.bf16 %v5216, %v5212
    %v5481 = vpack.c.bf16 %v5217, %v5213
    %v5482 = vpack.c.bf16 %v5218, %v5214
    %v5483 = vpack.c.bf16 %v5219, %v5215
    %v5484 = vpack.c.bf16 %v5224, %v5220
    %v5485 = vpack.c.bf16 %v5225, %v5221
    %v5486 = vpack.c.bf16 %v5226, %v5222
    %v5487 = vpack.c.bf16 %v5227, %v5223
    %v5488 = vpack.c.bf16 %v5232, %v5228
    %v5489 = vpack.c.bf16 %v5233, %v5229
    %v5490 = vpack.c.bf16 %v5234, %v5230
    %v5491 = vpack.c.bf16 %v5235, %v5231
    %5492 = vset.pattern.permute.xlu0 2
    %5493 = vperm.xlu0 %5492, %v103
    %v5494 = vpop.permute.xlu0 %5493
    %5496 = vset.pattern.permute.xlu0 2
    %5497 = vperm.xlu0 %5496, %v104
    %v5498 = vpop.permute.xlu0 %5497
    %5500 = vset.pattern.permute.xlu0 2
    %5501 = vperm.xlu0 %5500, %v105
    %v5502 = vpop.permute.xlu0 %5501
    %5504 = vset.pattern.permute.xlu0 2
    %5505 = vperm.xlu0 %5504, %v106
    %v5506 = vpop.permute.xlu0 %5505
    %5508 = vset.pattern.permute.xlu0 2
    %5509 = vperm.xlu0 %5508, %v107
    %v5510 = vpop.permute.xlu0 %5509
    %5512 = vset.pattern.permute.xlu0 2
    %5513 = vperm.xlu0 %5512, %v108
    %v5514 = vpop.permute.xlu0 %5513
    %5516 = vset.pattern.permute.xlu0 2
    %5517 = vperm.xlu0 %5516, %v109
    %v5518 = vpop.permute.xlu0 %5517
    %5520 = vset.pattern.permute.xlu0 2
    %5521 = vperm.xlu0 %5520, %v110
    %v5522 = vpop.permute.xlu0 %5521
    %5524 = vset.pattern.permute.xlu0 2
    %5525 = vperm.xlu0 %5524, %v111
    %v5526 = vpop.permute.xlu0 %5525
    %5528 = vset.pattern.permute.xlu0 2
    %5529 = vperm.xlu0 %5528, %v112
    %v5530 = vpop.permute.xlu0 %5529
    %5532 = vset.pattern.permute.xlu0 2
    %5533 = vperm.xlu0 %5532, %v113
    %v5534 = vpop.permute.xlu0 %5533
    %5536 = vset.pattern.permute.xlu0 2
    %5537 = vperm.xlu0 %5536, %v114
    %v5538 = vpop.permute.xlu0 %5537
    %5540 = vset.pattern.permute.xlu0 2
    %5541 = vperm.xlu0 %5540, %v115
    %v5542 = vpop.permute.xlu0 %5541
    %5544 = vset.pattern.permute.xlu0 2
    %5545 = vperm.xlu0 %5544, %v116
    %v5546 = vpop.permute.xlu0 %5545
    %5548 = vset.pattern.permute.xlu0 2
    %5549 = vperm.xlu0 %5548, %v117
    %v5550 = vpop.permute.xlu0 %5549
    %5552 = vset.pattern.permute.xlu0 2
    %5553 = vperm.xlu0 %5552, %v118
    %v5554 = vpop.permute.xlu0 %5553
    %5556 = vset.pattern.permute.xlu0 2
    %5557 = vperm.xlu0 %5556, %v119
    %v5558 = vpop.permute.xlu0 %5557
    %5560 = vset.pattern.permute.xlu0 2
    %5561 = vperm.xlu0 %5560, %v120
    %v5562 = vpop.permute.xlu0 %5561
    %5564 = vset.pattern.permute.xlu0 2
    %5565 = vperm.xlu0 %5564, %v121
    %v5566 = vpop.permute.xlu0 %5565
    %5568 = vset.pattern.permute.xlu0 2
    %5569 = vperm.xlu0 %5568, %v122
    %v5570 = vpop.permute.xlu0 %5569
    %5572 = vset.pattern.permute.xlu0 2
    %5573 = vperm.xlu0 %5572, %v123
    %v5574 = vpop.permute.xlu0 %5573
    %5576 = vset.pattern.permute.xlu0 2
    %5577 = vperm.xlu0 %5576, %v124
    %v5578 = vpop.permute.xlu0 %5577
    %5580 = vset.pattern.permute.xlu0 2
    %5581 = vperm.xlu0 %5580, %v125
    %v5582 = vpop.permute.xlu0 %5581
    %5584 = vset.pattern.permute.xlu0 2
    %5585 = vperm.xlu0 %5584, %v126
    %v5586 = vpop.permute.xlu0 %5585
    %5588 = vset.pattern.permute.xlu0 2
    %5589 = vperm.xlu0 %5588, %v127
    %v5590 = vpop.permute.xlu0 %5589
    %5592 = vset.pattern.permute.xlu0 2
    %5593 = vperm.xlu0 %5592, %v128
    %v5594 = vpop.permute.xlu0 %5593
    %5596 = vset.pattern.permute.xlu0 2
    %5597 = vperm.xlu0 %5596, %v129
    %v5598 = vpop.permute.xlu0 %5597
    %5600 = vset.pattern.permute.xlu0 2
    %5601 = vperm.xlu0 %5600, %v130
    %v5602 = vpop.permute.xlu0 %5601
    %5604 = vset.pattern.permute.xlu0 2
    %5605 = vperm.xlu0 %5604, %v131
    %v5606 = vpop.permute.xlu0 %5605
    %5608 = vset.pattern.permute.xlu0 2
    %5609 = vperm.xlu0 %5608, %v132
    %v5610 = vpop.permute.xlu0 %5609
    %5612 = vset.pattern.permute.xlu0 2
    %5613 = vperm.xlu0 %5612, %v133
    %v5614 = vpop.permute.xlu0 %5613
    %5616 = vset.pattern.permute.xlu0 2
    %5617 = vperm.xlu0 %5616, %v134
    %v5618 = vpop.permute.xlu0 %5617
    %5620 = vset.pattern.permute.xlu0 2
    %5621 = vperm.xlu0 %5620, %v135
    %v5622 = vpop.permute.xlu0 %5621
    %5624 = vset.pattern.permute.xlu0 2
    %5625 = vperm.xlu0 %5624, %v136
    %v5626 = vpop.permute.xlu0 %5625
    %5628 = vset.pattern.permute.xlu0 2
    %5629 = vperm.xlu0 %5628, %v137
    %v5630 = vpop.permute.xlu0 %5629
    %5632 = vset.pattern.permute.xlu0 2
    %5633 = vperm.xlu0 %5632, %v138
    %v5634 = vpop.permute.xlu0 %5633
    %5636 = vset.pattern.permute.xlu0 2
    %5637 = vperm.xlu0 %5636, %v139
    %v5638 = vpop.permute.xlu0 %5637
    %5640 = vset.pattern.permute.xlu0 2
    %5641 = vperm.xlu0 %5640, %v140
    %v5642 = vpop.permute.xlu0 %5641
    %5644 = vset.pattern.permute.xlu0 2
    %5645 = vperm.xlu0 %5644, %v141
    %v5646 = vpop.permute.xlu0 %5645
    %5648 = vset.pattern.permute.xlu0 2
    %5649 = vperm.xlu0 %5648, %v142
    %v5650 = vpop.permute.xlu0 %5649
    %5652 = vset.pattern.permute.xlu0 2
    %5653 = vperm.xlu0 %5652, %v143
    %v5654 = vpop.permute.xlu0 %5653
    %5656 = vset.pattern.permute.xlu0 2
    %5657 = vperm.xlu0 %5656, %v144
    %v5658 = vpop.permute.xlu0 %5657
    %5660 = vset.pattern.permute.xlu0 2
    %5661 = vperm.xlu0 %5660, %v145
    %v5662 = vpop.permute.xlu0 %5661
    %5664 = vset.pattern.permute.xlu0 2
    %5665 = vperm.xlu0 %5664, %v146
    %v5666 = vpop.permute.xlu0 %5665
    %5668 = vset.pattern.permute.xlu0 2
    %5669 = vperm.xlu0 %5668, %v147
    %v5670 = vpop.permute.xlu0 %5669
    %5672 = vset.pattern.permute.xlu0 2
    %5673 = vperm.xlu0 %5672, %v148
    %v5674 = vpop.permute.xlu0 %5673
    %5676 = vset.pattern.permute.xlu0 2
    %5677 = vperm.xlu0 %5676, %v149
    %v5678 = vpop.permute.xlu0 %5677
    %5680 = vset.pattern.permute.xlu0 2
    %5681 = vperm.xlu0 %5680, %v150
    %v5682 = vpop.permute.xlu0 %5681
    %5684 = vset.pattern.permute.xlu0 2
    %5685 = vperm.xlu0 %5684, %v151
    %v5686 = vpop.permute.xlu0 %5685
    %5688 = vset.pattern.permute.xlu0 2
    %5689 = vperm.xlu0 %5688, %v152
    %v5690 = vpop.permute.xlu0 %5689
    %5692 = vset.pattern.permute.xlu0 2
    %5693 = vperm.xlu0 %5692, %v153
    %v5694 = vpop.permute.xlu0 %5693
    %5696 = vset.pattern.permute.xlu0 2
    %5697 = vperm.xlu0 %5696, %v154
    %v5698 = vpop.permute.xlu0 %5697
    %5700 = vset.pattern.permute.xlu0 2
    %5701 = vperm.xlu0 %5700, %v155
    %v5702 = vpop.permute.xlu0 %5701
    %5704 = vset.pattern.permute.xlu0 2
    %5705 = vperm.xlu0 %5704, %v156
    %v5706 = vpop.permute.xlu0 %5705
    %5708 = vset.pattern.permute.xlu0 2
    %5709 = vperm.xlu0 %5708, %v157
    %v5710 = vpop.permute.xlu0 %5709
    %5712 = vset.pattern.permute.xlu0 2
    %5713 = vperm.xlu0 %5712, %v158
    %v5714 = vpop.permute.xlu0 %5713
    %5716 = vset.pattern.permute.xlu0 2
    %5717 = vperm.xlu0 %5716, %v159
    %v5718 = vpop.permute.xlu0 %5717
    %5720 = vset.pattern.permute.xlu0 2
    %5721 = vperm.xlu0 %5720, %v160
    %v5722 = vpop.permute.xlu0 %5721
    %5724 = vset.pattern.permute.xlu0 2
    %5725 = vperm.xlu0 %5724, %v161
    %v5726 = vpop.permute.xlu0 %5725
    %5728 = vset.pattern.permute.xlu0 2
    %5729 = vperm.xlu0 %5728, %v162
    %v5730 = vpop.permute.xlu0 %5729
    %5732 = vset.pattern.permute.xlu0 2
    %5733 = vperm.xlu0 %5732, %v163
    %v5734 = vpop.permute.xlu0 %5733
    %5736 = vset.pattern.permute.xlu0 2
    %5737 = vperm.xlu0 %5736, %v164
    %v5738 = vpop.permute.xlu0 %5737
    %5740 = vset.pattern.permute.xlu0 2
    %5741 = vperm.xlu0 %5740, %v165
    %v5742 = vpop.permute.xlu0 %5741
    %5744 = vset.pattern.permute.xlu0 2
    %5745 = vperm.xlu0 %5744, %v166
    %v5746 = vpop.permute.xlu0 %5745
    %v5876 = vunpack.c.l.b16 %v5236
    %v5877 = vunpack.c.h.b16 %v5236
    %v5878 = vunpack.c.l.b16 %v5237
    %v5879 = vunpack.c.h.b16 %v5237
    %v5880 = vunpack.c.l.b16 %v5238
    %v5881 = vunpack.c.h.b16 %v5238
    %v5882 = vunpack.c.l.b16 %v5239
    %v5883 = vunpack.c.h.b16 %v5239
    %v5884 = vunpack.c.l.b16 %v5240
    %v5885 = vunpack.c.h.b16 %v5240
    %v5886 = vunpack.c.l.b16 %v5241
    %v5887 = vunpack.c.h.b16 %v5241
    %v5888 = vunpack.c.l.b16 %v5242
    %v5889 = vunpack.c.h.b16 %v5242
    %v5890 = vunpack.c.l.b16 %v5243
    %v5891 = vunpack.c.h.b16 %v5243
    %v5892 = vunpack.c.l.b16 %v5244
    %v5893 = vunpack.c.h.b16 %v5244
    %v5894 = vunpack.c.l.b16 %v5245
    %v5895 = vunpack.c.h.b16 %v5245
    %v5896 = vunpack.c.l.b16 %v5246
    %v5897 = vunpack.c.h.b16 %v5246
    %v5898 = vunpack.c.l.b16 %v5247
    %v5899 = vunpack.c.h.b16 %v5247
    %v5900 = vunpack.c.l.b16 %v5248
    %v5901 = vunpack.c.h.b16 %v5248
    %v5902 = vunpack.c.l.b16 %v5249
    %v5903 = vunpack.c.h.b16 %v5249
    %v5904 = vunpack.c.l.b16 %v5250
    %v5905 = vunpack.c.h.b16 %v5250
    %v5906 = vunpack.c.l.b16 %v5251
    %v5907 = vunpack.c.h.b16 %v5251
    %v5908 = vunpack.c.l.b16 %v5252
    %v5909 = vunpack.c.h.b16 %v5252
    %v5910 = vunpack.c.l.b16 %v5253
    %v5911 = vunpack.c.h.b16 %v5253
    %v5912 = vunpack.c.l.b16 %v5254
    %v5913 = vunpack.c.h.b16 %v5254
    %v5914 = vunpack.c.l.b16 %v5255
    %v5915 = vunpack.c.h.b16 %v5255
    %v5916 = vunpack.c.l.b16 %v5256
    %v5917 = vunpack.c.h.b16 %v5256
    %v5918 = vunpack.c.l.b16 %v5257
    %v5919 = vunpack.c.h.b16 %v5257
    %v5920 = vunpack.c.l.b16 %v5258
    %v5921 = vunpack.c.h.b16 %v5258
    %v5922 = vunpack.c.l.b16 %v5259
    %v5923 = vunpack.c.h.b16 %v5259
    %v5924 = vunpack.c.l.b16 %v5260
    %v5925 = vunpack.c.h.b16 %v5260
    %v5926 = vunpack.c.l.b16 %v5261
    %v5927 = vunpack.c.h.b16 %v5261
    %v5928 = vunpack.c.l.b16 %v5262
    %v5929 = vunpack.c.h.b16 %v5262
    %v5930 = vunpack.c.l.b16 %v5263
    %v5931 = vunpack.c.h.b16 %v5263
    %v5932 = vunpack.c.l.b16 %v5264
    %v5933 = vunpack.c.h.b16 %v5264
    %v5934 = vunpack.c.l.b16 %v5265
    %v5935 = vunpack.c.h.b16 %v5265
    %v5936 = vunpack.c.l.b16 %v5266
    %v5937 = vunpack.c.h.b16 %v5266
    %v5938 = vunpack.c.l.b16 %v5267
    %v5939 = vunpack.c.h.b16 %v5267
    %v5940 = vunpack.c.l.b16 %v5268
    %v5941 = vunpack.c.h.b16 %v5268
    %v5942 = vunpack.c.l.b16 %v5269
    %v5943 = vunpack.c.h.b16 %v5269
    %v5944 = vunpack.c.l.b16 %v5270
    %v5945 = vunpack.c.h.b16 %v5270
    %v5946 = vunpack.c.l.b16 %v5271
    %v5947 = vunpack.c.h.b16 %v5271
    %v5948 = vunpack.c.l.b16 %v5272
    %v5949 = vunpack.c.h.b16 %v5272
    %v5950 = vunpack.c.l.b16 %v5273
    %v5951 = vunpack.c.h.b16 %v5273
    %v5952 = vunpack.c.l.b16 %v5274
    %v5953 = vunpack.c.h.b16 %v5274
    %v5954 = vunpack.c.l.b16 %v5275
    %v5955 = vunpack.c.h.b16 %v5275
    %v5956 = vunpack.c.l.b16 %v5276
    %v5957 = vunpack.c.h.b16 %v5276
    %v5958 = vunpack.c.l.b16 %v5277
    %v5959 = vunpack.c.h.b16 %v5277
    %v5960 = vunpack.c.l.b16 %v5278
    %v5961 = vunpack.c.h.b16 %v5278
    %v5962 = vunpack.c.l.b16 %v5279
    %v5963 = vunpack.c.h.b16 %v5279
    %v5964 = vunpack.c.l.b16 %v5280
    %v5965 = vunpack.c.h.b16 %v5280
    %v5966 = vunpack.c.l.b16 %v5281
    %v5967 = vunpack.c.h.b16 %v5281
    %v5968 = vunpack.c.l.b16 %v5282
    %v5969 = vunpack.c.h.b16 %v5282
    %v5970 = vunpack.c.l.b16 %v5283
    %v5971 = vunpack.c.h.b16 %v5283
    %v5972 = vunpack.c.l.b16 %v5284
    %v5973 = vunpack.c.h.b16 %v5284
    %v5974 = vunpack.c.l.b16 %v5285
    %v5975 = vunpack.c.h.b16 %v5285
    %v5976 = vunpack.c.l.b16 %v5286
    %v5977 = vunpack.c.h.b16 %v5286
    %v5978 = vunpack.c.l.b16 %v5287
    %v5979 = vunpack.c.h.b16 %v5287
    %v5980 = vunpack.c.l.b16 %v5288
    %v5981 = vunpack.c.h.b16 %v5288
    %v5982 = vunpack.c.l.b16 %v5289
    %v5983 = vunpack.c.h.b16 %v5289
    %v5984 = vunpack.c.l.b16 %v5290
    %v5985 = vunpack.c.h.b16 %v5290
    %v5986 = vunpack.c.l.b16 %v5291
    %v5987 = vunpack.c.h.b16 %v5291
    %v5988 = vunpack.c.l.b16 %v5292
    %v5989 = vunpack.c.h.b16 %v5292
    %v5990 = vunpack.c.l.b16 %v5293
    %v5991 = vunpack.c.h.b16 %v5293
    %v5992 = vunpack.c.l.b16 %v5294
    %v5993 = vunpack.c.h.b16 %v5294
    %v5994 = vunpack.c.l.b16 %v5295
    %v5995 = vunpack.c.h.b16 %v5295
    %v5996 = vunpack.c.l.b16 %v5296
    %v5997 = vunpack.c.h.b16 %v5296
    %v5998 = vunpack.c.l.b16 %v5297
    %v5999 = vunpack.c.h.b16 %v5297
    %v6000 = vunpack.c.l.b16 %v5298
    %v6001 = vunpack.c.h.b16 %v5298
    %v6002 = vunpack.c.l.b16 %v5299
    %v6003 = vunpack.c.h.b16 %v5299
    %v6004 = vunpack.c.l.b16 %v5300
    %v6005 = vunpack.c.h.b16 %v5300
    %v6006 = vunpack.c.l.b16 %v5301
    %v6007 = vunpack.c.h.b16 %v5301
    %v6008 = vunpack.c.l.b16 %v5302
    %v6009 = vunpack.c.h.b16 %v5302
    %v6010 = vunpack.c.l.b16 %v5303
    %v6011 = vunpack.c.h.b16 %v5303
    %v6012 = vunpack.c.l.b16 %v5304
    %v6013 = vunpack.c.h.b16 %v5304
    %v6014 = vunpack.c.l.b16 %v5305
    %v6015 = vunpack.c.h.b16 %v5305
    %v6016 = vunpack.c.l.b16 %v5306
    %v6017 = vunpack.c.h.b16 %v5306
    %v6018 = vunpack.c.l.b16 %v5307
    %v6019 = vunpack.c.h.b16 %v5307
    %v6020 = vunpack.c.l.b16 %v5308
    %v6021 = vunpack.c.h.b16 %v5308
    %v6022 = vunpack.c.l.b16 %v5309
    %v6023 = vunpack.c.h.b16 %v5309
    %v6024 = vunpack.c.l.b16 %v5310
    %v6025 = vunpack.c.h.b16 %v5310
    %v6026 = vunpack.c.l.b16 %v5311
    %v6027 = vunpack.c.h.b16 %v5311
    %v6028 = vunpack.c.l.b16 %v5312
    %v6029 = vunpack.c.h.b16 %v5312
    %v6030 = vunpack.c.l.b16 %v5313
    %v6031 = vunpack.c.h.b16 %v5313
    %v6032 = vunpack.c.l.b16 %v5314
    %v6033 = vunpack.c.h.b16 %v5314
    %v6034 = vunpack.c.l.b16 %v5315
    %v6035 = vunpack.c.h.b16 %v5315
    %v6036 = vunpack.c.l.b16 %v5316
    %v6037 = vunpack.c.h.b16 %v5316
    %v6038 = vunpack.c.l.b16 %v5317
    %v6039 = vunpack.c.h.b16 %v5317
    %v6040 = vunpack.c.l.b16 %v5318
    %v6041 = vunpack.c.h.b16 %v5318
    %v6042 = vunpack.c.l.b16 %v5319
    %v6043 = vunpack.c.h.b16 %v5319
    %v6044 = vunpack.c.l.b16 %v5320
    %v6045 = vunpack.c.h.b16 %v5320
    %v6046 = vunpack.c.l.b16 %v5321
    %v6047 = vunpack.c.h.b16 %v5321
    %v6048 = vunpack.c.l.b16 %v5322
    %v6049 = vunpack.c.h.b16 %v5322
    %v6050 = vunpack.c.l.b16 %v5323
    %v6051 = vunpack.c.h.b16 %v5323
    %v6052 = vunpack.c.l.b16 %v5324
    %v6053 = vunpack.c.h.b16 %v5324
    %v6054 = vunpack.c.l.b16 %v5325
    %v6055 = vunpack.c.h.b16 %v5325
    %v6056 = vunpack.c.l.b16 %v5326
    %v6057 = vunpack.c.h.b16 %v5326
    %v6058 = vunpack.c.l.b16 %v5327
    %v6059 = vunpack.c.h.b16 %v5327
    %v6060 = vunpack.c.l.b16 %v5328
    %v6061 = vunpack.c.h.b16 %v5328
    %v6062 = vunpack.c.l.b16 %v5329
    %v6063 = vunpack.c.h.b16 %v5329
    %v6064 = vunpack.c.l.b16 %v5330
    %v6065 = vunpack.c.h.b16 %v5330
    %v6066 = vunpack.c.l.b16 %v5331
    %v6067 = vunpack.c.h.b16 %v5331
    %v6068 = vunpack.c.l.b16 %v5332
    %v6069 = vunpack.c.h.b16 %v5332
    %v6070 = vunpack.c.l.b16 %v5333
    %v6071 = vunpack.c.h.b16 %v5333
    %v6072 = vunpack.c.l.b16 %v5334
    %v6073 = vunpack.c.h.b16 %v5334
    %v6074 = vunpack.c.l.b16 %v5335
    %v6075 = vunpack.c.h.b16 %v5335
    %v6076 = vunpack.c.l.b16 %v5336
    %v6077 = vunpack.c.h.b16 %v5336
    %v6078 = vunpack.c.l.b16 %v5337
    %v6079 = vunpack.c.h.b16 %v5337
    %v6080 = vunpack.c.l.b16 %v5338
    %v6081 = vunpack.c.h.b16 %v5338
    %v6082 = vunpack.c.l.b16 %v5339
    %v6083 = vunpack.c.h.b16 %v5339
    %v6084 = vunpack.c.l.b16 %v5340
    %v6085 = vunpack.c.h.b16 %v5340
    %v6086 = vunpack.c.l.b16 %v5341
    %v6087 = vunpack.c.h.b16 %v5341
    %v6088 = vunpack.c.l.b16 %v5342
    %v6089 = vunpack.c.h.b16 %v5342
    %v6090 = vunpack.c.l.b16 %v5343
    %v6091 = vunpack.c.h.b16 %v5343
    %v6092 = vunpack.c.l.b16 %v5344
    %v6093 = vunpack.c.h.b16 %v5344
    %v6094 = vunpack.c.l.b16 %v5345
    %v6095 = vunpack.c.h.b16 %v5345
    %v6096 = vunpack.c.l.b16 %v5346
    %v6097 = vunpack.c.h.b16 %v5346
    %v6098 = vunpack.c.l.b16 %v5347
    %v6099 = vunpack.c.h.b16 %v5347
    %v6100 = vunpack.c.l.b16 %v5348
    %v6101 = vunpack.c.h.b16 %v5348
    %v6102 = vunpack.c.l.b16 %v5349
    %v6103 = vunpack.c.h.b16 %v5349
    %v6104 = vunpack.c.l.b16 %v5350
    %v6105 = vunpack.c.h.b16 %v5350
    %v6106 = vunpack.c.l.b16 %v5351
    %v6107 = vunpack.c.h.b16 %v5351
    %v6108 = vunpack.c.l.b16 %v5352
    %v6109 = vunpack.c.h.b16 %v5352
    %v6110 = vunpack.c.l.b16 %v5353
    %v6111 = vunpack.c.h.b16 %v5353
    %v6112 = vunpack.c.l.b16 %v5354
    %v6113 = vunpack.c.h.b16 %v5354
    %v6114 = vunpack.c.l.b16 %v5355
    %v6115 = vunpack.c.h.b16 %v5355
    %v6116 = vunpack.c.l.b16 %v5356
    %v6117 = vunpack.c.h.b16 %v5356
    %v6118 = vunpack.c.l.b16 %v5357
    %v6119 = vunpack.c.h.b16 %v5357
    %v6120 = vunpack.c.l.b16 %v5358
    %v6121 = vunpack.c.h.b16 %v5358
    %v6122 = vunpack.c.l.b16 %v5359
    %v6123 = vunpack.c.h.b16 %v5359
    %v6124 = vunpack.c.l.b16 %v5360
    %v6125 = vunpack.c.h.b16 %v5360
    %v6126 = vunpack.c.l.b16 %v5361
    %v6127 = vunpack.c.h.b16 %v5361
    %v6128 = vunpack.c.l.b16 %v5362
    %v6129 = vunpack.c.h.b16 %v5362
    %v6130 = vunpack.c.l.b16 %v5363
    %v6131 = vunpack.c.h.b16 %v5363
    %v6132 = vpack.c.b16 %v5880, %v5876
    %v6133 = vpack.c.b16 %v5881, %v5877
    %v6134 = vpack.c.b16 %v5882, %v5878
    %v6135 = vpack.c.b16 %v5883, %v5879
    %v6136 = vpack.c.b16 %v5888, %v5884
    %v6137 = vpack.c.b16 %v5889, %v5885
    %v6138 = vpack.c.b16 %v5890, %v5886
    %v6139 = vpack.c.b16 %v5891, %v5887
    %v6140 = vpack.c.b16 %v5896, %v5892
    %v6141 = vpack.c.b16 %v5897, %v5893
    %v6142 = vpack.c.b16 %v5898, %v5894
    %v6143 = vpack.c.b16 %v5899, %v5895
    %v6144 = vpack.c.b16 %v5904, %v5900
    %v6145 = vpack.c.b16 %v5905, %v5901
    %v6146 = vpack.c.b16 %v5906, %v5902
    %v6147 = vpack.c.b16 %v5907, %v5903
    %v6148 = vpack.c.b16 %v5912, %v5908
    %v6149 = vpack.c.b16 %v5913, %v5909
    %v6150 = vpack.c.b16 %v5914, %v5910
    %v6151 = vpack.c.b16 %v5915, %v5911
    %v6152 = vpack.c.b16 %v5920, %v5916
    %v6153 = vpack.c.b16 %v5921, %v5917
    %v6154 = vpack.c.b16 %v5922, %v5918
    %v6155 = vpack.c.b16 %v5923, %v5919
    %v6156 = vpack.c.b16 %v5928, %v5924
    %v6157 = vpack.c.b16 %v5929, %v5925
    %v6158 = vpack.c.b16 %v5930, %v5926
    %v6159 = vpack.c.b16 %v5931, %v5927
    %v6160 = vpack.c.b16 %v5936, %v5932
    %v6161 = vpack.c.b16 %v5937, %v5933
    %v6162 = vpack.c.b16 %v5938, %v5934
    %v6163 = vpack.c.b16 %v5939, %v5935
    %v6164 = vpack.c.b16 %v5944, %v5940
    %v6165 = vpack.c.b16 %v5945, %v5941
    %v6166 = vpack.c.b16 %v5946, %v5942
    %v6167 = vpack.c.b16 %v5947, %v5943
    %v6168 = vpack.c.b16 %v5952, %v5948
    %v6169 = vpack.c.b16 %v5953, %v5949
    %v6170 = vpack.c.b16 %v5954, %v5950
    %v6171 = vpack.c.b16 %v5955, %v5951
    %v6172 = vpack.c.b16 %v5960, %v5956
    %v6173 = vpack.c.b16 %v5961, %v5957
    %v6174 = vpack.c.b16 %v5962, %v5958
    %v6175 = vpack.c.b16 %v5963, %v5959
    %v6176 = vpack.c.b16 %v5968, %v5964
    %v6177 = vpack.c.b16 %v5969, %v5965
    %v6178 = vpack.c.b16 %v5970, %v5966
    %v6179 = vpack.c.b16 %v5971, %v5967
    %v6180 = vpack.c.b16 %v5976, %v5972
    %v6181 = vpack.c.b16 %v5977, %v5973
    %v6182 = vpack.c.b16 %v5978, %v5974
    %v6183 = vpack.c.b16 %v5979, %v5975
    %v6184 = vpack.c.b16 %v5984, %v5980
    %v6185 = vpack.c.b16 %v5985, %v5981
    %v6186 = vpack.c.b16 %v5986, %v5982
    %v6187 = vpack.c.b16 %v5987, %v5983
    %v6188 = vpack.c.b16 %v5992, %v5988
    %v6189 = vpack.c.b16 %v5993, %v5989
    %v6190 = vpack.c.b16 %v5994, %v5990
    %v6191 = vpack.c.b16 %v5995, %v5991
    %v6192 = vpack.c.b16 %v6000, %v5996
    %v6193 = vpack.c.b16 %v6001, %v5997
    %v6194 = vpack.c.b16 %v6002, %v5998
    %v6195 = vpack.c.b16 %v6003, %v5999
    %v6196 = vpack.c.b16 %v6008, %v6004
    %v6197 = vpack.c.b16 %v6009, %v6005
    %v6198 = vpack.c.b16 %v6010, %v6006
    %v6199 = vpack.c.b16 %v6011, %v6007
    %v6200 = vpack.c.b16 %v6016, %v6012
    %v6201 = vpack.c.b16 %v6017, %v6013
    %v6202 = vpack.c.b16 %v6018, %v6014
    %v6203 = vpack.c.b16 %v6019, %v6015
    %v6204 = vpack.c.b16 %v6024, %v6020
    %v6205 = vpack.c.b16 %v6025, %v6021
    %v6206 = vpack.c.b16 %v6026, %v6022
    %v6207 = vpack.c.b16 %v6027, %v6023
    %v6208 = vpack.c.b16 %v6032, %v6028
    %v6209 = vpack.c.b16 %v6033, %v6029
    %v6210 = vpack.c.b16 %v6034, %v6030
    %v6211 = vpack.c.b16 %v6035, %v6031
    %v6212 = vpack.c.b16 %v6040, %v6036
    %v6213 = vpack.c.b16 %v6041, %v6037
    %v6214 = vpack.c.b16 %v6042, %v6038
    %v6215 = vpack.c.b16 %v6043, %v6039
    %v6216 = vpack.c.b16 %v6048, %v6044
    %v6217 = vpack.c.b16 %v6049, %v6045
    %v6218 = vpack.c.b16 %v6050, %v6046
    %v6219 = vpack.c.b16 %v6051, %v6047
    %v6220 = vpack.c.b16 %v6056, %v6052
    %v6221 = vpack.c.b16 %v6057, %v6053
    %v6222 = vpack.c.b16 %v6058, %v6054
    %v6223 = vpack.c.b16 %v6059, %v6055
    %v6224 = vpack.c.b16 %v6064, %v6060
    %v6225 = vpack.c.b16 %v6065, %v6061
    %v6226 = vpack.c.b16 %v6066, %v6062
    %v6227 = vpack.c.b16 %v6067, %v6063
    %v6228 = vpack.c.b16 %v6072, %v6068
    %v6229 = vpack.c.b16 %v6073, %v6069
    %v6230 = vpack.c.b16 %v6074, %v6070
    %v6231 = vpack.c.b16 %v6075, %v6071
    %v6232 = vpack.c.b16 %v6080, %v6076
    %v6233 = vpack.c.b16 %v6081, %v6077
    %v6234 = vpack.c.b16 %v6082, %v6078
    %v6235 = vpack.c.b16 %v6083, %v6079
    %v6236 = vpack.c.b16 %v6088, %v6084
    %v6237 = vpack.c.b16 %v6089, %v6085
    %v6238 = vpack.c.b16 %v6090, %v6086
    %v6239 = vpack.c.b16 %v6091, %v6087
    %v6240 = vpack.c.b16 %v6096, %v6092
    %v6241 = vpack.c.b16 %v6097, %v6093
    %v6242 = vpack.c.b16 %v6098, %v6094
    %v6243 = vpack.c.b16 %v6099, %v6095
    %v6244 = vpack.c.b16 %v6104, %v6100
    %v6245 = vpack.c.b16 %v6105, %v6101
    %v6246 = vpack.c.b16 %v6106, %v6102
    %v6247 = vpack.c.b16 %v6107, %v6103
    %v6248 = vpack.c.b16 %v6112, %v6108
    %v6249 = vpack.c.b16 %v6113, %v6109
    %v6250 = vpack.c.b16 %v6114, %v6110
    %v6251 = vpack.c.b16 %v6115, %v6111
    %v6252 = vpack.c.b16 %v6120, %v6116
    %v6253 = vpack.c.b16 %v6121, %v6117
    %v6254 = vpack.c.b16 %v6122, %v6118
    %v6255 = vpack.c.b16 %v6123, %v6119
    %v6256 = vpack.c.b16 %v6128, %v6124
    %v6257 = vpack.c.b16 %v6129, %v6125
    %v6258 = vpack.c.b16 %v6130, %v6126
    %v6259 = vpack.c.b16 %v6131, %v6127
    %6388 = vmatprep.subr.bf16.mxu0 %v5393
    %6389 = vmatpush1.bf16.msra.mxu0 %v5392
    %6390 = vmatprep.subr.bf16.mxu0 %v5389
    %6391 = vmatpush1.bf16.msra.mxu0 %v5388
    %6392 = vmatprep.subr.bf16.mxu0 %v5385
    %6393 = vmatpush1.bf16.msra.mxu0 %v5384
    %6394 = vmatprep.subr.bf16.mxu0 %v5381
    %6395 = vmatpush1.bf16.msra.mxu0 %v5380
    %6396 = vmatprep.subr.bf16.mxu0 %v5377
    %6397 = vmatpush1.bf16.msra.mxu0 %v5376
    %6398 = vmatprep.subr.bf16.mxu0 %v5373
    %6399 = vmatpush1.bf16.msra.mxu0 %v5372
    %6400 = vmatprep.subr.bf16.mxu0 %v5369
    %6401 = vmatpush1.bf16.msra.mxu0 %v5368
    %6402 = vmatprep.subr.bf16.mxu0 %v5365
    %6403 = vmatpush1.bf16.msra.mxu0 %v5364
    %6404 = vmatprep.subr.bf16.mxu0 %v5425
    %6405 = vmatpush2.bf16.msra.mxu0 %v5424
    %6406 = vmatprep.subr.bf16.mxu0 %v5421
    %6407 = vmatpush2.bf16.msra.mxu0 %v5420
    %6408 = vmatprep.subr.bf16.mxu0 %v5417
    %6409 = vmatpush2.bf16.msra.mxu0 %v5416
    %6410 = vmatprep.subr.bf16.mxu0 %v5413
    %6411 = vmatpush2.bf16.msra.mxu0 %v5412
    %6412 = vmatprep.subr.bf16.mxu0 %v5409
    %6413 = vmatpush2.bf16.msra.mxu0 %v5408
    %6414 = vmatprep.subr.bf16.mxu0 %v5405
    %6415 = vmatpush2.bf16.msra.mxu0 %v5404
    %6416 = vmatprep.subr.bf16.mxu0 %v5401
    %6417 = vmatpush2.bf16.msra.mxu0 %v5400
    %6418 = vmatprep.subr.bf16.mxu0 %v5397
    %6419 = vmatpush2.bf16.msra.mxu0 %v5396
    %6420 = vmatprep.mubr.bf16.mxu0 %v6133
    %6421 = vmatmul.mubr.bf16.gmra.mxu0 %v6132
    %v6422 = vpop.f32.mrf.mxu0
    %v6423 = vadd.f32 %v5494, %v6422
    %v6424 = vpop.f32.mrf.mxu0
    %v6425 = vadd.f32 %v5494, %v6424
    %v6426 = vpop.f32.mrf.mxu0
    %v6427 = vadd.f32 %v5498, %v6426
    %v6428 = vpop.f32.mrf.mxu0
    %v6429 = vadd.f32 %v5498, %v6428
    %6430 = vmatprep.mubr.bf16.mxu0 %v6137
    %6431 = vmatmul.mubr.bf16.gmra.mxu0 %v6136
    %v6432 = vpop.f32.mrf.mxu0
    %v6433 = vadd.f32 %v5502, %v6432
    %v6434 = vpop.f32.mrf.mxu0
    %v6435 = vadd.f32 %v5502, %v6434
    %v6436 = vpop.f32.mrf.mxu0
    %v6437 = vadd.f32 %v5506, %v6436
    %v6438 = vpop.f32.mrf.mxu0
    %v6439 = vadd.f32 %v5506, %v6438
    %6440 = vmatprep.mubr.bf16.mxu0 %v6141
    %6441 = vmatmul.mubr.bf16.gmra.mxu0 %v6140
    %v6442 = vpop.f32.mrf.mxu0
    %v6443 = vadd.f32 %v5510, %v6442
    %v6444 = vpop.f32.mrf.mxu0
    %v6445 = vadd.f32 %v5510, %v6444
    %v6446 = vpop.f32.mrf.mxu0
    %v6447 = vadd.f32 %v5514, %v6446
    %v6448 = vpop.f32.mrf.mxu0
    %v6449 = vadd.f32 %v5514, %v6448
    %6450 = vmatprep.mubr.bf16.mxu0 %v6145
    %6451 = vmatmul.mubr.bf16.gmra.mxu0 %v6144
    %v6452 = vpop.f32.mrf.mxu0
    %v6453 = vadd.f32 %v5518, %v6452
    %v6454 = vpop.f32.mrf.mxu0
    %v6455 = vadd.f32 %v5518, %v6454
    %v6456 = vpop.f32.mrf.mxu0
    %v6457 = vadd.f32 %v5522, %v6456
    %v6458 = vpop.f32.mrf.mxu0
    %v6459 = vadd.f32 %v5522, %v6458
    %6460 = vmatprep.mubr.bf16.mxu0 %v6149
    %6461 = vmatmul.mubr.bf16.gmra.mxu0 %v6148
    %v6462 = vpop.f32.mrf.mxu0
    %v6463 = vadd.f32 %v5526, %v6462
    %v6464 = vpop.f32.mrf.mxu0
    %v6465 = vadd.f32 %v5526, %v6464
    %v6466 = vpop.f32.mrf.mxu0
    %v6467 = vadd.f32 %v5530, %v6466
    %v6468 = vpop.f32.mrf.mxu0
    %v6469 = vadd.f32 %v5530, %v6468
    %6470 = vmatprep.mubr.bf16.mxu0 %v6153
    %6471 = vmatmul.mubr.bf16.gmra.mxu0 %v6152
    %v6472 = vpop.f32.mrf.mxu0
    %v6473 = vadd.f32 %v5534, %v6472
    %v6474 = vpop.f32.mrf.mxu0
    %v6475 = vadd.f32 %v5534, %v6474
    %v6476 = vpop.f32.mrf.mxu0
    %v6477 = vadd.f32 %v5538, %v6476
    %v6478 = vpop.f32.mrf.mxu0
    %v6479 = vadd.f32 %v5538, %v6478
    %6480 = vmatprep.mubr.bf16.mxu0 %v6157
    %6481 = vmatmul.mubr.bf16.gmra.mxu0 %v6156
    %v6482 = vpop.f32.mrf.mxu0
    %v6483 = vadd.f32 %v5542, %v6482
    %v6484 = vpop.f32.mrf.mxu0
    %v6485 = vadd.f32 %v5542, %v6484
    %v6486 = vpop.f32.mrf.mxu0
    %v6487 = vadd.f32 %v5546, %v6486
    %v6488 = vpop.f32.mrf.mxu0
    %v6489 = vadd.f32 %v5546, %v6488
    %6490 = vmatprep.mubr.bf16.mxu0 %v6161
    %6491 = vmatmul.mubr.bf16.gmra.mxu0 %v6160
    %v6492 = vpop.f32.mrf.mxu0
    %v6493 = vadd.f32 %v5550, %v6492
    %v6494 = vpop.f32.mrf.mxu0
    %v6495 = vadd.f32 %v5550, %v6494
    %v6496 = vpop.f32.mrf.mxu0
    %v6497 = vadd.f32 %v5554, %v6496
    %v6498 = vpop.f32.mrf.mxu0
    %v6499 = vadd.f32 %v5554, %v6498
    %6500 = vmatprep.mubr.bf16.mxu0 %v6165
    %6501 = vmatmul.mubr.bf16.gmra.mxu0 %v6164
    %v6502 = vpop.f32.mrf.mxu0
    %v6503 = vadd.f32 %v5558, %v6502
    %v6504 = vpop.f32.mrf.mxu0
    %v6505 = vadd.f32 %v5558, %v6504
    %v6506 = vpop.f32.mrf.mxu0
    %v6507 = vadd.f32 %v5562, %v6506
    %v6508 = vpop.f32.mrf.mxu0
    %v6509 = vadd.f32 %v5562, %v6508
    %6510 = vmatprep.mubr.bf16.mxu0 %v6169
    %6511 = vmatmul.mubr.bf16.gmra.mxu0 %v6168
    %v6512 = vpop.f32.mrf.mxu0
    %v6513 = vadd.f32 %v5566, %v6512
    %v6514 = vpop.f32.mrf.mxu0
    %v6515 = vadd.f32 %v5566, %v6514
    %v6516 = vpop.f32.mrf.mxu0
    %v6517 = vadd.f32 %v5570, %v6516
    %v6518 = vpop.f32.mrf.mxu0
    %v6519 = vadd.f32 %v5570, %v6518
    %6520 = vmatprep.mubr.bf16.mxu0 %v6173
    %6521 = vmatmul.mubr.bf16.gmra.mxu0 %v6172
    %v6522 = vpop.f32.mrf.mxu0
    %v6523 = vadd.f32 %v5574, %v6522
    %v6524 = vpop.f32.mrf.mxu0
    %v6525 = vadd.f32 %v5574, %v6524
    %v6526 = vpop.f32.mrf.mxu0
    %v6527 = vadd.f32 %v5578, %v6526
    %v6528 = vpop.f32.mrf.mxu0
    %v6529 = vadd.f32 %v5578, %v6528
    %6530 = vmatprep.mubr.bf16.mxu0 %v6177
    %6531 = vmatmul.mubr.bf16.gmra.mxu0 %v6176
    %v6532 = vpop.f32.mrf.mxu0
    %v6533 = vadd.f32 %v5582, %v6532
    %v6534 = vpop.f32.mrf.mxu0
    %v6535 = vadd.f32 %v5582, %v6534
    %v6536 = vpop.f32.mrf.mxu0
    %v6537 = vadd.f32 %v5586, %v6536
    %v6538 = vpop.f32.mrf.mxu0
    %v6539 = vadd.f32 %v5586, %v6538
    %6540 = vmatprep.mubr.bf16.mxu0 %v6181
    %6541 = vmatmul.mubr.bf16.gmra.mxu0 %v6180
    %v6542 = vpop.f32.mrf.mxu0
    %v6543 = vadd.f32 %v5590, %v6542
    %v6544 = vpop.f32.mrf.mxu0
    %v6545 = vadd.f32 %v5590, %v6544
    %v6546 = vpop.f32.mrf.mxu0
    %v6547 = vadd.f32 %v5594, %v6546
    %v6548 = vpop.f32.mrf.mxu0
    %v6549 = vadd.f32 %v5594, %v6548
    %6550 = vmatprep.mubr.bf16.mxu0 %v6185
    %6551 = vmatmul.mubr.bf16.gmra.mxu0 %v6184
    %v6552 = vpop.f32.mrf.mxu0
    %v6553 = vadd.f32 %v5598, %v6552
    %v6554 = vpop.f32.mrf.mxu0
    %v6555 = vadd.f32 %v5598, %v6554
    %v6556 = vpop.f32.mrf.mxu0
    %v6557 = vadd.f32 %v5602, %v6556
    %v6558 = vpop.f32.mrf.mxu0
    %v6559 = vadd.f32 %v5602, %v6558
    %6560 = vmatprep.mubr.bf16.mxu0 %v6189
    %6561 = vmatmul.mubr.bf16.gmra.mxu0 %v6188
    %v6562 = vpop.f32.mrf.mxu0
    %v6563 = vadd.f32 %v5606, %v6562
    %v6564 = vpop.f32.mrf.mxu0
    %v6565 = vadd.f32 %v5606, %v6564
    %v6566 = vpop.f32.mrf.mxu0
    %v6567 = vadd.f32 %v5610, %v6566
    %v6568 = vpop.f32.mrf.mxu0
    %v6569 = vadd.f32 %v5610, %v6568
    %6570 = vmatprep.mubr.bf16.mxu0 %v6193
    %6571 = vmatmul.mubr.bf16.gmra.mxu0 %v6192
    %v6572 = vpop.f32.mrf.mxu0
    %v6573 = vadd.f32 %v5614, %v6572
    %v6574 = vpop.f32.mrf.mxu0
    %v6575 = vadd.f32 %v5614, %v6574
    %v6576 = vpop.f32.mrf.mxu0
    %v6577 = vadd.f32 %v5618, %v6576
    %v6578 = vpop.f32.mrf.mxu0
    %v6579 = vadd.f32 %v5618, %v6578
    %6580 = vmatprep.mubr.bf16.mxu0 %v6197
    %6581 = vmatmul.mubr.bf16.gmra.mxu0 %v6196
    %v6582 = vpop.f32.mrf.mxu0
    %v6583 = vadd.f32 %v5622, %v6582
    %v6584 = vpop.f32.mrf.mxu0
    %v6585 = vadd.f32 %v5622, %v6584
    %v6586 = vpop.f32.mrf.mxu0
    %v6587 = vadd.f32 %v5626, %v6586
    %v6588 = vpop.f32.mrf.mxu0
    %v6589 = vadd.f32 %v5626, %v6588
    %6590 = vmatprep.mubr.bf16.mxu0 %v6201
    %6591 = vmatmul.mubr.bf16.gmra.mxu0 %v6200
    %v6592 = vpop.f32.mrf.mxu0
    %v6593 = vadd.f32 %v5630, %v6592
    %v6594 = vpop.f32.mrf.mxu0
    %v6595 = vadd.f32 %v5630, %v6594
    %v6596 = vpop.f32.mrf.mxu0
    %v6597 = vadd.f32 %v5634, %v6596
    %v6598 = vpop.f32.mrf.mxu0
    %v6599 = vadd.f32 %v5634, %v6598
    %6600 = vmatprep.mubr.bf16.mxu0 %v6205
    %6601 = vmatmul.mubr.bf16.gmra.mxu0 %v6204
    %v6602 = vpop.f32.mrf.mxu0
    %v6603 = vadd.f32 %v5638, %v6602
    %v6604 = vpop.f32.mrf.mxu0
    %v6605 = vadd.f32 %v5638, %v6604
    %v6606 = vpop.f32.mrf.mxu0
    %v6607 = vadd.f32 %v5642, %v6606
    %v6608 = vpop.f32.mrf.mxu0
    %v6609 = vadd.f32 %v5642, %v6608
    %6610 = vmatprep.mubr.bf16.mxu0 %v6209
    %6611 = vmatmul.mubr.bf16.gmra.mxu0 %v6208
    %v6612 = vpop.f32.mrf.mxu0
    %v6613 = vadd.f32 %v5646, %v6612
    %v6614 = vpop.f32.mrf.mxu0
    %v6615 = vadd.f32 %v5646, %v6614
    %v6616 = vpop.f32.mrf.mxu0
    %v6617 = vadd.f32 %v5650, %v6616
    %v6618 = vpop.f32.mrf.mxu0
    %v6619 = vadd.f32 %v5650, %v6618
    %6620 = vmatprep.mubr.bf16.mxu0 %v6213
    %6621 = vmatmul.mubr.bf16.gmra.mxu0 %v6212
    %v6622 = vpop.f32.mrf.mxu0
    %v6623 = vadd.f32 %v5654, %v6622
    %v6624 = vpop.f32.mrf.mxu0
    %v6625 = vadd.f32 %v5654, %v6624
    %v6626 = vpop.f32.mrf.mxu0
    %v6627 = vadd.f32 %v5658, %v6626
    %v6628 = vpop.f32.mrf.mxu0
    %v6629 = vadd.f32 %v5658, %v6628
    %6630 = vmatprep.mubr.bf16.mxu0 %v6217
    %6631 = vmatmul.mubr.bf16.gmra.mxu0 %v6216
    %v6632 = vpop.f32.mrf.mxu0
    %v6633 = vadd.f32 %v5662, %v6632
    %v6634 = vpop.f32.mrf.mxu0
    %v6635 = vadd.f32 %v5662, %v6634
    %v6636 = vpop.f32.mrf.mxu0
    %v6637 = vadd.f32 %v5666, %v6636
    %v6638 = vpop.f32.mrf.mxu0
    %v6639 = vadd.f32 %v5666, %v6638
    %6640 = vmatprep.mubr.bf16.mxu0 %v6221
    %6641 = vmatmul.mubr.bf16.gmra.mxu0 %v6220
    %v6642 = vpop.f32.mrf.mxu0
    %v6643 = vadd.f32 %v5670, %v6642
    %v6644 = vpop.f32.mrf.mxu0
    %v6645 = vadd.f32 %v5670, %v6644
    %v6646 = vpop.f32.mrf.mxu0
    %v6647 = vadd.f32 %v5674, %v6646
    %v6648 = vpop.f32.mrf.mxu0
    %v6649 = vadd.f32 %v5674, %v6648
    %6650 = vmatprep.mubr.bf16.mxu0 %v6225
    %6651 = vmatmul.mubr.bf16.gmra.mxu0 %v6224
    %v6652 = vpop.f32.mrf.mxu0
    %v6653 = vadd.f32 %v5678, %v6652
    %v6654 = vpop.f32.mrf.mxu0
    %v6655 = vadd.f32 %v5678, %v6654
    %v6656 = vpop.f32.mrf.mxu0
    %v6657 = vadd.f32 %v5682, %v6656
    %v6658 = vpop.f32.mrf.mxu0
    %v6659 = vadd.f32 %v5682, %v6658
    %6660 = vmatprep.mubr.bf16.mxu0 %v6229
    %6661 = vmatmul.mubr.bf16.gmra.mxu0 %v6228
    %v6662 = vpop.f32.mrf.mxu0
    %v6663 = vadd.f32 %v5686, %v6662
    %v6664 = vpop.f32.mrf.mxu0
    %v6665 = vadd.f32 %v5686, %v6664
    %v6666 = vpop.f32.mrf.mxu0
    %v6667 = vadd.f32 %v5690, %v6666
    %v6668 = vpop.f32.mrf.mxu0
    %v6669 = vadd.f32 %v5690, %v6668
    %6670 = vmatprep.mubr.bf16.mxu0 %v6233
    %6671 = vmatmul.mubr.bf16.gmra.mxu0 %v6232
    %v6672 = vpop.f32.mrf.mxu0
    %v6673 = vadd.f32 %v5694, %v6672
    %v6674 = vpop.f32.mrf.mxu0
    %v6675 = vadd.f32 %v5694, %v6674
    %v6676 = vpop.f32.mrf.mxu0
    %v6677 = vadd.f32 %v5698, %v6676
    %v6678 = vpop.f32.mrf.mxu0
    %v6679 = vadd.f32 %v5698, %v6678
    %6680 = vmatprep.mubr.bf16.mxu0 %v6237
    %6681 = vmatmul.mubr.bf16.gmra.mxu0 %v6236
    %v6682 = vpop.f32.mrf.mxu0
    %v6683 = vadd.f32 %v5702, %v6682
    %v6684 = vpop.f32.mrf.mxu0
    %v6685 = vadd.f32 %v5702, %v6684
    %v6686 = vpop.f32.mrf.mxu0
    %v6687 = vadd.f32 %v5706, %v6686
    %v6688 = vpop.f32.mrf.mxu0
    %v6689 = vadd.f32 %v5706, %v6688
    %6690 = vmatprep.mubr.bf16.mxu0 %v6241
    %6691 = vmatmul.mubr.bf16.gmra.mxu0 %v6240
    %v6692 = vpop.f32.mrf.mxu0
    %v6693 = vadd.f32 %v5710, %v6692
    %v6694 = vpop.f32.mrf.mxu0
    %v6695 = vadd.f32 %v5710, %v6694
    %v6696 = vpop.f32.mrf.mxu0
    %v6697 = vadd.f32 %v5714, %v6696
    %v6698 = vpop.f32.mrf.mxu0
    %v6699 = vadd.f32 %v5714, %v6698
    %6700 = vmatprep.mubr.bf16.mxu0 %v6245
    %6701 = vmatmul.mubr.bf16.gmra.mxu0 %v6244
    %v6702 = vpop.f32.mrf.mxu0
    %v6703 = vadd.f32 %v5718, %v6702
    %v6704 = vpop.f32.mrf.mxu0
    %v6705 = vadd.f32 %v5718, %v6704
    %v6706 = vpop.f32.mrf.mxu0
    %v6707 = vadd.f32 %v5722, %v6706
    %v6708 = vpop.f32.mrf.mxu0
    %v6709 = vadd.f32 %v5722, %v6708
    %6710 = vmatprep.mubr.bf16.mxu0 %v6249
    %6711 = vmatmul.mubr.bf16.gmra.mxu0 %v6248
    %v6712 = vpop.f32.mrf.mxu0
    %v6713 = vadd.f32 %v5726, %v6712
    %v6714 = vpop.f32.mrf.mxu0
    %v6715 = vadd.f32 %v5726, %v6714
    %v6716 = vpop.f32.mrf.mxu0
    %v6717 = vadd.f32 %v5730, %v6716
    %v6718 = vpop.f32.mrf.mxu0
    %v6719 = vadd.f32 %v5730, %v6718
    %6720 = vmatprep.mubr.bf16.mxu0 %v6253
    %6721 = vmatmul.mubr.bf16.gmra.mxu0 %v6252
    %v6722 = vpop.f32.mrf.mxu0
    %v6723 = vadd.f32 %v5734, %v6722
    %v6724 = vpop.f32.mrf.mxu0
    %v6725 = vadd.f32 %v5734, %v6724
    %v6726 = vpop.f32.mrf.mxu0
    %v6727 = vadd.f32 %v5738, %v6726
    %v6728 = vpop.f32.mrf.mxu0
    %v6729 = vadd.f32 %v5738, %v6728
    %6730 = vmatprep.mubr.bf16.mxu0 %v6257
    %6731 = vmatmul.mubr.bf16.gmra.mxu0 %v6256
    %v6732 = vpop.f32.mrf.mxu0
    %v6733 = vadd.f32 %v5742, %v6732
    %v6734 = vpop.f32.mrf.mxu0
    %v6735 = vadd.f32 %v5742, %v6734
    %v6736 = vpop.f32.mrf.mxu0
    %v6737 = vadd.f32 %v5746, %v6736
    %v6738 = vpop.f32.mrf.mxu0
    %v6739 = vadd.f32 %v5746, %v6738
    %6740 = vdwg.mxu0
    %6741 = vmatprep.subr.bf16.mxu0 %v5457
    %6742 = vmatpush1.bf16.msra.mxu0 %v5456
    %6743 = vmatprep.subr.bf16.mxu0 %v5453
    %6744 = vmatpush1.bf16.msra.mxu0 %v5452
    %6745 = vmatprep.subr.bf16.mxu0 %v5449
    %6746 = vmatpush1.bf16.msra.mxu0 %v5448
    %6747 = vmatprep.subr.bf16.mxu0 %v5445
    %6748 = vmatpush1.bf16.msra.mxu0 %v5444
    %6749 = vmatprep.subr.bf16.mxu0 %v5441
    %6750 = vmatpush1.bf16.msra.mxu0 %v5440
    %6751 = vmatprep.subr.bf16.mxu0 %v5437
    %6752 = vmatpush1.bf16.msra.mxu0 %v5436
    %6753 = vmatprep.subr.bf16.mxu0 %v5433
    %6754 = vmatpush1.bf16.msra.mxu0 %v5432
    %6755 = vmatprep.subr.bf16.mxu0 %v5429
    %6756 = vmatpush1.bf16.msra.mxu0 %v5428
    %6757 = vmatprep.subr.bf16.mxu0 %v5489
    %6758 = vmatpush2.bf16.msra.mxu0 %v5488
    %6759 = vmatprep.subr.bf16.mxu0 %v5485
    %6760 = vmatpush2.bf16.msra.mxu0 %v5484
    %6761 = vmatprep.subr.bf16.mxu0 %v5481
    %6762 = vmatpush2.bf16.msra.mxu0 %v5480
    %6763 = vmatprep.subr.bf16.mxu0 %v5477
    %6764 = vmatpush2.bf16.msra.mxu0 %v5476
    %6765 = vmatprep.subr.bf16.mxu0 %v5473
    %6766 = vmatpush2.bf16.msra.mxu0 %v5472
    %6767 = vmatprep.subr.bf16.mxu0 %v5469
    %6768 = vmatpush2.bf16.msra.mxu0 %v5468
    %6769 = vmatprep.subr.bf16.mxu0 %v5465
    %6770 = vmatpush2.bf16.msra.mxu0 %v5464
    %6771 = vmatprep.subr.bf16.mxu0 %v5461
    %6772 = vmatpush2.bf16.msra.mxu0 %v5460
    %6773 = vmatprep.mubr.bf16.mxu0 %v6135
    %6774 = vmatmul.mubr.bf16.gmra.mxu0 %v6134
    %v6775 = vpop.f32.mrf.mxu0
    %v6776 = vadd.f32 %v6423, %v6775
    %v6777 = vpop.f32.mrf.mxu0
    %v6778 = vadd.f32 %v6425, %v6777
    %v6779 = vpop.f32.mrf.mxu0
    %v6780 = vadd.f32 %v6427, %v6779
    %v6781 = vpop.f32.mrf.mxu0
    %v6782 = vadd.f32 %v6429, %v6781
    %6783 = vmatprep.mubr.bf16.mxu0 %v6139
    %6784 = vmatmul.mubr.bf16.gmra.mxu0 %v6138
    %v6785 = vpop.f32.mrf.mxu0
    %v6786 = vadd.f32 %v6433, %v6785
    %v6787 = vpop.f32.mrf.mxu0
    %v6788 = vadd.f32 %v6435, %v6787
    %v6789 = vpop.f32.mrf.mxu0
    %v6790 = vadd.f32 %v6437, %v6789
    %v6791 = vpop.f32.mrf.mxu0
    %v6792 = vadd.f32 %v6439, %v6791
    %6793 = vmatprep.mubr.bf16.mxu0 %v6143
    %6794 = vmatmul.mubr.bf16.gmra.mxu0 %v6142
    %v6795 = vpop.f32.mrf.mxu0
    %v6796 = vadd.f32 %v6443, %v6795
    %v6797 = vpop.f32.mrf.mxu0
    %v6798 = vadd.f32 %v6445, %v6797
    %v6799 = vpop.f32.mrf.mxu0
    %v6800 = vadd.f32 %v6447, %v6799
    %v6801 = vpop.f32.mrf.mxu0
    %v6802 = vadd.f32 %v6449, %v6801
    %6803 = vmatprep.mubr.bf16.mxu0 %v6147
    %6804 = vmatmul.mubr.bf16.gmra.mxu0 %v6146
    %v6805 = vpop.f32.mrf.mxu0
    %v6806 = vadd.f32 %v6453, %v6805
    %v6807 = vpop.f32.mrf.mxu0
    %v6808 = vadd.f32 %v6455, %v6807
    %v6809 = vpop.f32.mrf.mxu0
    %v6810 = vadd.f32 %v6457, %v6809
    %v6811 = vpop.f32.mrf.mxu0
    %v6812 = vadd.f32 %v6459, %v6811
    %6813 = vmatprep.mubr.bf16.mxu0 %v6151
    %6814 = vmatmul.mubr.bf16.gmra.mxu0 %v6150
    %v6815 = vpop.f32.mrf.mxu0
    %v6816 = vadd.f32 %v6463, %v6815
    %v6817 = vpop.f32.mrf.mxu0
    %v6818 = vadd.f32 %v6465, %v6817
    %v6819 = vpop.f32.mrf.mxu0
    %v6820 = vadd.f32 %v6467, %v6819
    %v6821 = vpop.f32.mrf.mxu0
    %v6822 = vadd.f32 %v6469, %v6821
    %6823 = vmatprep.mubr.bf16.mxu0 %v6155
    %6824 = vmatmul.mubr.bf16.gmra.mxu0 %v6154
    %v6825 = vpop.f32.mrf.mxu0
    %v6826 = vadd.f32 %v6473, %v6825
    %v6827 = vpop.f32.mrf.mxu0
    %v6828 = vadd.f32 %v6475, %v6827
    %v6829 = vpop.f32.mrf.mxu0
    %v6830 = vadd.f32 %v6477, %v6829
    %v6831 = vpop.f32.mrf.mxu0
    %v6832 = vadd.f32 %v6479, %v6831
    %6833 = vmatprep.mubr.bf16.mxu0 %v6159
    %6834 = vmatmul.mubr.bf16.gmra.mxu0 %v6158
    %v6835 = vpop.f32.mrf.mxu0
    %v6836 = vadd.f32 %v6483, %v6835
    %v6837 = vpop.f32.mrf.mxu0
    %v6838 = vadd.f32 %v6485, %v6837
    %v6839 = vpop.f32.mrf.mxu0
    %v6840 = vadd.f32 %v6487, %v6839
    %v6841 = vpop.f32.mrf.mxu0
    %v6842 = vadd.f32 %v6489, %v6841
    %6843 = vmatprep.mubr.bf16.mxu0 %v6163
    %6844 = vmatmul.mubr.bf16.gmra.mxu0 %v6162
    %v6845 = vpop.f32.mrf.mxu0
    %v6846 = vadd.f32 %v6493, %v6845
    %v6847 = vpop.f32.mrf.mxu0
    %v6848 = vadd.f32 %v6495, %v6847
    %v6849 = vpop.f32.mrf.mxu0
    %v6850 = vadd.f32 %v6497, %v6849
    %v6851 = vpop.f32.mrf.mxu0
    %v6852 = vadd.f32 %v6499, %v6851
    %6853 = vmatprep.mubr.bf16.mxu0 %v6167
    %6854 = vmatmul.mubr.bf16.gmra.mxu0 %v6166
    %v6855 = vpop.f32.mrf.mxu0
    %v6856 = vadd.f32 %v6503, %v6855
    %v6857 = vpop.f32.mrf.mxu0
    %v6858 = vadd.f32 %v6505, %v6857
    %v6859 = vpop.f32.mrf.mxu0
    %v6860 = vadd.f32 %v6507, %v6859
    %v6861 = vpop.f32.mrf.mxu0
    %v6862 = vadd.f32 %v6509, %v6861
    %6863 = vmatprep.mubr.bf16.mxu0 %v6171
    %6864 = vmatmul.mubr.bf16.gmra.mxu0 %v6170
    %v6865 = vpop.f32.mrf.mxu0
    %v6866 = vadd.f32 %v6513, %v6865
    %v6867 = vpop.f32.mrf.mxu0
    %v6868 = vadd.f32 %v6515, %v6867
    %v6869 = vpop.f32.mrf.mxu0
    %v6870 = vadd.f32 %v6517, %v6869
    %v6871 = vpop.f32.mrf.mxu0
    %v6872 = vadd.f32 %v6519, %v6871
    %6873 = vmatprep.mubr.bf16.mxu0 %v6175
    %6874 = vmatmul.mubr.bf16.gmra.mxu0 %v6174
    %v6875 = vpop.f32.mrf.mxu0
    %v6876 = vadd.f32 %v6523, %v6875
    %v6877 = vpop.f32.mrf.mxu0
    %v6878 = vadd.f32 %v6525, %v6877
    %v6879 = vpop.f32.mrf.mxu0
    %v6880 = vadd.f32 %v6527, %v6879
    %v6881 = vpop.f32.mrf.mxu0
    %v6882 = vadd.f32 %v6529, %v6881
    %6883 = vmatprep.mubr.bf16.mxu0 %v6179
    %6884 = vmatmul.mubr.bf16.gmra.mxu0 %v6178
    %v6885 = vpop.f32.mrf.mxu0
    %v6886 = vadd.f32 %v6533, %v6885
    %v6887 = vpop.f32.mrf.mxu0
    %v6888 = vadd.f32 %v6535, %v6887
    %v6889 = vpop.f32.mrf.mxu0
    %v6890 = vadd.f32 %v6537, %v6889
    %v6891 = vpop.f32.mrf.mxu0
    %v6892 = vadd.f32 %v6539, %v6891
    %6893 = vmatprep.mubr.bf16.mxu0 %v6183
    %6894 = vmatmul.mubr.bf16.gmra.mxu0 %v6182
    %v6895 = vpop.f32.mrf.mxu0
    %v6896 = vadd.f32 %v6543, %v6895
    %v6897 = vpop.f32.mrf.mxu0
    %v6898 = vadd.f32 %v6545, %v6897
    %v6899 = vpop.f32.mrf.mxu0
    %v6900 = vadd.f32 %v6547, %v6899
    %v6901 = vpop.f32.mrf.mxu0
    %v6902 = vadd.f32 %v6549, %v6901
    %6903 = vmatprep.mubr.bf16.mxu0 %v6187
    %6904 = vmatmul.mubr.bf16.gmra.mxu0 %v6186
    %v6905 = vpop.f32.mrf.mxu0
    %v6906 = vadd.f32 %v6553, %v6905
    %v6907 = vpop.f32.mrf.mxu0
    %v6908 = vadd.f32 %v6555, %v6907
    %v6909 = vpop.f32.mrf.mxu0
    %v6910 = vadd.f32 %v6557, %v6909
    %v6911 = vpop.f32.mrf.mxu0
    %v6912 = vadd.f32 %v6559, %v6911
    %6913 = vmatprep.mubr.bf16.mxu0 %v6191
    %6914 = vmatmul.mubr.bf16.gmra.mxu0 %v6190
    %v6915 = vpop.f32.mrf.mxu0
    %v6916 = vadd.f32 %v6563, %v6915
    %v6917 = vpop.f32.mrf.mxu0
    %v6918 = vadd.f32 %v6565, %v6917
    %v6919 = vpop.f32.mrf.mxu0
    %v6920 = vadd.f32 %v6567, %v6919
    %v6921 = vpop.f32.mrf.mxu0
    %v6922 = vadd.f32 %v6569, %v6921
    %6923 = vmatprep.mubr.bf16.mxu0 %v6195
    %6924 = vmatmul.mubr.bf16.gmra.mxu0 %v6194
    %v6925 = vpop.f32.mrf.mxu0
    %v6926 = vadd.f32 %v6573, %v6925
    %v6927 = vpop.f32.mrf.mxu0
    %v6928 = vadd.f32 %v6575, %v6927
    %v6929 = vpop.f32.mrf.mxu0
    %v6930 = vadd.f32 %v6577, %v6929
    %v6931 = vpop.f32.mrf.mxu0
    %v6932 = vadd.f32 %v6579, %v6931
    %6933 = vmatprep.mubr.bf16.mxu0 %v6199
    %6934 = vmatmul.mubr.bf16.gmra.mxu0 %v6198
    %v6935 = vpop.f32.mrf.mxu0
    %v6936 = vadd.f32 %v6583, %v6935
    %v6937 = vpop.f32.mrf.mxu0
    %v6938 = vadd.f32 %v6585, %v6937
    %v6939 = vpop.f32.mrf.mxu0
    %v6940 = vadd.f32 %v6587, %v6939
    %v6941 = vpop.f32.mrf.mxu0
    %v6942 = vadd.f32 %v6589, %v6941
    %6943 = vmatprep.mubr.bf16.mxu0 %v6203
    %6944 = vmatmul.mubr.bf16.gmra.mxu0 %v6202
    %v6945 = vpop.f32.mrf.mxu0
    %v6946 = vadd.f32 %v6593, %v6945
    %v6947 = vpop.f32.mrf.mxu0
    %v6948 = vadd.f32 %v6595, %v6947
    %v6949 = vpop.f32.mrf.mxu0
    %v6950 = vadd.f32 %v6597, %v6949
    %v6951 = vpop.f32.mrf.mxu0
    %v6952 = vadd.f32 %v6599, %v6951
    %6953 = vmatprep.mubr.bf16.mxu0 %v6207
    %6954 = vmatmul.mubr.bf16.gmra.mxu0 %v6206
    %v6955 = vpop.f32.mrf.mxu0
    %v6956 = vadd.f32 %v6603, %v6955
    %v6957 = vpop.f32.mrf.mxu0
    %v6958 = vadd.f32 %v6605, %v6957
    %v6959 = vpop.f32.mrf.mxu0
    %v6960 = vadd.f32 %v6607, %v6959
    %v6961 = vpop.f32.mrf.mxu0
    %v6962 = vadd.f32 %v6609, %v6961
    %6963 = vmatprep.mubr.bf16.mxu0 %v6211
    %6964 = vmatmul.mubr.bf16.gmra.mxu0 %v6210
    %v6965 = vpop.f32.mrf.mxu0
    %v6966 = vadd.f32 %v6613, %v6965
    %v6967 = vpop.f32.mrf.mxu0
    %v6968 = vadd.f32 %v6615, %v6967
    %v6969 = vpop.f32.mrf.mxu0
    %v6970 = vadd.f32 %v6617, %v6969
    %v6971 = vpop.f32.mrf.mxu0
    %v6972 = vadd.f32 %v6619, %v6971
    %6973 = vmatprep.mubr.bf16.mxu0 %v6215
    %6974 = vmatmul.mubr.bf16.gmra.mxu0 %v6214
    %v6975 = vpop.f32.mrf.mxu0
    %v6976 = vadd.f32 %v6623, %v6975
    %v6977 = vpop.f32.mrf.mxu0
    %v6978 = vadd.f32 %v6625, %v6977
    %v6979 = vpop.f32.mrf.mxu0
    %v6980 = vadd.f32 %v6627, %v6979
    %v6981 = vpop.f32.mrf.mxu0
    %v6982 = vadd.f32 %v6629, %v6981
    %6983 = vmatprep.mubr.bf16.mxu0 %v6219
    %6984 = vmatmul.mubr.bf16.gmra.mxu0 %v6218
    %v6985 = vpop.f32.mrf.mxu0
    %v6986 = vadd.f32 %v6633, %v6985
    %v6987 = vpop.f32.mrf.mxu0
    %v6988 = vadd.f32 %v6635, %v6987
    %v6989 = vpop.f32.mrf.mxu0
    %v6990 = vadd.f32 %v6637, %v6989
    %v6991 = vpop.f32.mrf.mxu0
    %v6992 = vadd.f32 %v6639, %v6991
    %6993 = vmatprep.mubr.bf16.mxu0 %v6223
    %6994 = vmatmul.mubr.bf16.gmra.mxu0 %v6222
    %v6995 = vpop.f32.mrf.mxu0
    %v6996 = vadd.f32 %v6643, %v6995
    %v6997 = vpop.f32.mrf.mxu0
    %v6998 = vadd.f32 %v6645, %v6997
    %v6999 = vpop.f32.mrf.mxu0
    %v7000 = vadd.f32 %v6647, %v6999
    %v7001 = vpop.f32.mrf.mxu0
    %v7002 = vadd.f32 %v6649, %v7001
    %7003 = vmatprep.mubr.bf16.mxu0 %v6227
    %7004 = vmatmul.mubr.bf16.gmra.mxu0 %v6226
    %v7005 = vpop.f32.mrf.mxu0
    %v7006 = vadd.f32 %v6653, %v7005
    %v7007 = vpop.f32.mrf.mxu0
    %v7008 = vadd.f32 %v6655, %v7007
    %v7009 = vpop.f32.mrf.mxu0
    %v7010 = vadd.f32 %v6657, %v7009
    %v7011 = vpop.f32.mrf.mxu0
    %v7012 = vadd.f32 %v6659, %v7011
    %7013 = vmatprep.mubr.bf16.mxu0 %v6231
    %7014 = vmatmul.mubr.bf16.gmra.mxu0 %v6230
    %v7015 = vpop.f32.mrf.mxu0
    %v7016 = vadd.f32 %v6663, %v7015
    %v7017 = vpop.f32.mrf.mxu0
    %v7018 = vadd.f32 %v6665, %v7017
    %v7019 = vpop.f32.mrf.mxu0
    %v7020 = vadd.f32 %v6667, %v7019
    %v7021 = vpop.f32.mrf.mxu0
    %v7022 = vadd.f32 %v6669, %v7021
    %7023 = vmatprep.mubr.bf16.mxu0 %v6235
    %7024 = vmatmul.mubr.bf16.gmra.mxu0 %v6234
    %v7025 = vpop.f32.mrf.mxu0
    %v7026 = vadd.f32 %v6673, %v7025
    %v7027 = vpop.f32.mrf.mxu0
    %v7028 = vadd.f32 %v6675, %v7027
    %v7029 = vpop.f32.mrf.mxu0
    %v7030 = vadd.f32 %v6677, %v7029
    %v7031 = vpop.f32.mrf.mxu0
    %v7032 = vadd.f32 %v6679, %v7031
    %7033 = vmatprep.mubr.bf16.mxu0 %v6239
    %7034 = vmatmul.mubr.bf16.gmra.mxu0 %v6238
    %v7035 = vpop.f32.mrf.mxu0
    %v7036 = vadd.f32 %v6683, %v7035
    %v7037 = vpop.f32.mrf.mxu0
    %v7038 = vadd.f32 %v6685, %v7037
    %v7039 = vpop.f32.mrf.mxu0
    %v7040 = vadd.f32 %v6687, %v7039
    %v7041 = vpop.f32.mrf.mxu0
    %v7042 = vadd.f32 %v6689, %v7041
    %7043 = vmatprep.mubr.bf16.mxu0 %v6243
    %7044 = vmatmul.mubr.bf16.gmra.mxu0 %v6242
    %v7045 = vpop.f32.mrf.mxu0
    %v7046 = vadd.f32 %v6693, %v7045
    %v7047 = vpop.f32.mrf.mxu0
    %v7048 = vadd.f32 %v6695, %v7047
    %v7049 = vpop.f32.mrf.mxu0
    %v7050 = vadd.f32 %v6697, %v7049
    %v7051 = vpop.f32.mrf.mxu0
    %v7052 = vadd.f32 %v6699, %v7051
    %7053 = vmatprep.mubr.bf16.mxu0 %v6247
    %7054 = vmatmul.mubr.bf16.gmra.mxu0 %v6246
    %v7055 = vpop.f32.mrf.mxu0
    %v7056 = vadd.f32 %v6703, %v7055
    %v7057 = vpop.f32.mrf.mxu0
    %v7058 = vadd.f32 %v6705, %v7057
    %v7059 = vpop.f32.mrf.mxu0
    %v7060 = vadd.f32 %v6707, %v7059
    %v7061 = vpop.f32.mrf.mxu0
    %v7062 = vadd.f32 %v6709, %v7061
    %7063 = vmatprep.mubr.bf16.mxu0 %v6251
    %7064 = vmatmul.mubr.bf16.gmra.mxu0 %v6250
    %v7065 = vpop.f32.mrf.mxu0
    %v7066 = vadd.f32 %v6713, %v7065
    %v7067 = vpop.f32.mrf.mxu0
    %v7068 = vadd.f32 %v6715, %v7067
    %v7069 = vpop.f32.mrf.mxu0
    %v7070 = vadd.f32 %v6717, %v7069
    %v7071 = vpop.f32.mrf.mxu0
    %v7072 = vadd.f32 %v6719, %v7071
    %7073 = vmatprep.mubr.bf16.mxu0 %v6255
    %7074 = vmatmul.mubr.bf16.gmra.mxu0 %v6254
    %v7075 = vpop.f32.mrf.mxu0
    %v7076 = vadd.f32 %v6723, %v7075
    %v7077 = vpop.f32.mrf.mxu0
    %v7078 = vadd.f32 %v6725, %v7077
    %v7079 = vpop.f32.mrf.mxu0
    %v7080 = vadd.f32 %v6727, %v7079
    %v7081 = vpop.f32.mrf.mxu0
    %v7082 = vadd.f32 %v6729, %v7081
    %7083 = vmatprep.mubr.bf16.mxu0 %v6259
    %7084 = vmatmul.mubr.bf16.gmra.mxu0 %v6258
    %v7085 = vpop.f32.mrf.mxu0
    %v7086 = vadd.f32 %v6733, %v7085
    %v7087 = vpop.f32.mrf.mxu0
    %v7088 = vadd.f32 %v6735, %v7087
    %v7089 = vpop.f32.mrf.mxu0
    %v7090 = vadd.f32 %v6737, %v7089
    %v7091 = vpop.f32.mrf.mxu0
    %v7092 = vadd.f32 %v6739, %v7091
    %7093 = vdwg.mxu0
    %7094 = vmatprep.subr.bf16.mxu0 %v5395
    %7095 = vmatpush1.bf16.msra.mxu0 %v5394
    %7096 = vmatprep.subr.bf16.mxu0 %v5391
    %7097 = vmatpush1.bf16.msra.mxu0 %v5390
    %7098 = vmatprep.subr.bf16.mxu0 %v5387
    %7099 = vmatpush1.bf16.msra.mxu0 %v5386
    %7100 = vmatprep.subr.bf16.mxu0 %v5383
    %7101 = vmatpush1.bf16.msra.mxu0 %v5382
    %7102 = vmatprep.subr.bf16.mxu0 %v5379
    %7103 = vmatpush1.bf16.msra.mxu0 %v5378
    %7104 = vmatprep.subr.bf16.mxu0 %v5375
    %7105 = vmatpush1.bf16.msra.mxu0 %v5374
    %7106 = vmatprep.subr.bf16.mxu0 %v5371
    %7107 = vmatpush1.bf16.msra.mxu0 %v5370
    %7108 = vmatprep.subr.bf16.mxu0 %v5367
    %7109 = vmatpush1.bf16.msra.mxu0 %v5366
    %7110 = vmatprep.subr.bf16.mxu0 %v5427
    %7111 = vmatpush2.bf16.msra.mxu0 %v5426
    %7112 = vmatprep.subr.bf16.mxu0 %v5423
    %7113 = vmatpush2.bf16.msra.mxu0 %v5422
    %7114 = vmatprep.subr.bf16.mxu0 %v5419
    %7115 = vmatpush2.bf16.msra.mxu0 %v5418
    %7116 = vmatprep.subr.bf16.mxu0 %v5415
    %7117 = vmatpush2.bf16.msra.mxu0 %v5414
    %7118 = vmatprep.subr.bf16.mxu0 %v5411
    %7119 = vmatpush2.bf16.msra.mxu0 %v5410
    %7120 = vmatprep.subr.bf16.mxu0 %v5407
    %7121 = vmatpush2.bf16.msra.mxu0 %v5406
    %7122 = vmatprep.subr.bf16.mxu0 %v5403
    %7123 = vmatpush2.bf16.msra.mxu0 %v5402
    %7124 = vmatprep.subr.bf16.mxu0 %v5399
    %7125 = vmatpush2.bf16.msra.mxu0 %v5398
    %7126 = vmatprep.mubr.bf16.mxu0 %v6133
    %7127 = vmatmul.mubr.bf16.gmra.mxu0 %v6132
    %v7128 = vpop.f32.mrf.mxu0
    %v7129 = vadd.f32 %v5494, %v7128
    %v7130 = vpop.f32.mrf.mxu0
    %v7131 = vadd.f32 %v5494, %v7130
    %v7132 = vpop.f32.mrf.mxu0
    %v7133 = vadd.f32 %v5498, %v7132
    %v7134 = vpop.f32.mrf.mxu0
    %v7135 = vadd.f32 %v5498, %v7134
    %7136 = vmatprep.mubr.bf16.mxu0 %v6137
    %7137 = vmatmul.mubr.bf16.gmra.mxu0 %v6136
    %v7138 = vpop.f32.mrf.mxu0
    %v7139 = vadd.f32 %v5502, %v7138
    %v7140 = vpop.f32.mrf.mxu0
    %v7141 = vadd.f32 %v5502, %v7140
    %v7142 = vpop.f32.mrf.mxu0
    %v7143 = vadd.f32 %v5506, %v7142
    %v7144 = vpop.f32.mrf.mxu0
    %v7145 = vadd.f32 %v5506, %v7144
    %7146 = vmatprep.mubr.bf16.mxu0 %v6141
    %7147 = vmatmul.mubr.bf16.gmra.mxu0 %v6140
    %v7148 = vpop.f32.mrf.mxu0
    %v7149 = vadd.f32 %v5510, %v7148
    %v7150 = vpop.f32.mrf.mxu0
    %v7151 = vadd.f32 %v5510, %v7150
    %v7152 = vpop.f32.mrf.mxu0
    %v7153 = vadd.f32 %v5514, %v7152
    %v7154 = vpop.f32.mrf.mxu0
    %v7155 = vadd.f32 %v5514, %v7154
    %7156 = vmatprep.mubr.bf16.mxu0 %v6145
    %7157 = vmatmul.mubr.bf16.gmra.mxu0 %v6144
    %v7158 = vpop.f32.mrf.mxu0
    %v7159 = vadd.f32 %v5518, %v7158
    %v7160 = vpop.f32.mrf.mxu0
    %v7161 = vadd.f32 %v5518, %v7160
    %v7162 = vpop.f32.mrf.mxu0
    %v7163 = vadd.f32 %v5522, %v7162
    %v7164 = vpop.f32.mrf.mxu0
    %v7165 = vadd.f32 %v5522, %v7164
    %7166 = vmatprep.mubr.bf16.mxu0 %v6149
    %7167 = vmatmul.mubr.bf16.gmra.mxu0 %v6148
    %v7168 = vpop.f32.mrf.mxu0
    %v7169 = vadd.f32 %v5526, %v7168
    %v7170 = vpop.f32.mrf.mxu0
    %v7171 = vadd.f32 %v5526, %v7170
    %v7172 = vpop.f32.mrf.mxu0
    %v7173 = vadd.f32 %v5530, %v7172
    %v7174 = vpop.f32.mrf.mxu0
    %v7175 = vadd.f32 %v5530, %v7174
    %7176 = vmatprep.mubr.bf16.mxu0 %v6153
    %7177 = vmatmul.mubr.bf16.gmra.mxu0 %v6152
    %v7178 = vpop.f32.mrf.mxu0
    %v7179 = vadd.f32 %v5534, %v7178
    %v7180 = vpop.f32.mrf.mxu0
    %v7181 = vadd.f32 %v5534, %v7180
    %v7182 = vpop.f32.mrf.mxu0
    %v7183 = vadd.f32 %v5538, %v7182
    %v7184 = vpop.f32.mrf.mxu0
    %v7185 = vadd.f32 %v5538, %v7184
    %7186 = vmatprep.mubr.bf16.mxu0 %v6157
    %7187 = vmatmul.mubr.bf16.gmra.mxu0 %v6156
    %v7188 = vpop.f32.mrf.mxu0
    %v7189 = vadd.f32 %v5542, %v7188
    %v7190 = vpop.f32.mrf.mxu0
    %v7191 = vadd.f32 %v5542, %v7190
    %v7192 = vpop.f32.mrf.mxu0
    %v7193 = vadd.f32 %v5546, %v7192
    %v7194 = vpop.f32.mrf.mxu0
    %v7195 = vadd.f32 %v5546, %v7194
    %7196 = vmatprep.mubr.bf16.mxu0 %v6161
    %7197 = vmatmul.mubr.bf16.gmra.mxu0 %v6160
    %v7198 = vpop.f32.mrf.mxu0
    %v7199 = vadd.f32 %v5550, %v7198
    %v7200 = vpop.f32.mrf.mxu0
    %v7201 = vadd.f32 %v5550, %v7200
    %v7202 = vpop.f32.mrf.mxu0
    %v7203 = vadd.f32 %v5554, %v7202
    %v7204 = vpop.f32.mrf.mxu0
    %v7205 = vadd.f32 %v5554, %v7204
    %7206 = vmatprep.mubr.bf16.mxu0 %v6165
    %7207 = vmatmul.mubr.bf16.gmra.mxu0 %v6164
    %v7208 = vpop.f32.mrf.mxu0
    %v7209 = vadd.f32 %v5558, %v7208
    %v7210 = vpop.f32.mrf.mxu0
    %v7211 = vadd.f32 %v5558, %v7210
    %v7212 = vpop.f32.mrf.mxu0
    %v7213 = vadd.f32 %v5562, %v7212
    %v7214 = vpop.f32.mrf.mxu0
    %v7215 = vadd.f32 %v5562, %v7214
    %7216 = vmatprep.mubr.bf16.mxu0 %v6169
    %7217 = vmatmul.mubr.bf16.gmra.mxu0 %v6168
    %v7218 = vpop.f32.mrf.mxu0
    %v7219 = vadd.f32 %v5566, %v7218
    %v7220 = vpop.f32.mrf.mxu0
    %v7221 = vadd.f32 %v5566, %v7220
    %v7222 = vpop.f32.mrf.mxu0
    %v7223 = vadd.f32 %v5570, %v7222
    %v7224 = vpop.f32.mrf.mxu0
    %v7225 = vadd.f32 %v5570, %v7224
    %7226 = vmatprep.mubr.bf16.mxu0 %v6173
    %7227 = vmatmul.mubr.bf16.gmra.mxu0 %v6172
    %v7228 = vpop.f32.mrf.mxu0
    %v7229 = vadd.f32 %v5574, %v7228
    %v7230 = vpop.f32.mrf.mxu0
    %v7231 = vadd.f32 %v5574, %v7230
    %v7232 = vpop.f32.mrf.mxu0
    %v7233 = vadd.f32 %v5578, %v7232
    %v7234 = vpop.f32.mrf.mxu0
    %v7235 = vadd.f32 %v5578, %v7234
    %7236 = vmatprep.mubr.bf16.mxu0 %v6177
    %7237 = vmatmul.mubr.bf16.gmra.mxu0 %v6176
    %v7238 = vpop.f32.mrf.mxu0
    %v7239 = vadd.f32 %v5582, %v7238
    %v7240 = vpop.f32.mrf.mxu0
    %v7241 = vadd.f32 %v5582, %v7240
    %v7242 = vpop.f32.mrf.mxu0
    %v7243 = vadd.f32 %v5586, %v7242
    %v7244 = vpop.f32.mrf.mxu0
    %v7245 = vadd.f32 %v5586, %v7244
    %7246 = vmatprep.mubr.bf16.mxu0 %v6181
    %7247 = vmatmul.mubr.bf16.gmra.mxu0 %v6180
    %v7248 = vpop.f32.mrf.mxu0
    %v7249 = vadd.f32 %v5590, %v7248
    %v7250 = vpop.f32.mrf.mxu0
    %v7251 = vadd.f32 %v5590, %v7250
    %v7252 = vpop.f32.mrf.mxu0
    %v7253 = vadd.f32 %v5594, %v7252
    %v7254 = vpop.f32.mrf.mxu0
    %v7255 = vadd.f32 %v5594, %v7254
    %7256 = vmatprep.mubr.bf16.mxu0 %v6185
    %7257 = vmatmul.mubr.bf16.gmra.mxu0 %v6184
    %v7258 = vpop.f32.mrf.mxu0
    %v7259 = vadd.f32 %v5598, %v7258
    %v7260 = vpop.f32.mrf.mxu0
    %v7261 = vadd.f32 %v5598, %v7260
    %v7262 = vpop.f32.mrf.mxu0
    %v7263 = vadd.f32 %v5602, %v7262
    %v7264 = vpop.f32.mrf.mxu0
    %v7265 = vadd.f32 %v5602, %v7264
    %7266 = vmatprep.mubr.bf16.mxu0 %v6189
    %7267 = vmatmul.mubr.bf16.gmra.mxu0 %v6188
    %v7268 = vpop.f32.mrf.mxu0
    %v7269 = vadd.f32 %v5606, %v7268
    %v7270 = vpop.f32.mrf.mxu0
    %v7271 = vadd.f32 %v5606, %v7270
    %v7272 = vpop.f32.mrf.mxu0
    %v7273 = vadd.f32 %v5610, %v7272
    %v7274 = vpop.f32.mrf.mxu0
    %v7275 = vadd.f32 %v5610, %v7274
    %7276 = vmatprep.mubr.bf16.mxu0 %v6193
    %7277 = vmatmul.mubr.bf16.gmra.mxu0 %v6192
    %v7278 = vpop.f32.mrf.mxu0
    %v7279 = vadd.f32 %v5614, %v7278
    %v7280 = vpop.f32.mrf.mxu0
    %v7281 = vadd.f32 %v5614, %v7280
    %v7282 = vpop.f32.mrf.mxu0
    %v7283 = vadd.f32 %v5618, %v7282
    %v7284 = vpop.f32.mrf.mxu0
    %v7285 = vadd.f32 %v5618, %v7284
    %7286 = vmatprep.mubr.bf16.mxu0 %v6197
    %7287 = vmatmul.mubr.bf16.gmra.mxu0 %v6196
    %v7288 = vpop.f32.mrf.mxu0
    %v7289 = vadd.f32 %v5622, %v7288
    %v7290 = vpop.f32.mrf.mxu0
    %v7291 = vadd.f32 %v5622, %v7290
    %v7292 = vpop.f32.mrf.mxu0
    %v7293 = vadd.f32 %v5626, %v7292
    %v7294 = vpop.f32.mrf.mxu0
    %v7295 = vadd.f32 %v5626, %v7294
    %7296 = vmatprep.mubr.bf16.mxu0 %v6201
    %7297 = vmatmul.mubr.bf16.gmra.mxu0 %v6200
    %v7298 = vpop.f32.mrf.mxu0
    %v7299 = vadd.f32 %v5630, %v7298
    %v7300 = vpop.f32.mrf.mxu0
    %v7301 = vadd.f32 %v5630, %v7300
    %v7302 = vpop.f32.mrf.mxu0
    %v7303 = vadd.f32 %v5634, %v7302
    %v7304 = vpop.f32.mrf.mxu0
    %v7305 = vadd.f32 %v5634, %v7304
    %7306 = vmatprep.mubr.bf16.mxu0 %v6205
    %7307 = vmatmul.mubr.bf16.gmra.mxu0 %v6204
    %v7308 = vpop.f32.mrf.mxu0
    %v7309 = vadd.f32 %v5638, %v7308
    %v7310 = vpop.f32.mrf.mxu0
    %v7311 = vadd.f32 %v5638, %v7310
    %v7312 = vpop.f32.mrf.mxu0
    %v7313 = vadd.f32 %v5642, %v7312
    %v7314 = vpop.f32.mrf.mxu0
    %v7315 = vadd.f32 %v5642, %v7314
    %7316 = vmatprep.mubr.bf16.mxu0 %v6209
    %7317 = vmatmul.mubr.bf16.gmra.mxu0 %v6208
    %v7318 = vpop.f32.mrf.mxu0
    %v7319 = vadd.f32 %v5646, %v7318
    %v7320 = vpop.f32.mrf.mxu0
    %v7321 = vadd.f32 %v5646, %v7320
    %v7322 = vpop.f32.mrf.mxu0
    %v7323 = vadd.f32 %v5650, %v7322
    %v7324 = vpop.f32.mrf.mxu0
    %v7325 = vadd.f32 %v5650, %v7324
    %7326 = vmatprep.mubr.bf16.mxu0 %v6213
    %7327 = vmatmul.mubr.bf16.gmra.mxu0 %v6212
    %v7328 = vpop.f32.mrf.mxu0
    %v7329 = vadd.f32 %v5654, %v7328
    %v7330 = vpop.f32.mrf.mxu0
    %v7331 = vadd.f32 %v5654, %v7330
    %v7332 = vpop.f32.mrf.mxu0
    %v7333 = vadd.f32 %v5658, %v7332
    %v7334 = vpop.f32.mrf.mxu0
    %v7335 = vadd.f32 %v5658, %v7334
    %7336 = vmatprep.mubr.bf16.mxu0 %v6217
    %7337 = vmatmul.mubr.bf16.gmra.mxu0 %v6216
    %v7338 = vpop.f32.mrf.mxu0
    %v7339 = vadd.f32 %v5662, %v7338
    %v7340 = vpop.f32.mrf.mxu0
    %v7341 = vadd.f32 %v5662, %v7340
    %v7342 = vpop.f32.mrf.mxu0
    %v7343 = vadd.f32 %v5666, %v7342
    %v7344 = vpop.f32.mrf.mxu0
    %v7345 = vadd.f32 %v5666, %v7344
    %7346 = vmatprep.mubr.bf16.mxu0 %v6221
    %7347 = vmatmul.mubr.bf16.gmra.mxu0 %v6220
    %v7348 = vpop.f32.mrf.mxu0
    %v7349 = vadd.f32 %v5670, %v7348
    %v7350 = vpop.f32.mrf.mxu0
    %v7351 = vadd.f32 %v5670, %v7350
    %v7352 = vpop.f32.mrf.mxu0
    %v7353 = vadd.f32 %v5674, %v7352
    %v7354 = vpop.f32.mrf.mxu0
    %v7355 = vadd.f32 %v5674, %v7354
    %7356 = vmatprep.mubr.bf16.mxu0 %v6225
    %7357 = vmatmul.mubr.bf16.gmra.mxu0 %v6224
    %v7358 = vpop.f32.mrf.mxu0
    %v7359 = vadd.f32 %v5678, %v7358
    %v7360 = vpop.f32.mrf.mxu0
    %v7361 = vadd.f32 %v5678, %v7360
    %v7362 = vpop.f32.mrf.mxu0
    %v7363 = vadd.f32 %v5682, %v7362
    %v7364 = vpop.f32.mrf.mxu0
    %v7365 = vadd.f32 %v5682, %v7364
    %7366 = vmatprep.mubr.bf16.mxu0 %v6229
    %7367 = vmatmul.mubr.bf16.gmra.mxu0 %v6228
    %v7368 = vpop.f32.mrf.mxu0
    %v7369 = vadd.f32 %v5686, %v7368
    %v7370 = vpop.f32.mrf.mxu0
    %v7371 = vadd.f32 %v5686, %v7370
    %v7372 = vpop.f32.mrf.mxu0
    %v7373 = vadd.f32 %v5690, %v7372
    %v7374 = vpop.f32.mrf.mxu0
    %v7375 = vadd.f32 %v5690, %v7374
    %7376 = vmatprep.mubr.bf16.mxu0 %v6233
    %7377 = vmatmul.mubr.bf16.gmra.mxu0 %v6232
    %v7378 = vpop.f32.mrf.mxu0
    %v7379 = vadd.f32 %v5694, %v7378
    %v7380 = vpop.f32.mrf.mxu0
    %v7381 = vadd.f32 %v5694, %v7380
    %v7382 = vpop.f32.mrf.mxu0
    %v7383 = vadd.f32 %v5698, %v7382
    %v7384 = vpop.f32.mrf.mxu0
    %v7385 = vadd.f32 %v5698, %v7384
    %7386 = vmatprep.mubr.bf16.mxu0 %v6237
    %7387 = vmatmul.mubr.bf16.gmra.mxu0 %v6236
    %v7388 = vpop.f32.mrf.mxu0
    %v7389 = vadd.f32 %v5702, %v7388
    %v7390 = vpop.f32.mrf.mxu0
    %v7391 = vadd.f32 %v5702, %v7390
    %v7392 = vpop.f32.mrf.mxu0
    %v7393 = vadd.f32 %v5706, %v7392
    %v7394 = vpop.f32.mrf.mxu0
    %v7395 = vadd.f32 %v5706, %v7394
    %7396 = vmatprep.mubr.bf16.mxu0 %v6241
    %7397 = vmatmul.mubr.bf16.gmra.mxu0 %v6240
    %v7398 = vpop.f32.mrf.mxu0
    %v7399 = vadd.f32 %v5710, %v7398
    %v7400 = vpop.f32.mrf.mxu0
    %v7401 = vadd.f32 %v5710, %v7400
    %v7402 = vpop.f32.mrf.mxu0
    %v7403 = vadd.f32 %v5714, %v7402
    %v7404 = vpop.f32.mrf.mxu0
    %v7405 = vadd.f32 %v5714, %v7404
    %7406 = vmatprep.mubr.bf16.mxu0 %v6245
    %7407 = vmatmul.mubr.bf16.gmra.mxu0 %v6244
    %v7408 = vpop.f32.mrf.mxu0
    %v7409 = vadd.f32 %v5718, %v7408
    %v7410 = vpop.f32.mrf.mxu0
    %v7411 = vadd.f32 %v5718, %v7410
    %v7412 = vpop.f32.mrf.mxu0
    %v7413 = vadd.f32 %v5722, %v7412
    %v7414 = vpop.f32.mrf.mxu0
    %v7415 = vadd.f32 %v5722, %v7414
    %7416 = vmatprep.mubr.bf16.mxu0 %v6249
    %7417 = vmatmul.mubr.bf16.gmra.mxu0 %v6248
    %v7418 = vpop.f32.mrf.mxu0
    %v7419 = vadd.f32 %v5726, %v7418
    %v7420 = vpop.f32.mrf.mxu0
    %v7421 = vadd.f32 %v5726, %v7420
    %v7422 = vpop.f32.mrf.mxu0
    %v7423 = vadd.f32 %v5730, %v7422
    %v7424 = vpop.f32.mrf.mxu0
    %v7425 = vadd.f32 %v5730, %v7424
    %7426 = vmatprep.mubr.bf16.mxu0 %v6253
    %7427 = vmatmul.mubr.bf16.gmra.mxu0 %v6252
    %v7428 = vpop.f32.mrf.mxu0
    %v7429 = vadd.f32 %v5734, %v7428
    %v7430 = vpop.f32.mrf.mxu0
    %v7431 = vadd.f32 %v5734, %v7430
    %v7432 = vpop.f32.mrf.mxu0
    %v7433 = vadd.f32 %v5738, %v7432
    %v7434 = vpop.f32.mrf.mxu0
    %v7435 = vadd.f32 %v5738, %v7434
    %7436 = vmatprep.mubr.bf16.mxu0 %v6257
    %7437 = vmatmul.mubr.bf16.gmra.mxu0 %v6256
    %v7438 = vpop.f32.mrf.mxu0
    %v7439 = vadd.f32 %v5742, %v7438
    %v7440 = vpop.f32.mrf.mxu0
    %v7441 = vadd.f32 %v5742, %v7440
    %v7442 = vpop.f32.mrf.mxu0
    %v7443 = vadd.f32 %v5746, %v7442
    %v7444 = vpop.f32.mrf.mxu0
    %v7445 = vadd.f32 %v5746, %v7444
    %7446 = vdwg.mxu0
    %7447 = vmatprep.subr.bf16.mxu0 %v5459
    %7448 = vmatpush1.bf16.msra.mxu0 %v5458
    %7449 = vmatprep.subr.bf16.mxu0 %v5455
    %7450 = vmatpush1.bf16.msra.mxu0 %v5454
    %7451 = vmatprep.subr.bf16.mxu0 %v5451
    %7452 = vmatpush1.bf16.msra.mxu0 %v5450
    %7453 = vmatprep.subr.bf16.mxu0 %v5447
    %7454 = vmatpush1.bf16.msra.mxu0 %v5446
    %7455 = vmatprep.subr.bf16.mxu0 %v5443
    %7456 = vmatpush1.bf16.msra.mxu0 %v5442
    %7457 = vmatprep.subr.bf16.mxu0 %v5439
    %7458 = vmatpush1.bf16.msra.mxu0 %v5438
    %7459 = vmatprep.subr.bf16.mxu0 %v5435
    %7460 = vmatpush1.bf16.msra.mxu0 %v5434
    %7461 = vmatprep.subr.bf16.mxu0 %v5431
    %7462 = vmatpush1.bf16.msra.mxu0 %v5430
    %7463 = vmatprep.subr.bf16.mxu0 %v5491
    %7464 = vmatpush2.bf16.msra.mxu0 %v5490
    %7465 = vmatprep.subr.bf16.mxu0 %v5487
    %7466 = vmatpush2.bf16.msra.mxu0 %v5486
    %7467 = vmatprep.subr.bf16.mxu0 %v5483
    %7468 = vmatpush2.bf16.msra.mxu0 %v5482
    %7469 = vmatprep.subr.bf16.mxu0 %v5479
    %7470 = vmatpush2.bf16.msra.mxu0 %v5478
    %7471 = vmatprep.subr.bf16.mxu0 %v5475
    %7472 = vmatpush2.bf16.msra.mxu0 %v5474
    %7473 = vmatprep.subr.bf16.mxu0 %v5471
    %7474 = vmatpush2.bf16.msra.mxu0 %v5470
    %7475 = vmatprep.subr.bf16.mxu0 %v5467
    %7476 = vmatpush2.bf16.msra.mxu0 %v5466
    %7477 = vmatprep.subr.bf16.mxu0 %v5463
    %7478 = vmatpush2.bf16.msra.mxu0 %v5462
    %7479 = vmatprep.mubr.bf16.mxu0 %v6135
    %7480 = vmatmul.mubr.bf16.gmra.mxu0 %v6134
    %v7481 = vpop.f32.mrf.mxu0
    %v7482 = vadd.f32 %v7129, %v7481
    %v7483 = vpop.f32.mrf.mxu0
    %v7484 = vadd.f32 %v7131, %v7483
    %v7485 = vpop.f32.mrf.mxu0
    %v7486 = vadd.f32 %v7133, %v7485
    %v7487 = vpop.f32.mrf.mxu0
    %v7488 = vadd.f32 %v7135, %v7487
    %7489 = vmatprep.mubr.bf16.mxu0 %v6139
    %7490 = vmatmul.mubr.bf16.gmra.mxu0 %v6138
    %v7491 = vpop.f32.mrf.mxu0
    %v7492 = vadd.f32 %v7139, %v7491
    %v7493 = vpop.f32.mrf.mxu0
    %v7494 = vadd.f32 %v7141, %v7493
    %v7495 = vpop.f32.mrf.mxu0
    %v7496 = vadd.f32 %v7143, %v7495
    %v7497 = vpop.f32.mrf.mxu0
    %v7498 = vadd.f32 %v7145, %v7497
    %7499 = vmatprep.mubr.bf16.mxu0 %v6143
    %7500 = vmatmul.mubr.bf16.gmra.mxu0 %v6142
    %v7501 = vpop.f32.mrf.mxu0
    %v7502 = vadd.f32 %v7149, %v7501
    %v7503 = vpop.f32.mrf.mxu0
    %v7504 = vadd.f32 %v7151, %v7503
    %v7505 = vpop.f32.mrf.mxu0
    %v7506 = vadd.f32 %v7153, %v7505
    %v7507 = vpop.f32.mrf.mxu0
    %v7508 = vadd.f32 %v7155, %v7507
    %7509 = vmatprep.mubr.bf16.mxu0 %v6147
    %7510 = vmatmul.mubr.bf16.gmra.mxu0 %v6146
    %v7511 = vpop.f32.mrf.mxu0
    %v7512 = vadd.f32 %v7159, %v7511
    %v7513 = vpop.f32.mrf.mxu0
    %v7514 = vadd.f32 %v7161, %v7513
    %v7515 = vpop.f32.mrf.mxu0
    %v7516 = vadd.f32 %v7163, %v7515
    %v7517 = vpop.f32.mrf.mxu0
    %v7518 = vadd.f32 %v7165, %v7517
    %7519 = vmatprep.mubr.bf16.mxu0 %v6151
    %7520 = vmatmul.mubr.bf16.gmra.mxu0 %v6150
    %v7521 = vpop.f32.mrf.mxu0
    %v7522 = vadd.f32 %v7169, %v7521
    %v7523 = vpop.f32.mrf.mxu0
    %v7524 = vadd.f32 %v7171, %v7523
    %v7525 = vpop.f32.mrf.mxu0
    %v7526 = vadd.f32 %v7173, %v7525
    %v7527 = vpop.f32.mrf.mxu0
    %v7528 = vadd.f32 %v7175, %v7527
    %7529 = vmatprep.mubr.bf16.mxu0 %v6155
    %7530 = vmatmul.mubr.bf16.gmra.mxu0 %v6154
    %v7531 = vpop.f32.mrf.mxu0
    %v7532 = vadd.f32 %v7179, %v7531
    %v7533 = vpop.f32.mrf.mxu0
    %v7534 = vadd.f32 %v7181, %v7533
    %v7535 = vpop.f32.mrf.mxu0
    %v7536 = vadd.f32 %v7183, %v7535
    %v7537 = vpop.f32.mrf.mxu0
    %v7538 = vadd.f32 %v7185, %v7537
    %7539 = vmatprep.mubr.bf16.mxu0 %v6159
    %7540 = vmatmul.mubr.bf16.gmra.mxu0 %v6158
    %v7541 = vpop.f32.mrf.mxu0
    %v7542 = vadd.f32 %v7189, %v7541
    %v7543 = vpop.f32.mrf.mxu0
    %v7544 = vadd.f32 %v7191, %v7543
    %v7545 = vpop.f32.mrf.mxu0
    %v7546 = vadd.f32 %v7193, %v7545
    %v7547 = vpop.f32.mrf.mxu0
    %v7548 = vadd.f32 %v7195, %v7547
    %7549 = vmatprep.mubr.bf16.mxu0 %v6163
    %7550 = vmatmul.mubr.bf16.gmra.mxu0 %v6162
    %v7551 = vpop.f32.mrf.mxu0
    %v7552 = vadd.f32 %v7199, %v7551
    %v7553 = vpop.f32.mrf.mxu0
    %v7554 = vadd.f32 %v7201, %v7553
    %v7555 = vpop.f32.mrf.mxu0
    %v7556 = vadd.f32 %v7203, %v7555
    %v7557 = vpop.f32.mrf.mxu0
    %v7558 = vadd.f32 %v7205, %v7557
    %7559 = vmatprep.mubr.bf16.mxu0 %v6167
    %7560 = vmatmul.mubr.bf16.gmra.mxu0 %v6166
    %v7561 = vpop.f32.mrf.mxu0
    %v7562 = vadd.f32 %v7209, %v7561
    %v7563 = vpop.f32.mrf.mxu0
    %v7564 = vadd.f32 %v7211, %v7563
    %v7565 = vpop.f32.mrf.mxu0
    %v7566 = vadd.f32 %v7213, %v7565
    %v7567 = vpop.f32.mrf.mxu0
    %v7568 = vadd.f32 %v7215, %v7567
    %7569 = vmatprep.mubr.bf16.mxu0 %v6171
    %7570 = vmatmul.mubr.bf16.gmra.mxu0 %v6170
    %v7571 = vpop.f32.mrf.mxu0
    %v7572 = vadd.f32 %v7219, %v7571
    %v7573 = vpop.f32.mrf.mxu0
    %v7574 = vadd.f32 %v7221, %v7573
    %v7575 = vpop.f32.mrf.mxu0
    %v7576 = vadd.f32 %v7223, %v7575
    %v7577 = vpop.f32.mrf.mxu0
    %v7578 = vadd.f32 %v7225, %v7577
    %7579 = vmatprep.mubr.bf16.mxu0 %v6175
    %7580 = vmatmul.mubr.bf16.gmra.mxu0 %v6174
    %v7581 = vpop.f32.mrf.mxu0
    %v7582 = vadd.f32 %v7229, %v7581
    %v7583 = vpop.f32.mrf.mxu0
    %v7584 = vadd.f32 %v7231, %v7583
    %v7585 = vpop.f32.mrf.mxu0
    %v7586 = vadd.f32 %v7233, %v7585
    %v7587 = vpop.f32.mrf.mxu0
    %v7588 = vadd.f32 %v7235, %v7587
    %7589 = vmatprep.mubr.bf16.mxu0 %v6179
    %7590 = vmatmul.mubr.bf16.gmra.mxu0 %v6178
    %v7591 = vpop.f32.mrf.mxu0
    %v7592 = vadd.f32 %v7239, %v7591
    %v7593 = vpop.f32.mrf.mxu0
    %v7594 = vadd.f32 %v7241, %v7593
    %v7595 = vpop.f32.mrf.mxu0
    %v7596 = vadd.f32 %v7243, %v7595
    %v7597 = vpop.f32.mrf.mxu0
    %v7598 = vadd.f32 %v7245, %v7597
    %7599 = vmatprep.mubr.bf16.mxu0 %v6183
    %7600 = vmatmul.mubr.bf16.gmra.mxu0 %v6182
    %v7601 = vpop.f32.mrf.mxu0
    %v7602 = vadd.f32 %v7249, %v7601
    %v7603 = vpop.f32.mrf.mxu0
    %v7604 = vadd.f32 %v7251, %v7603
    %v7605 = vpop.f32.mrf.mxu0
    %v7606 = vadd.f32 %v7253, %v7605
    %v7607 = vpop.f32.mrf.mxu0
    %v7608 = vadd.f32 %v7255, %v7607
    %7609 = vmatprep.mubr.bf16.mxu0 %v6187
    %7610 = vmatmul.mubr.bf16.gmra.mxu0 %v6186
    %v7611 = vpop.f32.mrf.mxu0
    %v7612 = vadd.f32 %v7259, %v7611
    %v7613 = vpop.f32.mrf.mxu0
    %v7614 = vadd.f32 %v7261, %v7613
    %v7615 = vpop.f32.mrf.mxu0
    %v7616 = vadd.f32 %v7263, %v7615
    %v7617 = vpop.f32.mrf.mxu0
    %v7618 = vadd.f32 %v7265, %v7617
    %7619 = vmatprep.mubr.bf16.mxu0 %v6191
    %7620 = vmatmul.mubr.bf16.gmra.mxu0 %v6190
    %v7621 = vpop.f32.mrf.mxu0
    %v7622 = vadd.f32 %v7269, %v7621
    %v7623 = vpop.f32.mrf.mxu0
    %v7624 = vadd.f32 %v7271, %v7623
    %v7625 = vpop.f32.mrf.mxu0
    %v7626 = vadd.f32 %v7273, %v7625
    %v7627 = vpop.f32.mrf.mxu0
    %v7628 = vadd.f32 %v7275, %v7627
    %7629 = vmatprep.mubr.bf16.mxu0 %v6195
    %7630 = vmatmul.mubr.bf16.gmra.mxu0 %v6194
    %v7631 = vpop.f32.mrf.mxu0
    %v7632 = vadd.f32 %v7279, %v7631
    %v7633 = vpop.f32.mrf.mxu0
    %v7634 = vadd.f32 %v7281, %v7633
    %v7635 = vpop.f32.mrf.mxu0
    %v7636 = vadd.f32 %v7283, %v7635
    %v7637 = vpop.f32.mrf.mxu0
    %v7638 = vadd.f32 %v7285, %v7637
    %7639 = vmatprep.mubr.bf16.mxu0 %v6199
    %7640 = vmatmul.mubr.bf16.gmra.mxu0 %v6198
    %v7641 = vpop.f32.mrf.mxu0
    %v7642 = vadd.f32 %v7289, %v7641
    %v7643 = vpop.f32.mrf.mxu0
    %v7644 = vadd.f32 %v7291, %v7643
    %v7645 = vpop.f32.mrf.mxu0
    %v7646 = vadd.f32 %v7293, %v7645
    %v7647 = vpop.f32.mrf.mxu0
    %v7648 = vadd.f32 %v7295, %v7647
    %7649 = vmatprep.mubr.bf16.mxu0 %v6203
    %7650 = vmatmul.mubr.bf16.gmra.mxu0 %v6202
    %v7651 = vpop.f32.mrf.mxu0
    %v7652 = vadd.f32 %v7299, %v7651
    %v7653 = vpop.f32.mrf.mxu0
    %v7654 = vadd.f32 %v7301, %v7653
    %v7655 = vpop.f32.mrf.mxu0
    %v7656 = vadd.f32 %v7303, %v7655
    %v7657 = vpop.f32.mrf.mxu0
    %v7658 = vadd.f32 %v7305, %v7657
    %7659 = vmatprep.mubr.bf16.mxu0 %v6207
    %7660 = vmatmul.mubr.bf16.gmra.mxu0 %v6206
    %v7661 = vpop.f32.mrf.mxu0
    %v7662 = vadd.f32 %v7309, %v7661
    %v7663 = vpop.f32.mrf.mxu0
    %v7664 = vadd.f32 %v7311, %v7663
    %v7665 = vpop.f32.mrf.mxu0
    %v7666 = vadd.f32 %v7313, %v7665
    %v7667 = vpop.f32.mrf.mxu0
    %v7668 = vadd.f32 %v7315, %v7667
    %7669 = vmatprep.mubr.bf16.mxu0 %v6211
    %7670 = vmatmul.mubr.bf16.gmra.mxu0 %v6210
    %v7671 = vpop.f32.mrf.mxu0
    %v7672 = vadd.f32 %v7319, %v7671
    %v7673 = vpop.f32.mrf.mxu0
    %v7674 = vadd.f32 %v7321, %v7673
    %v7675 = vpop.f32.mrf.mxu0
    %v7676 = vadd.f32 %v7323, %v7675
    %v7677 = vpop.f32.mrf.mxu0
    %v7678 = vadd.f32 %v7325, %v7677
    %7679 = vmatprep.mubr.bf16.mxu0 %v6215
    %7680 = vmatmul.mubr.bf16.gmra.mxu0 %v6214
    %v7681 = vpop.f32.mrf.mxu0
    %v7682 = vadd.f32 %v7329, %v7681
    %v7683 = vpop.f32.mrf.mxu0
    %v7684 = vadd.f32 %v7331, %v7683
    %v7685 = vpop.f32.mrf.mxu0
    %v7686 = vadd.f32 %v7333, %v7685
    %v7687 = vpop.f32.mrf.mxu0
    %v7688 = vadd.f32 %v7335, %v7687
    %7689 = vmatprep.mubr.bf16.mxu0 %v6219
    %7690 = vmatmul.mubr.bf16.gmra.mxu0 %v6218
    %v7691 = vpop.f32.mrf.mxu0
    %v7692 = vadd.f32 %v7339, %v7691
    %v7693 = vpop.f32.mrf.mxu0
    %v7694 = vadd.f32 %v7341, %v7693
    %v7695 = vpop.f32.mrf.mxu0
    %v7696 = vadd.f32 %v7343, %v7695
    %v7697 = vpop.f32.mrf.mxu0
    %v7698 = vadd.f32 %v7345, %v7697
    %7699 = vmatprep.mubr.bf16.mxu0 %v6223
    %7700 = vmatmul.mubr.bf16.gmra.mxu0 %v6222
    %v7701 = vpop.f32.mrf.mxu0
    %v7702 = vadd.f32 %v7349, %v7701
    %v7703 = vpop.f32.mrf.mxu0
    %v7704 = vadd.f32 %v7351, %v7703
    %v7705 = vpop.f32.mrf.mxu0
    %v7706 = vadd.f32 %v7353, %v7705
    %v7707 = vpop.f32.mrf.mxu0
    %v7708 = vadd.f32 %v7355, %v7707
    %7709 = vmatprep.mubr.bf16.mxu0 %v6227
    %7710 = vmatmul.mubr.bf16.gmra.mxu0 %v6226
    %v7711 = vpop.f32.mrf.mxu0
    %v7712 = vadd.f32 %v7359, %v7711
    %v7713 = vpop.f32.mrf.mxu0
    %v7714 = vadd.f32 %v7361, %v7713
    %v7715 = vpop.f32.mrf.mxu0
    %v7716 = vadd.f32 %v7363, %v7715
    %v7717 = vpop.f32.mrf.mxu0
    %v7718 = vadd.f32 %v7365, %v7717
    %7719 = vmatprep.mubr.bf16.mxu0 %v6231
    %7720 = vmatmul.mubr.bf16.gmra.mxu0 %v6230
    %v7721 = vpop.f32.mrf.mxu0
    %v7722 = vadd.f32 %v7369, %v7721
    %v7723 = vpop.f32.mrf.mxu0
    %v7724 = vadd.f32 %v7371, %v7723
    %v7725 = vpop.f32.mrf.mxu0
    %v7726 = vadd.f32 %v7373, %v7725
    %v7727 = vpop.f32.mrf.mxu0
    %v7728 = vadd.f32 %v7375, %v7727
    %7729 = vmatprep.mubr.bf16.mxu0 %v6235
    %7730 = vmatmul.mubr.bf16.gmra.mxu0 %v6234
    %v7731 = vpop.f32.mrf.mxu0
    %v7732 = vadd.f32 %v7379, %v7731
    %v7733 = vpop.f32.mrf.mxu0
    %v7734 = vadd.f32 %v7381, %v7733
    %v7735 = vpop.f32.mrf.mxu0
    %v7736 = vadd.f32 %v7383, %v7735
    %v7737 = vpop.f32.mrf.mxu0
    %v7738 = vadd.f32 %v7385, %v7737
    %7739 = vmatprep.mubr.bf16.mxu0 %v6239
    %7740 = vmatmul.mubr.bf16.gmra.mxu0 %v6238
    %v7741 = vpop.f32.mrf.mxu0
    %v7742 = vadd.f32 %v7389, %v7741
    %v7743 = vpop.f32.mrf.mxu0
    %v7744 = vadd.f32 %v7391, %v7743
    %v7745 = vpop.f32.mrf.mxu0
    %v7746 = vadd.f32 %v7393, %v7745
    %v7747 = vpop.f32.mrf.mxu0
    %v7748 = vadd.f32 %v7395, %v7747
    %7749 = vmatprep.mubr.bf16.mxu0 %v6243
    %7750 = vmatmul.mubr.bf16.gmra.mxu0 %v6242
    %v7751 = vpop.f32.mrf.mxu0
    %v7752 = vadd.f32 %v7399, %v7751
    %v7753 = vpop.f32.mrf.mxu0
    %v7754 = vadd.f32 %v7401, %v7753
    %v7755 = vpop.f32.mrf.mxu0
    %v7756 = vadd.f32 %v7403, %v7755
    %v7757 = vpop.f32.mrf.mxu0
    %v7758 = vadd.f32 %v7405, %v7757
    %7759 = vmatprep.mubr.bf16.mxu0 %v6247
    %7760 = vmatmul.mubr.bf16.gmra.mxu0 %v6246
    %v7761 = vpop.f32.mrf.mxu0
    %v7762 = vadd.f32 %v7409, %v7761
    %v7763 = vpop.f32.mrf.mxu0
    %v7764 = vadd.f32 %v7411, %v7763
    %v7765 = vpop.f32.mrf.mxu0
    %v7766 = vadd.f32 %v7413, %v7765
    %v7767 = vpop.f32.mrf.mxu0
    %v7768 = vadd.f32 %v7415, %v7767
    %7769 = vmatprep.mubr.bf16.mxu0 %v6251
    %7770 = vmatmul.mubr.bf16.gmra.mxu0 %v6250
    %v7771 = vpop.f32.mrf.mxu0
    %v7772 = vadd.f32 %v7419, %v7771
    %v7773 = vpop.f32.mrf.mxu0
    %v7774 = vadd.f32 %v7421, %v7773
    %v7775 = vpop.f32.mrf.mxu0
    %v7776 = vadd.f32 %v7423, %v7775
    %v7777 = vpop.f32.mrf.mxu0
    %v7778 = vadd.f32 %v7425, %v7777
    %7779 = vmatprep.mubr.bf16.mxu0 %v6255
    %7780 = vmatmul.mubr.bf16.gmra.mxu0 %v6254
    %v7781 = vpop.f32.mrf.mxu0
    %v7782 = vadd.f32 %v7429, %v7781
    %v7783 = vpop.f32.mrf.mxu0
    %v7784 = vadd.f32 %v7431, %v7783
    %v7785 = vpop.f32.mrf.mxu0
    %v7786 = vadd.f32 %v7433, %v7785
    %v7787 = vpop.f32.mrf.mxu0
    %v7788 = vadd.f32 %v7435, %v7787
    %7789 = vmatprep.mubr.bf16.mxu0 %v6259
    %7790 = vmatmul.mubr.bf16.gmra.mxu0 %v6258
    %v7791 = vpop.f32.mrf.mxu0
    %v7792 = vadd.f32 %v7439, %v7791
    %v7793 = vpop.f32.mrf.mxu0
    %v7794 = vadd.f32 %v7441, %v7793
    %v7795 = vpop.f32.mrf.mxu0
    %v7796 = vadd.f32 %v7443, %v7795
    %v7797 = vpop.f32.mrf.mxu0
    %v7798 = vadd.f32 %v7445, %v7797
    %7799 = vdwg.mxu0
    %v7800 = vmax.f32 %v6776, 0.0
    %v7801 = vmax.f32 %v6778, 0.0
    %v7802 = vmax.f32 %v7482, 0.0
    %v7803 = vmax.f32 %v7484, 0.0
    %v7804 = vmax.f32 %v6780, 0.0
    %v7805 = vmax.f32 %v6782, 0.0
    %v7806 = vmax.f32 %v7486, 0.0
    %v7807 = vmax.f32 %v7488, 0.0
    %v7808 = vmax.f32 %v6786, 0.0
    %v7809 = vmax.f32 %v6788, 0.0
    %v7810 = vmax.f32 %v7492, 0.0
    %v7811 = vmax.f32 %v7494, 0.0
    %v7812 = vmax.f32 %v6790, 0.0
    %v7813 = vmax.f32 %v6792, 0.0
    %v7814 = vmax.f32 %v7496, 0.0
    %v7815 = vmax.f32 %v7498, 0.0
    %v7816 = vmax.f32 %v6796, 0.0
    %v7817 = vmax.f32 %v6798, 0.0
    %v7818 = vmax.f32 %v7502, 0.0
    %v7819 = vmax.f32 %v7504, 0.0
    %v7820 = vmax.f32 %v6800, 0.0
    %v7821 = vmax.f32 %v6802, 0.0
    %v7822 = vmax.f32 %v7506, 0.0
    %v7823 = vmax.f32 %v7508, 0.0
    %v7824 = vmax.f32 %v6806, 0.0
    %v7825 = vmax.f32 %v6808, 0.0
    %v7826 = vmax.f32 %v7512, 0.0
    %v7827 = vmax.f32 %v7514, 0.0
    %v7828 = vmax.f32 %v6810, 0.0
    %v7829 = vmax.f32 %v6812, 0.0
    %v7830 = vmax.f32 %v7516, 0.0
    %v7831 = vmax.f32 %v7518, 0.0
    %v7832 = vmax.f32 %v6816, 0.0
    %v7833 = vmax.f32 %v6818, 0.0
    %v7834 = vmax.f32 %v7522, 0.0
    %v7835 = vmax.f32 %v7524, 0.0
    %v7836 = vmax.f32 %v6820, 0.0
    %v7837 = vmax.f32 %v6822, 0.0
    %v7838 = vmax.f32 %v7526, 0.0
    %v7839 = vmax.f32 %v7528, 0.0
    %v7840 = vmax.f32 %v6826, 0.0
    %v7841 = vmax.f32 %v6828, 0.0
    %v7842 = vmax.f32 %v7532, 0.0
    %v7843 = vmax.f32 %v7534, 0.0
    %v7844 = vmax.f32 %v6830, 0.0
    %v7845 = vmax.f32 %v6832, 0.0
    %v7846 = vmax.f32 %v7536, 0.0
    %v7847 = vmax.f32 %v7538, 0.0
    %v7848 = vmax.f32 %v6836, 0.0
    %v7849 = vmax.f32 %v6838, 0.0
    %v7850 = vmax.f32 %v7542, 0.0
    %v7851 = vmax.f32 %v7544, 0.0
    %v7852 = vmax.f32 %v6840, 0.0
    %v7853 = vmax.f32 %v6842, 0.0
    %v7854 = vmax.f32 %v7546, 0.0
    %v7855 = vmax.f32 %v7548, 0.0
    %v7856 = vmax.f32 %v6846, 0.0
    %v7857 = vmax.f32 %v6848, 0.0
    %v7858 = vmax.f32 %v7552, 0.0
    %v7859 = vmax.f32 %v7554, 0.0
    %v7860 = vmax.f32 %v6850, 0.0
    %v7861 = vmax.f32 %v6852, 0.0
    %v7862 = vmax.f32 %v7556, 0.0
    %v7863 = vmax.f32 %v7558, 0.0
    %v7864 = vmax.f32 %v6856, 0.0
    %v7865 = vmax.f32 %v6858, 0.0
    %v7866 = vmax.f32 %v7562, 0.0
    %v7867 = vmax.f32 %v7564, 0.0
    %v7868 = vmax.f32 %v6860, 0.0
    %v7869 = vmax.f32 %v6862, 0.0
    %v7870 = vmax.f32 %v7566, 0.0
    %v7871 = vmax.f32 %v7568, 0.0
    %v7872 = vmax.f32 %v6866, 0.0
    %v7873 = vmax.f32 %v6868, 0.0
    %v7874 = vmax.f32 %v7572, 0.0
    %v7875 = vmax.f32 %v7574, 0.0
    %v7876 = vmax.f32 %v6870, 0.0
    %v7877 = vmax.f32 %v6872, 0.0
    %v7878 = vmax.f32 %v7576, 0.0
    %v7879 = vmax.f32 %v7578, 0.0
    %v7880 = vmax.f32 %v6876, 0.0
    %v7881 = vmax.f32 %v6878, 0.0
    %v7882 = vmax.f32 %v7582, 0.0
    %v7883 = vmax.f32 %v7584, 0.0
    %v7884 = vmax.f32 %v6880, 0.0
    %v7885 = vmax.f32 %v6882, 0.0
    %v7886 = vmax.f32 %v7586, 0.0
    %v7887 = vmax.f32 %v7588, 0.0
    %v7888 = vmax.f32 %v6886, 0.0
    %v7889 = vmax.f32 %v6888, 0.0
    %v7890 = vmax.f32 %v7592, 0.0
    %v7891 = vmax.f32 %v7594, 0.0
    %v7892 = vmax.f32 %v6890, 0.0
    %v7893 = vmax.f32 %v6892, 0.0
    %v7894 = vmax.f32 %v7596, 0.0
    %v7895 = vmax.f32 %v7598, 0.0
    %v7896 = vmax.f32 %v6896, 0.0
    %v7897 = vmax.f32 %v6898, 0.0
    %v7898 = vmax.f32 %v7602, 0.0
    %v7899 = vmax.f32 %v7604, 0.0
    %v7900 = vmax.f32 %v6900, 0.0
    %v7901 = vmax.f32 %v6902, 0.0
    %v7902 = vmax.f32 %v7606, 0.0
    %v7903 = vmax.f32 %v7608, 0.0
    %v7904 = vmax.f32 %v6906, 0.0
    %v7905 = vmax.f32 %v6908, 0.0
    %v7906 = vmax.f32 %v7612, 0.0
    %v7907 = vmax.f32 %v7614, 0.0
    %v7908 = vmax.f32 %v6910, 0.0
    %v7909 = vmax.f32 %v6912, 0.0
    %v7910 = vmax.f32 %v7616, 0.0
    %v7911 = vmax.f32 %v7618, 0.0
    %v7912 = vmax.f32 %v6916, 0.0
    %v7913 = vmax.f32 %v6918, 0.0
    %v7914 = vmax.f32 %v7622, 0.0
    %v7915 = vmax.f32 %v7624, 0.0
    %v7916 = vmax.f32 %v6920, 0.0
    %v7917 = vmax.f32 %v6922, 0.0
    %v7918 = vmax.f32 %v7626, 0.0
    %v7919 = vmax.f32 %v7628, 0.0
    %v7920 = vmax.f32 %v6926, 0.0
    %v7921 = vmax.f32 %v6928, 0.0
    %v7922 = vmax.f32 %v7632, 0.0
    %v7923 = vmax.f32 %v7634, 0.0
    %v7924 = vmax.f32 %v6930, 0.0
    %v7925 = vmax.f32 %v6932, 0.0
    %v7926 = vmax.f32 %v7636, 0.0
    %v7927 = vmax.f32 %v7638, 0.0
    %v7928 = vmax.f32 %v6936, 0.0
    %v7929 = vmax.f32 %v6938, 0.0
    %v7930 = vmax.f32 %v7642, 0.0
    %v7931 = vmax.f32 %v7644, 0.0
    %v7932 = vmax.f32 %v6940, 0.0
    %v7933 = vmax.f32 %v6942, 0.0
    %v7934 = vmax.f32 %v7646, 0.0
    %v7935 = vmax.f32 %v7648, 0.0
    %v7936 = vmax.f32 %v6946, 0.0
    %v7937 = vmax.f32 %v6948, 0.0
    %v7938 = vmax.f32 %v7652, 0.0
    %v7939 = vmax.f32 %v7654, 0.0
    %v7940 = vmax.f32 %v6950, 0.0
    %v7941 = vmax.f32 %v6952, 0.0
    %v7942 = vmax.f32 %v7656, 0.0
    %v7943 = vmax.f32 %v7658, 0.0
    %v7944 = vmax.f32 %v6956, 0.0
    %v7945 = vmax.f32 %v6958, 0.0
    %v7946 = vmax.f32 %v7662, 0.0
    %v7947 = vmax.f32 %v7664, 0.0
    %v7948 = vmax.f32 %v6960, 0.0
    %v7949 = vmax.f32 %v6962, 0.0
    %v7950 = vmax.f32 %v7666, 0.0
    %v7951 = vmax.f32 %v7668, 0.0
    %v7952 = vmax.f32 %v6966, 0.0
    %v7953 = vmax.f32 %v6968, 0.0
    %v7954 = vmax.f32 %v7672, 0.0
    %v7955 = vmax.f32 %v7674, 0.0
    %v7956 = vmax.f32 %v6970, 0.0
    %v7957 = vmax.f32 %v6972, 0.0
    %v7958 = vmax.f32 %v7676, 0.0
    %v7959 = vmax.f32 %v7678, 0.0
    %v7960 = vmax.f32 %v6976, 0.0
    %v7961 = vmax.f32 %v6978, 0.0
    %v7962 = vmax.f32 %v7682, 0.0
    %v7963 = vmax.f32 %v7684, 0.0
    %v7964 = vmax.f32 %v6980, 0.0
    %v7965 = vmax.f32 %v6982, 0.0
    %v7966 = vmax.f32 %v7686, 0.0
    %v7967 = vmax.f32 %v7688, 0.0
    %v7968 = vmax.f32 %v6986, 0.0
    %v7969 = vmax.f32 %v6988, 0.0
    %v7970 = vmax.f32 %v7692, 0.0
    %v7971 = vmax.f32 %v7694, 0.0
    %v7972 = vmax.f32 %v6990, 0.0
    %v7973 = vmax.f32 %v6992, 0.0
    %v7974 = vmax.f32 %v7696, 0.0
    %v7975 = vmax.f32 %v7698, 0.0
    %v7976 = vmax.f32 %v6996, 0.0
    %v7977 = vmax.f32 %v6998, 0.0
    %v7978 = vmax.f32 %v7702, 0.0
    %v7979 = vmax.f32 %v7704, 0.0
    %v7980 = vmax.f32 %v7000, 0.0
    %v7981 = vmax.f32 %v7002, 0.0
    %v7982 = vmax.f32 %v7706, 0.0
    %v7983 = vmax.f32 %v7708, 0.0
    %v7984 = vmax.f32 %v7006, 0.0
    %v7985 = vmax.f32 %v7008, 0.0
    %v7986 = vmax.f32 %v7712, 0.0
    %v7987 = vmax.f32 %v7714, 0.0
    %v7988 = vmax.f32 %v7010, 0.0
    %v7989 = vmax.f32 %v7012, 0.0
    %v7990 = vmax.f32 %v7716, 0.0
    %v7991 = vmax.f32 %v7718, 0.0
    %v7992 = vmax.f32 %v7016, 0.0
    %v7993 = vmax.f32 %v7018, 0.0
    %v7994 = vmax.f32 %v7722, 0.0
    %v7995 = vmax.f32 %v7724, 0.0
    %v7996 = vmax.f32 %v7020, 0.0
    %v7997 = vmax.f32 %v7022, 0.0
    %v7998 = vmax.f32 %v7726, 0.0
    %v7999 = vmax.f32 %v7728, 0.0
    %v8000 = vmax.f32 %v7026, 0.0
    %v8001 = vmax.f32 %v7028, 0.0
    %v8002 = vmax.f32 %v7732, 0.0
    %v8003 = vmax.f32 %v7734, 0.0
    %v8004 = vmax.f32 %v7030, 0.0
    %v8005 = vmax.f32 %v7032, 0.0
    %v8006 = vmax.f32 %v7736, 0.0
    %v8007 = vmax.f32 %v7738, 0.0
    %v8008 = vmax.f32 %v7036, 0.0
    %v8009 = vmax.f32 %v7038, 0.0
    %v8010 = vmax.f32 %v7742, 0.0
    %v8011 = vmax.f32 %v7744, 0.0
    %v8012 = vmax.f32 %v7040, 0.0
    %v8013 = vmax.f32 %v7042, 0.0
    %v8014 = vmax.f32 %v7746, 0.0
    %v8015 = vmax.f32 %v7748, 0.0
    %v8016 = vmax.f32 %v7046, 0.0
    %v8017 = vmax.f32 %v7048, 0.0
    %v8018 = vmax.f32 %v7752, 0.0
    %v8019 = vmax.f32 %v7754, 0.0
    %v8020 = vmax.f32 %v7050, 0.0
    %v8021 = vmax.f32 %v7052, 0.0
    %v8022 = vmax.f32 %v7756, 0.0
    %v8023 = vmax.f32 %v7758, 0.0
    %v8024 = vmax.f32 %v7056, 0.0
    %v8025 = vmax.f32 %v7058, 0.0
    %v8026 = vmax.f32 %v7762, 0.0
    %v8027 = vmax.f32 %v7764, 0.0
    %v8028 = vmax.f32 %v7060, 0.0
    %v8029 = vmax.f32 %v7062, 0.0
    %v8030 = vmax.f32 %v7766, 0.0
    %v8031 = vmax.f32 %v7768, 0.0
    %v8032 = vmax.f32 %v7066, 0.0
    %v8033 = vmax.f32 %v7068, 0.0
    %v8034 = vmax.f32 %v7772, 0.0
    %v8035 = vmax.f32 %v7774, 0.0
    %v8036 = vmax.f32 %v7070, 0.0
    %v8037 = vmax.f32 %v7072, 0.0
    %v8038 = vmax.f32 %v7776, 0.0
    %v8039 = vmax.f32 %v7778, 0.0
    %v8040 = vmax.f32 %v7076, 0.0
    %v8041 = vmax.f32 %v7078, 0.0
    %v8042 = vmax.f32 %v7782, 0.0
    %v8043 = vmax.f32 %v7784, 0.0
    %v8044 = vmax.f32 %v7080, 0.0
    %v8045 = vmax.f32 %v7082, 0.0
    %v8046 = vmax.f32 %v7786, 0.0
    %v8047 = vmax.f32 %v7788, 0.0
    %v8048 = vmax.f32 %v7086, 0.0
    %v8049 = vmax.f32 %v7088, 0.0
    %v8050 = vmax.f32 %v7792, 0.0
    %v8051 = vmax.f32 %v7794, 0.0
    %v8052 = vmax.f32 %v7090, 0.0
    %v8053 = vmax.f32 %v7092, 0.0
    %v8054 = vmax.f32 %v7796, 0.0
    %v8055 = vmax.f32 %v7798, 0.0
    %v8056 = vld [vmem:[%s5] sm:$0xff]
    %v8057 = vld [vmem:[%s5 + $0x8] sm:$0xff]
    %v8058 = vld [vmem:[%s5 + $0x10] sm:$0xff]
    %v8059 = vld [vmem:[%s5 + $0x18] sm:$0xff]
    %v8060 = vld [vmem:[%s5 + $0x20] sm:$0xff]
    %v8061 = vld [vmem:[%s5 + $0x28] sm:$0xff]
    %v8062 = vld [vmem:[%s5 + $0x30] sm:$0xff]
    %v8063 = vld [vmem:[%s5 + $0x38] sm:$0xff]
    %v8064 = vld [vmem:[%s5 + $0x40] sm:$0xff]
    %v8065 = vld [vmem:[%s5 + $0x48] sm:$0xff]
    %v8066 = vld [vmem:[%s5 + $0x50] sm:$0xff]
    %v8067 = vld [vmem:[%s5 + $0x58] sm:$0xff]
    %v8068 = vld [vmem:[%s5 + $0x60] sm:$0xff]
    %v8069 = vld [vmem:[%s5 + $0x68] sm:$0xff]
    %v8070 = vld [vmem:[%s5 + $0x70] sm:$0xff]
    %v8071 = vld [vmem:[%s5 + $0x78] sm:$0xff]
    %v8072 = vld [vmem:[%s5 + $0x80] sm:$0xff]
    %v8073 = vld [vmem:[%s5 + $0x88] sm:$0xff]
    %v8074 = vld [vmem:[%s5 + $0x90] sm:$0xff]
    %v8075 = vld [vmem:[%s5 + $0x98] sm:$0xff]
    %v8076 = vld [vmem:[%s5 + $0xa0] sm:$0xff]
    %v8077 = vld [vmem:[%s5 + $0xa8] sm:$0xff]
    %v8078 = vld [vmem:[%s5 + $0xb0] sm:$0xff]
    %v8079 = vld [vmem:[%s5 + $0xb8] sm:$0xff]
    %v8080 = vld [vmem:[%s5 + $0xc0] sm:$0xff]
    %v8081 = vld [vmem:[%s5 + $0xc8] sm:$0xff]
    %v8082 = vld [vmem:[%s5 + $0xd0] sm:$0xff]
    %v8083 = vld [vmem:[%s5 + $0xd8] sm:$0xff]
    %v8084 = vld [vmem:[%s5 + $0xe0] sm:$0xff]
    %v8085 = vld [vmem:[%s5 + $0xe8] sm:$0xff]
    %v8086 = vld [vmem:[%s5 + $0xf0] sm:$0xff]
    %v8087 = vld [vmem:[%s5 + $0xf8] sm:$0xff]
    %v8088 = vld [vmem:[%s5 + $0x100] sm:$0xff]
    %v8089 = vld [vmem:[%s5 + $0x108] sm:$0xff]
    %v8090 = vld [vmem:[%s5 + $0x110] sm:$0xff]
    %v8091 = vld [vmem:[%s5 + $0x118] sm:$0xff]
    %v8092 = vld [vmem:[%s5 + $0x120] sm:$0xff]
    %v8093 = vld [vmem:[%s5 + $0x128] sm:$0xff]
    %v8094 = vld [vmem:[%s5 + $0x130] sm:$0xff]
    %v8095 = vld [vmem:[%s5 + $0x138] sm:$0xff]
    %v8096 = vld [vmem:[%s5 + $0x140] sm:$0xff]
    %v8097 = vld [vmem:[%s5 + $0x148] sm:$0xff]
    %v8098 = vld [vmem:[%s5 + $0x150] sm:$0xff]
    %v8099 = vld [vmem:[%s5 + $0x158] sm:$0xff]
    %v8100 = vld [vmem:[%s5 + $0x160] sm:$0xff]
    %v8101 = vld [vmem:[%s5 + $0x168] sm:$0xff]
    %v8102 = vld [vmem:[%s5 + $0x170] sm:$0xff]
    %v8103 = vld [vmem:[%s5 + $0x178] sm:$0xff]
    %v8104 = vld [vmem:[%s5 + $0x180] sm:$0xff]
    %v8105 = vld [vmem:[%s5 + $0x188] sm:$0xff]
    %v8106 = vld [vmem:[%s5 + $0x190] sm:$0xff]
    %v8107 = vld [vmem:[%s5 + $0x198] sm:$0xff]
    %v8108 = vld [vmem:[%s5 + $0x1a0] sm:$0xff]
    %v8109 = vld [vmem:[%s5 + $0x1a8] sm:$0xff]
    %v8110 = vld [vmem:[%s5 + $0x1b0] sm:$0xff]
    %v8111 = vld [vmem:[%s5 + $0x1b8] sm:$0xff]
    %v8112 = vld [vmem:[%s5 + $0x1c0] sm:$0xff]
    %v8113 = vld [vmem:[%s5 + $0x1c8] sm:$0xff]
    %v8114 = vld [vmem:[%s5 + $0x1d0] sm:$0xff]
    %v8115 = vld [vmem:[%s5 + $0x1d8] sm:$0xff]
    %v8116 = vld [vmem:[%s5 + $0x1e0] sm:$0xff]
    %v8117 = vld [vmem:[%s5 + $0x1e8] sm:$0xff]
    %v8118 = vld [vmem:[%s5 + $0x1f0] sm:$0xff]
    %v8119 = vld [vmem:[%s5 + $0x1f8] sm:$0xff]
    %8121 = vset.pattern.permute.xlu0 0
    %8122 = vperm.xlu0 %8121, %v8056
    %v8123 = vpop.permute.xlu0 %8122
    %8126 = vset.pattern.permute.xlu0 0
    %8127 = vperm.xlu0 %8126, %v8057
    %v8128 = vpop.permute.xlu0 %8127
    %8131 = vset.pattern.permute.xlu0 0
    %8132 = vperm.xlu0 %8131, %v8058
    %v8133 = vpop.permute.xlu0 %8132
    %8136 = vset.pattern.permute.xlu0 0
    %8137 = vperm.xlu0 %8136, %v8059
    %v8138 = vpop.permute.xlu0 %8137
    %8141 = vset.pattern.permute.xlu0 0
    %8142 = vperm.xlu0 %8141, %v8060
    %v8143 = vpop.permute.xlu0 %8142
    %8146 = vset.pattern.permute.xlu0 0
    %8147 = vperm.xlu0 %8146, %v8061
    %v8148 = vpop.permute.xlu0 %8147
    %8151 = vset.pattern.permute.xlu0 0
    %8152 = vperm.xlu0 %8151, %v8062
    %v8153 = vpop.permute.xlu0 %8152
    %8156 = vset.pattern.permute.xlu0 0
    %8157 = vperm.xlu0 %8156, %v8063
    %v8158 = vpop.permute.xlu0 %8157
    %8161 = vset.pattern.permute.xlu0 0
    %8162 = vperm.xlu0 %8161, %v8064
    %v8163 = vpop.permute.xlu0 %8162
    %8166 = vset.pattern.permute.xlu0 0
    %8167 = vperm.xlu0 %8166, %v8065
    %v8168 = vpop.permute.xlu0 %8167
    %8171 = vset.pattern.permute.xlu0 0
    %8172 = vperm.xlu0 %8171, %v8066
    %v8173 = vpop.permute.xlu0 %8172
    %8176 = vset.pattern.permute.xlu0 0
    %8177 = vperm.xlu0 %8176, %v8067
    %v8178 = vpop.permute.xlu0 %8177
    %8181 = vset.pattern.permute.xlu0 0
    %8182 = vperm.xlu0 %8181, %v8068
    %v8183 = vpop.permute.xlu0 %8182
    %8186 = vset.pattern.permute.xlu0 0
    %8187 = vperm.xlu0 %8186, %v8069
    %v8188 = vpop.permute.xlu0 %8187
    %8191 = vset.pattern.permute.xlu0 0
    %8192 = vperm.xlu0 %8191, %v8070
    %v8193 = vpop.permute.xlu0 %8192
    %8196 = vset.pattern.permute.xlu0 0
    %8197 = vperm.xlu0 %8196, %v8071
    %v8198 = vpop.permute.xlu0 %8197
    %8201 = vset.pattern.permute.xlu0 0
    %8202 = vperm.xlu0 %8201, %v8072
    %v8203 = vpop.permute.xlu0 %8202
    %8206 = vset.pattern.permute.xlu0 0
    %8207 = vperm.xlu0 %8206, %v8073
    %v8208 = vpop.permute.xlu0 %8207
    %8211 = vset.pattern.permute.xlu0 0
    %8212 = vperm.xlu0 %8211, %v8074
    %v8213 = vpop.permute.xlu0 %8212
    %8216 = vset.pattern.permute.xlu0 0
    %8217 = vperm.xlu0 %8216, %v8075
    %v8218 = vpop.permute.xlu0 %8217
    %8221 = vset.pattern.permute.xlu0 0
    %8222 = vperm.xlu0 %8221, %v8076
    %v8223 = vpop.permute.xlu0 %8222
    %8226 = vset.pattern.permute.xlu0 0
    %8227 = vperm.xlu0 %8226, %v8077
    %v8228 = vpop.permute.xlu0 %8227
    %8231 = vset.pattern.permute.xlu0 0
    %8232 = vperm.xlu0 %8231, %v8078
    %v8233 = vpop.permute.xlu0 %8232
    %8236 = vset.pattern.permute.xlu0 0
    %8237 = vperm.xlu0 %8236, %v8079
    %v8238 = vpop.permute.xlu0 %8237
    %8241 = vset.pattern.permute.xlu0 0
    %8242 = vperm.xlu0 %8241, %v8080
    %v8243 = vpop.permute.xlu0 %8242
    %8246 = vset.pattern.permute.xlu0 0
    %8247 = vperm.xlu0 %8246, %v8081
    %v8248 = vpop.permute.xlu0 %8247
    %8251 = vset.pattern.permute.xlu0 0
    %8252 = vperm.xlu0 %8251, %v8082
    %v8253 = vpop.permute.xlu0 %8252
    %8256 = vset.pattern.permute.xlu0 0
    %8257 = vperm.xlu0 %8256, %v8083
    %v8258 = vpop.permute.xlu0 %8257
    %8261 = vset.pattern.permute.xlu0 0
    %8262 = vperm.xlu0 %8261, %v8084
    %v8263 = vpop.permute.xlu0 %8262
    %8266 = vset.pattern.permute.xlu0 0
    %8267 = vperm.xlu0 %8266, %v8085
    %v8268 = vpop.permute.xlu0 %8267
    %8271 = vset.pattern.permute.xlu0 0
    %8272 = vperm.xlu0 %8271, %v8086
    %v8273 = vpop.permute.xlu0 %8272
    %8276 = vset.pattern.permute.xlu0 0
    %8277 = vperm.xlu0 %8276, %v8087
    %v8278 = vpop.permute.xlu0 %8277
    %8281 = vset.pattern.permute.xlu0 0
    %8282 = vperm.xlu0 %8281, %v8088
    %v8283 = vpop.permute.xlu0 %8282
    %8286 = vset.pattern.permute.xlu0 0
    %8287 = vperm.xlu0 %8286, %v8089
    %v8288 = vpop.permute.xlu0 %8287
    %8291 = vset.pattern.permute.xlu0 0
    %8292 = vperm.xlu0 %8291, %v8090
    %v8293 = vpop.permute.xlu0 %8292
    %8296 = vset.pattern.permute.xlu0 0
    %8297 = vperm.xlu0 %8296, %v8091
    %v8298 = vpop.permute.xlu0 %8297
    %8301 = vset.pattern.permute.xlu0 0
    %8302 = vperm.xlu0 %8301, %v8092
    %v8303 = vpop.permute.xlu0 %8302
    %8306 = vset.pattern.permute.xlu0 0
    %8307 = vperm.xlu0 %8306, %v8093
    %v8308 = vpop.permute.xlu0 %8307
    %8311 = vset.pattern.permute.xlu0 0
    %8312 = vperm.xlu0 %8311, %v8094
    %v8313 = vpop.permute.xlu0 %8312
    %8316 = vset.pattern.permute.xlu0 0
    %8317 = vperm.xlu0 %8316, %v8095
    %v8318 = vpop.permute.xlu0 %8317
    %8321 = vset.pattern.permute.xlu0 0
    %8322 = vperm.xlu0 %8321, %v8096
    %v8323 = vpop.permute.xlu0 %8322
    %8326 = vset.pattern.permute.xlu0 0
    %8327 = vperm.xlu0 %8326, %v8097
    %v8328 = vpop.permute.xlu0 %8327
    %8331 = vset.pattern.permute.xlu0 0
    %8332 = vperm.xlu0 %8331, %v8098
    %v8333 = vpop.permute.xlu0 %8332
    %8336 = vset.pattern.permute.xlu0 0
    %8337 = vperm.xlu0 %8336, %v8099
    %v8338 = vpop.permute.xlu0 %8337
    %8341 = vset.pattern.permute.xlu0 0
    %8342 = vperm.xlu0 %8341, %v8100
    %v8343 = vpop.permute.xlu0 %8342
    %8346 = vset.pattern.permute.xlu0 0
    %8347 = vperm.xlu0 %8346, %v8101
    %v8348 = vpop.permute.xlu0 %8347
    %8351 = vset.pattern.permute.xlu0 0
    %8352 = vperm.xlu0 %8351, %v8102
    %v8353 = vpop.permute.xlu0 %8352
    %8356 = vset.pattern.permute.xlu0 0
    %8357 = vperm.xlu0 %8356, %v8103
    %v8358 = vpop.permute.xlu0 %8357
    %8361 = vset.pattern.permute.xlu0 0
    %8362 = vperm.xlu0 %8361, %v8104
    %v8363 = vpop.permute.xlu0 %8362
    %8366 = vset.pattern.permute.xlu0 0
    %8367 = vperm.xlu0 %8366, %v8105
    %v8368 = vpop.permute.xlu0 %8367
    %8371 = vset.pattern.permute.xlu0 0
    %8372 = vperm.xlu0 %8371, %v8106
    %v8373 = vpop.permute.xlu0 %8372
    %8376 = vset.pattern.permute.xlu0 0
    %8377 = vperm.xlu0 %8376, %v8107
    %v8378 = vpop.permute.xlu0 %8377
    %8381 = vset.pattern.permute.xlu0 0
    %8382 = vperm.xlu0 %8381, %v8108
    %v8383 = vpop.permute.xlu0 %8382
    %8386 = vset.pattern.permute.xlu0 0
    %8387 = vperm.xlu0 %8386, %v8109
    %v8388 = vpop.permute.xlu0 %8387
    %8391 = vset.pattern.permute.xlu0 0
    %8392 = vperm.xlu0 %8391, %v8110
    %v8393 = vpop.permute.xlu0 %8392
    %8396 = vset.pattern.permute.xlu0 0
    %8397 = vperm.xlu0 %8396, %v8111
    %v8398 = vpop.permute.xlu0 %8397
    %8401 = vset.pattern.permute.xlu0 0
    %8402 = vperm.xlu0 %8401, %v8112
    %v8403 = vpop.permute.xlu0 %8402
    %8406 = vset.pattern.permute.xlu0 0
    %8407 = vperm.xlu0 %8406, %v8113
    %v8408 = vpop.permute.xlu0 %8407
    %8411 = vset.pattern.permute.xlu0 0
    %8412 = vperm.xlu0 %8411, %v8114
    %v8413 = vpop.permute.xlu0 %8412
    %8416 = vset.pattern.permute.xlu0 0
    %8417 = vperm.xlu0 %8416, %v8115
    %v8418 = vpop.permute.xlu0 %8417
    %8421 = vset.pattern.permute.xlu0 0
    %8422 = vperm.xlu0 %8421, %v8116
    %v8423 = vpop.permute.xlu0 %8422
    %8426 = vset.pattern.permute.xlu0 0
    %8427 = vperm.xlu0 %8426, %v8117
    %v8428 = vpop.permute.xlu0 %8427
    %8431 = vset.pattern.permute.xlu0 0
    %8432 = vperm.xlu0 %8431, %v8118
    %v8433 = vpop.permute.xlu0 %8432
    %8436 = vset.pattern.permute.xlu0 0
    %8437 = vperm.xlu0 %8436, %v8119
    %v8438 = vpop.permute.xlu0 %8437
    %v8440 = vmul.f32 %v7800, %v8123
    %v8441 = vmul.f32 %v7801, %v8123
    %v8442 = vmul.f32 %v7802, %v8123
    %v8443 = vmul.f32 %v7803, %v8123
    %v8444 = vmul.f32 %v7804, %v8128
    %v8445 = vmul.f32 %v7805, %v8128
    %v8446 = vmul.f32 %v7806, %v8128
    %v8447 = vmul.f32 %v7807, %v8128
    %v8448 = vmul.f32 %v7808, %v8133
    %v8449 = vmul.f32 %v7809, %v8133
    %v8450 = vmul.f32 %v7810, %v8133
    %v8451 = vmul.f32 %v7811, %v8133
    %v8452 = vmul.f32 %v7812, %v8138
    %v8453 = vmul.f32 %v7813, %v8138
    %v8454 = vmul.f32 %v7814, %v8138
    %v8455 = vmul.f32 %v7815, %v8138
    %v8456 = vmul.f32 %v7816, %v8143
    %v8457 = vmul.f32 %v7817, %v8143
    %v8458 = vmul.f32 %v7818, %v8143
    %v8459 = vmul.f32 %v7819, %v8143
    %v8460 = vmul.f32 %v7820, %v8148
    %v8461 = vmul.f32 %v7821, %v8148
    %v8462 = vmul.f32 %v7822, %v8148
    %v8463 = vmul.f32 %v7823, %v8148
    %v8464 = vmul.f32 %v7824, %v8153
    %v8465 = vmul.f32 %v7825, %v8153
    %v8466 = vmul.f32 %v7826, %v8153
    %v8467 = vmul.f32 %v7827, %v8153
    %v8468 = vmul.f32 %v7828, %v8158
    %v8469 = vmul.f32 %v7829, %v8158
    %v8470 = vmul.f32 %v7830, %v8158
    %v8471 = vmul.f32 %v7831, %v8158
    %v8472 = vmul.f32 %v7832, %v8163
    %v8473 = vmul.f32 %v7833, %v8163
    %v8474 = vmul.f32 %v7834, %v8163
    %v8475 = vmul.f32 %v7835, %v8163
    %v8476 = vmul.f32 %v7836, %v8168
    %v8477 = vmul.f32 %v7837, %v8168
    %v8478 = vmul.f32 %v7838, %v8168
    %v8479 = vmul.f32 %v7839, %v8168
    %v8480 = vmul.f32 %v7840, %v8173
    %v8481 = vmul.f32 %v7841, %v8173
    %v8482 = vmul.f32 %v7842, %v8173
    %v8483 = vmul.f32 %v7843, %v8173
    %v8484 = vmul.f32 %v7844, %v8178
    %v8485 = vmul.f32 %v7845, %v8178
    %v8486 = vmul.f32 %v7846, %v8178
    %v8487 = vmul.f32 %v7847, %v8178
    %v8488 = vmul.f32 %v7848, %v8183
    %v8489 = vmul.f32 %v7849, %v8183
    %v8490 = vmul.f32 %v7850, %v8183
    %v8491 = vmul.f32 %v7851, %v8183
    %v8492 = vmul.f32 %v7852, %v8188
    %v8493 = vmul.f32 %v7853, %v8188
    %v8494 = vmul.f32 %v7854, %v8188
    %v8495 = vmul.f32 %v7855, %v8188
    %v8496 = vmul.f32 %v7856, %v8193
    %v8497 = vmul.f32 %v7857, %v8193
    %v8498 = vmul.f32 %v7858, %v8193
    %v8499 = vmul.f32 %v7859, %v8193
    %v8500 = vmul.f32 %v7860, %v8198
    %v8501 = vmul.f32 %v7861, %v8198
    %v8502 = vmul.f32 %v7862, %v8198
    %v8503 = vmul.f32 %v7863, %v8198
    %v8504 = vmul.f32 %v7864, %v8203
    %v8505 = vmul.f32 %v7865, %v8203
    %v8506 = vmul.f32 %v7866, %v8203
    %v8507 = vmul.f32 %v7867, %v8203
    %v8508 = vmul.f32 %v7868, %v8208
    %v8509 = vmul.f32 %v7869, %v8208
    %v8510 = vmul.f32 %v7870, %v8208
    %v8511 = vmul.f32 %v7871, %v8208
    %v8512 = vmul.f32 %v7872, %v8213
    %v8513 = vmul.f32 %v7873, %v8213
    %v8514 = vmul.f32 %v7874, %v8213
    %v8515 = vmul.f32 %v7875, %v8213
    %v8516 = vmul.f32 %v7876, %v8218
    %v8517 = vmul.f32 %v7877, %v8218
    %v8518 = vmul.f32 %v7878, %v8218
    %v8519 = vmul.f32 %v7879, %v8218
    %v8520 = vmul.f32 %v7880, %v8223
    %v8521 = vmul.f32 %v7881, %v8223
    %v8522 = vmul.f32 %v7882, %v8223
    %v8523 = vmul.f32 %v7883, %v8223
    %v8524 = vmul.f32 %v7884, %v8228
    %v8525 = vmul.f32 %v7885, %v8228
    %v8526 = vmul.f32 %v7886, %v8228
    %v8527 = vmul.f32 %v7887, %v8228
    %v8528 = vmul.f32 %v7888, %v8233
    %v8529 = vmul.f32 %v7889, %v8233
    %v8530 = vmul.f32 %v7890, %v8233
    %v8531 = vmul.f32 %v7891, %v8233
    %v8532 = vmul.f32 %v7892, %v8238
    %v8533 = vmul.f32 %v7893, %v8238
    %v8534 = vmul.f32 %v7894, %v8238
    %v8535 = vmul.f32 %v7895, %v8238
    %v8536 = vmul.f32 %v7896, %v8243
    %v8537 = vmul.f32 %v7897, %v8243
    %v8538 = vmul.f32 %v7898, %v8243
    %v8539 = vmul.f32 %v7899, %v8243
    %v8540 = vmul.f32 %v7900, %v8248
    %v8541 = vmul.f32 %v7901, %v8248
    %v8542 = vmul.f32 %v7902, %v8248
    %v8543 = vmul.f32 %v7903, %v8248
    %v8544 = vmul.f32 %v7904, %v8253
    %v8545 = vmul.f32 %v7905, %v8253
    %v8546 = vmul.f32 %v7906, %v8253
    %v8547 = vmul.f32 %v7907, %v8253
    %v8548 = vmul.f32 %v7908, %v8258
    %v8549 = vmul.f32 %v7909, %v8258
    %v8550 = vmul.f32 %v7910, %v8258
    %v8551 = vmul.f32 %v7911, %v8258
    %v8552 = vmul.f32 %v7912, %v8263
    %v8553 = vmul.f32 %v7913, %v8263
    %v8554 = vmul.f32 %v7914, %v8263
    %v8555 = vmul.f32 %v7915, %v8263
    %v8556 = vmul.f32 %v7916, %v8268
    %v8557 = vmul.f32 %v7917, %v8268
    %v8558 = vmul.f32 %v7918, %v8268
    %v8559 = vmul.f32 %v7919, %v8268
    %v8560 = vmul.f32 %v7920, %v8273
    %v8561 = vmul.f32 %v7921, %v8273
    %v8562 = vmul.f32 %v7922, %v8273
    %v8563 = vmul.f32 %v7923, %v8273
    %v8564 = vmul.f32 %v7924, %v8278
    %v8565 = vmul.f32 %v7925, %v8278
    %v8566 = vmul.f32 %v7926, %v8278
    %v8567 = vmul.f32 %v7927, %v8278
    %v8568 = vmul.f32 %v7928, %v8283
    %v8569 = vmul.f32 %v7929, %v8283
    %v8570 = vmul.f32 %v7930, %v8283
    %v8571 = vmul.f32 %v7931, %v8283
    %v8572 = vmul.f32 %v7932, %v8288
    %v8573 = vmul.f32 %v7933, %v8288
    %v8574 = vmul.f32 %v7934, %v8288
    %v8575 = vmul.f32 %v7935, %v8288
    %v8576 = vmul.f32 %v7936, %v8293
    %v8577 = vmul.f32 %v7937, %v8293
    %v8578 = vmul.f32 %v7938, %v8293
    %v8579 = vmul.f32 %v7939, %v8293
    %v8580 = vmul.f32 %v7940, %v8298
    %v8581 = vmul.f32 %v7941, %v8298
    %v8582 = vmul.f32 %v7942, %v8298
    %v8583 = vmul.f32 %v7943, %v8298
    %v8584 = vmul.f32 %v7944, %v8303
    %v8585 = vmul.f32 %v7945, %v8303
    %v8586 = vmul.f32 %v7946, %v8303
    %v8587 = vmul.f32 %v7947, %v8303
    %v8588 = vmul.f32 %v7948, %v8308
    %v8589 = vmul.f32 %v7949, %v8308
    %v8590 = vmul.f32 %v7950, %v8308
    %v8591 = vmul.f32 %v7951, %v8308
    %v8592 = vmul.f32 %v7952, %v8313
    %v8593 = vmul.f32 %v7953, %v8313
    %v8594 = vmul.f32 %v7954, %v8313
    %v8595 = vmul.f32 %v7955, %v8313
    %v8596 = vmul.f32 %v7956, %v8318
    %v8597 = vmul.f32 %v7957, %v8318
    %v8598 = vmul.f32 %v7958, %v8318
    %v8599 = vmul.f32 %v7959, %v8318
    %v8600 = vmul.f32 %v7960, %v8323
    %v8601 = vmul.f32 %v7961, %v8323
    %v8602 = vmul.f32 %v7962, %v8323
    %v8603 = vmul.f32 %v7963, %v8323
    %v8604 = vmul.f32 %v7964, %v8328
    %v8605 = vmul.f32 %v7965, %v8328
    %v8606 = vmul.f32 %v7966, %v8328
    %v8607 = vmul.f32 %v7967, %v8328
    %v8608 = vmul.f32 %v7968, %v8333
    %v8609 = vmul.f32 %v7969, %v8333
    %v8610 = vmul.f32 %v7970, %v8333
    %v8611 = vmul.f32 %v7971, %v8333
    %v8612 = vmul.f32 %v7972, %v8338
    %v8613 = vmul.f32 %v7973, %v8338
    %v8614 = vmul.f32 %v7974, %v8338
    %v8615 = vmul.f32 %v7975, %v8338
    %v8616 = vmul.f32 %v7976, %v8343
    %v8617 = vmul.f32 %v7977, %v8343
    %v8618 = vmul.f32 %v7978, %v8343
    %v8619 = vmul.f32 %v7979, %v8343
    %v8620 = vmul.f32 %v7980, %v8348
    %v8621 = vmul.f32 %v7981, %v8348
    %v8622 = vmul.f32 %v7982, %v8348
    %v8623 = vmul.f32 %v7983, %v8348
    %v8624 = vmul.f32 %v7984, %v8353
    %v8625 = vmul.f32 %v7985, %v8353
    %v8626 = vmul.f32 %v7986, %v8353
    %v8627 = vmul.f32 %v7987, %v8353
    %v8628 = vmul.f32 %v7988, %v8358
    %v8629 = vmul.f32 %v7989, %v8358
    %v8630 = vmul.f32 %v7990, %v8358
    %v8631 = vmul.f32 %v7991, %v8358
    %v8632 = vmul.f32 %v7992, %v8363
    %v8633 = vmul.f32 %v7993, %v8363
    %v8634 = vmul.f32 %v7994, %v8363
    %v8635 = vmul.f32 %v7995, %v8363
    %v8636 = vmul.f32 %v7996, %v8368
    %v8637 = vmul.f32 %v7997, %v8368
    %v8638 = vmul.f32 %v7998, %v8368
    %v8639 = vmul.f32 %v7999, %v8368
    %v8640 = vmul.f32 %v8000, %v8373
    %v8641 = vmul.f32 %v8001, %v8373
    %v8642 = vmul.f32 %v8002, %v8373
    %v8643 = vmul.f32 %v8003, %v8373
    %v8644 = vmul.f32 %v8004, %v8378
    %v8645 = vmul.f32 %v8005, %v8378
    %v8646 = vmul.f32 %v8006, %v8378
    %v8647 = vmul.f32 %v8007, %v8378
    %v8648 = vmul.f32 %v8008, %v8383
    %v8649 = vmul.f32 %v8009, %v8383
    %v8650 = vmul.f32 %v8010, %v8383
    %v8651 = vmul.f32 %v8011, %v8383
    %v8652 = vmul.f32 %v8012, %v8388
    %v8653 = vmul.f32 %v8013, %v8388
    %v8654 = vmul.f32 %v8014, %v8388
    %v8655 = vmul.f32 %v8015, %v8388
    %v8656 = vmul.f32 %v8016, %v8393
    %v8657 = vmul.f32 %v8017, %v8393
    %v8658 = vmul.f32 %v8018, %v8393
    %v8659 = vmul.f32 %v8019, %v8393
    %v8660 = vmul.f32 %v8020, %v8398
    %v8661 = vmul.f32 %v8021, %v8398
    %v8662 = vmul.f32 %v8022, %v8398
    %v8663 = vmul.f32 %v8023, %v8398
    %v8664 = vmul.f32 %v8024, %v8403
    %v8665 = vmul.f32 %v8025, %v8403
    %v8666 = vmul.f32 %v8026, %v8403
    %v8667 = vmul.f32 %v8027, %v8403
    %v8668 = vmul.f32 %v8028, %v8408
    %v8669 = vmul.f32 %v8029, %v8408
    %v8670 = vmul.f32 %v8030, %v8408
    %v8671 = vmul.f32 %v8031, %v8408
    %v8672 = vmul.f32 %v8032, %v8413
    %v8673 = vmul.f32 %v8033, %v8413
    %v8674 = vmul.f32 %v8034, %v8413
    %v8675 = vmul.f32 %v8035, %v8413
    %v8676 = vmul.f32 %v8036, %v8418
    %v8677 = vmul.f32 %v8037, %v8418
    %v8678 = vmul.f32 %v8038, %v8418
    %v8679 = vmul.f32 %v8039, %v8418
    %v8680 = vmul.f32 %v8040, %v8423
    %v8681 = vmul.f32 %v8041, %v8423
    %v8682 = vmul.f32 %v8042, %v8423
    %v8683 = vmul.f32 %v8043, %v8423
    %v8684 = vmul.f32 %v8044, %v8428
    %v8685 = vmul.f32 %v8045, %v8428
    %v8686 = vmul.f32 %v8046, %v8428
    %v8687 = vmul.f32 %v8047, %v8428
    %v8688 = vmul.f32 %v8048, %v8433
    %v8689 = vmul.f32 %v8049, %v8433
    %v8690 = vmul.f32 %v8050, %v8433
    %v8691 = vmul.f32 %v8051, %v8433
    %v8692 = vmul.f32 %v8052, %v8438
    %v8693 = vmul.f32 %v8053, %v8438
    %v8694 = vmul.f32 %v8054, %v8438
    %v8695 = vmul.f32 %v8055, %v8438
    %v8696 = vadd.f32 %v8440, %v8444
    %v8697 = vadd.f32 %v8696, %v8448
    %v8698 = vadd.f32 %v8697, %v8452
    %v8699 = vadd.f32 %v8698, %v8456
    %v8700 = vadd.f32 %v8699, %v8460
    %v8701 = vadd.f32 %v8700, %v8464
    %v8702 = vadd.f32 %v8701, %v8468
    %v8703 = vadd.f32 %v8702, %v8472
    %v8704 = vadd.f32 %v8703, %v8476
    %v8705 = vadd.f32 %v8704, %v8480
    %v8706 = vadd.f32 %v8705, %v8484
    %v8707 = vadd.f32 %v8706, %v8488
    %v8708 = vadd.f32 %v8707, %v8492
    %v8709 = vadd.f32 %v8708, %v8496
    %v8710 = vadd.f32 %v8709, %v8500
    %v8711 = vadd.f32 %v8710, %v8504
    %v8712 = vadd.f32 %v8711, %v8508
    %v8713 = vadd.f32 %v8712, %v8512
    %v8714 = vadd.f32 %v8713, %v8516
    %v8715 = vadd.f32 %v8714, %v8520
    %v8716 = vadd.f32 %v8715, %v8524
    %v8717 = vadd.f32 %v8716, %v8528
    %v8718 = vadd.f32 %v8717, %v8532
    %v8719 = vadd.f32 %v8718, %v8536
    %v8720 = vadd.f32 %v8719, %v8540
    %v8721 = vadd.f32 %v8720, %v8544
    %v8722 = vadd.f32 %v8721, %v8548
    %v8723 = vadd.f32 %v8722, %v8552
    %v8724 = vadd.f32 %v8723, %v8556
    %v8725 = vadd.f32 %v8724, %v8560
    %v8726 = vadd.f32 %v8725, %v8564
    %v8727 = vadd.f32 %v8726, %v8568
    %v8728 = vadd.f32 %v8727, %v8572
    %v8729 = vadd.f32 %v8728, %v8576
    %v8730 = vadd.f32 %v8729, %v8580
    %v8731 = vadd.f32 %v8730, %v8584
    %v8732 = vadd.f32 %v8731, %v8588
    %v8733 = vadd.f32 %v8732, %v8592
    %v8734 = vadd.f32 %v8733, %v8596
    %v8735 = vadd.f32 %v8734, %v8600
    %v8736 = vadd.f32 %v8735, %v8604
    %v8737 = vadd.f32 %v8736, %v8608
    %v8738 = vadd.f32 %v8737, %v8612
    %v8739 = vadd.f32 %v8738, %v8616
    %v8740 = vadd.f32 %v8739, %v8620
    %v8741 = vadd.f32 %v8740, %v8624
    %v8742 = vadd.f32 %v8741, %v8628
    %v8743 = vadd.f32 %v8742, %v8632
    %v8744 = vadd.f32 %v8743, %v8636
    %v8745 = vadd.f32 %v8744, %v8640
    %v8746 = vadd.f32 %v8745, %v8644
    %v8747 = vadd.f32 %v8746, %v8648
    %v8748 = vadd.f32 %v8747, %v8652
    %v8749 = vadd.f32 %v8748, %v8656
    %v8750 = vadd.f32 %v8749, %v8660
    %v8751 = vadd.f32 %v8750, %v8664
    %v8752 = vadd.f32 %v8751, %v8668
    %v8753 = vadd.f32 %v8752, %v8672
    %v8754 = vadd.f32 %v8753, %v8676
    %v8755 = vadd.f32 %v8754, %v8680
    %v8756 = vadd.f32 %v8755, %v8684
    %v8757 = vadd.f32 %v8756, %v8688
    %v8758 = vadd.f32 %v8757, %v8692
    %v8759 = vrot.slane %v8758, 4
    %v8760 = vadd.f32 %v8758, %v8759
    %v8761 = vrot.slane %v8760, 2
    %v8762 = vadd.f32 %v8760, %v8761
    %v8763 = vrot.slane %v8762, 1
    %v8764 = vadd.f32 %v8762, %v8763
    %v8765 = vadd.f32 %v8441, %v8445
    %v8766 = vadd.f32 %v8765, %v8449
    %v8767 = vadd.f32 %v8766, %v8453
    %v8768 = vadd.f32 %v8767, %v8457
    %v8769 = vadd.f32 %v8768, %v8461
    %v8770 = vadd.f32 %v8769, %v8465
    %v8771 = vadd.f32 %v8770, %v8469
    %v8772 = vadd.f32 %v8771, %v8473
    %v8773 = vadd.f32 %v8772, %v8477
    %v8774 = vadd.f32 %v8773, %v8481
    %v8775 = vadd.f32 %v8774, %v8485
    %v8776 = vadd.f32 %v8775, %v8489
    %v8777 = vadd.f32 %v8776, %v8493
    %v8778 = vadd.f32 %v8777, %v8497
    %v8779 = vadd.f32 %v8778, %v8501
    %v8780 = vadd.f32 %v8779, %v8505
    %v8781 = vadd.f32 %v8780, %v8509
    %v8782 = vadd.f32 %v8781, %v8513
    %v8783 = vadd.f32 %v8782, %v8517
    %v8784 = vadd.f32 %v8783, %v8521
    %v8785 = vadd.f32 %v8784, %v8525
    %v8786 = vadd.f32 %v8785, %v8529
    %v8787 = vadd.f32 %v8786, %v8533
    %v8788 = vadd.f32 %v8787, %v8537
    %v8789 = vadd.f32 %v8788, %v8541
    %v8790 = vadd.f32 %v8789, %v8545
    %v8791 = vadd.f32 %v8790, %v8549
    %v8792 = vadd.f32 %v8791, %v8553
    %v8793 = vadd.f32 %v8792, %v8557
    %v8794 = vadd.f32 %v8793, %v8561
    %v8795 = vadd.f32 %v8794, %v8565
    %v8796 = vadd.f32 %v8795, %v8569
    %v8797 = vadd.f32 %v8796, %v8573
    %v8798 = vadd.f32 %v8797, %v8577
    %v8799 = vadd.f32 %v8798, %v8581
    %v8800 = vadd.f32 %v8799, %v8585
    %v8801 = vadd.f32 %v8800, %v8589
    %v8802 = vadd.f32 %v8801, %v8593
    %v8803 = vadd.f32 %v8802, %v8597
    %v8804 = vadd.f32 %v8803, %v8601
    %v8805 = vadd.f32 %v8804, %v8605
    %v8806 = vadd.f32 %v8805, %v8609
    %v8807 = vadd.f32 %v8806, %v8613
    %v8808 = vadd.f32 %v8807, %v8617
    %v8809 = vadd.f32 %v8808, %v8621
    %v8810 = vadd.f32 %v8809, %v8625
    %v8811 = vadd.f32 %v8810, %v8629
    %v8812 = vadd.f32 %v8811, %v8633
    %v8813 = vadd.f32 %v8812, %v8637
    %v8814 = vadd.f32 %v8813, %v8641
    %v8815 = vadd.f32 %v8814, %v8645
    %v8816 = vadd.f32 %v8815, %v8649
    %v8817 = vadd.f32 %v8816, %v8653
    %v8818 = vadd.f32 %v8817, %v8657
    %v8819 = vadd.f32 %v8818, %v8661
    %v8820 = vadd.f32 %v8819, %v8665
    %v8821 = vadd.f32 %v8820, %v8669
    %v8822 = vadd.f32 %v8821, %v8673
    %v8823 = vadd.f32 %v8822, %v8677
    %v8824 = vadd.f32 %v8823, %v8681
    %v8825 = vadd.f32 %v8824, %v8685
    %v8826 = vadd.f32 %v8825, %v8689
    %v8827 = vadd.f32 %v8826, %v8693
    %v8828 = vrot.slane %v8827, 4
    %v8829 = vadd.f32 %v8827, %v8828
    %v8830 = vrot.slane %v8829, 2
    %v8831 = vadd.f32 %v8829, %v8830
    %v8832 = vrot.slane %v8831, 1
    %v8833 = vadd.f32 %v8831, %v8832
    %v8834 = vadd.f32 %v8442, %v8446
    %v8835 = vadd.f32 %v8834, %v8450
    %v8836 = vadd.f32 %v8835, %v8454
    %v8837 = vadd.f32 %v8836, %v8458
    %v8838 = vadd.f32 %v8837, %v8462
    %v8839 = vadd.f32 %v8838, %v8466
    %v8840 = vadd.f32 %v8839, %v8470
    %v8841 = vadd.f32 %v8840, %v8474
    %v8842 = vadd.f32 %v8841, %v8478
    %v8843 = vadd.f32 %v8842, %v8482
    %v8844 = vadd.f32 %v8843, %v8486
    %v8845 = vadd.f32 %v8844, %v8490
    %v8846 = vadd.f32 %v8845, %v8494
    %v8847 = vadd.f32 %v8846, %v8498
    %v8848 = vadd.f32 %v8847, %v8502
    %v8849 = vadd.f32 %v8848, %v8506
    %v8850 = vadd.f32 %v8849, %v8510
    %v8851 = vadd.f32 %v8850, %v8514
    %v8852 = vadd.f32 %v8851, %v8518
    %v8853 = vadd.f32 %v8852, %v8522
    %v8854 = vadd.f32 %v8853, %v8526
    %v8855 = vadd.f32 %v8854, %v8530
    %v8856 = vadd.f32 %v8855, %v8534
    %v8857 = vadd.f32 %v8856, %v8538
    %v8858 = vadd.f32 %v8857, %v8542
    %v8859 = vadd.f32 %v8858, %v8546
    %v8860 = vadd.f32 %v8859, %v8550
    %v8861 = vadd.f32 %v8860, %v8554
    %v8862 = vadd.f32 %v8861, %v8558
    %v8863 = vadd.f32 %v8862, %v8562
    %v8864 = vadd.f32 %v8863, %v8566
    %v8865 = vadd.f32 %v8864, %v8570
    %v8866 = vadd.f32 %v8865, %v8574
    %v8867 = vadd.f32 %v8866, %v8578
    %v8868 = vadd.f32 %v8867, %v8582
    %v8869 = vadd.f32 %v8868, %v8586
    %v8870 = vadd.f32 %v8869, %v8590
    %v8871 = vadd.f32 %v8870, %v8594
    %v8872 = vadd.f32 %v8871, %v8598
    %v8873 = vadd.f32 %v8872, %v8602
    %v8874 = vadd.f32 %v8873, %v8606
    %v8875 = vadd.f32 %v8874, %v8610
    %v8876 = vadd.f32 %v8875, %v8614
    %v8877 = vadd.f32 %v8876, %v8618
    %v8878 = vadd.f32 %v8877, %v8622
    %v8879 = vadd.f32 %v8878, %v8626
    %v8880 = vadd.f32 %v8879, %v8630
    %v8881 = vadd.f32 %v8880, %v8634
    %v8882 = vadd.f32 %v8881, %v8638
    %v8883 = vadd.f32 %v8882, %v8642
    %v8884 = vadd.f32 %v8883, %v8646
    %v8885 = vadd.f32 %v8884, %v8650
    %v8886 = vadd.f32 %v8885, %v8654
    %v8887 = vadd.f32 %v8886, %v8658
    %v8888 = vadd.f32 %v8887, %v8662
    %v8889 = vadd.f32 %v8888, %v8666
    %v8890 = vadd.f32 %v8889, %v8670
    %v8891 = vadd.f32 %v8890, %v8674
    %v8892 = vadd.f32 %v8891, %v8678
    %v8893 = vadd.f32 %v8892, %v8682
    %v8894 = vadd.f32 %v8893, %v8686
    %v8895 = vadd.f32 %v8894, %v8690
    %v8896 = vadd.f32 %v8895, %v8694
    %v8897 = vrot.slane %v8896, 4
    %v8898 = vadd.f32 %v8896, %v8897
    %v8899 = vrot.slane %v8898, 2
    %v8900 = vadd.f32 %v8898, %v8899
    %v8901 = vrot.slane %v8900, 1
    %v8902 = vadd.f32 %v8900, %v8901
    %v8903 = vadd.f32 %v8443, %v8447
    %v8904 = vadd.f32 %v8903, %v8451
    %v8905 = vadd.f32 %v8904, %v8455
    %v8906 = vadd.f32 %v8905, %v8459
    %v8907 = vadd.f32 %v8906, %v8463
    %v8908 = vadd.f32 %v8907, %v8467
    %v8909 = vadd.f32 %v8908, %v8471
    %v8910 = vadd.f32 %v8909, %v8475
    %v8911 = vadd.f32 %v8910, %v8479
    %v8912 = vadd.f32 %v8911, %v8483
    %v8913 = vadd.f32 %v8912, %v8487
    %v8914 = vadd.f32 %v8913, %v8491
    %v8915 = vadd.f32 %v8914, %v8495
    %v8916 = vadd.f32 %v8915, %v8499
    %v8917 = vadd.f32 %v8916, %v8503
    %v8918 = vadd.f32 %v8917, %v8507
    %v8919 = vadd.f32 %v8918, %v8511
    %v8920 = vadd.f32 %v8919, %v8515
    %v8921 = vadd.f32 %v8920, %v8519
    %v8922 = vadd.f32 %v8921, %v8523
    %v8923 = vadd.f32 %v8922, %v8527
    %v8924 = vadd.f32 %v8923, %v8531
    %v8925 = vadd.f32 %v8924, %v8535
    %v8926 = vadd.f32 %v8925, %v8539
    %v8927 = vadd.f32 %v8926, %v8543
    %v8928 = vadd.f32 %v8927, %v8547
    %v8929 = vadd.f32 %v8928, %v8551
    %v8930 = vadd.f32 %v8929, %v8555
    %v8931 = vadd.f32 %v8930, %v8559
    %v8932 = vadd.f32 %v8931, %v8563
    %v8933 = vadd.f32 %v8932, %v8567
    %v8934 = vadd.f32 %v8933, %v8571
    %v8935 = vadd.f32 %v8934, %v8575
    %v8936 = vadd.f32 %v8935, %v8579
    %v8937 = vadd.f32 %v8936, %v8583
    %v8938 = vadd.f32 %v8937, %v8587
    %v8939 = vadd.f32 %v8938, %v8591
    %v8940 = vadd.f32 %v8939, %v8595
    %v8941 = vadd.f32 %v8940, %v8599
    %v8942 = vadd.f32 %v8941, %v8603
    %v8943 = vadd.f32 %v8942, %v8607
    %v8944 = vadd.f32 %v8943, %v8611
    %v8945 = vadd.f32 %v8944, %v8615
    %v8946 = vadd.f32 %v8945, %v8619
    %v8947 = vadd.f32 %v8946, %v8623
    %v8948 = vadd.f32 %v8947, %v8627
    %v8949 = vadd.f32 %v8948, %v8631
    %v8950 = vadd.f32 %v8949, %v8635
    %v8951 = vadd.f32 %v8950, %v8639
    %v8952 = vadd.f32 %v8951, %v8643
    %v8953 = vadd.f32 %v8952, %v8647
    %v8954 = vadd.f32 %v8953, %v8651
    %v8955 = vadd.f32 %v8954, %v8655
    %v8956 = vadd.f32 %v8955, %v8659
    %v8957 = vadd.f32 %v8956, %v8663
    %v8958 = vadd.f32 %v8957, %v8667
    %v8959 = vadd.f32 %v8958, %v8671
    %v8960 = vadd.f32 %v8959, %v8675
    %v8961 = vadd.f32 %v8960, %v8679
    %v8962 = vadd.f32 %v8961, %v8683
    %v8963 = vadd.f32 %v8962, %v8687
    %v8964 = vadd.f32 %v8963, %v8691
    %v8965 = vadd.f32 %v8964, %v8695
    %v8966 = vrot.slane %v8965, 4
    %v8967 = vadd.f32 %v8965, %v8966
    %v8968 = vrot.slane %v8967, 2
    %v8969 = vadd.f32 %v8967, %v8968
    %v8970 = vrot.slane %v8969, 1
    %v8971 = vadd.f32 %v8969, %v8970
    %v8972 = vld [vmem:[%s2] sm:$0x1]
    %8974 = vset.pattern.permute.xlu0 3
    %8975 = vperm.xlu0 %8974, %v8972
    %v8976 = vpop.permute.xlu0 %8975
    %v8978 = vadd.f32 %v8764, %v8976
    %v8979 = vadd.f32 %v8833, %v8976
    %v8980 = vadd.f32 %v8902, %v8976
    %v8981 = vadd.f32 %v8971, %v8976
    %v8986 = vcombine.low %v8978, %v8979
    %v8987 = vcombine.low %v8980, %v8981
    %v8989 = vunpack.c.l.s4 1966171168
    %v8990 = vunpack.c.0.s8 %v8989
    %v8991 = vlaneseq
    %v8992 = vshrl.u32 %v8991, 7
    %v8993 = vsub.s32 %v8990, %v8992
    %v8994 = vrot.slane %v8986, %v8993
    %v8996 = vunpack.c.l.s4 1966171168
    %v8997 = vunpack.c.0.s8 %v8996
    %v8998 = vlaneseq
    %v8999 = vshrl.u32 %v8998, 7
    %v9000 = vsub.s32 %v8997, %v8999
    %v9001 = vrot.slane %v8987, %v9000
    %v9002 = vcombine.low %v8994, %v9001
    %v9004 = vunpack.c.l.s4 1966171168
    %v9005 = vunpack.c.0.s8 %v9004
    %v9006 = vlaneseq
    %v9007 = vshrl.u32 %v9006, 7
    %v9008 = vsub.s32 %v9005, %v9007
    %v9009 = vrot.slane %v9002, %v9008
    %v9011 = vlaneseq
    %vm9012 = vcmp.ge.s32.totalorder %v9011, 0
    %vm9013 = vcmp.lt.s32.totalorder %v9011, 512
    %vm9014 = vmand %vm9012, %vm9013
    %9015 = vst.msk [vmem:[#allocation5] sm:$0xf] %vm9014, %v9009
    // Predicated region
    $region30: #{tpu_custom_call.1} parent=1 // pred_check
      _
    $region31: #{tpu_custom_call.1} parent=1 // pred_check_branch
      %9017 = sbr.rel (0) target = $region33
    $region32: #{tpu_custom_call.1} parent=1 // pred_region
      %s9019 = ssub.s32 64, 64
      %9020 = vsyncadd [#allocation4], %s9019
      %s9022 = sshll.u32 [#allocation5], 4
      %s9023 = int_to_ptr.vmem [resolvable:$true] %s9022
      %9025 = dma.vmem_to_hbm [thread:$0]  %s9023, 64, %s6, [#allocation4]
    $region33: #{tpu_custom_call.1} parent=1 // pred_fallthru
      _
    // Predicated region
    $region34: #{tpu_custom_call.1} parent=1 // pred_check
      _
    $region35: #{tpu_custom_call.1} parent=1 // pred_check_branch
      %9027 = sbr.rel (0) target = $region37
    $region36: #{tpu_custom_call.1} parent=1 // pred_region
      %9028 = dma.done [#allocation4], 64
    $region37: #{tpu_custom_call.1} parent=1 // pred_fallthru
      _
    %9029 = vsyncpa [#allocation3], 1
    %9030 = vsyncpa [#allocation4], 1

</llo_original>
